<compile_context>
chip_gen: v6e
topology: v6e:2x2x1
jax: 0.10.0
libtpu: 0.0.40
codegen_flags: <defaults>
</compile_context>

<pallas_src>
import functools

import jax
import jax.numpy as jnp
from jax.experimental import pallas as pl
from jax.experimental.pallas import tpu as pltpu


RES_FEAT = 2048   # resnet50 avg-pooled feature dim (fc in_features)
DEN_FEAT = 1920   # densenet201 classifier in_features
ALEX_OUT = 1000   # alexnet output logits


# ----------------------------------------------------------------------------
# Fused kernel: K-tiled trunk matmuls + whole head network in the epilogue.
# ----------------------------------------------------------------------------
def _smile_fused_kernel(
    # per-stream image chunks (f32, cast to bf16 in-kernel), [Bp, tk] each
    faces_ref, mouths_ref, eyes_ref,
    # frozen trunk stubs: bf16 weight chunks streamed over K, f32 biases
    res_tw, res_tb, den_tw, den_tb, alex_tw, alex_tb,
    # merged per-family heads: [F, 3H] bf16 weights, [1, 3H] f32 biases
    res_hw, res_hb, den_hw, den_hb, ale_hw, ale_hb,
    # fusion MLP + output (f32, tiny)
    fc1_w, fc1_b, fc2_w, fc2_b, fc3_w, fc3_b, out_w, out_b,
    # output
    o_ref,                                              # [Bp, num_classes] f32
    # f32 accumulators, resident across the K grid
    res_acc, den_acc, alex_acc,
    *, bp: int, hidden: int):
    f32 = jnp.float32
    k = pl.program_id(0)

    @pl.when(k == 0)
    def _():
        res_acc[...] = jnp.zeros_like(res_acc)
        den_acc[...] = jnp.zeros_like(den_acc)
        alex_acc[...] = jnp.zeros_like(alex_acc)

    # Stack faces/mouths/eyes along the sublane (batch) axis so each shared
    # frozen-trunk weight chunk is read from HBM once and multiplied once.
    x = jnp.concatenate(
        [faces_ref[...], mouths_ref[...], eyes_ref[...]], axis=0
    ).astype(jnp.bfloat16)                               # [3Bp, tk]

    res_acc[...] += jnp.dot(x, res_tw[...], preferred_element_type=f32)
    den_acc[...] += jnp.dot(x, den_tw[...], preferred_element_type=f32)
    alex_acc[...] += jnp.dot(x, alex_tw[...], preferred_element_type=f32)

    @pl.when(k == pl.num_programs(0) - 1)
    def _():
        H = hidden

        def mm(a, w):
            return jnp.dot(a, w, preferred_element_type=f32)

        # Trunk epilogue.  The ReLU on the alexnet stub output *is* the
        # module's relu7/relu8/relu9 (applied to the 1000-way alexnet logits,
        # before ale_*); the ReLUs on the res/den stubs model the post-ReLU
        # pooled backbone features feeding the replaced fc/classifier heads.
        res_feat = jnp.maximum(res_acc[...] + res_tb[...], 0.0).astype(jnp.bfloat16)
        den_feat = jnp.maximum(den_acc[...] + den_tb[...], 0.0).astype(jnp.bfloat16)
        alex_feat = jnp.maximum(alex_acc[...] + alex_tb[...], 0.0).astype(jnp.bfloat16)

        # Merged per-family heads: one [3Bp, F] @ [F, 3H] matmul per family.
        res_full = jnp.maximum(mm(res_feat, res_hw[...]) + res_hb[...], 0.0)  # relu1/2/3
        den_full = jnp.maximum(mm(den_feat, den_hw[...]) + den_hb[...], 0.0)  # relu4/5/6
        ale_full = mm(alex_feat, ale_hw[...]) + ale_hb[...]                   # ale_*: no relu

        def band(full, s):
            # stream s lives in rows [s*Bp, (s+1)*Bp) and owns weight columns
            # [s*H, (s+1)*H) of the merged head output.
            return full[s * bp:(s + 1) * bp, s * H:(s + 1) * H]               # [Bp, H] f32

        # fc(cat(a_f, a_m, a_e)) == a_f @ W[:H] + a_m @ W[H:2H] + a_e @ W[2H:] + b
        # (requires hidden % 8 == 0 for relayout-free sublane slices of W)
        def split_dot(full, w_ref, b_ref):
            w = w_ref[...]
            return (mm(band(full, 0), w[0:H, :])
                    + mm(band(full, 1), w[H:2 * H, :])
                    + mm(band(full, 2), w[2 * H:3 * H, :])
                    + b_ref[...])

        # dropout d1/d2/d3 are identity at eval
        out1 = jnp.maximum(split_dot(res_full, fc1_w, fc1_b), 0.0)
        out2 = jnp.maximum(split_dot(den_full, fc2_w, fc2_b), 0.0)
        out3 = jnp.maximum(split_dot(ale_full, fc3_w, fc3_b), 0.0)

        ow = out_w[...]
        o_ref[...] = (mm(out1, ow[0:H, :]) + mm(out2, ow[H:2 * H, :])
                      + mm(out3, ow[2 * H:3 * H, :]) + out_b[...]).astype(o_ref.dtype)


# ----------------------------------------------------------------------------
# Parameters (deterministic, mimics nn.Linear init scale).
# ----------------------------------------------------------------------------
def _linear_params(key, fan_in, fan_out, w_dtype):
    kw, kb = jax.random.split(key)
    bound = 1.0 / (fan_in ** 0.5)
    w = jax.random.uniform(kw, (fan_in, fan_out), jnp.float32, -bound, bound)
    b = jax.random.uniform(kb, (1, fan_out), jnp.float32, -bound, bound)
    return w.astype(w_dtype), b


def _merged_head_params(key, fan_in, hidden):
    # Three separate nn.Linear(fan_in, hidden) heads (faces / mouths / eyes),
    # concatenated along the output dim into one [fan_in, 3*hidden] matmul.
    ws, bs = [], []
    for k in jax.random.split(key, 3):
        w, b = _linear_params(k, fan_in, hidden, jnp.bfloat16)
        ws.append(w)
        bs.append(b)
    return jnp.concatenate(ws, axis=1), jnp.concatenate(bs, axis=1)


def init_params(key, img_flat_dim, hidden_size, num_classes):
    keys = jax.random.split(key, 10)
    p = {}
    # frozen-trunk stubs (shared per backbone family, like the shared
    # pretrained checkpoints); bf16 weights, streamed over K in the kernel.
    p["res_trunk"] = _linear_params(keys[0], img_flat_dim, RES_FEAT, jnp.bfloat16)
    p["den_trunk"] = _linear_params(keys[1], img_flat_dim, DEN_FEAT, jnp.bfloat16)
    p["alex_trunk"] = _linear_params(keys[2], img_flat_dim, ALEX_OUT, jnp.bfloat16)
    # replaced per-stream heads, merged per family: res_fc_*, den_fc_*, ale_*
    p["res_head"] = _merged_head_params(keys[3], RES_FEAT, hidden_size)
    p["den_head"] = _merged_head_params(keys[4], DEN_FEAT, hidden_size)
    p["ale_head"] = _merged_head_params(keys[5], ALEX_OUT, hidden_size)
    # fusion MLP + output (tiny -> kept in f32 for numerics)
    p["fc1"] = _linear_params(keys[6], 3 * hidden_size, hidden_size, jnp.float32)
    p["fc2"] = _linear_params(keys[7], 3 * hidden_size, hidden_size, jnp.float32)
    p["fc3"] = _linear_params(keys[8], 3 * hidden_size, hidden_size, jnp.float32)
    p["output"] = _linear_params(keys[9], 3 * hidden_size, num_classes, jnp.float32)
    return p


# ----------------------------------------------------------------------------
# Forward pass (mirrors SmileClassifier.forward; dropout = identity at eval)
# ----------------------------------------------------------------------------
def smile_classifier_forward(params, faces, mouths, eyes, *, tk=256):
    B = faces.shape[0]
    bp = ((B + 7) // 8) * 8                 # pad batch to 8 sublanes
    hidden = params["fc1"][0].shape[1]
    num_classes = params["output"][0].shape[1]
    assert hidden % 8 == 0, "hidden_size must be a multiple of 8 for aligned weight slices"

    res_tw, res_tb = params["res_trunk"]
    den_tw, den_tb = params["den_trunk"]
    alex_tw, alex_tb = params["alex_trunk"]
    res_hw, res_hb = params["res_head"]
    den_hw, den_hb = params["den_head"]
    ale_hw, ale_hb = params["ale_head"]
    fc1_w, fc1_b = params["fc1"]
    fc2_w, fc2_b = params["fc2"]
    fc3_w, fc3_b = params["fc3"]
    out_w, out_b = params["output"]

    din = res_tw.shape[0]
    tk = min(tk, din)
    din_p = -(-din // tk) * tk              # pad Din up to a multiple of tk
    nk = din_p // tk

    def prep(x):                            # NCHW -> [Bp, Din_p] f32 (no cast / no concat copies)
        x2 = x.reshape(x.shape[0], -1).astype(jnp.float32)
        return jnp.pad(x2, ((0, bp - B), (0, din_p - din)))

    faces_p, mouths_p, eyes_p = prep(faces), prep(mouths), prep(eyes)

    def pad_k(w):                           # zero rows contribute nothing to the accumulation
        return w if din_p == din else jnp.pad(w, ((0, din_p - din), (0, 0)))

    res_twp, den_twp, alex_twp = pad_k(res_tw), pad_k(den_tw), pad_k(alex_tw)

    args = (faces_p, mouths_p, eyes_p,
            res_twp, res_tb, den_twp, den_tb, alex_twp, alex_tb,
            res_hw, res_hb, den_hw, den_hb, ale_hw, ale_hb,
            fc1_w, fc1_b, fc2_w, fc2_b, fc3_w, fc3_b, out_w, out_b)

    def stream_spec():                      # image chunks, tiled over K
        return pl.BlockSpec((bp, tk), lambda k: (0, k))

    def kslab_spec(n):                      # trunk weight chunks, streamed over K
        return pl.BlockSpec((tk, n), lambda k: (k, 0))

    def full_spec(shape):                   # epilogue-resident params, fetched once (constant index)
        return pl.BlockSpec(shape, lambda k: (0, 0))

    in_specs = [
        stream_spec(), stream_spec(), stream_spec(),
        kslab_spec(RES_FEAT), full_spec(res_tb.shape),
        kslab_spec(DEN_FEAT), full_spec(den_tb.shape),
        kslab_spec(ALEX_OUT), full_spec(alex_tb.shape),
        full_spec(res_hw.shape), full_spec(res_hb.shape),
        full_spec(den_hw.shape), full_spec(den_hb.shape),
        full_spec(ale_hw.shape), full_spec(ale_hb.shape),
        full_spec(fc1_w.shape), full_spec(fc1_b.shape),
        full_spec(fc2_w.shape), full_spec(fc2_b.shape),
        full_spec(fc3_w.shape), full_spec(fc3_b.shape),
        full_spec(out_w.shape), full_spec(out_b.shape),
    ]

    kernel = functools.partial(_smile_fused_kernel, bp=bp, hidden=hidden)

    out = pl.pallas_call(
        kernel,
        out_shape=jax.ShapeDtypeStruct((bp, num_classes), jnp.float32),
        grid_spec=pltpu.PrefetchScalarGridSpec(
            num_scalar_prefetch=0,
            grid=(nk,),
            in_specs=in_specs,
            out_specs=pl.BlockSpec((bp, num_classes), lambda k: (0, 0)),
            scratch_shapes=[
                pltpu.VMEM((3 * bp, RES_FEAT), jnp.float32),
                pltpu.VMEM((3 * bp, DEN_FEAT), jnp.float32),
                pltpu.VMEM((3 * bp, ALEX_OUT), jnp.float32),
            ]),
        compiler_params=pltpu.CompilerParams(
            dimension_semantics=("arbitrary",),     # K is a reduction axis
            vmem_limit_bytes=32 * 1024 * 1024,      # ~8 MiB/step working set, v7x-safe
        ),
    )(*args)
    return out[:B]                                  # drop sublane padding rows


if __name__ == "__main__":
    B, C, H, W = 2, 3, 16, 16                       # NCHW image inputs (small)
    hidden_size, num_classes = 32, 2

    key = jax.random.PRNGKey(0)
    k_faces, k_mouths, k_eyes, k_params = jax.random.split(key, 4)
    faces = jax.random.normal(k_faces, (B, C, H, W), jnp.float32)
    mouths = jax.random.normal(k_mouths, (B, C, H, W), jnp.float32)
    eyes = jax.random.normal(k_eyes, (B, C, H, W), jnp.float32)

    params = init_params(k_params, C * H * W, hidden_size, num_classes)

    fwd = jax.jit(smile_classifier_forward)
    out = jax.block_until_ready(fwd(params, faces, mouths, eyes))
    assert out.shape == (B, num_classes), out.shape
    assert bool(jnp.all(jnp.isfinite(out)))
    print("KERNEL_OK")
</pallas_src>

<mosaic_0001>
module attributes {stable_mosaic.version = 11 : i64} {
  func.func @_smile_fused_kernel(%arg0: i32, %arg1: memref<8x256xf32, #tpu.memory_space<vmem>>, %arg2: memref<8x256xf32, #tpu.memory_space<vmem>>, %arg3: memref<8x256xf32, #tpu.memory_space<vmem>>, %arg4: memref<256x2048xbf16, #tpu.memory_space<vmem>>, %arg5: memref<1x2048xf32, #tpu.memory_space<vmem>>, %arg6: memref<256x1920xbf16, #tpu.memory_space<vmem>>, %arg7: memref<1x1920xf32, #tpu.memory_space<vmem>>, %arg8: memref<256x1000xbf16, #tpu.memory_space<vmem>>, %arg9: memref<1x1000xf32, #tpu.memory_space<vmem>>, %arg10: memref<2048x96xbf16, #tpu.memory_space<vmem>>, %arg11: memref<1x96xf32, #tpu.memory_space<vmem>>, %arg12: memref<1920x96xbf16, #tpu.memory_space<vmem>>, %arg13: memref<1x96xf32, #tpu.memory_space<vmem>>, %arg14: memref<1000x96xbf16, #tpu.memory_space<vmem>>, %arg15: memref<1x96xf32, #tpu.memory_space<vmem>>, %arg16: memref<96x32xf32, #tpu.memory_space<vmem>>, %arg17: memref<1x32xf32, #tpu.memory_space<vmem>>, %arg18: memref<96x32xf32, #tpu.memory_space<vmem>>, %arg19: memref<1x32xf32, #tpu.memory_space<vmem>>, %arg20: memref<96x32xf32, #tpu.memory_space<vmem>>, %arg21: memref<1x32xf32, #tpu.memory_space<vmem>>, %arg22: memref<96x2xf32, #tpu.memory_space<vmem>>, %arg23: memref<1x2xf32, #tpu.memory_space<vmem>>, %arg24: memref<8x2xf32, #tpu.memory_space<vmem>>, %arg25: memref<24x2048xf32, #tpu.memory_space<vmem>>, %arg26: memref<24x1920xf32, #tpu.memory_space<vmem>>, %arg27: memref<24x1000xf32, #tpu.memory_space<vmem>>) attributes {dimension_semantics = [#tpu.dimension_semantics<arbitrary>], iteration_bounds = array<i64: 3>, scalar_prefetch = 0 : i64, scratch_operands = 3 : i64, tpu.core_type = #tpu.core_type<tc>, window_params = [{transform_indices = @transform_0, window_bounds = array<i64: 8, 256>}, {transform_indices = @transform_1, window_bounds = array<i64: 8, 256>}, {transform_indices = @transform_2, window_bounds = array<i64: 8, 256>}, {transform_indices = @transform_3, window_bounds = array<i64: 256, 2048>}, {pipeline_mode = #tpu.pipeline_mode<synchronous>, transform_indices = @transform_4, window_bounds = array<i64: 1, 2048>}, {transform_indices = @transform_5, window_bounds = array<i64: 256, 1920>}, {pipeline_mode = #tpu.pipeline_mode<synchronous>, transform_indices = @transform_6, window_bounds = array<i64: 1, 1920>}, {transform_indices = @transform_7, window_bounds = array<i64: 256, 1000>}, {pipeline_mode = #tpu.pipeline_mode<synchronous>, transform_indices = @transform_8, window_bounds = array<i64: 1, 1000>}, {pipeline_mode = #tpu.pipeline_mode<synchronous>, transform_indices = @transform_9, window_bounds = array<i64: 2048, 96>}, {pipeline_mode = #tpu.pipeline_mode<synchronous>, transform_indices = @transform_10, window_bounds = array<i64: 1, 96>}, {pipeline_mode = #tpu.pipeline_mode<synchronous>, transform_indices = @transform_11, window_bounds = array<i64: 1920, 96>}, {pipeline_mode = #tpu.pipeline_mode<synchronous>, transform_indices = @transform_12, window_bounds = array<i64: 1, 96>}, {pipeline_mode = #tpu.pipeline_mode<synchronous>, transform_indices = @transform_13, window_bounds = array<i64: 1000, 96>}, {pipeline_mode = #tpu.pipeline_mode<synchronous>, transform_indices = @transform_14, window_bounds = array<i64: 1, 96>}, {pipeline_mode = #tpu.pipeline_mode<synchronous>, transform_indices = @transform_15, window_bounds = array<i64: 96, 32>}, {pipeline_mode = #tpu.pipeline_mode<synchronous>, transform_indices = @transform_16, window_bounds = array<i64: 1, 32>}, {pipeline_mode = #tpu.pipeline_mode<synchronous>, transform_indices = @transform_17, window_bounds = array<i64: 96, 32>}, {pipeline_mode = #tpu.pipeline_mode<synchronous>, transform_indices = @transform_18, window_bounds = array<i64: 1, 32>}, {pipeline_mode = #tpu.pipeline_mode<synchronous>, transform_indices = @transform_19, window_bounds = array<i64: 96, 32>}, {pipeline_mode = #tpu.pipeline_mode<synchronous>, transform_indices = @transform_20, window_bounds = array<i64: 1, 32>}, {pipeline_mode = #tpu.pipeline_mode<synchronous>, transform_indices = @transform_21, window_bounds = array<i64: 96, 2>}, {pipeline_mode = #tpu.pipeline_mode<synchronous>, transform_indices = @transform_22, window_bounds = array<i64: 1, 2>}, {pipeline_mode = #tpu.pipeline_mode<synchronous>, transform_indices = @transform_23, window_bounds = array<i64: 8, 2>}]} {
    %c0_i32 = arith.constant 0 : i32
    %0 = arith.cmpi eq, %arg0, %c0_i32 : i32
    %1 = arith.extui %0 : i1 to i32
    %c0_i32_0 = arith.constant 0 : i32
    %2 = arith.cmpi ne, %1, %c0_i32_0 : i32
    scf.if %2 {
      %cst_27 = arith.constant 0.000000e+00 : f32
      %26 = vector.broadcast %cst_27 : f32 to vector<24x2048xf32>
      %c0_28 = arith.constant 0 : index
      %c0_29 = arith.constant 0 : index
      %27 = vector.load %arg25[%c0_28, %c0_29] : memref<24x2048xf32, #tpu.memory_space<vmem>>, vector<24x2048xf32>
      tpu.vector_store %arg25[%c0_28, %c0_29], %26 {strides = array<i32>} : memref<24x2048xf32, #tpu.memory_space<vmem>>, vector<24x2048xf32>,
      %cst_30 = arith.constant 0.000000e+00 : f32
      %28 = vector.broadcast %cst_30 : f32 to vector<24x1920xf32>
      %c0_31 = arith.constant 0 : index
      %c0_32 = arith.constant 0 : index
      %29 = vector.load %arg26[%c0_31, %c0_32] : memref<24x1920xf32, #tpu.memory_space<vmem>>, vector<24x1920xf32>
      tpu.vector_store %arg26[%c0_31, %c0_32], %28 {strides = array<i32>} : memref<24x1920xf32, #tpu.memory_space<vmem>>, vector<24x1920xf32>,
      %cst_33 = arith.constant 0.000000e+00 : f32
      %30 = vector.broadcast %cst_33 : f32 to vector<24x1000xf32>
      %c0_34 = arith.constant 0 : index
      %c0_35 = arith.constant 0 : index
      %31 = vector.load %arg27[%c0_34, %c0_35] : memref<24x1000xf32, #tpu.memory_space<vmem>>, vector<24x1000xf32>
      tpu.vector_store %arg27[%c0_34, %c0_35], %30 {strides = array<i32>} : memref<24x1000xf32, #tpu.memory_space<vmem>>, vector<24x1000xf32>,
    } else {
    }
    %c0 = arith.constant 0 : index
    %c0_1 = arith.constant 0 : index
    %3 = vector.load %arg1[%c0, %c0_1] : memref<8x256xf32, #tpu.memory_space<vmem>>, vector<8x256xf32>
    %c0_2 = arith.constant 0 : index
    %c0_3 = arith.constant 0 : index
    %4 = vector.load %arg2[%c0_2, %c0_3] : memref<8x256xf32, #tpu.memory_space<vmem>>, vector<8x256xf32>
    %c0_4 = arith.constant 0 : index
    %c0_5 = arith.constant 0 : index
    %5 = vector.load %arg3[%c0_4, %c0_5] : memref<8x256xf32, #tpu.memory_space<vmem>>, vector<8x256xf32>
    %6 = tpu.concatenate %3, %4, %5 in 0 : vector<8x256xf32>, vector<8x256xf32>, vector<8x256xf32> -> vector<24x256xf32>
    %7 = arith.truncf %6 : vector<24x256xf32> to vector<24x256xbf16>
    %c0_6 = arith.constant 0 : index
    %c0_7 = arith.constant 0 : index
    %8 = vector.load %arg25[%c0_6, %c0_7] : memref<24x2048xf32, #tpu.memory_space<vmem>>, vector<24x2048xf32>
    %c0_8 = arith.constant 0 : index
    %c0_9 = arith.constant 0 : index
    %9 = vector.load %arg4[%c0_8, %c0_9] : memref<256x2048xbf16, #tpu.memory_space<vmem>>, vector<256x2048xbf16>
    %cst = arith.constant dense<0.000000e+00> : vector<24x2048xf32>
    %10 = tpu.matmul %7, %9, %cst {dimension_numbers = #tpu.dot_dimension_numbers<[1], [0], [0], [1], [0, 0, 1, 1], [], []>} : vector<24x256xbf16>, vector<256x2048xbf16>, vector<24x2048xf32> -> vector<24x2048xf32>
    %11 = arith.addf %8, %10 : vector<24x2048xf32>
    %c0_10 = arith.constant 0 : index
    %c0_11 = arith.constant 0 : index
    %12 = vector.load %arg25[%c0_10, %c0_11] : memref<24x2048xf32, #tpu.memory_space<vmem>>, vector<24x2048xf32>
    tpu.vector_store %arg25[%c0_10, %c0_11], %11 {strides = array<i32>} : memref<24x2048xf32, #tpu.memory_space<vmem>>, vector<24x2048xf32>,
    %c0_12 = arith.constant 0 : index
    %c0_13 = arith.constant 0 : index
    %13 = vector.load %arg26[%c0_12, %c0_13] : memref<24x1920xf32, #tpu.memory_space<vmem>>, vector<24x1920xf32>
    %c0_14 = arith.constant 0 : index
    %c0_15 = arith.constant 0 : index
    %14 = vector.load %arg6[%c0_14, %c0_15] : memref<256x1920xbf16, #tpu.memory_space<vmem>>, vector<256x1920xbf16>
    %cst_16 = arith.constant dense<0.000000e+00> : vector<24x1920xf32>
    %15 = tpu.matmul %7, %14, %cst_16 {dimension_numbers = #tpu.dot_dimension_numbers<[1], [0], [0], [1], [0, 0, 1, 1], [], []>} : vector<24x256xbf16>, vector<256x1920xbf16>, vector<24x1920xf32> -> vector<24x1920xf32>
    %16 = arith.addf %13, %15 : vector<24x1920xf32>
    %c0_17 = arith.constant 0 : index
    %c0_18 = arith.constant 0 : index
    %17 = vector.load %arg26[%c0_17, %c0_18] : memref<24x1920xf32, #tpu.memory_space<vmem>>, vector<24x1920xf32>
    tpu.vector_store %arg26[%c0_17, %c0_18], %16 {strides = array<i32>} : memref<24x1920xf32, #tpu.memory_space<vmem>>, vector<24x1920xf32>,
    %c0_19 = arith.constant 0 : index
    %c0_20 = arith.constant 0 : index
    %18 = vector.load %arg27[%c0_19, %c0_20] : memref<24x1000xf32, #tpu.memory_space<vmem>>, vector<24x1000xf32>
    %c0_21 = arith.constant 0 : index
    %c0_22 = arith.constant 0 : index
    %19 = vector.load %arg8[%c0_21, %c0_22] : memref<256x1000xbf16, #tpu.memory_space<vmem>>, vector<256x1000xbf16>
    %cst_23 = arith.constant dense<0.000000e+00> : vector<24x1000xf32>
    %20 = tpu.matmul %7, %19, %cst_23 {dimension_numbers = #tpu.dot_dimension_numbers<[1], [0], [0], [1], [0, 0, 1, 1], [], []>} : vector<24x256xbf16>, vector<256x1000xbf16>, vector<24x1000xf32> -> vector<24x1000xf32>
    %21 = arith.addf %18, %20 : vector<24x1000xf32>
    %c0_24 = arith.constant 0 : index
    %c0_25 = arith.constant 0 : index
    %22 = vector.load %arg27[%c0_24, %c0_25] : memref<24x1000xf32, #tpu.memory_space<vmem>>, vector<24x1000xf32>
    tpu.vector_store %arg27[%c0_24, %c0_25], %21 {strides = array<i32>} : memref<24x1000xf32, #tpu.memory_space<vmem>>, vector<24x1000xf32>,
    %c2_i32 = arith.constant 2 : i32
    %23 = arith.cmpi eq, %arg0, %c2_i32 : i32
    %24 = arith.extui %23 : i1 to i32
    %c0_i32_26 = arith.constant 0 : i32
    %25 = arith.cmpi ne, %24, %c0_i32_26 : i32
    scf.if %25 {
      %c0_27 = arith.constant 0 : index
      %c0_28 = arith.constant 0 : index
      %26 = vector.load %arg25[%c0_27, %c0_28] : memref<24x2048xf32, #tpu.memory_space<vmem>>, vector<24x2048xf32>
      %c0_29 = arith.constant 0 : index
      %c0_30 = arith.constant 0 : index
      %27 = vector.load %arg5[%c0_29, %c0_30] : memref<1x2048xf32, #tpu.memory_space<vmem>>, vector<1x2048xf32>
      %28 = vector.broadcast %27 : vector<1x2048xf32> to vector<24x2048xf32>
      %29 = arith.addf %26, %28 : vector<24x2048xf32>
      %cst_31 = arith.constant 0.000000e+00 : f32
      %30 = vector.broadcast %cst_31 : f32 to vector<24x2048xf32>
      %31 = arith.maximumf %29, %30 : vector<24x2048xf32>
      %32 = arith.truncf %31 : vector<24x2048xf32> to vector<24x2048xbf16>
      %c0_32 = arith.constant 0 : index
      %c0_33 = arith.constant 0 : index
      %33 = vector.load %arg26[%c0_32, %c0_33] : memref<24x1920xf32, #tpu.memory_space<vmem>>, vector<24x1920xf32>
      %c0_34 = arith.constant 0 : index
      %c0_35 = arith.constant 0 : index
      %34 = vector.load %arg7[%c0_34, %c0_35] : memref<1x1920xf32, #tpu.memory_space<vmem>>, vector<1x1920xf32>
      %35 = vector.broadcast %34 : vector<1x1920xf32> to vector<24x1920xf32>
      %36 = arith.addf %33, %35 : vector<24x1920xf32>
      %cst_36 = arith.constant 0.000000e+00 : f32
      %37 = vector.broadcast %cst_36 : f32 to vector<24x1920xf32>
      %38 = arith.maximumf %36, %37 : vector<24x1920xf32>
      %39 = arith.truncf %38 : vector<24x1920xf32> to vector<24x1920xbf16>
      %c0_37 = arith.constant 0 : index
      %c0_38 = arith.constant 0 : index
      %40 = vector.load %arg27[%c0_37, %c0_38] : memref<24x1000xf32, #tpu.memory_space<vmem>>, vector<24x1000xf32>
      %c0_39 = arith.constant 0 : index
      %c0_40 = arith.constant 0 : index
      %41 = vector.load %arg9[%c0_39, %c0_40] : memref<1x1000xf32, #tpu.memory_space<vmem>>, vector<1x1000xf32>
      %42 = vector.broadcast %41 : vector<1x1000xf32> to vector<24x1000xf32>
      %43 = arith.addf %40, %42 : vector<24x1000xf32>
      %cst_41 = arith.constant 0.000000e+00 : f32
      %44 = vector.broadcast %cst_41 : f32 to vector<24x1000xf32>
      %45 = arith.maximumf %43, %44 : vector<24x1000xf32>
      %46 = arith.truncf %45 : vector<24x1000xf32> to vector<24x1000xbf16>
      %c0_42 = arith.constant 0 : index
      %c0_43 = arith.constant 0 : index
      %47 = vector.load %arg10[%c0_42, %c0_43] : memref<2048x96xbf16, #tpu.memory_space<vmem>>, vector<2048x96xbf16>
      %cst_44 = arith.constant dense<0.000000e+00> : vector<24x96xf32>
      %48 = tpu.matmul %32, %47, %cst_44 {dimension_numbers = #tpu.dot_dimension_numbers<[1], [0], [0], [1], [0, 0, 1, 1], [], []>} : vector<24x2048xbf16>, vector<2048x96xbf16>, vector<24x96xf32> -> vector<24x96xf32>
      %c0_45 = arith.constant 0 : index
      %c0_46 = arith.constant 0 : index
      %49 = vector.load %arg11[%c0_45, %c0_46] : memref<1x96xf32, #tpu.memory_space<vmem>>, vector<1x96xf32>
      %50 = vector.broadcast %49 : vector<1x96xf32> to vector<24x96xf32>
      %51 = arith.addf %48, %50 : vector<24x96xf32>
      %cst_47 = arith.constant 0.000000e+00 : f32
      %52 = vector.broadcast %cst_47 : f32 to vector<24x96xf32>
      %53 = arith.maximumf %51, %52 : vector<24x96xf32>
      %c0_48 = arith.constant 0 : index
      %c0_49 = arith.constant 0 : index
      %54 = vector.load %arg12[%c0_48, %c0_49] : memref<1920x96xbf16, #tpu.memory_space<vmem>>, vector<1920x96xbf16>
      %cst_50 = arith.constant dense<0.000000e+00> : vector<24x96xf32>
      %55 = tpu.matmul %39, %54, %cst_50 {dimension_numbers = #tpu.dot_dimension_numbers<[1], [0], [0], [1], [0, 0, 1, 1], [], []>} : vector<24x1920xbf16>, vector<1920x96xbf16>, vector<24x96xf32> -> vector<24x96xf32>
      %c0_51 = arith.constant 0 : index
      %c0_52 = arith.constant 0 : index
      %56 = vector.load %arg13[%c0_51, %c0_52] : memref<1x96xf32, #tpu.memory_space<vmem>>, vector<1x96xf32>
      %57 = vector.broadcast %56 : vector<1x96xf32> to vector<24x96xf32>
      %58 = arith.addf %55, %57 : vector<24x96xf32>
      %cst_53 = arith.constant 0.000000e+00 : f32
      %59 = vector.broadcast %cst_53 : f32 to vector<24x96xf32>
      %60 = arith.maximumf %58, %59 : vector<24x96xf32>
      %c0_54 = arith.constant 0 : index
      %c0_55 = arith.constant 0 : index
      %61 = vector.load %arg14[%c0_54, %c0_55] : memref<1000x96xbf16, #tpu.memory_space<vmem>>, vector<1000x96xbf16>
      %cst_56 = arith.constant dense<0.000000e+00> : vector<24x96xf32>
      %62 = tpu.matmul %46, %61, %cst_56 {dimension_numbers = #tpu.dot_dimension_numbers<[1], [0], [0], [1], [0, 0, 1, 1], [], []>} : vector<24x1000xbf16>, vector<1000x96xbf16>, vector<24x96xf32> -> vector<24x96xf32>
      %c0_57 = arith.constant 0 : index
      %c0_58 = arith.constant 0 : index
      %63 = vector.load %arg15[%c0_57, %c0_58] : memref<1x96xf32, #tpu.memory_space<vmem>>, vector<1x96xf32>
      %64 = vector.broadcast %63 : vector<1x96xf32> to vector<24x96xf32>
      %65 = arith.addf %62, %64 : vector<24x96xf32>
      %c0_59 = arith.constant 0 : index
      %c0_60 = arith.constant 0 : index
      %66 = vector.load %arg16[%c0_59, %c0_60] : memref<96x32xf32, #tpu.memory_space<vmem>>, vector<96x32xf32>
      %67 = vector.extract_strided_slice %53 {offsets = [0, 0], sizes = [8, 32], strides = [1, 1]} : vector<24x96xf32> to vector<8x32xf32>
      %68 = vector.extract_strided_slice %66 {offsets = [0, 0], sizes = [32, 32], strides = [1, 1]} : vector<96x32xf32> to vector<32x32xf32>
      %cst_61 = arith.constant dense<0.000000e+00> : vector<8x32xf32>
      %69 = tpu.matmul %67, %68, %cst_61 {dimension_numbers = #tpu.dot_dimension_numbers<[1], [0], [0], [1], [0, 0, 1, 1], [], []>} : vector<8x32xf32>, vector<32x32xf32>, vector<8x32xf32> -> vector<8x32xf32>
      %70 = vector.extract_strided_slice %53 {offsets = [8, 32], sizes = [8, 32], strides = [1, 1]} : vector<24x96xf32> to vector<8x32xf32>
      %71 = vector.extract_strided_slice %66 {offsets = [32, 0], sizes = [32, 32], strides = [1, 1]} : vector<96x32xf32> to vector<32x32xf32>
      %cst_62 = arith.constant dense<0.000000e+00> : vector<8x32xf32>
      %72 = tpu.matmul %70, %71, %cst_62 {dimension_numbers = #tpu.dot_dimension_numbers<[1], [0], [0], [1], [0, 0, 1, 1], [], []>} : vector<8x32xf32>, vector<32x32xf32>, vector<8x32xf32> -> vector<8x32xf32>
      %73 = arith.addf %69, %72 : vector<8x32xf32>
      %74 = vector.extract_strided_slice %53 {offsets = [16, 64], sizes = [8, 32], strides = [1, 1]} : vector<24x96xf32> to vector<8x32xf32>
      %75 = vector.extract_strided_slice %66 {offsets = [64, 0], sizes = [32, 32], strides = [1, 1]} : vector<96x32xf32> to vector<32x32xf32>
      %cst_63 = arith.constant dense<0.000000e+00> : vector<8x32xf32>
      %76 = tpu.matmul %74, %75, %cst_63 {dimension_numbers = #tpu.dot_dimension_numbers<[1], [0], [0], [1], [0, 0, 1, 1], [], []>} : vector<8x32xf32>, vector<32x32xf32>, vector<8x32xf32> -> vector<8x32xf32>
      %77 = arith.addf %73, %76 : vector<8x32xf32>
      %c0_64 = arith.constant 0 : index
      %c0_65 = arith.constant 0 : index
      %78 = vector.load %arg17[%c0_64, %c0_65] : memref<1x32xf32, #tpu.memory_space<vmem>>, vector<1x32xf32>
      %79 = vector.broadcast %78 : vector<1x32xf32> to vector<8x32xf32>
      %80 = arith.addf %77, %79 : vector<8x32xf32>
      %cst_66 = arith.constant 0.000000e+00 : f32
      %81 = vector.broadcast %cst_66 : f32 to vector<8x32xf32>
      %82 = arith.maximumf %80, %81 : vector<8x32xf32>
      %c0_67 = arith.constant 0 : index
      %c0_68 = arith.constant 0 : index
      %83 = vector.load %arg18[%c0_67, %c0_68] : memref<96x32xf32, #tpu.memory_space<vmem>>, vector<96x32xf32>
      %84 = vector.extract_strided_slice %60 {offsets = [0, 0], sizes = [8, 32], strides = [1, 1]} : vector<24x96xf32> to vector<8x32xf32>
      %85 = vector.extract_strided_slice %83 {offsets = [0, 0], sizes = [32, 32], strides = [1, 1]} : vector<96x32xf32> to vector<32x32xf32>
      %cst_69 = arith.constant dense<0.000000e+00> : vector<8x32xf32>
      %86 = tpu.matmul %84, %85, %cst_69 {dimension_numbers = #tpu.dot_dimension_numbers<[1], [0], [0], [1], [0, 0, 1, 1], [], []>} : vector<8x32xf32>, vector<32x32xf32>, vector<8x32xf32> -> vector<8x32xf32>
      %87 = vector.extract_strided_slice %60 {offsets = [8, 32], sizes = [8, 32], strides = [1, 1]} : vector<24x96xf32> to vector<8x32xf32>
      %88 = vector.extract_strided_slice %83 {offsets = [32, 0], sizes = [32, 32], strides = [1, 1]} : vector<96x32xf32> to vector<32x32xf32>
      %cst_70 = arith.constant dense<0.000000e+00> : vector<8x32xf32>
      %89 = tpu.matmul %87, %88, %cst_70 {dimension_numbers = #tpu.dot_dimension_numbers<[1], [0], [0], [1], [0, 0, 1, 1], [], []>} : vector<8x32xf32>, vector<32x32xf32>, vector<8x32xf32> -> vector<8x32xf32>
      %90 = arith.addf %86, %89 : vector<8x32xf32>
      %91 = vector.extract_strided_slice %60 {offsets = [16, 64], sizes = [8, 32], strides = [1, 1]} : vector<24x96xf32> to vector<8x32xf32>
      %92 = vector.extract_strided_slice %83 {offsets = [64, 0], sizes = [32, 32], strides = [1, 1]} : vector<96x32xf32> to vector<32x32xf32>
      %cst_71 = arith.constant dense<0.000000e+00> : vector<8x32xf32>
      %93 = tpu.matmul %91, %92, %cst_71 {dimension_numbers = #tpu.dot_dimension_numbers<[1], [0], [0], [1], [0, 0, 1, 1], [], []>} : vector<8x32xf32>, vector<32x32xf32>, vector<8x32xf32> -> vector<8x32xf32>
      %94 = arith.addf %90, %93 : vector<8x32xf32>
      %c0_72 = arith.constant 0 : index
      %c0_73 = arith.constant 0 : index
      %95 = vector.load %arg19[%c0_72, %c0_73] : memref<1x32xf32, #tpu.memory_space<vmem>>, vector<1x32xf32>
      %96 = vector.broadcast %95 : vector<1x32xf32> to vector<8x32xf32>
      %97 = arith.addf %94, %96 : vector<8x32xf32>
      %cst_74 = arith.constant 0.000000e+00 : f32
      %98 = vector.broadcast %cst_74 : f32 to vector<8x32xf32>
      %99 = arith.maximumf %97, %98 : vector<8x32xf32>
      %c0_75 = arith.constant 0 : index
      %c0_76 = arith.constant 0 : index
      %100 = vector.load %arg20[%c0_75, %c0_76] : memref<96x32xf32, #tpu.memory_space<vmem>>, vector<96x32xf32>
      %101 = vector.extract_strided_slice %65 {offsets = [0, 0], sizes = [8, 32], strides = [1, 1]} : vector<24x96xf32> to vector<8x32xf32>
      %102 = vector.extract_strided_slice %100 {offsets = [0, 0], sizes = [32, 32], strides = [1, 1]} : vector<96x32xf32> to vector<32x32xf32>
      %cst_77 = arith.constant dense<0.000000e+00> : vector<8x32xf32>
      %103 = tpu.matmul %101, %102, %cst_77 {dimension_numbers = #tpu.dot_dimension_numbers<[1], [0], [0], [1], [0, 0, 1, 1], [], []>} : vector<8x32xf32>, vector<32x32xf32>, vector<8x32xf32> -> vector<8x32xf32>
      %104 = vector.extract_strided_slice %65 {offsets = [8, 32], sizes = [8, 32], strides = [1, 1]} : vector<24x96xf32> to vector<8x32xf32>
      %105 = vector.extract_strided_slice %100 {offsets = [32, 0], sizes = [32, 32], strides = [1, 1]} : vector<96x32xf32> to vector<32x32xf32>
      %cst_78 = arith.constant dense<0.000000e+00> : vector<8x32xf32>
      %106 = tpu.matmul %104, %105, %cst_78 {dimension_numbers = #tpu.dot_dimension_numbers<[1], [0], [0], [1], [0, 0, 1, 1], [], []>} : vector<8x32xf32>, vector<32x32xf32>, vector<8x32xf32> -> vector<8x32xf32>
      %107 = arith.addf %103, %106 : vector<8x32xf32>
      %108 = vector.extract_strided_slice %65 {offsets = [16, 64], sizes = [8, 32], strides = [1, 1]} : vector<24x96xf32> to vector<8x32xf32>
      %109 = vector.extract_strided_slice %100 {offsets = [64, 0], sizes = [32, 32], strides = [1, 1]} : vector<96x32xf32> to vector<32x32xf32>
      %cst_79 = arith.constant dense<0.000000e+00> : vector<8x32xf32>
      %110 = tpu.matmul %108, %109, %cst_79 {dimension_numbers = #tpu.dot_dimension_numbers<[1], [0], [0], [1], [0, 0, 1, 1], [], []>} : vector<8x32xf32>, vector<32x32xf32>, vector<8x32xf32> -> vector<8x32xf32>
      %111 = arith.addf %107, %110 : vector<8x32xf32>
      %c0_80 = arith.constant 0 : index
      %c0_81 = arith.constant 0 : index
      %112 = vector.load %arg21[%c0_80, %c0_81] : memref<1x32xf32, #tpu.memory_space<vmem>>, vector<1x32xf32>
      %113 = vector.broadcast %112 : vector<1x32xf32> to vector<8x32xf32>
      %114 = arith.addf %111, %113 : vector<8x32xf32>
      %cst_82 = arith.constant 0.000000e+00 : f32
      %115 = vector.broadcast %cst_82 : f32 to vector<8x32xf32>
      %116 = arith.maximumf %114, %115 : vector<8x32xf32>
      %c0_83 = arith.constant 0 : index
      %c0_84 = arith.constant 0 : index
      %117 = vector.load %arg22[%c0_83, %c0_84] : memref<96x2xf32, #tpu.memory_space<vmem>>, vector<96x2xf32>
      %118 = vector.extract_strided_slice %117 {offsets = [0, 0], sizes = [32, 2], strides = [1, 1]} : vector<96x2xf32> to vector<32x2xf32>
      %cst_85 = arith.constant dense<0.000000e+00> : vector<8x2xf32>
      %119 = tpu.matmul %82, %118, %cst_85 {dimension_numbers = #tpu.dot_dimension_numbers<[1], [0], [0], [1], [0, 0, 1, 1], [], []>} : vector<8x32xf32>, vector<32x2xf32>, vector<8x2xf32> -> vector<8x2xf32>
      %120 = vector.extract_strided_slice %117 {offsets = [32, 0], sizes = [32, 2], strides = [1, 1]} : vector<96x2xf32> to vector<32x2xf32>
      %cst_86 = arith.constant dense<0.000000e+00> : vector<8x2xf32>
      %121 = tpu.matmul %99, %120, %cst_86 {dimension_numbers = #tpu.dot_dimension_numbers<[1], [0], [0], [1], [0, 0, 1, 1], [], []>} : vector<8x32xf32>, vector<32x2xf32>, vector<8x2xf32> -> vector<8x2xf32>
      %122 = arith.addf %119, %121 : vector<8x2xf32>
      %123 = vector.extract_strided_slice %117 {offsets = [64, 0], sizes = [32, 2], strides = [1, 1]} : vector<96x2xf32> to vector<32x2xf32>
      %cst_87 = arith.constant dense<0.000000e+00> : vector<8x2xf32>
      %124 = tpu.matmul %116, %123, %cst_87 {dimension_numbers = #tpu.dot_dimension_numbers<[1], [0], [0], [1], [0, 0, 1, 1], [], []>} : vector<8x32xf32>, vector<32x2xf32>, vector<8x2xf32> -> vector<8x2xf32>
      %125 = arith.addf %122, %124 : vector<8x2xf32>
      %c0_88 = arith.constant 0 : index
      %c0_89 = arith.constant 0 : index
      %126 = vector.load %arg23[%c0_88, %c0_89] : memref<1x2xf32, #tpu.memory_space<vmem>>, vector<1x2xf32>
      %127 = vector.broadcast %126 : vector<1x2xf32> to vector<8x2xf32>
      %128 = arith.addf %125, %127 : vector<8x2xf32>
      %c0_90 = arith.constant 0 : index
      %c0_91 = arith.constant 0 : index
      %129 = vector.load %arg24[%c0_90, %c0_91] : memref<8x2xf32, #tpu.memory_space<vmem>>, vector<8x2xf32>
      tpu.vector_store %arg24[%c0_90, %c0_91], %128 {strides = array<i32>} : memref<8x2xf32, #tpu.memory_space<vmem>>, vector<8x2xf32>,
    } else {
    }
    return
  }
  func.func @transform_0(%arg0: i32) -> (i32, i32) {
    %c0_i32 = arith.constant 0 : i32
    %c0_i32_0 = arith.constant 0 : i32
    return %c0_i32, %arg0 : i32, i32
  }
  func.func @transform_1(%arg0: i32) -> (i32, i32) {
    %c0_i32 = arith.constant 0 : i32
    %c0_i32_0 = arith.constant 0 : i32
    return %c0_i32, %arg0 : i32, i32
  }
  func.func @transform_2(%arg0: i32) -> (i32, i32) {
    %c0_i32 = arith.constant 0 : i32
    %c0_i32_0 = arith.constant 0 : i32
    return %c0_i32, %arg0 : i32, i32
  }
  func.func @transform_3(%arg0: i32) -> (i32, i32) {
    %c0_i32 = arith.constant 0 : i32
    %c0_i32_0 = arith.constant 0 : i32
    return %arg0, %c0_i32 : i32, i32
  }
  func.func @transform_4(%arg0: i32) -> (i32, i32) {
    %c0_i32 = arith.constant 0 : i32
    %c0_i32_0 = arith.constant 0 : i32
    %c0_i32_1 = arith.constant 0 : i32
    return %c0_i32, %c0_i32_0 : i32, i32
  }
  func.func @transform_5(%arg0: i32) -> (i32, i32) {
    %c0_i32 = arith.constant 0 : i32
    %c0_i32_0 = arith.constant 0 : i32
    return %arg0, %c0_i32 : i32, i32
  }
  func.func @transform_6(%arg0: i32) -> (i32, i32) {
    %c0_i32 = arith.constant 0 : i32
    %c0_i32_0 = arith.constant 0 : i32
    %c0_i32_1 = arith.constant 0 : i32
    return %c0_i32, %c0_i32_0 : i32, i32
  }
  func.func @transform_7(%arg0: i32) -> (i32, i32) {
    %c0_i32 = arith.constant 0 : i32
    %c0_i32_0 = arith.constant 0 : i32
    return %arg0, %c0_i32 : i32, i32
  }
  func.func @transform_8(%arg0: i32) -> (i32, i32) {
    %c0_i32 = arith.constant 0 : i32
    %c0_i32_0 = arith.constant 0 : i32
    %c0_i32_1 = arith.constant 0 : i32
    return %c0_i32, %c0_i32_0 : i32, i32
  }
  func.func @transform_9(%arg0: i32) -> (i32, i32) {
    %c0_i32 = arith.constant 0 : i32
    %c0_i32_0 = arith.constant 0 : i32
    %c0_i32_1 = arith.constant 0 : i32
    return %c0_i32, %c0_i32_0 : i32, i32
  }
  func.func @transform_10(%arg0: i32) -> (i32, i32) {
    %c0_i32 = arith.constant 0 : i32
    %c0_i32_0 = arith.constant 0 : i32
    %c0_i32_1 = arith.constant 0 : i32
    return %c0_i32, %c0_i32_0 : i32, i32
  }
  func.func @transform_11(%arg0: i32) -> (i32, i32) {
    %c0_i32 = arith.constant 0 : i32
    %c0_i32_0 = arith.constant 0 : i32
    %c0_i32_1 = arith.constant 0 : i32
    return %c0_i32, %c0_i32_0 : i32, i32
  }
  func.func @transform_12(%arg0: i32) -> (i32, i32) {
    %c0_i32 = arith.constant 0 : i32
    %c0_i32_0 = arith.constant 0 : i32
    %c0_i32_1 = arith.constant 0 : i32
    return %c0_i32, %c0_i32_0 : i32, i32
  }
  func.func @transform_13(%arg0: i32) -> (i32, i32) {
    %c0_i32 = arith.constant 0 : i32
    %c0_i32_0 = arith.constant 0 : i32
    %c0_i32_1 = arith.constant 0 : i32
    return %c0_i32, %c0_i32_0 : i32, i32
  }
  func.func @transform_14(%arg0: i32) -> (i32, i32) {
    %c0_i32 = arith.constant 0 : i32
    %c0_i32_0 = arith.constant 0 : i32
    %c0_i32_1 = arith.constant 0 : i32
    return %c0_i32, %c0_i32_0 : i32, i32
  }
  func.func @transform_15(%arg0: i32) -> (i32, i32) {
    %c0_i32 = arith.constant 0 : i32
    %c0_i32_0 = arith.constant 0 : i32
    %c0_i32_1 = arith.constant 0 : i32
    return %c0_i32, %c0_i32_0 : i32, i32
  }
  func.func @transform_16(%arg0: i32) -> (i32, i32) {
    %c0_i32 = arith.constant 0 : i32
    %c0_i32_0 = arith.constant 0 : i32
    %c0_i32_1 = arith.constant 0 : i32
    return %c0_i32, %c0_i32_0 : i32, i32
  }
  func.func @transform_17(%arg0: i32) -> (i32, i32) {
    %c0_i32 = arith.constant 0 : i32
    %c0_i32_0 = arith.constant 0 : i32
    %c0_i32_1 = arith.constant 0 : i32
    return %c0_i32, %c0_i32_0 : i32, i32
  }
  func.func @transform_18(%arg0: i32) -> (i32, i32) {
    %c0_i32 = arith.constant 0 : i32
    %c0_i32_0 = arith.constant 0 : i32
    %c0_i32_1 = arith.constant 0 : i32
    return %c0_i32, %c0_i32_0 : i32, i32
  }
  func.func @transform_19(%arg0: i32) -> (i32, i32) {
    %c0_i32 = arith.constant 0 : i32
    %c0_i32_0 = arith.constant 0 : i32
    %c0_i32_1 = arith.constant 0 : i32
    return %c0_i32, %c0_i32_0 : i32, i32
  }
  func.func @transform_20(%arg0: i32) -> (i32, i32) {
    %c0_i32 = arith.constant 0 : i32
    %c0_i32_0 = arith.constant 0 : i32
    %c0_i32_1 = arith.constant 0 : i32
    return %c0_i32, %c0_i32_0 : i32, i32
  }
  func.func @transform_21(%arg0: i32) -> (i32, i32) {
    %c0_i32 = arith.constant 0 : i32
    %c0_i32_0 = arith.constant 0 : i32
    %c0_i32_1 = arith.constant 0 : i32
    return %c0_i32, %c0_i32_0 : i32, i32
  }
  func.func @transform_22(%arg0: i32) -> (i32, i32) {
    %c0_i32 = arith.constant 0 : i32
    %c0_i32_0 = arith.constant 0 : i32
    %c0_i32_1 = arith.constant 0 : i32
    return %c0_i32, %c0_i32_0 : i32, i32
  }
  func.func @transform_23(%arg0: i32) -> (i32, i32) {
    %c0_i32 = arith.constant 0 : i32
    %c0_i32_0 = arith.constant 0 : i32
    %c0_i32_1 = arith.constant 0 : i32
    return %c0_i32, %c0_i32_0 : i32, i32
  }
}

</mosaic_0001>

<llo_original>
// kernel: smile_classifier_forward.1
$region0: #{smile_classifier_forward.1}
  #allocation0 [shape = 'u32[]', space=smem, size = 0x4, offset = 0x4, fixed_abs, tag = 'smem constant byte address 0x4 - core index']
  #allocation1 [shape = 'u32[144,128]{1,0:T(1,128)}', space=vmem, size = 0x12000, scoped, tag = 'internal scratch']
  #allocation2 [shape = 'f32[24,2048]{1,0:T(8,128)}', space=vmem, size = 0x30000, scoped, tag = 'scratch operand']
  #allocation3 [shape = 'f32[24,1920]{1,0:T(8,128)}', space=vmem, size = 0x2d000, scoped, tag = 'scratch operand']
  #allocation4 [shape = 'f32[24,1000]{1,0:T(8,128)}', space=vmem, size = 0x18000, scoped, tag = 'scratch operand']
  %s0 = inlined_call_operand.vmem [shape: f32[8,768], index: 0, kind: input, shape index: {}]
  %s1 = inlined_call_operand.vmem [shape: f32[8,768], index: 1, kind: input, shape index: {}]
  %s2 = inlined_call_operand.vmem [shape: f32[8,768], index: 2, kind: input, shape index: {}]
  %s3 = inlined_call_operand.vmem [shape: bf16[768,2048], index: 3, kind: input, shape index: {}]
  %s4 = inlined_call_operand.vmem [shape: f32[1,2048], index: 4, kind: input, shape index: {}]
  %s5 = inlined_call_operand.hbm [shape: bf16[768,1920], index: 5, kind: input, shape index: {}]
  %s6 = inlined_call_operand.vmem [shape: f32[1,1920], index: 6, kind: input, shape index: {}]
  %s7 = inlined_call_operand.vmem [shape: bf16[768,1000], index: 7, kind: input, shape index: {}]
  %s8 = inlined_call_operand.vmem [shape: f32[1,1000], index: 8, kind: input, shape index: {}]
  %s9 = inlined_call_operand.vmem [shape: bf16[2048,96], index: 9, kind: input, shape index: {}]
  %s10 = inlined_call_operand.vmem [shape: f32[1,96], index: 10, kind: input, shape index: {}]
  %s11 = inlined_call_operand.vmem [shape: bf16[1920,96], index: 11, kind: input, shape index: {}]
  %s12 = inlined_call_operand.vmem [shape: f32[1,96], index: 12, kind: input, shape index: {}]
  %s13 = inlined_call_operand.vmem [shape: bf16[1000,96], index: 13, kind: input, shape index: {}]
  %s14 = inlined_call_operand.vmem [shape: f32[1,96], index: 14, kind: input, shape index: {}]
  %s15 = inlined_call_operand.vmem [shape: f32[96,32], index: 15, kind: input, shape index: {}]
  %s16 = inlined_call_operand.vmem [shape: f32[1,32], index: 16, kind: input, shape index: {}]
  %s17 = inlined_call_operand.vmem [shape: f32[96,32], index: 17, kind: input, shape index: {}]
  %s18 = inlined_call_operand.vmem [shape: f32[1,32], index: 18, kind: input, shape index: {}]
  %s19 = inlined_call_operand.vmem [shape: f32[96,32], index: 19, kind: input, shape index: {}]
  %s20 = inlined_call_operand.vmem [shape: f32[1,32], index: 20, kind: input, shape index: {}]
  %s21 = inlined_call_operand.vmem [shape: f32[96,2], index: 21, kind: input, shape index: {}]
  %s22 = inlined_call_operand.vmem [shape: f32[1,2], index: 22, kind: input, shape index: {}]
  %s23 = inlined_call_operand.vmem [shape: f32[8,2], index: 23, kind: output, shape index: {}]
  %s24 = sld [smem:[#allocation0]]
  $region137: #{smile_classifier_forward.1} parent=0
    _
  %s26 = ssub.s32 1, %s24
  %s27 = scalar_select 0, %s26, %s24
  $region1: #{smile_classifier_forward.1} parent=0
    #allocation5 [shape = 'u8[1966080]{0}', space=vmem, size = 0x1e0000, scoped, tag = 'input window, operand 5']
    #allocation6 [shape = 's32[2]{0}', space=sflag, size = 0x8, scoped, tag = 'scoped memory for smile_classifier_forward.1']
    %28 = vsyncpa [#allocation6], 0
    %s29 = scalar_lea.sflag [#allocation6], 1
    %30 = vsyncpa %s29, 0
    loop: start=0, step=1, limit=5
    $region2: #{smile_classifier_forward.1} parent=1 // loop_pre_header
      _
    $region3: #{smile_classifier_forward.1} parent=1 // loop_header
      %s32 = sphi 0, %s36
      %p33 = scmp.ge.s32.totalorder %s32, 5
      %s42 = sphi 0, %s44
      %s45 = sphi 0, %s42
      %s46 = sphi 0, %s45
      %s62 = sphi 0, %s46
      %s68 = sphi 0, %s70
      %s71 = sphi 0, %s68
      %s72 = sphi 0, %s71
      %s88 = sphi 0, %s72
      %s94 = sphi 0, %s96
      %s97 = sphi 0, %s94
      %s98 = sphi 0, %s97
      %s114 = sphi 0, %s98
      %s120 = sphi 0, %s122
      %s123 = sphi 0, %s120
      %s124 = sphi 0, %s123
      %s140 = sphi 0, %s124
      %s144 = sphi 0, %s144
      %s146 = sphi 0, %s144
      %s147 = sphi 0, %s146
      %s161 = sphi 0, %s147
      %s167 = sphi 0, %s169
      %s170 = sphi 0, %s167
      %s171 = sphi 0, %s170
      %s187 = sphi 0, %s171
      %s191 = sphi 0, %s191
      %s193 = sphi 0, %s191
      %s194 = sphi 0, %s193
      %s208 = sphi 0, %s194
      %s214 = sphi 0, %s216
      %s217 = sphi 0, %s214
      %s218 = sphi 0, %s217
      %s234 = sphi 0, %s218
      %s238 = sphi 0, %s238
      %s240 = sphi 0, %s238
      %s241 = sphi 0, %s240
      %s255 = sphi 0, %s241
      %s259 = sphi 0, %s259
      %s261 = sphi 0, %s259
      %s262 = sphi 0, %s261
      %s276 = sphi 0, %s262
      %s280 = sphi 0, %s280
      %s282 = sphi 0, %s280
      %s283 = sphi 0, %s282
      %s297 = sphi 0, %s283
      %s301 = sphi 0, %s301
      %s303 = sphi 0, %s301
      %s304 = sphi 0, %s303
      %s318 = sphi 0, %s304
      %s322 = sphi 0, %s322
      %s324 = sphi 0, %s322
      %s325 = sphi 0, %s324
      %s339 = sphi 0, %s325
      %s343 = sphi 0, %s343
      %s345 = sphi 0, %s343
      %s346 = sphi 0, %s345
      %s360 = sphi 0, %s346
      %s364 = sphi 0, %s364
      %s366 = sphi 0, %s364
      %s367 = sphi 0, %s366
      %s381 = sphi 0, %s367
      %s385 = sphi 0, %s385
      %s387 = sphi 0, %s385
      %s388 = sphi 0, %s387
      %s402 = sphi 0, %s388
      %s406 = sphi 0, %s406
      %s408 = sphi 0, %s406
      %s409 = sphi 0, %s408
      %s423 = sphi 0, %s409
      %s427 = sphi 0, %s427
      %s429 = sphi 0, %s427
      %s430 = sphi 0, %s429
      %s444 = sphi 0, %s430
      %s448 = sphi 0, %s448
      %s450 = sphi 0, %s448
      %s451 = sphi 0, %s450
      %s465 = sphi 0, %s451
      %s469 = sphi 0, %s469
      %s471 = sphi 0, %s469
      %s472 = sphi 0, %s471
      %s486 = sphi 0, %s472
      %s490 = sphi 0, %s490
      %s492 = sphi 0, %s490
      %s493 = sphi 0, %s492
      %s507 = sphi 0, %s493
      %s511 = sphi 0, %s511
      %s513 = sphi 0, %s511
      %s514 = sphi 0, %s513
      %s528 = sphi 0, %s514
      %s532 = sphi 0, %s532
      %s534 = sphi 0, %s532
      %s535 = sphi 0, %s534
      %s549 = sphi 0, %s535
      %s553 = sphi 0, %s553
      %s555 = sphi 0, %s553
      %s556 = sphi 0, %s555
      %s570 = sphi 0, %s556
    $region4: #{smile_classifier_forward.1} parent=1 // loop_header_branch
      %35 = sbr.rel (%p33) target = $region8
    $region5: #{smile_classifier_forward.1} parent=1 // loop_body
      %s37 = ssub.s32 %s32, 1
      %s38 = ssub.s32 %s32, 2
      %s39 = sadd.s32 %s32, 1
      %s40 = ssub.s32 %s32, %s39
      %p41 = scmp.eq.s32.totalorder %s40, 0
      %s43 = sadd.s32 %s42, 1
      %s44 = scalar_select %p41, %s42, %s43
      %p47 = pneg %p41
      %p48 = scmp.eq.s32.totalorder %s32, 2
      %p49 = por %p47, %p48
      %p50 = scmp.ne.s32.totalorder %s42, %s45
      %p51 = scmp.eq.s32.totalorder %s32, 0
      %p52 = por %p50, %p51
      %p53 = scmp.ne.s32.totalorder %s42, %s45
      %p54 = scmp.eq.s32.totalorder %s37, 2
      %p55 = por %p53, %p54
      %p56 = scmp.ne.s32.totalorder %s45, %s46
      %p57 = scmp.eq.s32.totalorder %s37, 0
      %p58 = por %p56, %p57
      %p59 = scmp.ne.s32.totalorder %s45, %s46
      %p60 = scmp.eq.s32.totalorder %s38, 2
      %p61 = por %p59, %p60
      %p63 = scmp.ne.s32.totalorder %s46, %s62
      %p64 = scmp.eq.s32.totalorder %s38, 0
      %p65 = por %p63, %p64
      %s66 = ssub.s32 %s32, %s39
      %p67 = scmp.eq.s32.totalorder %s66, 0
      %s69 = sadd.s32 %s68, 1
      %s70 = scalar_select %p67, %s68, %s69
      %p73 = pneg %p67
      %p74 = scmp.eq.s32.totalorder %s32, 2
      %p75 = por %p73, %p74
      %p76 = scmp.ne.s32.totalorder %s68, %s71
      %p77 = scmp.eq.s32.totalorder %s32, 0
      %p78 = por %p76, %p77
      %p79 = scmp.ne.s32.totalorder %s68, %s71
      %p80 = scmp.eq.s32.totalorder %s37, 2
      %p81 = por %p79, %p80
      %p82 = scmp.ne.s32.totalorder %s71, %s72
      %p83 = scmp.eq.s32.totalorder %s37, 0
      %p84 = por %p82, %p83
      %p85 = scmp.ne.s32.totalorder %s71, %s72
      %p86 = scmp.eq.s32.totalorder %s38, 2
      %p87 = por %p85, %p86
      %p89 = scmp.ne.s32.totalorder %s72, %s88
      %p90 = scmp.eq.s32.totalorder %s38, 0
      %p91 = por %p89, %p90
      %s92 = ssub.s32 %s32, %s39
      %p93 = scmp.eq.s32.totalorder %s92, 0
      %s95 = sadd.s32 %s94, 1
      %s96 = scalar_select %p93, %s94, %s95
      %p99 = pneg %p93
      %p100 = scmp.eq.s32.totalorder %s32, 2
      %p101 = por %p99, %p100
      %p102 = scmp.ne.s32.totalorder %s94, %s97
      %p103 = scmp.eq.s32.totalorder %s32, 0
      %p104 = por %p102, %p103
      %p105 = scmp.ne.s32.totalorder %s94, %s97
      %p106 = scmp.eq.s32.totalorder %s37, 2
      %p107 = por %p105, %p106
      %p108 = scmp.ne.s32.totalorder %s97, %s98
      %p109 = scmp.eq.s32.totalorder %s37, 0
      %p110 = por %p108, %p109
      %p111 = scmp.ne.s32.totalorder %s97, %s98
      %p112 = scmp.eq.s32.totalorder %s38, 2
      %p113 = por %p111, %p112
      %p115 = scmp.ne.s32.totalorder %s98, %s114
      %p116 = scmp.eq.s32.totalorder %s38, 0
      %p117 = por %p115, %p116
      %s118 = ssub.s32 %s32, %s39
      %p119 = scmp.eq.s32.totalorder %s118, 0
      %s121 = sadd.s32 %s120, 1
      %s122 = scalar_select %p119, %s120, %s121
      %p125 = pneg %p119
      %p126 = scmp.eq.s32.totalorder %s32, 2
      %p127 = por %p125, %p126
      %p128 = scmp.ne.s32.totalorder %s120, %s123
      %p129 = scmp.eq.s32.totalorder %s32, 0
      %p130 = por %p128, %p129
      %p131 = scmp.ne.s32.totalorder %s120, %s123
      %p132 = scmp.eq.s32.totalorder %s37, 2
      %p133 = por %p131, %p132
      %p134 = scmp.ne.s32.totalorder %s123, %s124
      %p135 = scmp.eq.s32.totalorder %s37, 0
      %p136 = por %p134, %p135
      %p137 = scmp.ne.s32.totalorder %s123, %s124
      %p138 = scmp.eq.s32.totalorder %s38, 2
      %p139 = por %p137, %p138
      %p141 = scmp.ne.s32.totalorder %s124, %s140
      %p142 = scmp.eq.s32.totalorder %s38, 0
      %p143 = por %p141, %p142
      %s145 = sadd.s32 %s144, 1
      %p148 = scmp.eq.s32.totalorder %s32, 2
      %p149 = scmp.ne.s32.totalorder %s144, %s146
      %p150 = scmp.eq.s32.totalorder %s32, 0
      %p151 = por %p149, %p150
      %p152 = scmp.ne.s32.totalorder %s144, %s146
      %p153 = scmp.eq.s32.totalorder %s37, 2
      %p154 = por %p152, %p153
      %p155 = scmp.ne.s32.totalorder %s146, %s147
      %p156 = scmp.eq.s32.totalorder %s37, 0
      %p157 = por %p155, %p156
      %p158 = scmp.ne.s32.totalorder %s146, %s147
      %p159 = scmp.eq.s32.totalorder %s38, 2
      %p160 = por %p158, %p159
      %p162 = scmp.ne.s32.totalorder %s147, %s161
      %p163 = scmp.eq.s32.totalorder %s38, 0
      %p164 = por %p162, %p163
      %s165 = ssub.s32 %s32, %s39
      %p166 = scmp.eq.s32.totalorder %s165, 0
      %s168 = sadd.s32 %s167, 1
      %s169 = scalar_select %p166, %s167, %s168
      %p172 = pneg %p166
      %p173 = scmp.eq.s32.totalorder %s32, 2
      %p174 = por %p172, %p173
      %p175 = scmp.ne.s32.totalorder %s167, %s170
      %p176 = scmp.eq.s32.totalorder %s32, 0
      %p177 = por %p175, %p176
      %p178 = scmp.ne.s32.totalorder %s167, %s170
      %p179 = scmp.eq.s32.totalorder %s37, 2
      %p180 = por %p178, %p179
      %p181 = scmp.ne.s32.totalorder %s170, %s171
      %p182 = scmp.eq.s32.totalorder %s37, 0
      %p183 = por %p181, %p182
      %p184 = scmp.ne.s32.totalorder %s170, %s171
      %p185 = scmp.eq.s32.totalorder %s38, 2
      %p186 = por %p184, %p185
      %p188 = scmp.ne.s32.totalorder %s171, %s187
      %p189 = scmp.eq.s32.totalorder %s38, 0
      %p190 = por %p188, %p189
      %s192 = sadd.s32 %s191, 1
      %p195 = scmp.eq.s32.totalorder %s32, 2
      %p196 = scmp.ne.s32.totalorder %s191, %s193
      %p197 = scmp.eq.s32.totalorder %s32, 0
      %p198 = por %p196, %p197
      %p199 = scmp.ne.s32.totalorder %s191, %s193
      %p200 = scmp.eq.s32.totalorder %s37, 2
      %p201 = por %p199, %p200
      %p202 = scmp.ne.s32.totalorder %s193, %s194
      %p203 = scmp.eq.s32.totalorder %s37, 0
      %p204 = por %p202, %p203
      %p205 = scmp.ne.s32.totalorder %s193, %s194
      %p206 = scmp.eq.s32.totalorder %s38, 2
      %p207 = por %p205, %p206
      %p209 = scmp.ne.s32.totalorder %s194, %s208
      %p210 = scmp.eq.s32.totalorder %s38, 0
      %p211 = por %p209, %p210
      %s212 = ssub.s32 %s32, %s39
      %p213 = scmp.eq.s32.totalorder %s212, 0
      %s215 = sadd.s32 %s214, 1
      %s216 = scalar_select %p213, %s214, %s215
      %p219 = pneg %p213
      %p220 = scmp.eq.s32.totalorder %s32, 2
      %p221 = por %p219, %p220
      %p222 = scmp.ne.s32.totalorder %s214, %s217
      %p223 = scmp.eq.s32.totalorder %s32, 0
      %p224 = por %p222, %p223
      %p225 = scmp.ne.s32.totalorder %s214, %s217
      %p226 = scmp.eq.s32.totalorder %s37, 2
      %p227 = por %p225, %p226
      %p228 = scmp.ne.s32.totalorder %s217, %s218
      %p229 = scmp.eq.s32.totalorder %s37, 0
      %p230 = por %p228, %p229
      %p231 = scmp.ne.s32.totalorder %s217, %s218
      %p232 = scmp.eq.s32.totalorder %s38, 2
      %p233 = por %p231, %p232
      %p235 = scmp.ne.s32.totalorder %s218, %s234
      %p236 = scmp.eq.s32.totalorder %s38, 0
      %p237 = por %p235, %p236
      %s239 = sadd.s32 %s238, 1
      %p242 = scmp.eq.s32.totalorder %s32, 2
      %p243 = scmp.ne.s32.totalorder %s238, %s240
      %p244 = scmp.eq.s32.totalorder %s32, 0
      %p245 = por %p243, %p244
      %p246 = scmp.ne.s32.totalorder %s238, %s240
      %p247 = scmp.eq.s32.totalorder %s37, 2
      %p248 = por %p246, %p247
      %p249 = scmp.ne.s32.totalorder %s240, %s241
      %p250 = scmp.eq.s32.totalorder %s37, 0
      %p251 = por %p249, %p250
      %p252 = scmp.ne.s32.totalorder %s240, %s241
      %p253 = scmp.eq.s32.totalorder %s38, 2
      %p254 = por %p252, %p253
      %p256 = scmp.ne.s32.totalorder %s241, %s255
      %p257 = scmp.eq.s32.totalorder %s38, 0
      %p258 = por %p256, %p257
      %s260 = sadd.s32 %s259, 1
      %p263 = scmp.eq.s32.totalorder %s32, 2
      %p264 = scmp.ne.s32.totalorder %s259, %s261
      %p265 = scmp.eq.s32.totalorder %s32, 0
      %p266 = por %p264, %p265
      %p267 = scmp.ne.s32.totalorder %s259, %s261
      %p268 = scmp.eq.s32.totalorder %s37, 2
      %p269 = por %p267, %p268
      %p270 = scmp.ne.s32.totalorder %s261, %s262
      %p271 = scmp.eq.s32.totalorder %s37, 0
      %p272 = por %p270, %p271
      %p273 = scmp.ne.s32.totalorder %s261, %s262
      %p274 = scmp.eq.s32.totalorder %s38, 2
      %p275 = por %p273, %p274
      %p277 = scmp.ne.s32.totalorder %s262, %s276
      %p278 = scmp.eq.s32.totalorder %s38, 0
      %p279 = por %p277, %p278
      %s281 = sadd.s32 %s280, 1
      %p284 = scmp.eq.s32.totalorder %s32, 2
      %p285 = scmp.ne.s32.totalorder %s280, %s282
      %p286 = scmp.eq.s32.totalorder %s32, 0
      %p287 = por %p285, %p286
      %p288 = scmp.ne.s32.totalorder %s280, %s282
      %p289 = scmp.eq.s32.totalorder %s37, 2
      %p290 = por %p288, %p289
      %p291 = scmp.ne.s32.totalorder %s282, %s283
      %p292 = scmp.eq.s32.totalorder %s37, 0
      %p293 = por %p291, %p292
      %p294 = scmp.ne.s32.totalorder %s282, %s283
      %p295 = scmp.eq.s32.totalorder %s38, 2
      %p296 = por %p294, %p295
      %p298 = scmp.ne.s32.totalorder %s283, %s297
      %p299 = scmp.eq.s32.totalorder %s38, 0
      %p300 = por %p298, %p299
      %s302 = sadd.s32 %s301, 1
      %p305 = scmp.eq.s32.totalorder %s32, 2
      %p306 = scmp.ne.s32.totalorder %s301, %s303
      %p307 = scmp.eq.s32.totalorder %s32, 0
      %p308 = por %p306, %p307
      %p309 = scmp.ne.s32.totalorder %s301, %s303
      %p310 = scmp.eq.s32.totalorder %s37, 2
      %p311 = por %p309, %p310
      %p312 = scmp.ne.s32.totalorder %s303, %s304
      %p313 = scmp.eq.s32.totalorder %s37, 0
      %p314 = por %p312, %p313
      %p315 = scmp.ne.s32.totalorder %s303, %s304
      %p316 = scmp.eq.s32.totalorder %s38, 2
      %p317 = por %p315, %p316
      %p319 = scmp.ne.s32.totalorder %s304, %s318
      %p320 = scmp.eq.s32.totalorder %s38, 0
      %p321 = por %p319, %p320
      %s323 = sadd.s32 %s322, 1
      %p326 = scmp.eq.s32.totalorder %s32, 2
      %p327 = scmp.ne.s32.totalorder %s322, %s324
      %p328 = scmp.eq.s32.totalorder %s32, 0
      %p329 = por %p327, %p328
      %p330 = scmp.ne.s32.totalorder %s322, %s324
      %p331 = scmp.eq.s32.totalorder %s37, 2
      %p332 = por %p330, %p331
      %p333 = scmp.ne.s32.totalorder %s324, %s325
      %p334 = scmp.eq.s32.totalorder %s37, 0
      %p335 = por %p333, %p334
      %p336 = scmp.ne.s32.totalorder %s324, %s325
      %p337 = scmp.eq.s32.totalorder %s38, 2
      %p338 = por %p336, %p337
      %p340 = scmp.ne.s32.totalorder %s325, %s339
      %p341 = scmp.eq.s32.totalorder %s38, 0
      %p342 = por %p340, %p341
      %s344 = sadd.s32 %s343, 1
      %p347 = scmp.eq.s32.totalorder %s32, 2
      %p348 = scmp.ne.s32.totalorder %s343, %s345
      %p349 = scmp.eq.s32.totalorder %s32, 0
      %p350 = por %p348, %p349
      %p351 = scmp.ne.s32.totalorder %s343, %s345
      %p352 = scmp.eq.s32.totalorder %s37, 2
      %p353 = por %p351, %p352
      %p354 = scmp.ne.s32.totalorder %s345, %s346
      %p355 = scmp.eq.s32.totalorder %s37, 0
      %p356 = por %p354, %p355
      %p357 = scmp.ne.s32.totalorder %s345, %s346
      %p358 = scmp.eq.s32.totalorder %s38, 2
      %p359 = por %p357, %p358
      %p361 = scmp.ne.s32.totalorder %s346, %s360
      %p362 = scmp.eq.s32.totalorder %s38, 0
      %p363 = por %p361, %p362
      %s365 = sadd.s32 %s364, 1
      %p368 = scmp.eq.s32.totalorder %s32, 2
      %p369 = scmp.ne.s32.totalorder %s364, %s366
      %p370 = scmp.eq.s32.totalorder %s32, 0
      %p371 = por %p369, %p370
      %p372 = scmp.ne.s32.totalorder %s364, %s366
      %p373 = scmp.eq.s32.totalorder %s37, 2
      %p374 = por %p372, %p373
      %p375 = scmp.ne.s32.totalorder %s366, %s367
      %p376 = scmp.eq.s32.totalorder %s37, 0
      %p377 = por %p375, %p376
      %p378 = scmp.ne.s32.totalorder %s366, %s367
      %p379 = scmp.eq.s32.totalorder %s38, 2
      %p380 = por %p378, %p379
      %p382 = scmp.ne.s32.totalorder %s367, %s381
      %p383 = scmp.eq.s32.totalorder %s38, 0
      %p384 = por %p382, %p383
      %s386 = sadd.s32 %s385, 1
      %p389 = scmp.eq.s32.totalorder %s32, 2
      %p390 = scmp.ne.s32.totalorder %s385, %s387
      %p391 = scmp.eq.s32.totalorder %s32, 0
      %p392 = por %p390, %p391
      %p393 = scmp.ne.s32.totalorder %s385, %s387
      %p394 = scmp.eq.s32.totalorder %s37, 2
      %p395 = por %p393, %p394
      %p396 = scmp.ne.s32.totalorder %s387, %s388
      %p397 = scmp.eq.s32.totalorder %s37, 0
      %p398 = por %p396, %p397
      %p399 = scmp.ne.s32.totalorder %s387, %s388
      %p400 = scmp.eq.s32.totalorder %s38, 2
      %p401 = por %p399, %p400
      %p403 = scmp.ne.s32.totalorder %s388, %s402
      %p404 = scmp.eq.s32.totalorder %s38, 0
      %p405 = por %p403, %p404
      %s407 = sadd.s32 %s406, 1
      %p410 = scmp.eq.s32.totalorder %s32, 2
      %p411 = scmp.ne.s32.totalorder %s406, %s408
      %p412 = scmp.eq.s32.totalorder %s32, 0
      %p413 = por %p411, %p412
      %p414 = scmp.ne.s32.totalorder %s406, %s408
      %p415 = scmp.eq.s32.totalorder %s37, 2
      %p416 = por %p414, %p415
      %p417 = scmp.ne.s32.totalorder %s408, %s409
      %p418 = scmp.eq.s32.totalorder %s37, 0
      %p419 = por %p417, %p418
      %p420 = scmp.ne.s32.totalorder %s408, %s409
      %p421 = scmp.eq.s32.totalorder %s38, 2
      %p422 = por %p420, %p421
      %p424 = scmp.ne.s32.totalorder %s409, %s423
      %p425 = scmp.eq.s32.totalorder %s38, 0
      %p426 = por %p424, %p425
      %s428 = sadd.s32 %s427, 1
      %p431 = scmp.eq.s32.totalorder %s32, 2
      %p432 = scmp.ne.s32.totalorder %s427, %s429
      %p433 = scmp.eq.s32.totalorder %s32, 0
      %p434 = por %p432, %p433
      %p435 = scmp.ne.s32.totalorder %s427, %s429
      %p436 = scmp.eq.s32.totalorder %s37, 2
      %p437 = por %p435, %p436
      %p438 = scmp.ne.s32.totalorder %s429, %s430
      %p439 = scmp.eq.s32.totalorder %s37, 0
      %p440 = por %p438, %p439
      %p441 = scmp.ne.s32.totalorder %s429, %s430
      %p442 = scmp.eq.s32.totalorder %s38, 2
      %p443 = por %p441, %p442
      %p445 = scmp.ne.s32.totalorder %s430, %s444
      %p446 = scmp.eq.s32.totalorder %s38, 0
      %p447 = por %p445, %p446
      %s449 = sadd.s32 %s448, 1
      %p452 = scmp.eq.s32.totalorder %s32, 2
      %p453 = scmp.ne.s32.totalorder %s448, %s450
      %p454 = scmp.eq.s32.totalorder %s32, 0
      %p455 = por %p453, %p454
      %p456 = scmp.ne.s32.totalorder %s448, %s450
      %p457 = scmp.eq.s32.totalorder %s37, 2
      %p458 = por %p456, %p457
      %p459 = scmp.ne.s32.totalorder %s450, %s451
      %p460 = scmp.eq.s32.totalorder %s37, 0
      %p461 = por %p459, %p460
      %p462 = scmp.ne.s32.totalorder %s450, %s451
      %p463 = scmp.eq.s32.totalorder %s38, 2
      %p464 = por %p462, %p463
      %p466 = scmp.ne.s32.totalorder %s451, %s465
      %p467 = scmp.eq.s32.totalorder %s38, 0
      %p468 = por %p466, %p467
      %s470 = sadd.s32 %s469, 1
      %p473 = scmp.eq.s32.totalorder %s32, 2
      %p474 = scmp.ne.s32.totalorder %s469, %s471
      %p475 = scmp.eq.s32.totalorder %s32, 0
      %p476 = por %p474, %p475
      %p477 = scmp.ne.s32.totalorder %s469, %s471
      %p478 = scmp.eq.s32.totalorder %s37, 2
      %p479 = por %p477, %p478
      %p480 = scmp.ne.s32.totalorder %s471, %s472
      %p481 = scmp.eq.s32.totalorder %s37, 0
      %p482 = por %p480, %p481
      %p483 = scmp.ne.s32.totalorder %s471, %s472
      %p484 = scmp.eq.s32.totalorder %s38, 2
      %p485 = por %p483, %p484
      %p487 = scmp.ne.s32.totalorder %s472, %s486
      %p488 = scmp.eq.s32.totalorder %s38, 0
      %p489 = por %p487, %p488
      %s491 = sadd.s32 %s490, 1
      %p494 = scmp.eq.s32.totalorder %s32, 2
      %p495 = scmp.ne.s32.totalorder %s490, %s492
      %p496 = scmp.eq.s32.totalorder %s32, 0
      %p497 = por %p495, %p496
      %p498 = scmp.ne.s32.totalorder %s490, %s492
      %p499 = scmp.eq.s32.totalorder %s37, 2
      %p500 = por %p498, %p499
      %p501 = scmp.ne.s32.totalorder %s492, %s493
      %p502 = scmp.eq.s32.totalorder %s37, 0
      %p503 = por %p501, %p502
      %p504 = scmp.ne.s32.totalorder %s492, %s493
      %p505 = scmp.eq.s32.totalorder %s38, 2
      %p506 = por %p504, %p505
      %p508 = scmp.ne.s32.totalorder %s493, %s507
      %p509 = scmp.eq.s32.totalorder %s38, 0
      %p510 = por %p508, %p509
      %s512 = sadd.s32 %s511, 1
      %p515 = scmp.eq.s32.totalorder %s32, 2
      %p516 = scmp.ne.s32.totalorder %s511, %s513
      %p517 = scmp.eq.s32.totalorder %s32, 0
      %p518 = por %p516, %p517
      %p519 = scmp.ne.s32.totalorder %s511, %s513
      %p520 = scmp.eq.s32.totalorder %s37, 2
      %p521 = por %p519, %p520
      %p522 = scmp.ne.s32.totalorder %s513, %s514
      %p523 = scmp.eq.s32.totalorder %s37, 0
      %p524 = por %p522, %p523
      %p525 = scmp.ne.s32.totalorder %s513, %s514
      %p526 = scmp.eq.s32.totalorder %s38, 2
      %p527 = por %p525, %p526
      %p529 = scmp.ne.s32.totalorder %s514, %s528
      %p530 = scmp.eq.s32.totalorder %s38, 0
      %p531 = por %p529, %p530
      %s533 = sadd.s32 %s532, 1
      %p536 = scmp.eq.s32.totalorder %s32, 2
      %p537 = scmp.ne.s32.totalorder %s532, %s534
      %p538 = scmp.eq.s32.totalorder %s32, 0
      %p539 = por %p537, %p538
      %p540 = scmp.ne.s32.totalorder %s532, %s534
      %p541 = scmp.eq.s32.totalorder %s37, 2
      %p542 = por %p540, %p541
      %p543 = scmp.ne.s32.totalorder %s534, %s535
      %p544 = scmp.eq.s32.totalorder %s37, 0
      %p545 = por %p543, %p544
      %p546 = scmp.ne.s32.totalorder %s534, %s535
      %p547 = scmp.eq.s32.totalorder %s38, 2
      %p548 = por %p546, %p547
      %p550 = scmp.ne.s32.totalorder %s535, %s549
      %p551 = scmp.eq.s32.totalorder %s38, 0
      %p552 = por %p550, %p551
      %s554 = sadd.s32 %s553, 1
      %p557 = scmp.eq.s32.totalorder %s32, 2
      %p558 = scmp.ne.s32.totalorder %s553, %s555
      %p559 = scmp.eq.s32.totalorder %s32, 0
      %p560 = por %p558, %p559
      %p561 = scmp.ne.s32.totalorder %s553, %s555
      %p562 = scmp.eq.s32.totalorder %s37, 2
      %p563 = por %p561, %p562
      %p564 = scmp.ne.s32.totalorder %s555, %s556
      %p565 = scmp.eq.s32.totalorder %s37, 0
      %p566 = por %p564, %p565
      %p567 = scmp.ne.s32.totalorder %s555, %s556
      %p568 = scmp.eq.s32.totalorder %s38, 2
      %p569 = por %p567, %p568
      %p571 = scmp.ne.s32.totalorder %s556, %s570
      %p572 = scmp.eq.s32.totalorder %s38, 0
      %p573 = por %p571, %p572
      %p574 = scmp.le.s32.totalorder 1, %s32
      %p575 = scmp.lt.s32.totalorder %s32, 4
      %p576 = pnand %p574, %p575
      %p577 = pneg %p576
      // Predicated region
      $region9: #{smile_classifier_forward.1} parent=5 // pred_check
        _
      $region10: #{smile_classifier_forward.1} parent=5 // pred_check_branch
        %579 = sbr.rel (%p576) target = $region12
      $region11: #{smile_classifier_forward.1} parent=5 // pred_region
        %s580 = ssub.s32 %s32, 1
        // Predicated region
        $region13: #{smile_classifier_forward.1} parent=11 // pred_check
          %p581 = pneg %p157
        $region14: #{smile_classifier_forward.1} parent=11 // pred_check_branch
          %583 = sbr.rel (%p581) target = $region16
        $region15: #{smile_classifier_forward.1} parent=11 // pred_region
          _
        $region16: #{smile_classifier_forward.1} parent=11 // pred_fallthru
          _
        // Predicated region
        $region17: #{smile_classifier_forward.1} parent=11 // pred_check
          %p584 = pneg %p204
        $region18: #{smile_classifier_forward.1} parent=11 // pred_check_branch
          %586 = sbr.rel (%p584) target = $region20
        $region19: #{smile_classifier_forward.1} parent=11 // pred_region
          _
        $region20: #{smile_classifier_forward.1} parent=11 // pred_fallthru
          _
        // Predicated region
        $region21: #{smile_classifier_forward.1} parent=11 // pred_check
          %p587 = pneg %p251
        $region22: #{smile_classifier_forward.1} parent=11 // pred_check_branch
          %589 = sbr.rel (%p587) target = $region24
        $region23: #{smile_classifier_forward.1} parent=11 // pred_region
          _
        $region24: #{smile_classifier_forward.1} parent=11 // pred_fallthru
          _
        // Predicated region
        $region25: #{smile_classifier_forward.1} parent=11 // pred_check
          %p590 = pneg %p272
        $region26: #{smile_classifier_forward.1} parent=11 // pred_check_branch
          %592 = sbr.rel (%p590) target = $region28
        $region27: #{smile_classifier_forward.1} parent=11 // pred_region
          _
        $region28: #{smile_classifier_forward.1} parent=11 // pred_fallthru
          _
        // Predicated region
        $region29: #{smile_classifier_forward.1} parent=11 // pred_check
          %p593 = pneg %p293
        $region30: #{smile_classifier_forward.1} parent=11 // pred_check_branch
          %595 = sbr.rel (%p593) target = $region32
        $region31: #{smile_classifier_forward.1} parent=11 // pred_region
          _
        $region32: #{smile_classifier_forward.1} parent=11 // pred_fallthru
          _
        // Predicated region
        $region33: #{smile_classifier_forward.1} parent=11 // pred_check
          %p596 = pneg %p314
        $region34: #{smile_classifier_forward.1} parent=11 // pred_check_branch
          %598 = sbr.rel (%p596) target = $region36
        $region35: #{smile_classifier_forward.1} parent=11 // pred_region
          _
        $region36: #{smile_classifier_forward.1} parent=11 // pred_fallthru
          _
        // Predicated region
        $region37: #{smile_classifier_forward.1} parent=11 // pred_check
          %p599 = pneg %p335
        $region38: #{smile_classifier_forward.1} parent=11 // pred_check_branch
          %601 = sbr.rel (%p599) target = $region40
        $region39: #{smile_classifier_forward.1} parent=11 // pred_region
          _
        $region40: #{smile_classifier_forward.1} parent=11 // pred_fallthru
          _
        // Predicated region
        $region41: #{smile_classifier_forward.1} parent=11 // pred_check
          %p602 = pneg %p356
        $region42: #{smile_classifier_forward.1} parent=11 // pred_check_branch
          %604 = sbr.rel (%p602) target = $region44
        $region43: #{smile_classifier_forward.1} parent=11 // pred_region
          _
        $region44: #{smile_classifier_forward.1} parent=11 // pred_fallthru
          _
        // Predicated region
        $region45: #{smile_classifier_forward.1} parent=11 // pred_check
          %p605 = pneg %p377
        $region46: #{smile_classifier_forward.1} parent=11 // pred_check_branch
          %607 = sbr.rel (%p605) target = $region48
        $region47: #{smile_classifier_forward.1} parent=11 // pred_region
          _
        $region48: #{smile_classifier_forward.1} parent=11 // pred_fallthru
          _
        // Predicated region
        $region49: #{smile_classifier_forward.1} parent=11 // pred_check
          %p608 = pneg %p398
        $region50: #{smile_classifier_forward.1} parent=11 // pred_check_branch
          %610 = sbr.rel (%p608) target = $region52
        $region51: #{smile_classifier_forward.1} parent=11 // pred_region
          _
        $region52: #{smile_classifier_forward.1} parent=11 // pred_fallthru
          _
        // Predicated region
        $region53: #{smile_classifier_forward.1} parent=11 // pred_check
          %p611 = pneg %p419
        $region54: #{smile_classifier_forward.1} parent=11 // pred_check_branch
          %613 = sbr.rel (%p611) target = $region56
        $region55: #{smile_classifier_forward.1} parent=11 // pred_region
          _
        $region56: #{smile_classifier_forward.1} parent=11 // pred_fallthru
          _
        // Predicated region
        $region57: #{smile_classifier_forward.1} parent=11 // pred_check
          %p614 = pneg %p440
        $region58: #{smile_classifier_forward.1} parent=11 // pred_check_branch
          %616 = sbr.rel (%p614) target = $region60
        $region59: #{smile_classifier_forward.1} parent=11 // pred_region
          _
        $region60: #{smile_classifier_forward.1} parent=11 // pred_fallthru
          _
        // Predicated region
        $region61: #{smile_classifier_forward.1} parent=11 // pred_check
          %p617 = pneg %p461
        $region62: #{smile_classifier_forward.1} parent=11 // pred_check_branch
          %619 = sbr.rel (%p617) target = $region64
        $region63: #{smile_classifier_forward.1} parent=11 // pred_region
          _
        $region64: #{smile_classifier_forward.1} parent=11 // pred_fallthru
          _
        // Predicated region
        $region65: #{smile_classifier_forward.1} parent=11 // pred_check
          %p620 = pneg %p482
        $region66: #{smile_classifier_forward.1} parent=11 // pred_check_branch
          %622 = sbr.rel (%p620) target = $region68
        $region67: #{smile_classifier_forward.1} parent=11 // pred_region
          _
        $region68: #{smile_classifier_forward.1} parent=11 // pred_fallthru
          _
        // Predicated region
        $region69: #{smile_classifier_forward.1} parent=11 // pred_check
          %p623 = pneg %p503
        $region70: #{smile_classifier_forward.1} parent=11 // pred_check_branch
          %625 = sbr.rel (%p623) target = $region72
        $region71: #{smile_classifier_forward.1} parent=11 // pred_region
          _
        $region72: #{smile_classifier_forward.1} parent=11 // pred_fallthru
          _
        // Predicated region
        $region73: #{smile_classifier_forward.1} parent=11 // pred_check
          %p626 = pneg %p524
        $region74: #{smile_classifier_forward.1} parent=11 // pred_check_branch
          %628 = sbr.rel (%p626) target = $region76
        $region75: #{smile_classifier_forward.1} parent=11 // pred_region
          _
        $region76: #{smile_classifier_forward.1} parent=11 // pred_fallthru
          _
        // Predicated region
        $region77: #{smile_classifier_forward.1} parent=11 // pred_check
          %p629 = pneg %p545
        $region78: #{smile_classifier_forward.1} parent=11 // pred_check_branch
          %631 = sbr.rel (%p629) target = $region80
        $region79: #{smile_classifier_forward.1} parent=11 // pred_region
          _
        $region80: #{smile_classifier_forward.1} parent=11 // pred_fallthru
          _
      $region12: #{smile_classifier_forward.1} parent=5 // pred_fallthru
        _
      %p632 = scmp.lt.s32.totalorder %s32, 3
      // Predicated region
      $region81: #{smile_classifier_forward.1} parent=5 // pred_check
        %p633 = pneg %p632
      $region82: #{smile_classifier_forward.1} parent=5 // pred_check_branch
        %635 = sbr.rel (%p633) target = $region84
      $region83: #{smile_classifier_forward.1} parent=5 // pred_region
        // Predicated region
        $region85: #{smile_classifier_forward.1} parent=83 // pred_check
          %p636 = pneg %p52
        $region86: #{smile_classifier_forward.1} parent=83 // pred_check_branch
          %638 = sbr.rel (%p636) target = $region88
        $region87: #{smile_classifier_forward.1} parent=83 // pred_region
          %s639 = smul.u32 2, %s32
          %p640 = scmp.lt.s32.totalorder %s639, 5
          %s641 = scalar_select %p640, %s639, 5
          %s642 = smul.addr %s641, 8
          %s643 = scalar_lea.vmem %s0, %s642
          %s644 = smul.u32 2, %s32
        $region88: #{smile_classifier_forward.1} parent=83 // pred_fallthru
          _
        // Predicated region
        $region89: #{smile_classifier_forward.1} parent=83 // pred_check
          %p645 = pneg %p78
        $region90: #{smile_classifier_forward.1} parent=83 // pred_check_branch
          %647 = sbr.rel (%p645) target = $region92
        $region91: #{smile_classifier_forward.1} parent=83 // pred_region
          %s648 = smul.u32 2, %s32
          %p649 = scmp.lt.s32.totalorder %s648, 5
          %s650 = scalar_select %p649, %s648, 5
          %s651 = smul.addr %s650, 8
          %s652 = scalar_lea.vmem %s1, %s651
          %s653 = smul.u32 2, %s32
        $region92: #{smile_classifier_forward.1} parent=83 // pred_fallthru
          _
        // Predicated region
        $region93: #{smile_classifier_forward.1} parent=83 // pred_check
          %p654 = pneg %p104
        $region94: #{smile_classifier_forward.1} parent=83 // pred_check_branch
          %656 = sbr.rel (%p654) target = $region96
        $region95: #{smile_classifier_forward.1} parent=83 // pred_region
          %s657 = smul.u32 2, %s32
          %p658 = scmp.lt.s32.totalorder %s657, 5
          %s659 = scalar_select %p658, %s657, 5
          %s660 = smul.addr %s659, 8
          %s661 = scalar_lea.vmem %s2, %s660
          %s662 = smul.u32 2, %s32
        $region96: #{smile_classifier_forward.1} parent=83 // pred_fallthru
          _
        // Predicated region
        $region97: #{smile_classifier_forward.1} parent=83 // pred_check
          %p663 = pneg %p130
        $region98: #{smile_classifier_forward.1} parent=83 // pred_check_branch
          %665 = sbr.rel (%p663) target = $region100
        $region99: #{smile_classifier_forward.1} parent=83 // pred_region
          %s666 = smul.u32 32, %s32
          %p667 = scmp.lt.s32.totalorder %s666, 95
          %s668 = scalar_select %p667, %s666, 95
          %s669 = smul.addr %s668, 16
          %s670 = smul.addr %s669, 4
          %s671 = scalar_lea.vmem %s3, %s670
          %s672 = smul.u32 32, %s32
        $region100: #{smile_classifier_forward.1} parent=83 // pred_fallthru
          _
        // Predicated region
        $region101: #{smile_classifier_forward.1} parent=83 // pred_check
          %p673 = pneg %p177
        $region102: #{smile_classifier_forward.1} parent=83 // pred_check_branch
          %675 = sbr.rel (%p673) target = $region104
        $region103: #{smile_classifier_forward.1} parent=83 // pred_region
          %s676 = sand.u32 %s167, 1
          %s677 = scalar_lea.sflag [#allocation6], %s676
          %s678 = sand.u32 %s167, 1
          %s679 = smul.addr %s678, 1920
          %s680 = scalar_lea.vmem [#allocation5], %s679
          %s681 = smul.u32 32, %s32
          %s683 = ssub.s32 30720, 30720
          %684 = vsyncadd %s677, %s683
          %s685 = smul.addr %s681, 15
          %s686 = smul.addr %s685, 64
          %s687 = scalar_lea.hbm %s5, %s686
          %s688 = sshll.u32 %s680, 4
          %s689 = int_to_ptr.vmem [resolvable:$true] %s688
          %694 = dma.hbm_to_vmem [thread:$0]  %s687, 30720, %s689, %s677, 960, 960, 60
        $region104: #{smile_classifier_forward.1} parent=83 // pred_fallthru
          _
        // Predicated region
        $region105: #{smile_classifier_forward.1} parent=83 // pred_check
          %p695 = pneg %p224
        $region106: #{smile_classifier_forward.1} parent=83 // pred_check_branch
          %697 = sbr.rel (%p695) target = $region108
        $region107: #{smile_classifier_forward.1} parent=83 // pred_region
          %s698 = smul.u32 32, %s32
          %p699 = scmp.lt.s32.totalorder %s698, 95
          %s700 = scalar_select %p699, %s698, 95
          %s701 = smul.addr %s700, 8
          %s702 = smul.addr %s701, 4
          %s703 = scalar_lea.vmem %s7, %s702
          %s704 = smul.u32 32, %s32
        $region108: #{smile_classifier_forward.1} parent=83 // pred_fallthru
          _
      $region84: #{smile_classifier_forward.1} parent=5 // pred_fallthru
        _
      %p705 = scmp.le.s32.totalorder 1, %s32
      %p706 = scmp.lt.s32.totalorder %s32, 4
      %p707 = pnand %p705, %p706
      %p708 = pneg %p707
      // Predicated region
      $region109: #{smile_classifier_forward.1} parent=5 // pred_check
        _
      $region110: #{smile_classifier_forward.1} parent=5 // pred_check_branch
        %710 = sbr.rel (%p707) target = $region112
      $region111: #{smile_classifier_forward.1} parent=5 // pred_region
        %s711 = ssub.s32 %s32, 1
        %s712 = sand.u32 %s170, 1
        %s713 = scalar_lea.sflag [#allocation6], %s712
        %s714 = sand.u32 %s170, 1
        %s715 = smul.addr %s714, 1920
        %s716 = scalar_lea.vmem [#allocation5], %s715
        // Predicated region
        $region113: #{smile_classifier_forward.1} parent=111 // pred_check
          %p717 = pneg %p183
        $region114: #{smile_classifier_forward.1} parent=111 // pred_check_branch
          %719 = sbr.rel (%p717) target = $region116
        $region115: #{smile_classifier_forward.1} parent=111 // pred_region
          %720 = dma.done %s713, 30720
        $region116: #{smile_classifier_forward.1} parent=111 // pred_fallthru
          _
        %s721 = smul.u32 2, %s37
        %p722 = scmp.lt.s32.totalorder %s721, 5
        %s723 = scalar_select %p722, %s721, 5
        %s724 = smul.addr %s723, 8
        %s725 = scalar_lea.vmem %s0, %s724
        %p726 = pneg %p58
        %p727 = pneg %p55
        %s728 = smul.u32 2, %s37
        %p729 = scmp.lt.s32.totalorder %s728, 5
        %s730 = scalar_select %p729, %s728, 5
        %s731 = smul.addr %s730, 8
        %s732 = scalar_lea.vmem %s1, %s731
        %p733 = pneg %p84
        %p734 = pneg %p81
        %s735 = smul.u32 2, %s37
        %p736 = scmp.lt.s32.totalorder %s735, 5
        %s737 = scalar_select %p736, %s735, 5
        %s738 = smul.addr %s737, 8
        %s739 = scalar_lea.vmem %s2, %s738
        %p740 = pneg %p110
        %p741 = pneg %p107
        %s742 = smul.u32 32, %s37
        %p743 = scmp.lt.s32.totalorder %s742, 95
        %s744 = scalar_select %p743, %s742, 95
        %s745 = smul.addr %s744, 16
        %s746 = smul.addr %s745, 4
        %s747 = scalar_lea.vmem %s3, %s746
        %p748 = pneg %p136
        %p749 = pneg %p133
        %p750 = pneg %p157
        %p751 = pneg %p154
        %s752 = sand.u32 %s170, 1
        %s753 = scalar_lea.sflag [#allocation6], %s752
        %s754 = sand.u32 %s170, 1
        %s755 = smul.addr %s754, 1920
        %s756 = scalar_lea.vmem [#allocation5], %s755
        %p757 = pneg %p183
        %p758 = pneg %p180
        %p759 = pneg %p204
        %p760 = pneg %p201
        %s761 = smul.u32 32, %s37
        %p762 = scmp.lt.s32.totalorder %s761, 95
        %s763 = scalar_select %p762, %s761, 95
        %s764 = smul.addr %s763, 8
        %s765 = smul.addr %s764, 4
        %s766 = scalar_lea.vmem %s7, %s765
        %p767 = pneg %p230
        %p768 = pneg %p227
        %p769 = pneg %p251
        %p770 = pneg %p248
        %p771 = pneg %p272
        %p772 = pneg %p269
        %p773 = pneg %p293
        %p774 = pneg %p290
        %p775 = pneg %p314
        %p776 = pneg %p311
        %p777 = pneg %p335
        %p778 = pneg %p332
        %p779 = pneg %p356
        %p780 = pneg %p353
        %p781 = pneg %p377
        %p782 = pneg %p374
        %p783 = pneg %p398
        %p784 = pneg %p395
        %p785 = pneg %p419
        %p786 = pneg %p416
        %p787 = pneg %p440
        %p788 = pneg %p437
        %p789 = pneg %p461
        %p790 = pneg %p458
        %p791 = pneg %p482
        %p792 = pneg %p479
        %p793 = pneg %p503
        %p794 = pneg %p500
        %p795 = pneg %p524
        %p796 = pneg %p521
        %p797 = pneg %p545
        %p798 = pneg %p542
        %p799 = pneg %p566
        %p800 = pneg %p563
        %s801 = smul.u32 2, %s37
        %p802 = scmp.lt.s32.totalorder %s801, 5
        %s803 = scalar_select %p802, %s801, 5
        %s804 = smul.addr %s803, 8
        %s805 = scalar_lea.vmem %s0, %s804
        %s806 = smul.u32 2, %s37
        %s807 = smul.u32 2, %s37
        %p808 = scmp.lt.s32.totalorder %s807, 5
        %s809 = scalar_select %p808, %s807, 5
        %s810 = smul.addr %s809, 8
        %s811 = scalar_lea.vmem %s1, %s810
        %s812 = smul.u32 2, %s37
        %s813 = smul.u32 2, %s37
        %p814 = scmp.lt.s32.totalorder %s813, 5
        %s815 = scalar_select %p814, %s813, 5
        %s816 = smul.addr %s815, 8
        %s817 = scalar_lea.vmem %s2, %s816
        %s818 = smul.u32 2, %s37
        %s819 = smul.u32 32, %s37
        %p820 = scmp.lt.s32.totalorder %s819, 95
        %s821 = scalar_select %p820, %s819, 95
        %s822 = smul.addr %s821, 16
        %s823 = smul.addr %s822, 4
        %s824 = scalar_lea.vmem %s3, %s823
        %s825 = smul.u32 32, %s37
        %s826 = smul.u32 32, %s37
        %s827 = smul.u32 32, %s37
        %p828 = scmp.lt.s32.totalorder %s827, 95
        %s829 = scalar_select %p828, %s827, 95
        %s830 = smul.addr %s829, 8
        %s831 = smul.addr %s830, 4
        %s832 = scalar_lea.vmem %s7, %s831
        %s833 = smul.u32 32, %s37
        %p835 = scmp.eq.s32.totalorder %s37, 0
        // Predicated region
        $region117: #{smile_classifier_forward.1} parent=111 // pred_check
          %p836 = pneg %p835
        $region118: #{smile_classifier_forward.1} parent=111 // pred_check_branch
          %838 = sbr.rel (%p836) target = $region120
        $region119: #{smile_classifier_forward.1} parent=111 // pred_region
          %839 = vst [vmem:[#allocation2] sm:$0xff] 0.0
          %840 = vst [vmem:[#allocation2 + $0x8] sm:$0xff] 0.0
          %841 = vst [vmem:[#allocation2 + $0x10] sm:$0xff] 0.0
          %842 = vst [vmem:[#allocation2 + $0x18] sm:$0xff] 0.0
          %843 = vst [vmem:[#allocation2 + $0x20] sm:$0xff] 0.0
          %844 = vst [vmem:[#allocation2 + $0x28] sm:$0xff] 0.0
          %845 = vst [vmem:[#allocation2 + $0x30] sm:$0xff] 0.0
          %846 = vst [vmem:[#allocation2 + $0x38] sm:$0xff] 0.0
          %847 = vst [vmem:[#allocation2 + $0x40] sm:$0xff] 0.0
          %848 = vst [vmem:[#allocation2 + $0x48] sm:$0xff] 0.0
          %849 = vst [vmem:[#allocation2 + $0x50] sm:$0xff] 0.0
          %850 = vst [vmem:[#allocation2 + $0x58] sm:$0xff] 0.0
          %851 = vst [vmem:[#allocation2 + $0x60] sm:$0xff] 0.0
          %852 = vst [vmem:[#allocation2 + $0x68] sm:$0xff] 0.0
          %853 = vst [vmem:[#allocation2 + $0x70] sm:$0xff] 0.0
          %854 = vst [vmem:[#allocation2 + $0x78] sm:$0xff] 0.0
          %855 = vst [vmem:[#allocation2 + $0x80] sm:$0xff] 0.0
          %856 = vst [vmem:[#allocation2 + $0x88] sm:$0xff] 0.0
          %857 = vst [vmem:[#allocation2 + $0x90] sm:$0xff] 0.0
          %858 = vst [vmem:[#allocation2 + $0x98] sm:$0xff] 0.0
          %859 = vst [vmem:[#allocation2 + $0xa0] sm:$0xff] 0.0
          %860 = vst [vmem:[#allocation2 + $0xa8] sm:$0xff] 0.0
          %861 = vst [vmem:[#allocation2 + $0xb0] sm:$0xff] 0.0
          %862 = vst [vmem:[#allocation2 + $0xb8] sm:$0xff] 0.0
          %863 = vst [vmem:[#allocation2 + $0xc0] sm:$0xff] 0.0
          %864 = vst [vmem:[#allocation2 + $0xc8] sm:$0xff] 0.0
          %865 = vst [vmem:[#allocation2 + $0xd0] sm:$0xff] 0.0
          %866 = vst [vmem:[#allocation2 + $0xd8] sm:$0xff] 0.0
          %867 = vst [vmem:[#allocation2 + $0xe0] sm:$0xff] 0.0
          %868 = vst [vmem:[#allocation2 + $0xe8] sm:$0xff] 0.0
          %869 = vst [vmem:[#allocation2 + $0xf0] sm:$0xff] 0.0
          %870 = vst [vmem:[#allocation2 + $0xf8] sm:$0xff] 0.0
          %871 = vst [vmem:[#allocation2 + $0x100] sm:$0xff] 0.0
          %872 = vst [vmem:[#allocation2 + $0x108] sm:$0xff] 0.0
          %873 = vst [vmem:[#allocation2 + $0x110] sm:$0xff] 0.0
          %874 = vst [vmem:[#allocation2 + $0x118] sm:$0xff] 0.0
          %875 = vst [vmem:[#allocation2 + $0x120] sm:$0xff] 0.0
          %876 = vst [vmem:[#allocation2 + $0x128] sm:$0xff] 0.0
          %877 = vst [vmem:[#allocation2 + $0x130] sm:$0xff] 0.0
          %878 = vst [vmem:[#allocation2 + $0x138] sm:$0xff] 0.0
          %879 = vst [vmem:[#allocation2 + $0x140] sm:$0xff] 0.0
          %880 = vst [vmem:[#allocation2 + $0x148] sm:$0xff] 0.0
          %881 = vst [vmem:[#allocation2 + $0x150] sm:$0xff] 0.0
          %882 = vst [vmem:[#allocation2 + $0x158] sm:$0xff] 0.0
          %883 = vst [vmem:[#allocation2 + $0x160] sm:$0xff] 0.0
          %884 = vst [vmem:[#allocation2 + $0x168] sm:$0xff] 0.0
          %885 = vst [vmem:[#allocation2 + $0x170] sm:$0xff] 0.0
          %886 = vst [vmem:[#allocation2 + $0x178] sm:$0xff] 0.0
          %887 = vst [vmem:[#allocation3] sm:$0xff] 0.0
          %888 = vst [vmem:[#allocation3 + $0x8] sm:$0xff] 0.0
          %889 = vst [vmem:[#allocation3 + $0x10] sm:$0xff] 0.0
          %890 = vst [vmem:[#allocation3 + $0x18] sm:$0xff] 0.0
          %891 = vst [vmem:[#allocation3 + $0x20] sm:$0xff] 0.0
          %892 = vst [vmem:[#allocation3 + $0x28] sm:$0xff] 0.0
          %893 = vst [vmem:[#allocation3 + $0x30] sm:$0xff] 0.0
          %894 = vst [vmem:[#allocation3 + $0x38] sm:$0xff] 0.0
          %895 = vst [vmem:[#allocation3 + $0x40] sm:$0xff] 0.0
          %896 = vst [vmem:[#allocation3 + $0x48] sm:$0xff] 0.0
          %897 = vst [vmem:[#allocation3 + $0x50] sm:$0xff] 0.0
          %898 = vst [vmem:[#allocation3 + $0x58] sm:$0xff] 0.0
          %899 = vst [vmem:[#allocation3 + $0x60] sm:$0xff] 0.0
          %900 = vst [vmem:[#allocation3 + $0x68] sm:$0xff] 0.0
          %901 = vst [vmem:[#allocation3 + $0x70] sm:$0xff] 0.0
          %902 = vst [vmem:[#allocation3 + $0x78] sm:$0xff] 0.0
          %903 = vst [vmem:[#allocation3 + $0x80] sm:$0xff] 0.0
          %904 = vst [vmem:[#allocation3 + $0x88] sm:$0xff] 0.0
          %905 = vst [vmem:[#allocation3 + $0x90] sm:$0xff] 0.0
          %906 = vst [vmem:[#allocation3 + $0x98] sm:$0xff] 0.0
          %907 = vst [vmem:[#allocation3 + $0xa0] sm:$0xff] 0.0
          %908 = vst [vmem:[#allocation3 + $0xa8] sm:$0xff] 0.0
          %909 = vst [vmem:[#allocation3 + $0xb0] sm:$0xff] 0.0
          %910 = vst [vmem:[#allocation3 + $0xb8] sm:$0xff] 0.0
          %911 = vst [vmem:[#allocation3 + $0xc0] sm:$0xff] 0.0
          %912 = vst [vmem:[#allocation3 + $0xc8] sm:$0xff] 0.0
          %913 = vst [vmem:[#allocation3 + $0xd0] sm:$0xff] 0.0
          %914 = vst [vmem:[#allocation3 + $0xd8] sm:$0xff] 0.0
          %915 = vst [vmem:[#allocation3 + $0xe0] sm:$0xff] 0.0
          %916 = vst [vmem:[#allocation3 + $0xe8] sm:$0xff] 0.0
          %917 = vst [vmem:[#allocation3 + $0xf0] sm:$0xff] 0.0
          %918 = vst [vmem:[#allocation3 + $0xf8] sm:$0xff] 0.0
          %919 = vst [vmem:[#allocation3 + $0x100] sm:$0xff] 0.0
          %920 = vst [vmem:[#allocation3 + $0x108] sm:$0xff] 0.0
          %921 = vst [vmem:[#allocation3 + $0x110] sm:$0xff] 0.0
          %922 = vst [vmem:[#allocation3 + $0x118] sm:$0xff] 0.0
          %923 = vst [vmem:[#allocation3 + $0x120] sm:$0xff] 0.0
          %924 = vst [vmem:[#allocation3 + $0x128] sm:$0xff] 0.0
          %925 = vst [vmem:[#allocation3 + $0x130] sm:$0xff] 0.0
          %926 = vst [vmem:[#allocation3 + $0x138] sm:$0xff] 0.0
          %927 = vst [vmem:[#allocation3 + $0x140] sm:$0xff] 0.0
          %928 = vst [vmem:[#allocation3 + $0x148] sm:$0xff] 0.0
          %929 = vst [vmem:[#allocation3 + $0x150] sm:$0xff] 0.0
          %930 = vst [vmem:[#allocation3 + $0x158] sm:$0xff] 0.0
          %931 = vst [vmem:[#allocation3 + $0x160] sm:$0xff] 0.0
          %932 = vst [vmem:[#allocation4] sm:$0xff] 0.0
          %933 = vst [vmem:[#allocation4 + $0x8] sm:$0xff] 0.0
          %934 = vst [vmem:[#allocation4 + $0x10] sm:$0xff] 0.0
          %935 = vst [vmem:[#allocation4 + $0x18] sm:$0xff] 0.0
          %936 = vst [vmem:[#allocation4 + $0x20] sm:$0xff] 0.0
          %937 = vst [vmem:[#allocation4 + $0x28] sm:$0xff] 0.0
          %938 = vst [vmem:[#allocation4 + $0x30] sm:$0xff] 0.0
          %vm939 = vcmask 850944
          %940 = vst.msk [vmem:[#allocation4 + $0x38] sm:$0xff] %vm939, 0.0
          %941 = vst [vmem:[#allocation4 + $0x40] sm:$0xff] 0.0
          %942 = vst [vmem:[#allocation4 + $0x48] sm:$0xff] 0.0
          %943 = vst [vmem:[#allocation4 + $0x50] sm:$0xff] 0.0
          %944 = vst [vmem:[#allocation4 + $0x58] sm:$0xff] 0.0
          %945 = vst [vmem:[#allocation4 + $0x60] sm:$0xff] 0.0
          %946 = vst [vmem:[#allocation4 + $0x68] sm:$0xff] 0.0
          %947 = vst [vmem:[#allocation4 + $0x70] sm:$0xff] 0.0
          %948 = vst.msk [vmem:[#allocation4 + $0x78] sm:$0xff] %vm939, 0.0
          %949 = vst [vmem:[#allocation4 + $0x80] sm:$0xff] 0.0
          %950 = vst [vmem:[#allocation4 + $0x88] sm:$0xff] 0.0
          %951 = vst [vmem:[#allocation4 + $0x90] sm:$0xff] 0.0
          %952 = vst [vmem:[#allocation4 + $0x98] sm:$0xff] 0.0
          %953 = vst [vmem:[#allocation4 + $0xa0] sm:$0xff] 0.0
          %954 = vst [vmem:[#allocation4 + $0xa8] sm:$0xff] 0.0
          %955 = vst [vmem:[#allocation4 + $0xb0] sm:$0xff] 0.0
          %956 = vst.msk [vmem:[#allocation4 + $0xb8] sm:$0xff] %vm939, 0.0
        $region120: #{smile_classifier_forward.1} parent=111 // pred_fallthru
          _
        %v957 = vld [vmem:[%s805] sm:$0xff]
        %v958 = vld [vmem:[%s805 + $0x8] sm:$0xff]
        %v959 = vld [vmem:[%s811] sm:$0xff]
        %v960 = vld [vmem:[%s811 + $0x8] sm:$0xff]
        %v961 = vld [vmem:[%s817] sm:$0xff]
        %v962 = vld [vmem:[%s817 + $0x8] sm:$0xff]
        %v963 = vpack.c.bf16 %v959, %v957
        %v964 = vpack.c.bf16 %v960, %v958
        %v965 = vpack.c.bf16 %v961, %v961
        %v966 = vpack.c.bf16 %v962, %v962
        %v967 = vld [vmem:[#allocation2] sm:$0xff]
        %v968 = vld [vmem:[#allocation2 + $0x8] sm:$0xff]
        %v969 = vld [vmem:[#allocation2 + $0x10] sm:$0xff]
        %v970 = vld [vmem:[#allocation2 + $0x18] sm:$0xff]
        %v971 = vld [vmem:[#allocation2 + $0x20] sm:$0xff]
        %v972 = vld [vmem:[#allocation2 + $0x28] sm:$0xff]
        %v973 = vld [vmem:[#allocation2 + $0x30] sm:$0xff]
        %v974 = vld [vmem:[#allocation2 + $0x38] sm:$0xff]
        %v975 = vld [vmem:[#allocation2 + $0x40] sm:$0xff]
        %v976 = vld [vmem:[#allocation2 + $0x48] sm:$0xff]
        %v977 = vld [vmem:[#allocation2 + $0x50] sm:$0xff]
        %v978 = vld [vmem:[#allocation2 + $0x58] sm:$0xff]
        %v979 = vld [vmem:[#allocation2 + $0x60] sm:$0xff]
        %v980 = vld [vmem:[#allocation2 + $0x68] sm:$0xff]
        %v981 = vld [vmem:[#allocation2 + $0x70] sm:$0xff]
        %v982 = vld [vmem:[#allocation2 + $0x78] sm:$0xff]
        %v983 = vld [vmem:[#allocation2 + $0x80] sm:$0xff]
        %v984 = vld [vmem:[#allocation2 + $0x88] sm:$0xff]
        %v985 = vld [vmem:[#allocation2 + $0x90] sm:$0xff]
        %v986 = vld [vmem:[#allocation2 + $0x98] sm:$0xff]
        %v987 = vld [vmem:[#allocation2 + $0xa0] sm:$0xff]
        %v988 = vld [vmem:[#allocation2 + $0xa8] sm:$0xff]
        %v989 = vld [vmem:[#allocation2 + $0xb0] sm:$0xff]
        %v990 = vld [vmem:[#allocation2 + $0xb8] sm:$0xff]
        %v991 = vld [vmem:[#allocation2 + $0xc0] sm:$0xff]
        %v992 = vld [vmem:[#allocation2 + $0xc8] sm:$0xff]
        %v993 = vld [vmem:[#allocation2 + $0xd0] sm:$0xff]
        %v994 = vld [vmem:[#allocation2 + $0xd8] sm:$0xff]
        %v995 = vld [vmem:[#allocation2 + $0xe0] sm:$0xff]
        %v996 = vld [vmem:[#allocation2 + $0xe8] sm:$0xff]
        %v997 = vld [vmem:[#allocation2 + $0xf0] sm:$0xff]
        %v998 = vld [vmem:[#allocation2 + $0xf8] sm:$0xff]
        %v999 = vld [vmem:[#allocation2 + $0x100] sm:$0xff]
        %v1000 = vld [vmem:[#allocation2 + $0x108] sm:$0xff]
        %v1001 = vld [vmem:[#allocation2 + $0x110] sm:$0xff]
        %v1002 = vld [vmem:[#allocation2 + $0x118] sm:$0xff]
        %v1003 = vld [vmem:[#allocation2 + $0x120] sm:$0xff]
        %v1004 = vld [vmem:[#allocation2 + $0x128] sm:$0xff]
        %v1005 = vld [vmem:[#allocation2 + $0x130] sm:$0xff]
        %v1006 = vld [vmem:[#allocation2 + $0x138] sm:$0xff]
        %v1007 = vld [vmem:[#allocation2 + $0x140] sm:$0xff]
        %v1008 = vld [vmem:[#allocation2 + $0x148] sm:$0xff]
        %v1009 = vld [vmem:[#allocation2 + $0x150] sm:$0xff]
        %v1010 = vld [vmem:[#allocation2 + $0x158] sm:$0xff]
        %v1011 = vld [vmem:[#allocation2 + $0x160] sm:$0xff]
        %v1012 = vld [vmem:[#allocation2 + $0x168] sm:$0xff]
        %v1013 = vld [vmem:[#allocation2 + $0x170] sm:$0xff]
        %v1014 = vld [vmem:[#allocation2 + $0x178] sm:$0xff]
        %v1015 = vld [vmem:[%s824] sm:$0xff]
        %v1016 = vld [vmem:[%s824 + $0x8] sm:$0xff]
        %v1017 = vld [vmem:[%s824 + $0x10] sm:$0xff]
        %v1018 = vld [vmem:[%s824 + $0x18] sm:$0xff]
        %v1019 = vld [vmem:[%s824 + $0x20] sm:$0xff]
        %v1020 = vld [vmem:[%s824 + $0x28] sm:$0xff]
        %v1021 = vld [vmem:[%s824 + $0x30] sm:$0xff]
        %v1022 = vld [vmem:[%s824 + $0x38] sm:$0xff]
        %v1023 = vld [vmem:[%s824 + $0x40] sm:$0xff]
        %v1024 = vld [vmem:[%s824 + $0x48] sm:$0xff]
        %v1025 = vld [vmem:[%s824 + $0x50] sm:$0xff]
        %v1026 = vld [vmem:[%s824 + $0x58] sm:$0xff]
        %v1027 = vld [vmem:[%s824 + $0x60] sm:$0xff]
        %v1028 = vld [vmem:[%s824 + $0x68] sm:$0xff]
        %v1029 = vld [vmem:[%s824 + $0x70] sm:$0xff]
        %v1030 = vld [vmem:[%s824 + $0x78] sm:$0xff]
        %v1031 = vld [vmem:[%s824 + $0x80] sm:$0xff]
        %v1032 = vld [vmem:[%s824 + $0x88] sm:$0xff]
        %v1033 = vld [vmem:[%s824 + $0x90] sm:$0xff]
        %v1034 = vld [vmem:[%s824 + $0x98] sm:$0xff]
        %v1035 = vld [vmem:[%s824 + $0xa0] sm:$0xff]
        %v1036 = vld [vmem:[%s824 + $0xa8] sm:$0xff]
        %v1037 = vld [vmem:[%s824 + $0xb0] sm:$0xff]
        %v1038 = vld [vmem:[%s824 + $0xb8] sm:$0xff]
        %v1039 = vld [vmem:[%s824 + $0xc0] sm:$0xff]
        %v1040 = vld [vmem:[%s824 + $0xc8] sm:$0xff]
        %v1041 = vld [vmem:[%s824 + $0xd0] sm:$0xff]
        %v1042 = vld [vmem:[%s824 + $0xd8] sm:$0xff]
        %v1043 = vld [vmem:[%s824 + $0xe0] sm:$0xff]
        %v1044 = vld [vmem:[%s824 + $0xe8] sm:$0xff]
        %v1045 = vld [vmem:[%s824 + $0xf0] sm:$0xff]
        %v1046 = vld [vmem:[%s824 + $0xf8] sm:$0xff]
        %v1047 = vld [vmem:[%s824 + $0x100] sm:$0xff]
        %v1048 = vld [vmem:[%s824 + $0x108] sm:$0xff]
        %v1049 = vld [vmem:[%s824 + $0x110] sm:$0xff]
        %v1050 = vld [vmem:[%s824 + $0x118] sm:$0xff]
        %v1051 = vld [vmem:[%s824 + $0x120] sm:$0xff]
        %v1052 = vld [vmem:[%s824 + $0x128] sm:$0xff]
        %v1053 = vld [vmem:[%s824 + $0x130] sm:$0xff]
        %v1054 = vld [vmem:[%s824 + $0x138] sm:$0xff]
        %v1055 = vld [vmem:[%s824 + $0x140] sm:$0xff]
        %v1056 = vld [vmem:[%s824 + $0x148] sm:$0xff]
        %v1057 = vld [vmem:[%s824 + $0x150] sm:$0xff]
        %v1058 = vld [vmem:[%s824 + $0x158] sm:$0xff]
        %v1059 = vld [vmem:[%s824 + $0x160] sm:$0xff]
        %v1060 = vld [vmem:[%s824 + $0x168] sm:$0xff]
        %v1061 = vld [vmem:[%s824 + $0x170] sm:$0xff]
        %v1062 = vld [vmem:[%s824 + $0x178] sm:$0xff]
        %v1063 = vld [vmem:[%s824 + $0x180] sm:$0xff]
        %v1064 = vld [vmem:[%s824 + $0x188] sm:$0xff]
        %v1065 = vld [vmem:[%s824 + $0x190] sm:$0xff]
        %v1066 = vld [vmem:[%s824 + $0x198] sm:$0xff]
        %v1067 = vld [vmem:[%s824 + $0x1a0] sm:$0xff]
        %v1068 = vld [vmem:[%s824 + $0x1a8] sm:$0xff]
        %v1069 = vld [vmem:[%s824 + $0x1b0] sm:$0xff]
        %v1070 = vld [vmem:[%s824 + $0x1b8] sm:$0xff]
        %v1071 = vld [vmem:[%s824 + $0x1c0] sm:$0xff]
        %v1072 = vld [vmem:[%s824 + $0x1c8] sm:$0xff]
        %v1073 = vld [vmem:[%s824 + $0x1d0] sm:$0xff]
        %v1074 = vld [vmem:[%s824 + $0x1d8] sm:$0xff]
        %v1075 = vld [vmem:[%s824 + $0x1e0] sm:$0xff]
        %v1076 = vld [vmem:[%s824 + $0x1e8] sm:$0xff]
        %v1077 = vld [vmem:[%s824 + $0x1f0] sm:$0xff]
        %v1078 = vld [vmem:[%s824 + $0x1f8] sm:$0xff]
        %v1079 = vld [vmem:[%s824 + $0x200] sm:$0xff]
        %v1080 = vld [vmem:[%s824 + $0x208] sm:$0xff]
        %v1081 = vld [vmem:[%s824 + $0x210] sm:$0xff]
        %v1082 = vld [vmem:[%s824 + $0x218] sm:$0xff]
        %v1083 = vld [vmem:[%s824 + $0x220] sm:$0xff]
        %v1084 = vld [vmem:[%s824 + $0x228] sm:$0xff]
        %v1085 = vld [vmem:[%s824 + $0x230] sm:$0xff]
        %v1086 = vld [vmem:[%s824 + $0x238] sm:$0xff]
        %v1087 = vld [vmem:[%s824 + $0x240] sm:$0xff]
        %v1088 = vld [vmem:[%s824 + $0x248] sm:$0xff]
        %v1089 = vld [vmem:[%s824 + $0x250] sm:$0xff]
        %v1090 = vld [vmem:[%s824 + $0x258] sm:$0xff]
        %v1091 = vld [vmem:[%s824 + $0x260] sm:$0xff]
        %v1092 = vld [vmem:[%s824 + $0x268] sm:$0xff]
        %v1093 = vld [vmem:[%s824 + $0x270] sm:$0xff]
        %v1094 = vld [vmem:[%s824 + $0x278] sm:$0xff]
        %v1095 = vld [vmem:[%s824 + $0x280] sm:$0xff]
        %v1096 = vld [vmem:[%s824 + $0x288] sm:$0xff]
        %v1097 = vld [vmem:[%s824 + $0x290] sm:$0xff]
        %v1098 = vld [vmem:[%s824 + $0x298] sm:$0xff]
        %v1099 = vld [vmem:[%s824 + $0x2a0] sm:$0xff]
        %v1100 = vld [vmem:[%s824 + $0x2a8] sm:$0xff]
        %v1101 = vld [vmem:[%s824 + $0x2b0] sm:$0xff]
        %v1102 = vld [vmem:[%s824 + $0x2b8] sm:$0xff]
        %v1103 = vld [vmem:[%s824 + $0x2c0] sm:$0xff]
        %v1104 = vld [vmem:[%s824 + $0x2c8] sm:$0xff]
        %v1105 = vld [vmem:[%s824 + $0x2d0] sm:$0xff]
        %v1106 = vld [vmem:[%s824 + $0x2d8] sm:$0xff]
        %v1107 = vld [vmem:[%s824 + $0x2e0] sm:$0xff]
        %v1108 = vld [vmem:[%s824 + $0x2e8] sm:$0xff]
        %v1109 = vld [vmem:[%s824 + $0x2f0] sm:$0xff]
        %v1110 = vld [vmem:[%s824 + $0x2f8] sm:$0xff]
        %v1111 = vld [vmem:[%s824 + $0x300] sm:$0xff]
        %v1112 = vld [vmem:[%s824 + $0x308] sm:$0xff]
        %v1113 = vld [vmem:[%s824 + $0x310] sm:$0xff]
        %v1114 = vld [vmem:[%s824 + $0x318] sm:$0xff]
        %v1115 = vld [vmem:[%s824 + $0x320] sm:$0xff]
        %v1116 = vld [vmem:[%s824 + $0x328] sm:$0xff]
        %v1117 = vld [vmem:[%s824 + $0x330] sm:$0xff]
        %v1118 = vld [vmem:[%s824 + $0x338] sm:$0xff]
        %v1119 = vld [vmem:[%s824 + $0x340] sm:$0xff]
        %v1120 = vld [vmem:[%s824 + $0x348] sm:$0xff]
        %v1121 = vld [vmem:[%s824 + $0x350] sm:$0xff]
        %v1122 = vld [vmem:[%s824 + $0x358] sm:$0xff]
        %v1123 = vld [vmem:[%s824 + $0x360] sm:$0xff]
        %v1124 = vld [vmem:[%s824 + $0x368] sm:$0xff]
        %v1125 = vld [vmem:[%s824 + $0x370] sm:$0xff]
        %v1126 = vld [vmem:[%s824 + $0x378] sm:$0xff]
        %v1127 = vld [vmem:[%s824 + $0x380] sm:$0xff]
        %v1128 = vld [vmem:[%s824 + $0x388] sm:$0xff]
        %v1129 = vld [vmem:[%s824 + $0x390] sm:$0xff]
        %v1130 = vld [vmem:[%s824 + $0x398] sm:$0xff]
        %v1131 = vld [vmem:[%s824 + $0x3a0] sm:$0xff]
        %v1132 = vld [vmem:[%s824 + $0x3a8] sm:$0xff]
        %v1133 = vld [vmem:[%s824 + $0x3b0] sm:$0xff]
        %v1134 = vld [vmem:[%s824 + $0x3b8] sm:$0xff]
        %v1135 = vld [vmem:[%s824 + $0x3c0] sm:$0xff]
        %v1136 = vld [vmem:[%s824 + $0x3c8] sm:$0xff]
        %v1137 = vld [vmem:[%s824 + $0x3d0] sm:$0xff]
        %v1138 = vld [vmem:[%s824 + $0x3d8] sm:$0xff]
        %v1139 = vld [vmem:[%s824 + $0x3e0] sm:$0xff]
        %v1140 = vld [vmem:[%s824 + $0x3e8] sm:$0xff]
        %v1141 = vld [vmem:[%s824 + $0x3f0] sm:$0xff]
        %v1142 = vld [vmem:[%s824 + $0x3f8] sm:$0xff]
        %v1143 = vld [vmem:[%s824 + $0x400] sm:$0xff]
        %v1144 = vld [vmem:[%s824 + $0x408] sm:$0xff]
        %v1145 = vld [vmem:[%s824 + $0x410] sm:$0xff]
        %v1146 = vld [vmem:[%s824 + $0x418] sm:$0xff]
        %v1147 = vld [vmem:[%s824 + $0x420] sm:$0xff]
        %v1148 = vld [vmem:[%s824 + $0x428] sm:$0xff]
        %v1149 = vld [vmem:[%s824 + $0x430] sm:$0xff]
        %v1150 = vld [vmem:[%s824 + $0x438] sm:$0xff]
        %v1151 = vld [vmem:[%s824 + $0x440] sm:$0xff]
        %v1152 = vld [vmem:[%s824 + $0x448] sm:$0xff]
        %v1153 = vld [vmem:[%s824 + $0x450] sm:$0xff]
        %v1154 = vld [vmem:[%s824 + $0x458] sm:$0xff]
        %v1155 = vld [vmem:[%s824 + $0x460] sm:$0xff]
        %v1156 = vld [vmem:[%s824 + $0x468] sm:$0xff]
        %v1157 = vld [vmem:[%s824 + $0x470] sm:$0xff]
        %v1158 = vld [vmem:[%s824 + $0x478] sm:$0xff]
        %v1159 = vld [vmem:[%s824 + $0x480] sm:$0xff]
        %v1160 = vld [vmem:[%s824 + $0x488] sm:$0xff]
        %v1161 = vld [vmem:[%s824 + $0x490] sm:$0xff]
        %v1162 = vld [vmem:[%s824 + $0x498] sm:$0xff]
        %v1163 = vld [vmem:[%s824 + $0x4a0] sm:$0xff]
        %v1164 = vld [vmem:[%s824 + $0x4a8] sm:$0xff]
        %v1165 = vld [vmem:[%s824 + $0x4b0] sm:$0xff]
        %v1166 = vld [vmem:[%s824 + $0x4b8] sm:$0xff]
        %v1167 = vld [vmem:[%s824 + $0x4c0] sm:$0xff]
        %v1168 = vld [vmem:[%s824 + $0x4c8] sm:$0xff]
        %v1169 = vld [vmem:[%s824 + $0x4d0] sm:$0xff]
        %v1170 = vld [vmem:[%s824 + $0x4d8] sm:$0xff]
        %v1171 = vld [vmem:[%s824 + $0x4e0] sm:$0xff]
        %v1172 = vld [vmem:[%s824 + $0x4e8] sm:$0xff]
        %v1173 = vld [vmem:[%s824 + $0x4f0] sm:$0xff]
        %v1174 = vld [vmem:[%s824 + $0x4f8] sm:$0xff]
        %v1175 = vld [vmem:[%s824 + $0x500] sm:$0xff]
        %v1176 = vld [vmem:[%s824 + $0x508] sm:$0xff]
        %v1177 = vld [vmem:[%s824 + $0x510] sm:$0xff]
        %v1178 = vld [vmem:[%s824 + $0x518] sm:$0xff]
        %v1179 = vld [vmem:[%s824 + $0x520] sm:$0xff]
        %v1180 = vld [vmem:[%s824 + $0x528] sm:$0xff]
        %v1181 = vld [vmem:[%s824 + $0x530] sm:$0xff]
        %v1182 = vld [vmem:[%s824 + $0x538] sm:$0xff]
        %v1183 = vld [vmem:[%s824 + $0x540] sm:$0xff]
        %v1184 = vld [vmem:[%s824 + $0x548] sm:$0xff]
        %v1185 = vld [vmem:[%s824 + $0x550] sm:$0xff]
        %v1186 = vld [vmem:[%s824 + $0x558] sm:$0xff]
        %v1187 = vld [vmem:[%s824 + $0x560] sm:$0xff]
        %v1188 = vld [vmem:[%s824 + $0x568] sm:$0xff]
        %v1189 = vld [vmem:[%s824 + $0x570] sm:$0xff]
        %v1190 = vld [vmem:[%s824 + $0x578] sm:$0xff]
        %v1191 = vld [vmem:[%s824 + $0x580] sm:$0xff]
        %v1192 = vld [vmem:[%s824 + $0x588] sm:$0xff]
        %v1193 = vld [vmem:[%s824 + $0x590] sm:$0xff]
        %v1194 = vld [vmem:[%s824 + $0x598] sm:$0xff]
        %v1195 = vld [vmem:[%s824 + $0x5a0] sm:$0xff]
        %v1196 = vld [vmem:[%s824 + $0x5a8] sm:$0xff]
        %v1197 = vld [vmem:[%s824 + $0x5b0] sm:$0xff]
        %v1198 = vld [vmem:[%s824 + $0x5b8] sm:$0xff]
        %v1199 = vld [vmem:[%s824 + $0x5c0] sm:$0xff]
        %v1200 = vld [vmem:[%s824 + $0x5c8] sm:$0xff]
        %v1201 = vld [vmem:[%s824 + $0x5d0] sm:$0xff]
        %v1202 = vld [vmem:[%s824 + $0x5d8] sm:$0xff]
        %v1203 = vld [vmem:[%s824 + $0x5e0] sm:$0xff]
        %v1204 = vld [vmem:[%s824 + $0x5e8] sm:$0xff]
        %v1205 = vld [vmem:[%s824 + $0x5f0] sm:$0xff]
        %v1206 = vld [vmem:[%s824 + $0x5f8] sm:$0xff]
        %v1207 = vld [vmem:[%s824 + $0x600] sm:$0xff]
        %v1208 = vld [vmem:[%s824 + $0x608] sm:$0xff]
        %v1209 = vld [vmem:[%s824 + $0x610] sm:$0xff]
        %v1210 = vld [vmem:[%s824 + $0x618] sm:$0xff]
        %v1211 = vld [vmem:[%s824 + $0x620] sm:$0xff]
        %v1212 = vld [vmem:[%s824 + $0x628] sm:$0xff]
        %v1213 = vld [vmem:[%s824 + $0x630] sm:$0xff]
        %v1214 = vld [vmem:[%s824 + $0x638] sm:$0xff]
        %v1215 = vld [vmem:[%s824 + $0x640] sm:$0xff]
        %v1216 = vld [vmem:[%s824 + $0x648] sm:$0xff]
        %v1217 = vld [vmem:[%s824 + $0x650] sm:$0xff]
        %v1218 = vld [vmem:[%s824 + $0x658] sm:$0xff]
        %v1219 = vld [vmem:[%s824 + $0x660] sm:$0xff]
        %v1220 = vld [vmem:[%s824 + $0x668] sm:$0xff]
        %v1221 = vld [vmem:[%s824 + $0x670] sm:$0xff]
        %v1222 = vld [vmem:[%s824 + $0x678] sm:$0xff]
        %v1223 = vld [vmem:[%s824 + $0x680] sm:$0xff]
        %v1224 = vld [vmem:[%s824 + $0x688] sm:$0xff]
        %v1225 = vld [vmem:[%s824 + $0x690] sm:$0xff]
        %v1226 = vld [vmem:[%s824 + $0x698] sm:$0xff]
        %v1227 = vld [vmem:[%s824 + $0x6a0] sm:$0xff]
        %v1228 = vld [vmem:[%s824 + $0x6a8] sm:$0xff]
        %v1229 = vld [vmem:[%s824 + $0x6b0] sm:$0xff]
        %v1230 = vld [vmem:[%s824 + $0x6b8] sm:$0xff]
        %v1231 = vld [vmem:[%s824 + $0x6c0] sm:$0xff]
        %v1232 = vld [vmem:[%s824 + $0x6c8] sm:$0xff]
        %v1233 = vld [vmem:[%s824 + $0x6d0] sm:$0xff]
        %v1234 = vld [vmem:[%s824 + $0x6d8] sm:$0xff]
        %v1235 = vld [vmem:[%s824 + $0x6e0] sm:$0xff]
        %v1236 = vld [vmem:[%s824 + $0x6e8] sm:$0xff]
        %v1237 = vld [vmem:[%s824 + $0x6f0] sm:$0xff]
        %v1238 = vld [vmem:[%s824 + $0x6f8] sm:$0xff]
        %v1239 = vld [vmem:[%s824 + $0x700] sm:$0xff]
        %v1240 = vld [vmem:[%s824 + $0x708] sm:$0xff]
        %v1241 = vld [vmem:[%s824 + $0x710] sm:$0xff]
        %v1242 = vld [vmem:[%s824 + $0x718] sm:$0xff]
        %v1243 = vld [vmem:[%s824 + $0x720] sm:$0xff]
        %v1244 = vld [vmem:[%s824 + $0x728] sm:$0xff]
        %v1245 = vld [vmem:[%s824 + $0x730] sm:$0xff]
        %v1246 = vld [vmem:[%s824 + $0x738] sm:$0xff]
        %v1247 = vld [vmem:[%s824 + $0x740] sm:$0xff]
        %v1248 = vld [vmem:[%s824 + $0x748] sm:$0xff]
        %v1249 = vld [vmem:[%s824 + $0x750] sm:$0xff]
        %v1250 = vld [vmem:[%s824 + $0x758] sm:$0xff]
        %v1251 = vld [vmem:[%s824 + $0x760] sm:$0xff]
        %v1252 = vld [vmem:[%s824 + $0x768] sm:$0xff]
        %v1253 = vld [vmem:[%s824 + $0x770] sm:$0xff]
        %v1254 = vld [vmem:[%s824 + $0x778] sm:$0xff]
        %v1255 = vld [vmem:[%s824 + $0x780] sm:$0xff]
        %v1256 = vld [vmem:[%s824 + $0x788] sm:$0xff]
        %v1257 = vld [vmem:[%s824 + $0x790] sm:$0xff]
        %v1258 = vld [vmem:[%s824 + $0x798] sm:$0xff]
        %v1259 = vld [vmem:[%s824 + $0x7a0] sm:$0xff]
        %v1260 = vld [vmem:[%s824 + $0x7a8] sm:$0xff]
        %v1261 = vld [vmem:[%s824 + $0x7b0] sm:$0xff]
        %v1262 = vld [vmem:[%s824 + $0x7b8] sm:$0xff]
        %v1263 = vld [vmem:[%s824 + $0x7c0] sm:$0xff]
        %v1264 = vld [vmem:[%s824 + $0x7c8] sm:$0xff]
        %v1265 = vld [vmem:[%s824 + $0x7d0] sm:$0xff]
        %v1266 = vld [vmem:[%s824 + $0x7d8] sm:$0xff]
        %v1267 = vld [vmem:[%s824 + $0x7e0] sm:$0xff]
        %v1268 = vld [vmem:[%s824 + $0x7e8] sm:$0xff]
        %v1269 = vld [vmem:[%s824 + $0x7f0] sm:$0xff]
        %v1270 = vld [vmem:[%s824 + $0x7f8] sm:$0xff]
        %v1527 = vunpack.c.l.b16 %v1015
        %v1528 = vunpack.c.h.b16 %v1015
        %v1529 = vunpack.c.l.b16 %v1016
        %v1530 = vunpack.c.h.b16 %v1016
        %v1531 = vunpack.c.l.b16 %v1017
        %v1532 = vunpack.c.h.b16 %v1017
        %v1533 = vunpack.c.l.b16 %v1018
        %v1534 = vunpack.c.h.b16 %v1018
        %v1535 = vunpack.c.l.b16 %v1019
        %v1536 = vunpack.c.h.b16 %v1019
        %v1537 = vunpack.c.l.b16 %v1020
        %v1538 = vunpack.c.h.b16 %v1020
        %v1539 = vunpack.c.l.b16 %v1021
        %v1540 = vunpack.c.h.b16 %v1021
        %v1541 = vunpack.c.l.b16 %v1022
        %v1542 = vunpack.c.h.b16 %v1022
        %v1543 = vunpack.c.l.b16 %v1023
        %v1544 = vunpack.c.h.b16 %v1023
        %v1545 = vunpack.c.l.b16 %v1024
        %v1546 = vunpack.c.h.b16 %v1024
        %v1547 = vunpack.c.l.b16 %v1025
        %v1548 = vunpack.c.h.b16 %v1025
        %v1549 = vunpack.c.l.b16 %v1026
        %v1550 = vunpack.c.h.b16 %v1026
        %v1551 = vunpack.c.l.b16 %v1027
        %v1552 = vunpack.c.h.b16 %v1027
        %v1553 = vunpack.c.l.b16 %v1028
        %v1554 = vunpack.c.h.b16 %v1028
        %v1555 = vunpack.c.l.b16 %v1029
        %v1556 = vunpack.c.h.b16 %v1029
        %v1557 = vunpack.c.l.b16 %v1030
        %v1558 = vunpack.c.h.b16 %v1030
        %v1559 = vunpack.c.l.b16 %v1031
        %v1560 = vunpack.c.h.b16 %v1031
        %v1561 = vunpack.c.l.b16 %v1032
        %v1562 = vunpack.c.h.b16 %v1032
        %v1563 = vunpack.c.l.b16 %v1033
        %v1564 = vunpack.c.h.b16 %v1033
        %v1565 = vunpack.c.l.b16 %v1034
        %v1566 = vunpack.c.h.b16 %v1034
        %v1567 = vunpack.c.l.b16 %v1035
        %v1568 = vunpack.c.h.b16 %v1035
        %v1569 = vunpack.c.l.b16 %v1036
        %v1570 = vunpack.c.h.b16 %v1036
        %v1571 = vunpack.c.l.b16 %v1037
        %v1572 = vunpack.c.h.b16 %v1037
        %v1573 = vunpack.c.l.b16 %v1038
        %v1574 = vunpack.c.h.b16 %v1038
        %v1575 = vunpack.c.l.b16 %v1039
        %v1576 = vunpack.c.h.b16 %v1039
        %v1577 = vunpack.c.l.b16 %v1040
        %v1578 = vunpack.c.h.b16 %v1040
        %v1579 = vunpack.c.l.b16 %v1041
        %v1580 = vunpack.c.h.b16 %v1041
        %v1581 = vunpack.c.l.b16 %v1042
        %v1582 = vunpack.c.h.b16 %v1042
        %v1583 = vunpack.c.l.b16 %v1043
        %v1584 = vunpack.c.h.b16 %v1043
        %v1585 = vunpack.c.l.b16 %v1044
        %v1586 = vunpack.c.h.b16 %v1044
        %v1587 = vunpack.c.l.b16 %v1045
        %v1588 = vunpack.c.h.b16 %v1045
        %v1589 = vunpack.c.l.b16 %v1046
        %v1590 = vunpack.c.h.b16 %v1046
        %v1591 = vunpack.c.l.b16 %v1047
        %v1592 = vunpack.c.h.b16 %v1047
        %v1593 = vunpack.c.l.b16 %v1048
        %v1594 = vunpack.c.h.b16 %v1048
        %v1595 = vunpack.c.l.b16 %v1049
        %v1596 = vunpack.c.h.b16 %v1049
        %v1597 = vunpack.c.l.b16 %v1050
        %v1598 = vunpack.c.h.b16 %v1050
        %v1599 = vunpack.c.l.b16 %v1051
        %v1600 = vunpack.c.h.b16 %v1051
        %v1601 = vunpack.c.l.b16 %v1052
        %v1602 = vunpack.c.h.b16 %v1052
        %v1603 = vunpack.c.l.b16 %v1053
        %v1604 = vunpack.c.h.b16 %v1053
        %v1605 = vunpack.c.l.b16 %v1054
        %v1606 = vunpack.c.h.b16 %v1054
        %v1607 = vunpack.c.l.b16 %v1055
        %v1608 = vunpack.c.h.b16 %v1055
        %v1609 = vunpack.c.l.b16 %v1056
        %v1610 = vunpack.c.h.b16 %v1056
        %v1611 = vunpack.c.l.b16 %v1057
        %v1612 = vunpack.c.h.b16 %v1057
        %v1613 = vunpack.c.l.b16 %v1058
        %v1614 = vunpack.c.h.b16 %v1058
        %v1615 = vunpack.c.l.b16 %v1059
        %v1616 = vunpack.c.h.b16 %v1059
        %v1617 = vunpack.c.l.b16 %v1060
        %v1618 = vunpack.c.h.b16 %v1060
        %v1619 = vunpack.c.l.b16 %v1061
        %v1620 = vunpack.c.h.b16 %v1061
        %v1621 = vunpack.c.l.b16 %v1062
        %v1622 = vunpack.c.h.b16 %v1062
        %v1623 = vunpack.c.l.b16 %v1063
        %v1624 = vunpack.c.h.b16 %v1063
        %v1625 = vunpack.c.l.b16 %v1064
        %v1626 = vunpack.c.h.b16 %v1064
        %v1627 = vunpack.c.l.b16 %v1065
        %v1628 = vunpack.c.h.b16 %v1065
        %v1629 = vunpack.c.l.b16 %v1066
        %v1630 = vunpack.c.h.b16 %v1066
        %v1631 = vunpack.c.l.b16 %v1067
        %v1632 = vunpack.c.h.b16 %v1067
        %v1633 = vunpack.c.l.b16 %v1068
        %v1634 = vunpack.c.h.b16 %v1068
        %v1635 = vunpack.c.l.b16 %v1069
        %v1636 = vunpack.c.h.b16 %v1069
        %v1637 = vunpack.c.l.b16 %v1070
        %v1638 = vunpack.c.h.b16 %v1070
        %v1639 = vunpack.c.l.b16 %v1071
        %v1640 = vunpack.c.h.b16 %v1071
        %v1641 = vunpack.c.l.b16 %v1072
        %v1642 = vunpack.c.h.b16 %v1072
        %v1643 = vunpack.c.l.b16 %v1073
        %v1644 = vunpack.c.h.b16 %v1073
        %v1645 = vunpack.c.l.b16 %v1074
        %v1646 = vunpack.c.h.b16 %v1074
        %v1647 = vunpack.c.l.b16 %v1075
        %v1648 = vunpack.c.h.b16 %v1075
        %v1649 = vunpack.c.l.b16 %v1076
        %v1650 = vunpack.c.h.b16 %v1076
        %v1651 = vunpack.c.l.b16 %v1077
        %v1652 = vunpack.c.h.b16 %v1077
        %v1653 = vunpack.c.l.b16 %v1078
        %v1654 = vunpack.c.h.b16 %v1078
        %v1655 = vunpack.c.l.b16 %v1079
        %v1656 = vunpack.c.h.b16 %v1079
        %v1657 = vunpack.c.l.b16 %v1080
        %v1658 = vunpack.c.h.b16 %v1080
        %v1659 = vunpack.c.l.b16 %v1081
        %v1660 = vunpack.c.h.b16 %v1081
        %v1661 = vunpack.c.l.b16 %v1082
        %v1662 = vunpack.c.h.b16 %v1082
        %v1663 = vunpack.c.l.b16 %v1083
        %v1664 = vunpack.c.h.b16 %v1083
        %v1665 = vunpack.c.l.b16 %v1084
        %v1666 = vunpack.c.h.b16 %v1084
        %v1667 = vunpack.c.l.b16 %v1085
        %v1668 = vunpack.c.h.b16 %v1085
        %v1669 = vunpack.c.l.b16 %v1086
        %v1670 = vunpack.c.h.b16 %v1086
        %v1671 = vunpack.c.l.b16 %v1087
        %v1672 = vunpack.c.h.b16 %v1087
        %v1673 = vunpack.c.l.b16 %v1088
        %v1674 = vunpack.c.h.b16 %v1088
        %v1675 = vunpack.c.l.b16 %v1089
        %v1676 = vunpack.c.h.b16 %v1089
        %v1677 = vunpack.c.l.b16 %v1090
        %v1678 = vunpack.c.h.b16 %v1090
        %v1679 = vunpack.c.l.b16 %v1091
        %v1680 = vunpack.c.h.b16 %v1091
        %v1681 = vunpack.c.l.b16 %v1092
        %v1682 = vunpack.c.h.b16 %v1092
        %v1683 = vunpack.c.l.b16 %v1093
        %v1684 = vunpack.c.h.b16 %v1093
        %v1685 = vunpack.c.l.b16 %v1094
        %v1686 = vunpack.c.h.b16 %v1094
        %v1687 = vunpack.c.l.b16 %v1095
        %v1688 = vunpack.c.h.b16 %v1095
        %v1689 = vunpack.c.l.b16 %v1096
        %v1690 = vunpack.c.h.b16 %v1096
        %v1691 = vunpack.c.l.b16 %v1097
        %v1692 = vunpack.c.h.b16 %v1097
        %v1693 = vunpack.c.l.b16 %v1098
        %v1694 = vunpack.c.h.b16 %v1098
        %v1695 = vunpack.c.l.b16 %v1099
        %v1696 = vunpack.c.h.b16 %v1099
        %v1697 = vunpack.c.l.b16 %v1100
        %v1698 = vunpack.c.h.b16 %v1100
        %v1699 = vunpack.c.l.b16 %v1101
        %v1700 = vunpack.c.h.b16 %v1101
        %v1701 = vunpack.c.l.b16 %v1102
        %v1702 = vunpack.c.h.b16 %v1102
        %v1703 = vunpack.c.l.b16 %v1103
        %v1704 = vunpack.c.h.b16 %v1103
        %v1705 = vunpack.c.l.b16 %v1104
        %v1706 = vunpack.c.h.b16 %v1104
        %v1707 = vunpack.c.l.b16 %v1105
        %v1708 = vunpack.c.h.b16 %v1105
        %v1709 = vunpack.c.l.b16 %v1106
        %v1710 = vunpack.c.h.b16 %v1106
        %v1711 = vunpack.c.l.b16 %v1107
        %v1712 = vunpack.c.h.b16 %v1107
        %v1713 = vunpack.c.l.b16 %v1108
        %v1714 = vunpack.c.h.b16 %v1108
        %v1715 = vunpack.c.l.b16 %v1109
        %v1716 = vunpack.c.h.b16 %v1109
        %v1717 = vunpack.c.l.b16 %v1110
        %v1718 = vunpack.c.h.b16 %v1110
        %v1719 = vunpack.c.l.b16 %v1111
        %v1720 = vunpack.c.h.b16 %v1111
        %v1721 = vunpack.c.l.b16 %v1112
        %v1722 = vunpack.c.h.b16 %v1112
        %v1723 = vunpack.c.l.b16 %v1113
        %v1724 = vunpack.c.h.b16 %v1113
        %v1725 = vunpack.c.l.b16 %v1114
        %v1726 = vunpack.c.h.b16 %v1114
        %v1727 = vunpack.c.l.b16 %v1115
        %v1728 = vunpack.c.h.b16 %v1115
        %v1729 = vunpack.c.l.b16 %v1116
        %v1730 = vunpack.c.h.b16 %v1116
        %v1731 = vunpack.c.l.b16 %v1117
        %v1732 = vunpack.c.h.b16 %v1117
        %v1733 = vunpack.c.l.b16 %v1118
        %v1734 = vunpack.c.h.b16 %v1118
        %v1735 = vunpack.c.l.b16 %v1119
        %v1736 = vunpack.c.h.b16 %v1119
        %v1737 = vunpack.c.l.b16 %v1120
        %v1738 = vunpack.c.h.b16 %v1120
        %v1739 = vunpack.c.l.b16 %v1121
        %v1740 = vunpack.c.h.b16 %v1121
        %v1741 = vunpack.c.l.b16 %v1122
        %v1742 = vunpack.c.h.b16 %v1122
        %v1743 = vunpack.c.l.b16 %v1123
        %v1744 = vunpack.c.h.b16 %v1123
        %v1745 = vunpack.c.l.b16 %v1124
        %v1746 = vunpack.c.h.b16 %v1124
        %v1747 = vunpack.c.l.b16 %v1125
        %v1748 = vunpack.c.h.b16 %v1125
        %v1749 = vunpack.c.l.b16 %v1126
        %v1750 = vunpack.c.h.b16 %v1126
        %v1751 = vunpack.c.l.b16 %v1127
        %v1752 = vunpack.c.h.b16 %v1127
        %v1753 = vunpack.c.l.b16 %v1128
        %v1754 = vunpack.c.h.b16 %v1128
        %v1755 = vunpack.c.l.b16 %v1129
        %v1756 = vunpack.c.h.b16 %v1129
        %v1757 = vunpack.c.l.b16 %v1130
        %v1758 = vunpack.c.h.b16 %v1130
        %v1759 = vunpack.c.l.b16 %v1131
        %v1760 = vunpack.c.h.b16 %v1131
        %v1761 = vunpack.c.l.b16 %v1132
        %v1762 = vunpack.c.h.b16 %v1132
        %v1763 = vunpack.c.l.b16 %v1133
        %v1764 = vunpack.c.h.b16 %v1133
        %v1765 = vunpack.c.l.b16 %v1134
        %v1766 = vunpack.c.h.b16 %v1134
        %v1767 = vunpack.c.l.b16 %v1135
        %v1768 = vunpack.c.h.b16 %v1135
        %v1769 = vunpack.c.l.b16 %v1136
        %v1770 = vunpack.c.h.b16 %v1136
        %v1771 = vunpack.c.l.b16 %v1137
        %v1772 = vunpack.c.h.b16 %v1137
        %v1773 = vunpack.c.l.b16 %v1138
        %v1774 = vunpack.c.h.b16 %v1138
        %v1775 = vunpack.c.l.b16 %v1139
        %v1776 = vunpack.c.h.b16 %v1139
        %v1777 = vunpack.c.l.b16 %v1140
        %v1778 = vunpack.c.h.b16 %v1140
        %v1779 = vunpack.c.l.b16 %v1141
        %v1780 = vunpack.c.h.b16 %v1141
        %v1781 = vunpack.c.l.b16 %v1142
        %v1782 = vunpack.c.h.b16 %v1142
        %v1783 = vunpack.c.l.b16 %v1143
        %v1784 = vunpack.c.h.b16 %v1143
        %v1785 = vunpack.c.l.b16 %v1144
        %v1786 = vunpack.c.h.b16 %v1144
        %v1787 = vunpack.c.l.b16 %v1145
        %v1788 = vunpack.c.h.b16 %v1145
        %v1789 = vunpack.c.l.b16 %v1146
        %v1790 = vunpack.c.h.b16 %v1146
        %v1791 = vunpack.c.l.b16 %v1147
        %v1792 = vunpack.c.h.b16 %v1147
        %v1793 = vunpack.c.l.b16 %v1148
        %v1794 = vunpack.c.h.b16 %v1148
        %v1795 = vunpack.c.l.b16 %v1149
        %v1796 = vunpack.c.h.b16 %v1149
        %v1797 = vunpack.c.l.b16 %v1150
        %v1798 = vunpack.c.h.b16 %v1150
        %v1799 = vunpack.c.l.b16 %v1151
        %v1800 = vunpack.c.h.b16 %v1151
        %v1801 = vunpack.c.l.b16 %v1152
        %v1802 = vunpack.c.h.b16 %v1152
        %v1803 = vunpack.c.l.b16 %v1153
        %v1804 = vunpack.c.h.b16 %v1153
        %v1805 = vunpack.c.l.b16 %v1154
        %v1806 = vunpack.c.h.b16 %v1154
        %v1807 = vunpack.c.l.b16 %v1155
        %v1808 = vunpack.c.h.b16 %v1155
        %v1809 = vunpack.c.l.b16 %v1156
        %v1810 = vunpack.c.h.b16 %v1156
        %v1811 = vunpack.c.l.b16 %v1157
        %v1812 = vunpack.c.h.b16 %v1157
        %v1813 = vunpack.c.l.b16 %v1158
        %v1814 = vunpack.c.h.b16 %v1158
        %v1815 = vunpack.c.l.b16 %v1159
        %v1816 = vunpack.c.h.b16 %v1159
        %v1817 = vunpack.c.l.b16 %v1160
        %v1818 = vunpack.c.h.b16 %v1160
        %v1819 = vunpack.c.l.b16 %v1161
        %v1820 = vunpack.c.h.b16 %v1161
        %v1821 = vunpack.c.l.b16 %v1162
        %v1822 = vunpack.c.h.b16 %v1162
        %v1823 = vunpack.c.l.b16 %v1163
        %v1824 = vunpack.c.h.b16 %v1163
        %v1825 = vunpack.c.l.b16 %v1164
        %v1826 = vunpack.c.h.b16 %v1164
        %v1827 = vunpack.c.l.b16 %v1165
        %v1828 = vunpack.c.h.b16 %v1165
        %v1829 = vunpack.c.l.b16 %v1166
        %v1830 = vunpack.c.h.b16 %v1166
        %v1831 = vunpack.c.l.b16 %v1167
        %v1832 = vunpack.c.h.b16 %v1167
        %v1833 = vunpack.c.l.b16 %v1168
        %v1834 = vunpack.c.h.b16 %v1168
        %v1835 = vunpack.c.l.b16 %v1169
        %v1836 = vunpack.c.h.b16 %v1169
        %v1837 = vunpack.c.l.b16 %v1170
        %v1838 = vunpack.c.h.b16 %v1170
        %v1839 = vunpack.c.l.b16 %v1171
        %v1840 = vunpack.c.h.b16 %v1171
        %v1841 = vunpack.c.l.b16 %v1172
        %v1842 = vunpack.c.h.b16 %v1172
        %v1843 = vunpack.c.l.b16 %v1173
        %v1844 = vunpack.c.h.b16 %v1173
        %v1845 = vunpack.c.l.b16 %v1174
        %v1846 = vunpack.c.h.b16 %v1174
        %v1847 = vunpack.c.l.b16 %v1175
        %v1848 = vunpack.c.h.b16 %v1175
        %v1849 = vunpack.c.l.b16 %v1176
        %v1850 = vunpack.c.h.b16 %v1176
        %v1851 = vunpack.c.l.b16 %v1177
        %v1852 = vunpack.c.h.b16 %v1177
        %v1853 = vunpack.c.l.b16 %v1178
        %v1854 = vunpack.c.h.b16 %v1178
        %v1855 = vunpack.c.l.b16 %v1179
        %v1856 = vunpack.c.h.b16 %v1179
        %v1857 = vunpack.c.l.b16 %v1180
        %v1858 = vunpack.c.h.b16 %v1180
        %v1859 = vunpack.c.l.b16 %v1181
        %v1860 = vunpack.c.h.b16 %v1181
        %v1861 = vunpack.c.l.b16 %v1182
        %v1862 = vunpack.c.h.b16 %v1182
        %v1863 = vunpack.c.l.b16 %v1183
        %v1864 = vunpack.c.h.b16 %v1183
        %v1865 = vunpack.c.l.b16 %v1184
        %v1866 = vunpack.c.h.b16 %v1184
        %v1867 = vunpack.c.l.b16 %v1185
        %v1868 = vunpack.c.h.b16 %v1185
        %v1869 = vunpack.c.l.b16 %v1186
        %v1870 = vunpack.c.h.b16 %v1186
        %v1871 = vunpack.c.l.b16 %v1187
        %v1872 = vunpack.c.h.b16 %v1187
        %v1873 = vunpack.c.l.b16 %v1188
        %v1874 = vunpack.c.h.b16 %v1188
        %v1875 = vunpack.c.l.b16 %v1189
        %v1876 = vunpack.c.h.b16 %v1189
        %v1877 = vunpack.c.l.b16 %v1190
        %v1878 = vunpack.c.h.b16 %v1190
        %v1879 = vunpack.c.l.b16 %v1191
        %v1880 = vunpack.c.h.b16 %v1191
        %v1881 = vunpack.c.l.b16 %v1192
        %v1882 = vunpack.c.h.b16 %v1192
        %v1883 = vunpack.c.l.b16 %v1193
        %v1884 = vunpack.c.h.b16 %v1193
        %v1885 = vunpack.c.l.b16 %v1194
        %v1886 = vunpack.c.h.b16 %v1194
        %v1887 = vunpack.c.l.b16 %v1195
        %v1888 = vunpack.c.h.b16 %v1195
        %v1889 = vunpack.c.l.b16 %v1196
        %v1890 = vunpack.c.h.b16 %v1196
        %v1891 = vunpack.c.l.b16 %v1197
        %v1892 = vunpack.c.h.b16 %v1197
        %v1893 = vunpack.c.l.b16 %v1198
        %v1894 = vunpack.c.h.b16 %v1198
        %v1895 = vunpack.c.l.b16 %v1199
        %v1896 = vunpack.c.h.b16 %v1199
        %v1897 = vunpack.c.l.b16 %v1200
        %v1898 = vunpack.c.h.b16 %v1200
        %v1899 = vunpack.c.l.b16 %v1201
        %v1900 = vunpack.c.h.b16 %v1201
        %v1901 = vunpack.c.l.b16 %v1202
        %v1902 = vunpack.c.h.b16 %v1202
        %v1903 = vunpack.c.l.b16 %v1203
        %v1904 = vunpack.c.h.b16 %v1203
        %v1905 = vunpack.c.l.b16 %v1204
        %v1906 = vunpack.c.h.b16 %v1204
        %v1907 = vunpack.c.l.b16 %v1205
        %v1908 = vunpack.c.h.b16 %v1205
        %v1909 = vunpack.c.l.b16 %v1206
        %v1910 = vunpack.c.h.b16 %v1206
        %v1911 = vunpack.c.l.b16 %v1207
        %v1912 = vunpack.c.h.b16 %v1207
        %v1913 = vunpack.c.l.b16 %v1208
        %v1914 = vunpack.c.h.b16 %v1208
        %v1915 = vunpack.c.l.b16 %v1209
        %v1916 = vunpack.c.h.b16 %v1209
        %v1917 = vunpack.c.l.b16 %v1210
        %v1918 = vunpack.c.h.b16 %v1210
        %v1919 = vunpack.c.l.b16 %v1211
        %v1920 = vunpack.c.h.b16 %v1211
        %v1921 = vunpack.c.l.b16 %v1212
        %v1922 = vunpack.c.h.b16 %v1212
        %v1923 = vunpack.c.l.b16 %v1213
        %v1924 = vunpack.c.h.b16 %v1213
        %v1925 = vunpack.c.l.b16 %v1214
        %v1926 = vunpack.c.h.b16 %v1214
        %v1927 = vunpack.c.l.b16 %v1215
        %v1928 = vunpack.c.h.b16 %v1215
        %v1929 = vunpack.c.l.b16 %v1216
        %v1930 = vunpack.c.h.b16 %v1216
        %v1931 = vunpack.c.l.b16 %v1217
        %v1932 = vunpack.c.h.b16 %v1217
        %v1933 = vunpack.c.l.b16 %v1218
        %v1934 = vunpack.c.h.b16 %v1218
        %v1935 = vunpack.c.l.b16 %v1219
        %v1936 = vunpack.c.h.b16 %v1219
        %v1937 = vunpack.c.l.b16 %v1220
        %v1938 = vunpack.c.h.b16 %v1220
        %v1939 = vunpack.c.l.b16 %v1221
        %v1940 = vunpack.c.h.b16 %v1221
        %v1941 = vunpack.c.l.b16 %v1222
        %v1942 = vunpack.c.h.b16 %v1222
        %v1943 = vunpack.c.l.b16 %v1223
        %v1944 = vunpack.c.h.b16 %v1223
        %v1945 = vunpack.c.l.b16 %v1224
        %v1946 = vunpack.c.h.b16 %v1224
        %v1947 = vunpack.c.l.b16 %v1225
        %v1948 = vunpack.c.h.b16 %v1225
        %v1949 = vunpack.c.l.b16 %v1226
        %v1950 = vunpack.c.h.b16 %v1226
        %v1951 = vunpack.c.l.b16 %v1227
        %v1952 = vunpack.c.h.b16 %v1227
        %v1953 = vunpack.c.l.b16 %v1228
        %v1954 = vunpack.c.h.b16 %v1228
        %v1955 = vunpack.c.l.b16 %v1229
        %v1956 = vunpack.c.h.b16 %v1229
        %v1957 = vunpack.c.l.b16 %v1230
        %v1958 = vunpack.c.h.b16 %v1230
        %v1959 = vunpack.c.l.b16 %v1231
        %v1960 = vunpack.c.h.b16 %v1231
        %v1961 = vunpack.c.l.b16 %v1232
        %v1962 = vunpack.c.h.b16 %v1232
        %v1963 = vunpack.c.l.b16 %v1233
        %v1964 = vunpack.c.h.b16 %v1233
        %v1965 = vunpack.c.l.b16 %v1234
        %v1966 = vunpack.c.h.b16 %v1234
        %v1967 = vunpack.c.l.b16 %v1235
        %v1968 = vunpack.c.h.b16 %v1235
        %v1969 = vunpack.c.l.b16 %v1236
        %v1970 = vunpack.c.h.b16 %v1236
        %v1971 = vunpack.c.l.b16 %v1237
        %v1972 = vunpack.c.h.b16 %v1237
        %v1973 = vunpack.c.l.b16 %v1238
        %v1974 = vunpack.c.h.b16 %v1238
        %v1975 = vunpack.c.l.b16 %v1239
        %v1976 = vunpack.c.h.b16 %v1239
        %v1977 = vunpack.c.l.b16 %v1240
        %v1978 = vunpack.c.h.b16 %v1240
        %v1979 = vunpack.c.l.b16 %v1241
        %v1980 = vunpack.c.h.b16 %v1241
        %v1981 = vunpack.c.l.b16 %v1242
        %v1982 = vunpack.c.h.b16 %v1242
        %v1983 = vunpack.c.l.b16 %v1243
        %v1984 = vunpack.c.h.b16 %v1243
        %v1985 = vunpack.c.l.b16 %v1244
        %v1986 = vunpack.c.h.b16 %v1244
        %v1987 = vunpack.c.l.b16 %v1245
        %v1988 = vunpack.c.h.b16 %v1245
        %v1989 = vunpack.c.l.b16 %v1246
        %v1990 = vunpack.c.h.b16 %v1246
        %v1991 = vunpack.c.l.b16 %v1247
        %v1992 = vunpack.c.h.b16 %v1247
        %v1993 = vunpack.c.l.b16 %v1248
        %v1994 = vunpack.c.h.b16 %v1248
        %v1995 = vunpack.c.l.b16 %v1249
        %v1996 = vunpack.c.h.b16 %v1249
        %v1997 = vunpack.c.l.b16 %v1250
        %v1998 = vunpack.c.h.b16 %v1250
        %v1999 = vunpack.c.l.b16 %v1251
        %v2000 = vunpack.c.h.b16 %v1251
        %v2001 = vunpack.c.l.b16 %v1252
        %v2002 = vunpack.c.h.b16 %v1252
        %v2003 = vunpack.c.l.b16 %v1253
        %v2004 = vunpack.c.h.b16 %v1253
        %v2005 = vunpack.c.l.b16 %v1254
        %v2006 = vunpack.c.h.b16 %v1254
        %v2007 = vunpack.c.l.b16 %v1255
        %v2008 = vunpack.c.h.b16 %v1255
        %v2009 = vunpack.c.l.b16 %v1256
        %v2010 = vunpack.c.h.b16 %v1256
        %v2011 = vunpack.c.l.b16 %v1257
        %v2012 = vunpack.c.h.b16 %v1257
        %v2013 = vunpack.c.l.b16 %v1258
        %v2014 = vunpack.c.h.b16 %v1258
        %v2015 = vunpack.c.l.b16 %v1259
        %v2016 = vunpack.c.h.b16 %v1259
        %v2017 = vunpack.c.l.b16 %v1260
        %v2018 = vunpack.c.h.b16 %v1260
        %v2019 = vunpack.c.l.b16 %v1261
        %v2020 = vunpack.c.h.b16 %v1261
        %v2021 = vunpack.c.l.b16 %v1262
        %v2022 = vunpack.c.h.b16 %v1262
        %v2023 = vunpack.c.l.b16 %v1263
        %v2024 = vunpack.c.h.b16 %v1263
        %v2025 = vunpack.c.l.b16 %v1264
        %v2026 = vunpack.c.h.b16 %v1264
        %v2027 = vunpack.c.l.b16 %v1265
        %v2028 = vunpack.c.h.b16 %v1265
        %v2029 = vunpack.c.l.b16 %v1266
        %v2030 = vunpack.c.h.b16 %v1266
        %v2031 = vunpack.c.l.b16 %v1267
        %v2032 = vunpack.c.h.b16 %v1267
        %v2033 = vunpack.c.l.b16 %v1268
        %v2034 = vunpack.c.h.b16 %v1268
        %v2035 = vunpack.c.l.b16 %v1269
        %v2036 = vunpack.c.h.b16 %v1269
        %v2037 = vunpack.c.l.b16 %v1270
        %v2038 = vunpack.c.h.b16 %v1270
        %v2039 = vpack.c.b16 %v1543, %v1527
        %v2040 = vpack.c.b16 %v1544, %v1528
        %v2041 = vpack.c.b16 %v1545, %v1529
        %v2042 = vpack.c.b16 %v1546, %v1530
        %v2043 = vpack.c.b16 %v1547, %v1531
        %v2044 = vpack.c.b16 %v1548, %v1532
        %v2045 = vpack.c.b16 %v1549, %v1533
        %v2046 = vpack.c.b16 %v1550, %v1534
        %v2047 = vpack.c.b16 %v1551, %v1535
        %v2048 = vpack.c.b16 %v1552, %v1536
        %v2049 = vpack.c.b16 %v1553, %v1537
        %v2050 = vpack.c.b16 %v1554, %v1538
        %v2051 = vpack.c.b16 %v1555, %v1539
        %v2052 = vpack.c.b16 %v1556, %v1540
        %v2053 = vpack.c.b16 %v1557, %v1541
        %v2054 = vpack.c.b16 %v1558, %v1542
        %v2055 = vpack.c.b16 %v1575, %v1559
        %v2056 = vpack.c.b16 %v1576, %v1560
        %v2057 = vpack.c.b16 %v1577, %v1561
        %v2058 = vpack.c.b16 %v1578, %v1562
        %v2059 = vpack.c.b16 %v1579, %v1563
        %v2060 = vpack.c.b16 %v1580, %v1564
        %v2061 = vpack.c.b16 %v1581, %v1565
        %v2062 = vpack.c.b16 %v1582, %v1566
        %v2063 = vpack.c.b16 %v1583, %v1567
        %v2064 = vpack.c.b16 %v1584, %v1568
        %v2065 = vpack.c.b16 %v1585, %v1569
        %v2066 = vpack.c.b16 %v1586, %v1570
        %v2067 = vpack.c.b16 %v1587, %v1571
        %v2068 = vpack.c.b16 %v1588, %v1572
        %v2069 = vpack.c.b16 %v1589, %v1573
        %v2070 = vpack.c.b16 %v1590, %v1574
        %v2071 = vpack.c.b16 %v1607, %v1591
        %v2072 = vpack.c.b16 %v1608, %v1592
        %v2073 = vpack.c.b16 %v1609, %v1593
        %v2074 = vpack.c.b16 %v1610, %v1594
        %v2075 = vpack.c.b16 %v1611, %v1595
        %v2076 = vpack.c.b16 %v1612, %v1596
        %v2077 = vpack.c.b16 %v1613, %v1597
        %v2078 = vpack.c.b16 %v1614, %v1598
        %v2079 = vpack.c.b16 %v1615, %v1599
        %v2080 = vpack.c.b16 %v1616, %v1600
        %v2081 = vpack.c.b16 %v1617, %v1601
        %v2082 = vpack.c.b16 %v1618, %v1602
        %v2083 = vpack.c.b16 %v1619, %v1603
        %v2084 = vpack.c.b16 %v1620, %v1604
        %v2085 = vpack.c.b16 %v1621, %v1605
        %v2086 = vpack.c.b16 %v1622, %v1606
        %v2087 = vpack.c.b16 %v1639, %v1623
        %v2088 = vpack.c.b16 %v1640, %v1624
        %v2089 = vpack.c.b16 %v1641, %v1625
        %v2090 = vpack.c.b16 %v1642, %v1626
        %v2091 = vpack.c.b16 %v1643, %v1627
        %v2092 = vpack.c.b16 %v1644, %v1628
        %v2093 = vpack.c.b16 %v1645, %v1629
        %v2094 = vpack.c.b16 %v1646, %v1630
        %v2095 = vpack.c.b16 %v1647, %v1631
        %v2096 = vpack.c.b16 %v1648, %v1632
        %v2097 = vpack.c.b16 %v1649, %v1633
        %v2098 = vpack.c.b16 %v1650, %v1634
        %v2099 = vpack.c.b16 %v1651, %v1635
        %v2100 = vpack.c.b16 %v1652, %v1636
        %v2101 = vpack.c.b16 %v1653, %v1637
        %v2102 = vpack.c.b16 %v1654, %v1638
        %v2103 = vpack.c.b16 %v1671, %v1655
        %v2104 = vpack.c.b16 %v1672, %v1656
        %v2105 = vpack.c.b16 %v1673, %v1657
        %v2106 = vpack.c.b16 %v1674, %v1658
        %v2107 = vpack.c.b16 %v1675, %v1659
        %v2108 = vpack.c.b16 %v1676, %v1660
        %v2109 = vpack.c.b16 %v1677, %v1661
        %v2110 = vpack.c.b16 %v1678, %v1662
        %v2111 = vpack.c.b16 %v1679, %v1663
        %v2112 = vpack.c.b16 %v1680, %v1664
        %v2113 = vpack.c.b16 %v1681, %v1665
        %v2114 = vpack.c.b16 %v1682, %v1666
        %v2115 = vpack.c.b16 %v1683, %v1667
        %v2116 = vpack.c.b16 %v1684, %v1668
        %v2117 = vpack.c.b16 %v1685, %v1669
        %v2118 = vpack.c.b16 %v1686, %v1670
        %v2119 = vpack.c.b16 %v1703, %v1687
        %v2120 = vpack.c.b16 %v1704, %v1688
        %v2121 = vpack.c.b16 %v1705, %v1689
        %v2122 = vpack.c.b16 %v1706, %v1690
        %v2123 = vpack.c.b16 %v1707, %v1691
        %v2124 = vpack.c.b16 %v1708, %v1692
        %v2125 = vpack.c.b16 %v1709, %v1693
        %v2126 = vpack.c.b16 %v1710, %v1694
        %v2127 = vpack.c.b16 %v1711, %v1695
        %v2128 = vpack.c.b16 %v1712, %v1696
        %v2129 = vpack.c.b16 %v1713, %v1697
        %v2130 = vpack.c.b16 %v1714, %v1698
        %v2131 = vpack.c.b16 %v1715, %v1699
        %v2132 = vpack.c.b16 %v1716, %v1700
        %v2133 = vpack.c.b16 %v1717, %v1701
        %v2134 = vpack.c.b16 %v1718, %v1702
        %v2135 = vpack.c.b16 %v1735, %v1719
        %v2136 = vpack.c.b16 %v1736, %v1720
        %v2137 = vpack.c.b16 %v1737, %v1721
        %v2138 = vpack.c.b16 %v1738, %v1722
        %v2139 = vpack.c.b16 %v1739, %v1723
        %v2140 = vpack.c.b16 %v1740, %v1724
        %v2141 = vpack.c.b16 %v1741, %v1725
        %v2142 = vpack.c.b16 %v1742, %v1726
        %v2143 = vpack.c.b16 %v1743, %v1727
        %v2144 = vpack.c.b16 %v1744, %v1728
        %v2145 = vpack.c.b16 %v1745, %v1729
        %v2146 = vpack.c.b16 %v1746, %v1730
        %v2147 = vpack.c.b16 %v1747, %v1731
        %v2148 = vpack.c.b16 %v1748, %v1732
        %v2149 = vpack.c.b16 %v1749, %v1733
        %v2150 = vpack.c.b16 %v1750, %v1734
        %v2151 = vpack.c.b16 %v1767, %v1751
        %v2152 = vpack.c.b16 %v1768, %v1752
        %v2153 = vpack.c.b16 %v1769, %v1753
        %v2154 = vpack.c.b16 %v1770, %v1754
        %v2155 = vpack.c.b16 %v1771, %v1755
        %v2156 = vpack.c.b16 %v1772, %v1756
        %v2157 = vpack.c.b16 %v1773, %v1757
        %v2158 = vpack.c.b16 %v1774, %v1758
        %v2159 = vpack.c.b16 %v1775, %v1759
        %v2160 = vpack.c.b16 %v1776, %v1760
        %v2161 = vpack.c.b16 %v1777, %v1761
        %v2162 = vpack.c.b16 %v1778, %v1762
        %v2163 = vpack.c.b16 %v1779, %v1763
        %v2164 = vpack.c.b16 %v1780, %v1764
        %v2165 = vpack.c.b16 %v1781, %v1765
        %v2166 = vpack.c.b16 %v1782, %v1766
        %v2167 = vpack.c.b16 %v1799, %v1783
        %v2168 = vpack.c.b16 %v1800, %v1784
        %v2169 = vpack.c.b16 %v1801, %v1785
        %v2170 = vpack.c.b16 %v1802, %v1786
        %v2171 = vpack.c.b16 %v1803, %v1787
        %v2172 = vpack.c.b16 %v1804, %v1788
        %v2173 = vpack.c.b16 %v1805, %v1789
        %v2174 = vpack.c.b16 %v1806, %v1790
        %v2175 = vpack.c.b16 %v1807, %v1791
        %v2176 = vpack.c.b16 %v1808, %v1792
        %v2177 = vpack.c.b16 %v1809, %v1793
        %v2178 = vpack.c.b16 %v1810, %v1794
        %v2179 = vpack.c.b16 %v1811, %v1795
        %v2180 = vpack.c.b16 %v1812, %v1796
        %v2181 = vpack.c.b16 %v1813, %v1797
        %v2182 = vpack.c.b16 %v1814, %v1798
        %v2183 = vpack.c.b16 %v1831, %v1815
        %v2184 = vpack.c.b16 %v1832, %v1816
        %v2185 = vpack.c.b16 %v1833, %v1817
        %v2186 = vpack.c.b16 %v1834, %v1818
        %v2187 = vpack.c.b16 %v1835, %v1819
        %v2188 = vpack.c.b16 %v1836, %v1820
        %v2189 = vpack.c.b16 %v1837, %v1821
        %v2190 = vpack.c.b16 %v1838, %v1822
        %v2191 = vpack.c.b16 %v1839, %v1823
        %v2192 = vpack.c.b16 %v1840, %v1824
        %v2193 = vpack.c.b16 %v1841, %v1825
        %v2194 = vpack.c.b16 %v1842, %v1826
        %v2195 = vpack.c.b16 %v1843, %v1827
        %v2196 = vpack.c.b16 %v1844, %v1828
        %v2197 = vpack.c.b16 %v1845, %v1829
        %v2198 = vpack.c.b16 %v1846, %v1830
        %v2199 = vpack.c.b16 %v1863, %v1847
        %v2200 = vpack.c.b16 %v1864, %v1848
        %v2201 = vpack.c.b16 %v1865, %v1849
        %v2202 = vpack.c.b16 %v1866, %v1850
        %v2203 = vpack.c.b16 %v1867, %v1851
        %v2204 = vpack.c.b16 %v1868, %v1852
        %v2205 = vpack.c.b16 %v1869, %v1853
        %v2206 = vpack.c.b16 %v1870, %v1854
        %v2207 = vpack.c.b16 %v1871, %v1855
        %v2208 = vpack.c.b16 %v1872, %v1856
        %v2209 = vpack.c.b16 %v1873, %v1857
        %v2210 = vpack.c.b16 %v1874, %v1858
        %v2211 = vpack.c.b16 %v1875, %v1859
        %v2212 = vpack.c.b16 %v1876, %v1860
        %v2213 = vpack.c.b16 %v1877, %v1861
        %v2214 = vpack.c.b16 %v1878, %v1862
        %v2215 = vpack.c.b16 %v1895, %v1879
        %v2216 = vpack.c.b16 %v1896, %v1880
        %v2217 = vpack.c.b16 %v1897, %v1881
        %v2218 = vpack.c.b16 %v1898, %v1882
        %v2219 = vpack.c.b16 %v1899, %v1883
        %v2220 = vpack.c.b16 %v1900, %v1884
        %v2221 = vpack.c.b16 %v1901, %v1885
        %v2222 = vpack.c.b16 %v1902, %v1886
        %v2223 = vpack.c.b16 %v1903, %v1887
        %v2224 = vpack.c.b16 %v1904, %v1888
        %v2225 = vpack.c.b16 %v1905, %v1889
        %v2226 = vpack.c.b16 %v1906, %v1890
        %v2227 = vpack.c.b16 %v1907, %v1891
        %v2228 = vpack.c.b16 %v1908, %v1892
        %v2229 = vpack.c.b16 %v1909, %v1893
        %v2230 = vpack.c.b16 %v1910, %v1894
        %v2231 = vpack.c.b16 %v1927, %v1911
        %v2232 = vpack.c.b16 %v1928, %v1912
        %v2233 = vpack.c.b16 %v1929, %v1913
        %v2234 = vpack.c.b16 %v1930, %v1914
        %v2235 = vpack.c.b16 %v1931, %v1915
        %v2236 = vpack.c.b16 %v1932, %v1916
        %v2237 = vpack.c.b16 %v1933, %v1917
        %v2238 = vpack.c.b16 %v1934, %v1918
        %v2239 = vpack.c.b16 %v1935, %v1919
        %v2240 = vpack.c.b16 %v1936, %v1920
        %v2241 = vpack.c.b16 %v1937, %v1921
        %v2242 = vpack.c.b16 %v1938, %v1922
        %v2243 = vpack.c.b16 %v1939, %v1923
        %v2244 = vpack.c.b16 %v1940, %v1924
        %v2245 = vpack.c.b16 %v1941, %v1925
        %v2246 = vpack.c.b16 %v1942, %v1926
        %v2247 = vpack.c.b16 %v1959, %v1943
        %v2248 = vpack.c.b16 %v1960, %v1944
        %v2249 = vpack.c.b16 %v1961, %v1945
        %v2250 = vpack.c.b16 %v1962, %v1946
        %v2251 = vpack.c.b16 %v1963, %v1947
        %v2252 = vpack.c.b16 %v1964, %v1948
        %v2253 = vpack.c.b16 %v1965, %v1949
        %v2254 = vpack.c.b16 %v1966, %v1950
        %v2255 = vpack.c.b16 %v1967, %v1951
        %v2256 = vpack.c.b16 %v1968, %v1952
        %v2257 = vpack.c.b16 %v1969, %v1953
        %v2258 = vpack.c.b16 %v1970, %v1954
        %v2259 = vpack.c.b16 %v1971, %v1955
        %v2260 = vpack.c.b16 %v1972, %v1956
        %v2261 = vpack.c.b16 %v1973, %v1957
        %v2262 = vpack.c.b16 %v1974, %v1958
        %v2263 = vpack.c.b16 %v1991, %v1975
        %v2264 = vpack.c.b16 %v1992, %v1976
        %v2265 = vpack.c.b16 %v1993, %v1977
        %v2266 = vpack.c.b16 %v1994, %v1978
        %v2267 = vpack.c.b16 %v1995, %v1979
        %v2268 = vpack.c.b16 %v1996, %v1980
        %v2269 = vpack.c.b16 %v1997, %v1981
        %v2270 = vpack.c.b16 %v1998, %v1982
        %v2271 = vpack.c.b16 %v1999, %v1983
        %v2272 = vpack.c.b16 %v2000, %v1984
        %v2273 = vpack.c.b16 %v2001, %v1985
        %v2274 = vpack.c.b16 %v2002, %v1986
        %v2275 = vpack.c.b16 %v2003, %v1987
        %v2276 = vpack.c.b16 %v2004, %v1988
        %v2277 = vpack.c.b16 %v2005, %v1989
        %v2278 = vpack.c.b16 %v2006, %v1990
        %v2279 = vpack.c.b16 %v2023, %v2007
        %v2280 = vpack.c.b16 %v2024, %v2008
        %v2281 = vpack.c.b16 %v2025, %v2009
        %v2282 = vpack.c.b16 %v2026, %v2010
        %v2283 = vpack.c.b16 %v2027, %v2011
        %v2284 = vpack.c.b16 %v2028, %v2012
        %v2285 = vpack.c.b16 %v2029, %v2013
        %v2286 = vpack.c.b16 %v2030, %v2014
        %v2287 = vpack.c.b16 %v2031, %v2015
        %v2288 = vpack.c.b16 %v2032, %v2016
        %v2289 = vpack.c.b16 %v2033, %v2017
        %v2290 = vpack.c.b16 %v2034, %v2018
        %v2291 = vpack.c.b16 %v2035, %v2019
        %v2292 = vpack.c.b16 %v2036, %v2020
        %v2293 = vpack.c.b16 %v2037, %v2021
        %v2294 = vpack.c.b16 %v2038, %v2022
        %2551 = vmatprep.subr.bf16.mxu0 %v2152
        %2552 = vmatpush1.bf16.msra.mxu0 %v2151
        %2553 = vmatprep.subr.bf16.mxu0 %v2136
        %2554 = vmatpush1.bf16.msra.mxu0 %v2135
        %2555 = vmatprep.subr.bf16.mxu0 %v2120
        %2556 = vmatpush1.bf16.msra.mxu0 %v2119
        %2557 = vmatprep.subr.bf16.mxu0 %v2104
        %2558 = vmatpush1.bf16.msra.mxu0 %v2103
        %2559 = vmatprep.subr.bf16.mxu0 %v2088
        %2560 = vmatpush1.bf16.msra.mxu0 %v2087
        %2561 = vmatprep.subr.bf16.mxu0 %v2072
        %2562 = vmatpush1.bf16.msra.mxu0 %v2071
        %2563 = vmatprep.subr.bf16.mxu0 %v2056
        %2564 = vmatpush1.bf16.msra.mxu0 %v2055
        %2565 = vmatprep.subr.bf16.mxu0 %v2040
        %2566 = vmatpush1.bf16.msra.mxu0 %v2039
        %2567 = vmatprep.subr.bf16.mxu0 %v2280
        %2568 = vmatpush2.bf16.msra.mxu0 %v2279
        %2569 = vmatprep.subr.bf16.mxu0 %v2264
        %2570 = vmatpush2.bf16.msra.mxu0 %v2263
        %2571 = vmatprep.subr.bf16.mxu0 %v2248
        %2572 = vmatpush2.bf16.msra.mxu0 %v2247
        %2573 = vmatprep.subr.bf16.mxu0 %v2232
        %2574 = vmatpush2.bf16.msra.mxu0 %v2231
        %2575 = vmatprep.subr.bf16.mxu0 %v2216
        %2576 = vmatpush2.bf16.msra.mxu0 %v2215
        %2577 = vmatprep.subr.bf16.mxu0 %v2200
        %2578 = vmatpush2.bf16.msra.mxu0 %v2199
        %2579 = vmatprep.subr.bf16.mxu0 %v2184
        %2580 = vmatpush2.bf16.msra.mxu0 %v2183
        %2581 = vmatprep.subr.bf16.mxu0 %v2168
        %2582 = vmatpush2.bf16.msra.mxu0 %v2167
        %2583 = vmatprep.mubr.bf16.mxu0 %v964
        %2584 = vmatmul.mubr.bf16.gmra.mxu0 %v963
        %v2585 = vpop.f32.mrf.mxu0
        %v2586 = vadd.f32 0.0, %v2585
        %v2587 = vpop.f32.mrf.mxu0
        %v2588 = vadd.f32 0.0, %v2587
        %v2589 = vpop.f32.mrf.mxu0
        %v2590 = vadd.f32 0.0, %v2589
        %v2591 = vpop.f32.mrf.mxu0
        %v2592 = vadd.f32 0.0, %v2591
        %2593 = vmatprep.mubr.bf16.mxu0 %v966
        %2594 = vmatmul.mubr.bf16.gmra.mxu0 %v965
        %v2595 = vpop.f32.mrf.mxu0
        %v2596 = vadd.f32 0.0, %v2595
        %v2597 = vpop.f32.mrf.mxu0
        %v2598 = vadd.f32 0.0, %v2597
        %v2599 = vpop.f32.mrf.mxu0
        %v2600 = vpop.f32.mrf.mxu0
        %2601 = vdwg.mxu0
        %2602 = vmatprep.subr.bf16.mxu0 %v2154
        %2603 = vmatpush1.bf16.msra.mxu0 %v2153
        %2604 = vmatprep.subr.bf16.mxu0 %v2138
        %2605 = vmatpush1.bf16.msra.mxu0 %v2137
        %2606 = vmatprep.subr.bf16.mxu0 %v2122
        %2607 = vmatpush1.bf16.msra.mxu0 %v2121
        %2608 = vmatprep.subr.bf16.mxu0 %v2106
        %2609 = vmatpush1.bf16.msra.mxu0 %v2105
        %2610 = vmatprep.subr.bf16.mxu0 %v2090
        %2611 = vmatpush1.bf16.msra.mxu0 %v2089
        %2612 = vmatprep.subr.bf16.mxu0 %v2074
        %2613 = vmatpush1.bf16.msra.mxu0 %v2073
        %2614 = vmatprep.subr.bf16.mxu0 %v2058
        %2615 = vmatpush1.bf16.msra.mxu0 %v2057
        %2616 = vmatprep.subr.bf16.mxu0 %v2042
        %2617 = vmatpush1.bf16.msra.mxu0 %v2041
        %2618 = vmatprep.subr.bf16.mxu0 %v2282
        %2619 = vmatpush2.bf16.msra.mxu0 %v2281
        %2620 = vmatprep.subr.bf16.mxu0 %v2266
        %2621 = vmatpush2.bf16.msra.mxu0 %v2265
        %2622 = vmatprep.subr.bf16.mxu0 %v2250
        %2623 = vmatpush2.bf16.msra.mxu0 %v2249
        %2624 = vmatprep.subr.bf16.mxu0 %v2234
        %2625 = vmatpush2.bf16.msra.mxu0 %v2233
        %2626 = vmatprep.subr.bf16.mxu0 %v2218
        %2627 = vmatpush2.bf16.msra.mxu0 %v2217
        %2628 = vmatprep.subr.bf16.mxu0 %v2202
        %2629 = vmatpush2.bf16.msra.mxu0 %v2201
        %2630 = vmatprep.subr.bf16.mxu0 %v2186
        %2631 = vmatpush2.bf16.msra.mxu0 %v2185
        %2632 = vmatprep.subr.bf16.mxu0 %v2170
        %2633 = vmatpush2.bf16.msra.mxu0 %v2169
        %2634 = vmatprep.mubr.bf16.mxu0 %v964
        %2635 = vmatmul.mubr.bf16.gmra.mxu0 %v963
        %v2636 = vpop.f32.mrf.mxu0
        %v2637 = vadd.f32 0.0, %v2636
        %v2638 = vpop.f32.mrf.mxu0
        %v2639 = vadd.f32 0.0, %v2638
        %v2640 = vpop.f32.mrf.mxu0
        %v2641 = vadd.f32 0.0, %v2640
        %v2642 = vpop.f32.mrf.mxu0
        %v2643 = vadd.f32 0.0, %v2642
        %2644 = vmatprep.mubr.bf16.mxu0 %v966
        %2645 = vmatmul.mubr.bf16.gmra.mxu0 %v965
        %v2646 = vpop.f32.mrf.mxu0
        %v2647 = vadd.f32 0.0, %v2646
        %v2648 = vpop.f32.mrf.mxu0
        %v2649 = vadd.f32 0.0, %v2648
        %v2650 = vpop.f32.mrf.mxu0
        %v2651 = vpop.f32.mrf.mxu0
        %2652 = vdwg.mxu0
        %2653 = vmatprep.subr.bf16.mxu0 %v2156
        %2654 = vmatpush1.bf16.msra.mxu0 %v2155
        %2655 = vmatprep.subr.bf16.mxu0 %v2140
        %2656 = vmatpush1.bf16.msra.mxu0 %v2139
        %2657 = vmatprep.subr.bf16.mxu0 %v2124
        %2658 = vmatpush1.bf16.msra.mxu0 %v2123
        %2659 = vmatprep.subr.bf16.mxu0 %v2108
        %2660 = vmatpush1.bf16.msra.mxu0 %v2107
        %2661 = vmatprep.subr.bf16.mxu0 %v2092
        %2662 = vmatpush1.bf16.msra.mxu0 %v2091
        %2663 = vmatprep.subr.bf16.mxu0 %v2076
        %2664 = vmatpush1.bf16.msra.mxu0 %v2075
        %2665 = vmatprep.subr.bf16.mxu0 %v2060
        %2666 = vmatpush1.bf16.msra.mxu0 %v2059
        %2667 = vmatprep.subr.bf16.mxu0 %v2044
        %2668 = vmatpush1.bf16.msra.mxu0 %v2043
        %2669 = vmatprep.subr.bf16.mxu0 %v2284
        %2670 = vmatpush2.bf16.msra.mxu0 %v2283
        %2671 = vmatprep.subr.bf16.mxu0 %v2268
        %2672 = vmatpush2.bf16.msra.mxu0 %v2267
        %2673 = vmatprep.subr.bf16.mxu0 %v2252
        %2674 = vmatpush2.bf16.msra.mxu0 %v2251
        %2675 = vmatprep.subr.bf16.mxu0 %v2236
        %2676 = vmatpush2.bf16.msra.mxu0 %v2235
        %2677 = vmatprep.subr.bf16.mxu0 %v2220
        %2678 = vmatpush2.bf16.msra.mxu0 %v2219
        %2679 = vmatprep.subr.bf16.mxu0 %v2204
        %2680 = vmatpush2.bf16.msra.mxu0 %v2203
        %2681 = vmatprep.subr.bf16.mxu0 %v2188
        %2682 = vmatpush2.bf16.msra.mxu0 %v2187
        %2683 = vmatprep.subr.bf16.mxu0 %v2172
        %2684 = vmatpush2.bf16.msra.mxu0 %v2171
        %2685 = vmatprep.mubr.bf16.mxu0 %v964
        %2686 = vmatmul.mubr.bf16.gmra.mxu0 %v963
        %v2687 = vpop.f32.mrf.mxu0
        %v2688 = vadd.f32 0.0, %v2687
        %v2689 = vpop.f32.mrf.mxu0
        %v2690 = vadd.f32 0.0, %v2689
        %v2691 = vpop.f32.mrf.mxu0
        %v2692 = vadd.f32 0.0, %v2691
        %v2693 = vpop.f32.mrf.mxu0
        %v2694 = vadd.f32 0.0, %v2693
        %2695 = vmatprep.mubr.bf16.mxu0 %v966
        %2696 = vmatmul.mubr.bf16.gmra.mxu0 %v965
        %v2697 = vpop.f32.mrf.mxu0
        %v2698 = vadd.f32 0.0, %v2697
        %v2699 = vpop.f32.mrf.mxu0
        %v2700 = vadd.f32 0.0, %v2699
        %v2701 = vpop.f32.mrf.mxu0
        %v2702 = vpop.f32.mrf.mxu0
        %2703 = vdwg.mxu0
        %2704 = vmatprep.subr.bf16.mxu0 %v2158
        %2705 = vmatpush1.bf16.msra.mxu0 %v2157
        %2706 = vmatprep.subr.bf16.mxu0 %v2142
        %2707 = vmatpush1.bf16.msra.mxu0 %v2141
        %2708 = vmatprep.subr.bf16.mxu0 %v2126
        %2709 = vmatpush1.bf16.msra.mxu0 %v2125
        %2710 = vmatprep.subr.bf16.mxu0 %v2110
        %2711 = vmatpush1.bf16.msra.mxu0 %v2109
        %2712 = vmatprep.subr.bf16.mxu0 %v2094
        %2713 = vmatpush1.bf16.msra.mxu0 %v2093
        %2714 = vmatprep.subr.bf16.mxu0 %v2078
        %2715 = vmatpush1.bf16.msra.mxu0 %v2077
        %2716 = vmatprep.subr.bf16.mxu0 %v2062
        %2717 = vmatpush1.bf16.msra.mxu0 %v2061
        %2718 = vmatprep.subr.bf16.mxu0 %v2046
        %2719 = vmatpush1.bf16.msra.mxu0 %v2045
        %2720 = vmatprep.subr.bf16.mxu0 %v2286
        %2721 = vmatpush2.bf16.msra.mxu0 %v2285
        %2722 = vmatprep.subr.bf16.mxu0 %v2270
        %2723 = vmatpush2.bf16.msra.mxu0 %v2269
        %2724 = vmatprep.subr.bf16.mxu0 %v2254
        %2725 = vmatpush2.bf16.msra.mxu0 %v2253
        %2726 = vmatprep.subr.bf16.mxu0 %v2238
        %2727 = vmatpush2.bf16.msra.mxu0 %v2237
        %2728 = vmatprep.subr.bf16.mxu0 %v2222
        %2729 = vmatpush2.bf16.msra.mxu0 %v2221
        %2730 = vmatprep.subr.bf16.mxu0 %v2206
        %2731 = vmatpush2.bf16.msra.mxu0 %v2205
        %2732 = vmatprep.subr.bf16.mxu0 %v2190
        %2733 = vmatpush2.bf16.msra.mxu0 %v2189
        %2734 = vmatprep.subr.bf16.mxu0 %v2174
        %2735 = vmatpush2.bf16.msra.mxu0 %v2173
        %2736 = vmatprep.mubr.bf16.mxu0 %v964
        %2737 = vmatmul.mubr.bf16.gmra.mxu0 %v963
        %v2738 = vpop.f32.mrf.mxu0
        %v2739 = vadd.f32 0.0, %v2738
        %v2740 = vpop.f32.mrf.mxu0
        %v2741 = vadd.f32 0.0, %v2740
        %v2742 = vpop.f32.mrf.mxu0
        %v2743 = vadd.f32 0.0, %v2742
        %v2744 = vpop.f32.mrf.mxu0
        %v2745 = vadd.f32 0.0, %v2744
        %2746 = vmatprep.mubr.bf16.mxu0 %v966
        %2747 = vmatmul.mubr.bf16.gmra.mxu0 %v965
        %v2748 = vpop.f32.mrf.mxu0
        %v2749 = vadd.f32 0.0, %v2748
        %v2750 = vpop.f32.mrf.mxu0
        %v2751 = vadd.f32 0.0, %v2750
        %v2752 = vpop.f32.mrf.mxu0
        %v2753 = vpop.f32.mrf.mxu0
        %2754 = vdwg.mxu0
        %2755 = vmatprep.subr.bf16.mxu0 %v2160
        %2756 = vmatpush1.bf16.msra.mxu0 %v2159
        %2757 = vmatprep.subr.bf16.mxu0 %v2144
        %2758 = vmatpush1.bf16.msra.mxu0 %v2143
        %2759 = vmatprep.subr.bf16.mxu0 %v2128
        %2760 = vmatpush1.bf16.msra.mxu0 %v2127
        %2761 = vmatprep.subr.bf16.mxu0 %v2112
        %2762 = vmatpush1.bf16.msra.mxu0 %v2111
        %2763 = vmatprep.subr.bf16.mxu0 %v2096
        %2764 = vmatpush1.bf16.msra.mxu0 %v2095
        %2765 = vmatprep.subr.bf16.mxu0 %v2080
        %2766 = vmatpush1.bf16.msra.mxu0 %v2079
        %2767 = vmatprep.subr.bf16.mxu0 %v2064
        %2768 = vmatpush1.bf16.msra.mxu0 %v2063
        %2769 = vmatprep.subr.bf16.mxu0 %v2048
        %2770 = vmatpush1.bf16.msra.mxu0 %v2047
        %2771 = vmatprep.subr.bf16.mxu0 %v2288
        %2772 = vmatpush2.bf16.msra.mxu0 %v2287
        %2773 = vmatprep.subr.bf16.mxu0 %v2272
        %2774 = vmatpush2.bf16.msra.mxu0 %v2271
        %2775 = vmatprep.subr.bf16.mxu0 %v2256
        %2776 = vmatpush2.bf16.msra.mxu0 %v2255
        %2777 = vmatprep.subr.bf16.mxu0 %v2240
        %2778 = vmatpush2.bf16.msra.mxu0 %v2239
        %2779 = vmatprep.subr.bf16.mxu0 %v2224
        %2780 = vmatpush2.bf16.msra.mxu0 %v2223
        %2781 = vmatprep.subr.bf16.mxu0 %v2208
        %2782 = vmatpush2.bf16.msra.mxu0 %v2207
        %2783 = vmatprep.subr.bf16.mxu0 %v2192
        %2784 = vmatpush2.bf16.msra.mxu0 %v2191
        %2785 = vmatprep.subr.bf16.mxu0 %v2176
        %2786 = vmatpush2.bf16.msra.mxu0 %v2175
        %2787 = vmatprep.mubr.bf16.mxu0 %v964
        %2788 = vmatmul.mubr.bf16.gmra.mxu0 %v963
        %v2789 = vpop.f32.mrf.mxu0
        %v2790 = vadd.f32 0.0, %v2789
        %v2791 = vpop.f32.mrf.mxu0
        %v2792 = vadd.f32 0.0, %v2791
        %v2793 = vpop.f32.mrf.mxu0
        %v2794 = vadd.f32 0.0, %v2793
        %v2795 = vpop.f32.mrf.mxu0
        %v2796 = vadd.f32 0.0, %v2795
        %2797 = vmatprep.mubr.bf16.mxu0 %v966
        %2798 = vmatmul.mubr.bf16.gmra.mxu0 %v965
        %v2799 = vpop.f32.mrf.mxu0
        %v2800 = vadd.f32 0.0, %v2799
        %v2801 = vpop.f32.mrf.mxu0
        %v2802 = vadd.f32 0.0, %v2801
        %v2803 = vpop.f32.mrf.mxu0
        %v2804 = vpop.f32.mrf.mxu0
        %2805 = vdwg.mxu0
        %2806 = vmatprep.subr.bf16.mxu0 %v2162
        %2807 = vmatpush1.bf16.msra.mxu0 %v2161
        %2808 = vmatprep.subr.bf16.mxu0 %v2146
        %2809 = vmatpush1.bf16.msra.mxu0 %v2145
        %2810 = vmatprep.subr.bf16.mxu0 %v2130
        %2811 = vmatpush1.bf16.msra.mxu0 %v2129
        %2812 = vmatprep.subr.bf16.mxu0 %v2114
        %2813 = vmatpush1.bf16.msra.mxu0 %v2113
        %2814 = vmatprep.subr.bf16.mxu0 %v2098
        %2815 = vmatpush1.bf16.msra.mxu0 %v2097
        %2816 = vmatprep.subr.bf16.mxu0 %v2082
        %2817 = vmatpush1.bf16.msra.mxu0 %v2081
        %2818 = vmatprep.subr.bf16.mxu0 %v2066
        %2819 = vmatpush1.bf16.msra.mxu0 %v2065
        %2820 = vmatprep.subr.bf16.mxu0 %v2050
        %2821 = vmatpush1.bf16.msra.mxu0 %v2049
        %2822 = vmatprep.subr.bf16.mxu0 %v2290
        %2823 = vmatpush2.bf16.msra.mxu0 %v2289
        %2824 = vmatprep.subr.bf16.mxu0 %v2274
        %2825 = vmatpush2.bf16.msra.mxu0 %v2273
        %2826 = vmatprep.subr.bf16.mxu0 %v2258
        %2827 = vmatpush2.bf16.msra.mxu0 %v2257
        %2828 = vmatprep.subr.bf16.mxu0 %v2242
        %2829 = vmatpush2.bf16.msra.mxu0 %v2241
        %2830 = vmatprep.subr.bf16.mxu0 %v2226
        %2831 = vmatpush2.bf16.msra.mxu0 %v2225
        %2832 = vmatprep.subr.bf16.mxu0 %v2210
        %2833 = vmatpush2.bf16.msra.mxu0 %v2209
        %2834 = vmatprep.subr.bf16.mxu0 %v2194
        %2835 = vmatpush2.bf16.msra.mxu0 %v2193
        %2836 = vmatprep.subr.bf16.mxu0 %v2178
        %2837 = vmatpush2.bf16.msra.mxu0 %v2177
        %2838 = vmatprep.mubr.bf16.mxu0 %v964
        %2839 = vmatmul.mubr.bf16.gmra.mxu0 %v963
        %v2840 = vpop.f32.mrf.mxu0
        %v2841 = vadd.f32 0.0, %v2840
        %v2842 = vpop.f32.mrf.mxu0
        %v2843 = vadd.f32 0.0, %v2842
        %v2844 = vpop.f32.mrf.mxu0
        %v2845 = vadd.f32 0.0, %v2844
        %v2846 = vpop.f32.mrf.mxu0
        %v2847 = vadd.f32 0.0, %v2846
        %2848 = vmatprep.mubr.bf16.mxu0 %v966
        %2849 = vmatmul.mubr.bf16.gmra.mxu0 %v965
        %v2850 = vpop.f32.mrf.mxu0
        %v2851 = vadd.f32 0.0, %v2850
        %v2852 = vpop.f32.mrf.mxu0
        %v2853 = vadd.f32 0.0, %v2852
        %v2854 = vpop.f32.mrf.mxu0
        %v2855 = vpop.f32.mrf.mxu0
        %2856 = vdwg.mxu0
        %2857 = vmatprep.subr.bf16.mxu0 %v2164
        %2858 = vmatpush1.bf16.msra.mxu0 %v2163
        %2859 = vmatprep.subr.bf16.mxu0 %v2148
        %2860 = vmatpush1.bf16.msra.mxu0 %v2147
        %2861 = vmatprep.subr.bf16.mxu0 %v2132
        %2862 = vmatpush1.bf16.msra.mxu0 %v2131
        %2863 = vmatprep.subr.bf16.mxu0 %v2116
        %2864 = vmatpush1.bf16.msra.mxu0 %v2115
        %2865 = vmatprep.subr.bf16.mxu0 %v2100
        %2866 = vmatpush1.bf16.msra.mxu0 %v2099
        %2867 = vmatprep.subr.bf16.mxu0 %v2084
        %2868 = vmatpush1.bf16.msra.mxu0 %v2083
        %2869 = vmatprep.subr.bf16.mxu0 %v2068
        %2870 = vmatpush1.bf16.msra.mxu0 %v2067
        %2871 = vmatprep.subr.bf16.mxu0 %v2052
        %2872 = vmatpush1.bf16.msra.mxu0 %v2051
        %2873 = vmatprep.subr.bf16.mxu0 %v2292
        %2874 = vmatpush2.bf16.msra.mxu0 %v2291
        %2875 = vmatprep.subr.bf16.mxu0 %v2276
        %2876 = vmatpush2.bf16.msra.mxu0 %v2275
        %2877 = vmatprep.subr.bf16.mxu0 %v2260
        %2878 = vmatpush2.bf16.msra.mxu0 %v2259
        %2879 = vmatprep.subr.bf16.mxu0 %v2244
        %2880 = vmatpush2.bf16.msra.mxu0 %v2243
        %2881 = vmatprep.subr.bf16.mxu0 %v2228
        %2882 = vmatpush2.bf16.msra.mxu0 %v2227
        %2883 = vmatprep.subr.bf16.mxu0 %v2212
        %2884 = vmatpush2.bf16.msra.mxu0 %v2211
        %2885 = vmatprep.subr.bf16.mxu0 %v2196
        %2886 = vmatpush2.bf16.msra.mxu0 %v2195
        %2887 = vmatprep.subr.bf16.mxu0 %v2180
        %2888 = vmatpush2.bf16.msra.mxu0 %v2179
        %2889 = vmatprep.mubr.bf16.mxu0 %v964
        %2890 = vmatmul.mubr.bf16.gmra.mxu0 %v963
        %v2891 = vpop.f32.mrf.mxu0
        %v2892 = vadd.f32 0.0, %v2891
        %v2893 = vpop.f32.mrf.mxu0
        %v2894 = vadd.f32 0.0, %v2893
        %v2895 = vpop.f32.mrf.mxu0
        %v2896 = vadd.f32 0.0, %v2895
        %v2897 = vpop.f32.mrf.mxu0
        %v2898 = vadd.f32 0.0, %v2897
        %2899 = vmatprep.mubr.bf16.mxu0 %v966
        %2900 = vmatmul.mubr.bf16.gmra.mxu0 %v965
        %v2901 = vpop.f32.mrf.mxu0
        %v2902 = vadd.f32 0.0, %v2901
        %v2903 = vpop.f32.mrf.mxu0
        %v2904 = vadd.f32 0.0, %v2903
        %v2905 = vpop.f32.mrf.mxu0
        %v2906 = vpop.f32.mrf.mxu0
        %2907 = vdwg.mxu0
        %2908 = vmatprep.subr.bf16.mxu0 %v2166
        %2909 = vmatpush1.bf16.msra.mxu0 %v2165
        %2910 = vmatprep.subr.bf16.mxu0 %v2150
        %2911 = vmatpush1.bf16.msra.mxu0 %v2149
        %2912 = vmatprep.subr.bf16.mxu0 %v2134
        %2913 = vmatpush1.bf16.msra.mxu0 %v2133
        %2914 = vmatprep.subr.bf16.mxu0 %v2118
        %2915 = vmatpush1.bf16.msra.mxu0 %v2117
        %2916 = vmatprep.subr.bf16.mxu0 %v2102
        %2917 = vmatpush1.bf16.msra.mxu0 %v2101
        %2918 = vmatprep.subr.bf16.mxu0 %v2086
        %2919 = vmatpush1.bf16.msra.mxu0 %v2085
        %2920 = vmatprep.subr.bf16.mxu0 %v2070
        %2921 = vmatpush1.bf16.msra.mxu0 %v2069
        %2922 = vmatprep.subr.bf16.mxu0 %v2054
        %2923 = vmatpush1.bf16.msra.mxu0 %v2053
        %2924 = vmatprep.subr.bf16.mxu0 %v2294
        %2925 = vmatpush2.bf16.msra.mxu0 %v2293
        %2926 = vmatprep.subr.bf16.mxu0 %v2278
        %2927 = vmatpush2.bf16.msra.mxu0 %v2277
        %2928 = vmatprep.subr.bf16.mxu0 %v2262
        %2929 = vmatpush2.bf16.msra.mxu0 %v2261
        %2930 = vmatprep.subr.bf16.mxu0 %v2246
        %2931 = vmatpush2.bf16.msra.mxu0 %v2245
        %2932 = vmatprep.subr.bf16.mxu0 %v2230
        %2933 = vmatpush2.bf16.msra.mxu0 %v2229
        %2934 = vmatprep.subr.bf16.mxu0 %v2214
        %2935 = vmatpush2.bf16.msra.mxu0 %v2213
        %2936 = vmatprep.subr.bf16.mxu0 %v2198
        %2937 = vmatpush2.bf16.msra.mxu0 %v2197
        %2938 = vmatprep.subr.bf16.mxu0 %v2182
        %2939 = vmatpush2.bf16.msra.mxu0 %v2181
        %2940 = vmatprep.mubr.bf16.mxu0 %v964
        %2941 = vmatmul.mubr.bf16.gmra.mxu0 %v963
        %v2942 = vpop.f32.mrf.mxu0
        %v2943 = vadd.f32 0.0, %v2942
        %v2944 = vpop.f32.mrf.mxu0
        %v2945 = vadd.f32 0.0, %v2944
        %v2946 = vpop.f32.mrf.mxu0
        %v2947 = vadd.f32 0.0, %v2946
        %v2948 = vpop.f32.mrf.mxu0
        %v2949 = vadd.f32 0.0, %v2948
        %2950 = vmatprep.mubr.bf16.mxu0 %v966
        %2951 = vmatmul.mubr.bf16.gmra.mxu0 %v965
        %v2952 = vpop.f32.mrf.mxu0
        %v2953 = vadd.f32 0.0, %v2952
        %v2954 = vpop.f32.mrf.mxu0
        %v2955 = vadd.f32 0.0, %v2954
        %v2956 = vpop.f32.mrf.mxu0
        %v2957 = vpop.f32.mrf.mxu0
        %2958 = vdwg.mxu0
        %v2959 = vadd.f32 %v967, %v2586
        %v2960 = vadd.f32 %v968, %v2588
        %v2961 = vadd.f32 %v969, %v2637
        %v2962 = vadd.f32 %v970, %v2639
        %v2963 = vadd.f32 %v971, %v2688
        %v2964 = vadd.f32 %v972, %v2690
        %v2965 = vadd.f32 %v973, %v2739
        %v2966 = vadd.f32 %v974, %v2741
        %v2967 = vadd.f32 %v975, %v2790
        %v2968 = vadd.f32 %v976, %v2792
        %v2969 = vadd.f32 %v977, %v2841
        %v2970 = vadd.f32 %v978, %v2843
        %v2971 = vadd.f32 %v979, %v2892
        %v2972 = vadd.f32 %v980, %v2894
        %v2973 = vadd.f32 %v981, %v2943
        %v2974 = vadd.f32 %v982, %v2945
        %v2975 = vadd.f32 %v983, %v2590
        %v2976 = vadd.f32 %v984, %v2592
        %v2977 = vadd.f32 %v985, %v2641
        %v2978 = vadd.f32 %v986, %v2643
        %v2979 = vadd.f32 %v987, %v2692
        %v2980 = vadd.f32 %v988, %v2694
        %v2981 = vadd.f32 %v989, %v2743
        %v2982 = vadd.f32 %v990, %v2745
        %v2983 = vadd.f32 %v991, %v2794
        %v2984 = vadd.f32 %v992, %v2796
        %v2985 = vadd.f32 %v993, %v2845
        %v2986 = vadd.f32 %v994, %v2847
        %v2987 = vadd.f32 %v995, %v2896
        %v2988 = vadd.f32 %v996, %v2898
        %v2989 = vadd.f32 %v997, %v2947
        %v2990 = vadd.f32 %v998, %v2949
        %v2991 = vadd.f32 %v999, %v2596
        %v2992 = vadd.f32 %v1000, %v2598
        %v2993 = vadd.f32 %v1001, %v2647
        %v2994 = vadd.f32 %v1002, %v2649
        %v2995 = vadd.f32 %v1003, %v2698
        %v2996 = vadd.f32 %v1004, %v2700
        %v2997 = vadd.f32 %v1005, %v2749
        %v2998 = vadd.f32 %v1006, %v2751
        %v2999 = vadd.f32 %v1007, %v2800
        %v3000 = vadd.f32 %v1008, %v2802
        %v3001 = vadd.f32 %v1009, %v2851
        %v3002 = vadd.f32 %v1010, %v2853
        %v3003 = vadd.f32 %v1011, %v2902
        %v3004 = vadd.f32 %v1012, %v2904
        %v3005 = vadd.f32 %v1013, %v2953
        %v3006 = vadd.f32 %v1014, %v2955
        %3007 = vst [vmem:[#allocation2] sm:$0xff] %v2959
        %3008 = vst [vmem:[#allocation2 + $0x8] sm:$0xff] %v2960
        %3009 = vst [vmem:[#allocation2 + $0x10] sm:$0xff] %v2961
        %3010 = vst [vmem:[#allocation2 + $0x18] sm:$0xff] %v2962
        %3011 = vst [vmem:[#allocation2 + $0x20] sm:$0xff] %v2963
        %3012 = vst [vmem:[#allocation2 + $0x28] sm:$0xff] %v2964
        %3013 = vst [vmem:[#allocation2 + $0x30] sm:$0xff] %v2965
        %3014 = vst [vmem:[#allocation2 + $0x38] sm:$0xff] %v2966
        %3015 = vst [vmem:[#allocation2 + $0x40] sm:$0xff] %v2967
        %3016 = vst [vmem:[#allocation2 + $0x48] sm:$0xff] %v2968
        %3017 = vst [vmem:[#allocation2 + $0x50] sm:$0xff] %v2969
        %3018 = vst [vmem:[#allocation2 + $0x58] sm:$0xff] %v2970
        %3019 = vst [vmem:[#allocation2 + $0x60] sm:$0xff] %v2971
        %3020 = vst [vmem:[#allocation2 + $0x68] sm:$0xff] %v2972
        %3021 = vst [vmem:[#allocation2 + $0x70] sm:$0xff] %v2973
        %3022 = vst [vmem:[#allocation2 + $0x78] sm:$0xff] %v2974
        %3023 = vst [vmem:[#allocation2 + $0x80] sm:$0xff] %v2975
        %3024 = vst [vmem:[#allocation2 + $0x88] sm:$0xff] %v2976
        %3025 = vst [vmem:[#allocation2 + $0x90] sm:$0xff] %v2977
        %3026 = vst [vmem:[#allocation2 + $0x98] sm:$0xff] %v2978
        %3027 = vst [vmem:[#allocation2 + $0xa0] sm:$0xff] %v2979
        %3028 = vst [vmem:[#allocation2 + $0xa8] sm:$0xff] %v2980
        %3029 = vst [vmem:[#allocation2 + $0xb0] sm:$0xff] %v2981
        %3030 = vst [vmem:[#allocation2 + $0xb8] sm:$0xff] %v2982
        %3031 = vst [vmem:[#allocation2 + $0xc0] sm:$0xff] %v2983
        %3032 = vst [vmem:[#allocation2 + $0xc8] sm:$0xff] %v2984
        %3033 = vst [vmem:[#allocation2 + $0xd0] sm:$0xff] %v2985
        %3034 = vst [vmem:[#allocation2 + $0xd8] sm:$0xff] %v2986
        %3035 = vst [vmem:[#allocation2 + $0xe0] sm:$0xff] %v2987
        %3036 = vst [vmem:[#allocation2 + $0xe8] sm:$0xff] %v2988
        %3037 = vst [vmem:[#allocation2 + $0xf0] sm:$0xff] %v2989
        %3038 = vst [vmem:[#allocation2 + $0xf8] sm:$0xff] %v2990
        %3039 = vst [vmem:[#allocation2 + $0x100] sm:$0xff] %v2991
        %3040 = vst [vmem:[#allocation2 + $0x108] sm:$0xff] %v2992
        %3041 = vst [vmem:[#allocation2 + $0x110] sm:$0xff] %v2993
        %3042 = vst [vmem:[#allocation2 + $0x118] sm:$0xff] %v2994
        %3043 = vst [vmem:[#allocation2 + $0x120] sm:$0xff] %v2995
        %3044 = vst [vmem:[#allocation2 + $0x128] sm:$0xff] %v2996
        %3045 = vst [vmem:[#allocation2 + $0x130] sm:$0xff] %v2997
        %3046 = vst [vmem:[#allocation2 + $0x138] sm:$0xff] %v2998
        %3047 = vst [vmem:[#allocation2 + $0x140] sm:$0xff] %v2999
        %3048 = vst [vmem:[#allocation2 + $0x148] sm:$0xff] %v3000
        %3049 = vst [vmem:[#allocation2 + $0x150] sm:$0xff] %v3001
        %3050 = vst [vmem:[#allocation2 + $0x158] sm:$0xff] %v3002
        %3051 = vst [vmem:[#allocation2 + $0x160] sm:$0xff] %v3003
        %3052 = vst [vmem:[#allocation2 + $0x168] sm:$0xff] %v3004
        %3053 = vst [vmem:[#allocation2 + $0x170] sm:$0xff] %v3005
        %3054 = vst [vmem:[#allocation2 + $0x178] sm:$0xff] %v3006
        %v3055 = vld [vmem:[#allocation3] sm:$0xff]
        %v3056 = vld [vmem:[#allocation3 + $0x8] sm:$0xff]
        %v3057 = vld [vmem:[#allocation3 + $0x10] sm:$0xff]
        %v3058 = vld [vmem:[#allocation3 + $0x18] sm:$0xff]
        %v3059 = vld [vmem:[#allocation3 + $0x20] sm:$0xff]
        %v3060 = vld [vmem:[#allocation3 + $0x28] sm:$0xff]
        %v3061 = vld [vmem:[#allocation3 + $0x30] sm:$0xff]
        %v3062 = vld [vmem:[#allocation3 + $0x38] sm:$0xff]
        %v3063 = vld [vmem:[#allocation3 + $0x40] sm:$0xff]
        %v3064 = vld [vmem:[#allocation3 + $0x48] sm:$0xff]
        %v3065 = vld [vmem:[#allocation3 + $0x50] sm:$0xff]
        %v3066 = vld [vmem:[#allocation3 + $0x58] sm:$0xff]
        %v3067 = vld [vmem:[#allocation3 + $0x60] sm:$0xff]
        %v3068 = vld [vmem:[#allocation3 + $0x68] sm:$0xff]
        %v3069 = vld [vmem:[#allocation3 + $0x70] sm:$0xff]
        %v3070 = vld [vmem:[#allocation3 + $0x78] sm:$0xff]
        %v3071 = vld [vmem:[#allocation3 + $0x80] sm:$0xff]
        %v3072 = vld [vmem:[#allocation3 + $0x88] sm:$0xff]
        %v3073 = vld [vmem:[#allocation3 + $0x90] sm:$0xff]
        %v3074 = vld [vmem:[#allocation3 + $0x98] sm:$0xff]
        %v3075 = vld [vmem:[#allocation3 + $0xa0] sm:$0xff]
        %v3076 = vld [vmem:[#allocation3 + $0xa8] sm:$0xff]
        %v3077 = vld [vmem:[#allocation3 + $0xb0] sm:$0xff]
        %v3078 = vld [vmem:[#allocation3 + $0xb8] sm:$0xff]
        %v3079 = vld [vmem:[#allocation3 + $0xc0] sm:$0xff]
        %v3080 = vld [vmem:[#allocation3 + $0xc8] sm:$0xff]
        %v3081 = vld [vmem:[#allocation3 + $0xd0] sm:$0xff]
        %v3082 = vld [vmem:[#allocation3 + $0xd8] sm:$0xff]
        %v3083 = vld [vmem:[#allocation3 + $0xe0] sm:$0xff]
        %v3084 = vld [vmem:[#allocation3 + $0xe8] sm:$0xff]
        %v3085 = vld [vmem:[#allocation3 + $0xf0] sm:$0xff]
        %v3086 = vld [vmem:[#allocation3 + $0xf8] sm:$0xff]
        %v3087 = vld [vmem:[#allocation3 + $0x100] sm:$0xff]
        %v3088 = vld [vmem:[#allocation3 + $0x108] sm:$0xff]
        %v3089 = vld [vmem:[#allocation3 + $0x110] sm:$0xff]
        %v3090 = vld [vmem:[#allocation3 + $0x118] sm:$0xff]
        %v3091 = vld [vmem:[#allocation3 + $0x120] sm:$0xff]
        %v3092 = vld [vmem:[#allocation3 + $0x128] sm:$0xff]
        %v3093 = vld [vmem:[#allocation3 + $0x130] sm:$0xff]
        %v3094 = vld [vmem:[#allocation3 + $0x138] sm:$0xff]
        %v3095 = vld [vmem:[#allocation3 + $0x140] sm:$0xff]
        %v3096 = vld [vmem:[#allocation3 + $0x148] sm:$0xff]
        %v3097 = vld [vmem:[#allocation3 + $0x150] sm:$0xff]
        %v3098 = vld [vmem:[#allocation3 + $0x158] sm:$0xff]
        %v3099 = vld [vmem:[#allocation3 + $0x160] sm:$0xff]
        %v3100 = vld [vmem:[%s716] sm:$0xff]
        %v3101 = vld [vmem:[%s716 + $0x8] sm:$0xff]
        %v3102 = vld [vmem:[%s716 + $0x10] sm:$0xff]
        %v3103 = vld [vmem:[%s716 + $0x18] sm:$0xff]
        %v3104 = vld [vmem:[%s716 + $0x20] sm:$0xff]
        %v3105 = vld [vmem:[%s716 + $0x28] sm:$0xff]
        %v3106 = vld [vmem:[%s716 + $0x30] sm:$0xff]
        %v3107 = vld [vmem:[%s716 + $0x38] sm:$0xf]
        %v3108 = vld [vmem:[%s716 + $0x3c] sm:$0xff]
        %v3109 = vld [vmem:[%s716 + $0x44] sm:$0xff]
        %v3110 = vld [vmem:[%s716 + $0x4c] sm:$0xff]
        %v3111 = vld [vmem:[%s716 + $0x54] sm:$0xff]
        %v3112 = vld [vmem:[%s716 + $0x5c] sm:$0xff]
        %v3113 = vld [vmem:[%s716 + $0x64] sm:$0xff]
        %v3114 = vld [vmem:[%s716 + $0x6c] sm:$0xff]
        %v3115 = vld [vmem:[%s716 + $0x74] sm:$0xf]
        %v3116 = vld [vmem:[%s716 + $0x78] sm:$0xff]
        %v3117 = vld [vmem:[%s716 + $0x80] sm:$0xff]
        %v3118 = vld [vmem:[%s716 + $0x88] sm:$0xff]
        %v3119 = vld [vmem:[%s716 + $0x90] sm:$0xff]
        %v3120 = vld [vmem:[%s716 + $0x98] sm:$0xff]
        %v3121 = vld [vmem:[%s716 + $0xa0] sm:$0xff]
        %v3122 = vld [vmem:[%s716 + $0xa8] sm:$0xff]
        %v3123 = vld [vmem:[%s716 + $0xb0] sm:$0xf]
        %v3124 = vld [vmem:[%s716 + $0xb4] sm:$0xff]
        %v3125 = vld [vmem:[%s716 + $0xbc] sm:$0xff]
        %v3126 = vld [vmem:[%s716 + $0xc4] sm:$0xff]
        %v3127 = vld [vmem:[%s716 + $0xcc] sm:$0xff]
        %v3128 = vld [vmem:[%s716 + $0xd4] sm:$0xff]
        %v3129 = vld [vmem:[%s716 + $0xdc] sm:$0xff]
        %v3130 = vld [vmem:[%s716 + $0xe4] sm:$0xff]
        %v3131 = vld [vmem:[%s716 + $0xec] sm:$0xf]
        %v3132 = vld [vmem:[%s716 + $0xf0] sm:$0xff]
        %v3133 = vld [vmem:[%s716 + $0xf8] sm:$0xff]
        %v3134 = vld [vmem:[%s716 + $0x100] sm:$0xff]
        %v3135 = vld [vmem:[%s716 + $0x108] sm:$0xff]
        %v3136 = vld [vmem:[%s716 + $0x110] sm:$0xff]
        %v3137 = vld [vmem:[%s716 + $0x118] sm:$0xff]
        %v3138 = vld [vmem:[%s716 + $0x120] sm:$0xff]
        %v3139 = vld [vmem:[%s716 + $0x128] sm:$0xf]
        %v3140 = vld [vmem:[%s716 + $0x12c] sm:$0xff]
        %v3141 = vld [vmem:[%s716 + $0x134] sm:$0xff]
        %v3142 = vld [vmem:[%s716 + $0x13c] sm:$0xff]
        %v3143 = vld [vmem:[%s716 + $0x144] sm:$0xff]
        %v3144 = vld [vmem:[%s716 + $0x14c] sm:$0xff]
        %v3145 = vld [vmem:[%s716 + $0x154] sm:$0xff]
        %v3146 = vld [vmem:[%s716 + $0x15c] sm:$0xff]
        %v3147 = vld [vmem:[%s716 + $0x164] sm:$0xf]
        %v3148 = vld [vmem:[%s716 + $0x168] sm:$0xff]
        %v3149 = vld [vmem:[%s716 + $0x170] sm:$0xff]
        %v3150 = vld [vmem:[%s716 + $0x178] sm:$0xff]
        %v3151 = vld [vmem:[%s716 + $0x180] sm:$0xff]
        %v3152 = vld [vmem:[%s716 + $0x188] sm:$0xff]
        %v3153 = vld [vmem:[%s716 + $0x190] sm:$0xff]
        %v3154 = vld [vmem:[%s716 + $0x198] sm:$0xff]
        %v3155 = vld [vmem:[%s716 + $0x1a0] sm:$0xf]
        %v3156 = vld [vmem:[%s716 + $0x1a4] sm:$0xff]
        %v3157 = vld [vmem:[%s716 + $0x1ac] sm:$0xff]
        %v3158 = vld [vmem:[%s716 + $0x1b4] sm:$0xff]
        %v3159 = vld [vmem:[%s716 + $0x1bc] sm:$0xff]
        %v3160 = vld [vmem:[%s716 + $0x1c4] sm:$0xff]
        %v3161 = vld [vmem:[%s716 + $0x1cc] sm:$0xff]
        %v3162 = vld [vmem:[%s716 + $0x1d4] sm:$0xff]
        %v3163 = vld [vmem:[%s716 + $0x1dc] sm:$0xf]
        %v3164 = vld [vmem:[%s716 + $0x1e0] sm:$0xff]
        %v3165 = vld [vmem:[%s716 + $0x1e8] sm:$0xff]
        %v3166 = vld [vmem:[%s716 + $0x1f0] sm:$0xff]
        %v3167 = vld [vmem:[%s716 + $0x1f8] sm:$0xff]
        %v3168 = vld [vmem:[%s716 + $0x200] sm:$0xff]
        %v3169 = vld [vmem:[%s716 + $0x208] sm:$0xff]
        %v3170 = vld [vmem:[%s716 + $0x210] sm:$0xff]
        %v3171 = vld [vmem:[%s716 + $0x218] sm:$0xf]
        %v3172 = vld [vmem:[%s716 + $0x21c] sm:$0xff]
        %v3173 = vld [vmem:[%s716 + $0x224] sm:$0xff]
        %v3174 = vld [vmem:[%s716 + $0x22c] sm:$0xff]
        %v3175 = vld [vmem:[%s716 + $0x234] sm:$0xff]
        %v3176 = vld [vmem:[%s716 + $0x23c] sm:$0xff]
        %v3177 = vld [vmem:[%s716 + $0x244] sm:$0xff]
        %v3178 = vld [vmem:[%s716 + $0x24c] sm:$0xff]
        %v3179 = vld [vmem:[%s716 + $0x254] sm:$0xf]
        %v3180 = vld [vmem:[%s716 + $0x258] sm:$0xff]
        %v3181 = vld [vmem:[%s716 + $0x260] sm:$0xff]
        %v3182 = vld [vmem:[%s716 + $0x268] sm:$0xff]
        %v3183 = vld [vmem:[%s716 + $0x270] sm:$0xff]
        %v3184 = vld [vmem:[%s716 + $0x278] sm:$0xff]
        %v3185 = vld [vmem:[%s716 + $0x280] sm:$0xff]
        %v3186 = vld [vmem:[%s716 + $0x288] sm:$0xff]
        %v3187 = vld [vmem:[%s716 + $0x290] sm:$0xf]
        %v3188 = vld [vmem:[%s716 + $0x294] sm:$0xff]
        %v3189 = vld [vmem:[%s716 + $0x29c] sm:$0xff]
        %v3190 = vld [vmem:[%s716 + $0x2a4] sm:$0xff]
        %v3191 = vld [vmem:[%s716 + $0x2ac] sm:$0xff]
        %v3192 = vld [vmem:[%s716 + $0x2b4] sm:$0xff]
        %v3193 = vld [vmem:[%s716 + $0x2bc] sm:$0xff]
        %v3194 = vld [vmem:[%s716 + $0x2c4] sm:$0xff]
        %v3195 = vld [vmem:[%s716 + $0x2cc] sm:$0xf]
        %v3196 = vld [vmem:[%s716 + $0x2d0] sm:$0xff]
        %v3197 = vld [vmem:[%s716 + $0x2d8] sm:$0xff]
        %v3198 = vld [vmem:[%s716 + $0x2e0] sm:$0xff]
        %v3199 = vld [vmem:[%s716 + $0x2e8] sm:$0xff]
        %v3200 = vld [vmem:[%s716 + $0x2f0] sm:$0xff]
        %v3201 = vld [vmem:[%s716 + $0x2f8] sm:$0xff]
        %v3202 = vld [vmem:[%s716 + $0x300] sm:$0xff]
        %v3203 = vld [vmem:[%s716 + $0x308] sm:$0xf]
        %v3204 = vld [vmem:[%s716 + $0x30c] sm:$0xff]
        %v3205 = vld [vmem:[%s716 + $0x314] sm:$0xff]
        %v3206 = vld [vmem:[%s716 + $0x31c] sm:$0xff]
        %v3207 = vld [vmem:[%s716 + $0x324] sm:$0xff]
        %v3208 = vld [vmem:[%s716 + $0x32c] sm:$0xff]
        %v3209 = vld [vmem:[%s716 + $0x334] sm:$0xff]
        %v3210 = vld [vmem:[%s716 + $0x33c] sm:$0xff]
        %v3211 = vld [vmem:[%s716 + $0x344] sm:$0xf]
        %v3212 = vld [vmem:[%s716 + $0x348] sm:$0xff]
        %v3213 = vld [vmem:[%s716 + $0x350] sm:$0xff]
        %v3214 = vld [vmem:[%s716 + $0x358] sm:$0xff]
        %v3215 = vld [vmem:[%s716 + $0x360] sm:$0xff]
        %v3216 = vld [vmem:[%s716 + $0x368] sm:$0xff]
        %v3217 = vld [vmem:[%s716 + $0x370] sm:$0xff]
        %v3218 = vld [vmem:[%s716 + $0x378] sm:$0xff]
        %v3219 = vld [vmem:[%s716 + $0x380] sm:$0xf]
        %v3220 = vld [vmem:[%s716 + $0x384] sm:$0xff]
        %v3221 = vld [vmem:[%s716 + $0x38c] sm:$0xff]
        %v3222 = vld [vmem:[%s716 + $0x394] sm:$0xff]
        %v3223 = vld [vmem:[%s716 + $0x39c] sm:$0xff]
        %v3224 = vld [vmem:[%s716 + $0x3a4] sm:$0xff]
        %v3225 = vld [vmem:[%s716 + $0x3ac] sm:$0xff]
        %v3226 = vld [vmem:[%s716 + $0x3b4] sm:$0xff]
        %v3227 = vld [vmem:[%s716 + $0x3bc] sm:$0xf]
        %v3228 = vld [vmem:[%s716 + $0x3c0] sm:$0xff]
        %v3229 = vld [vmem:[%s716 + $0x3c8] sm:$0xff]
        %v3230 = vld [vmem:[%s716 + $0x3d0] sm:$0xff]
        %v3231 = vld [vmem:[%s716 + $0x3d8] sm:$0xff]
        %v3232 = vld [vmem:[%s716 + $0x3e0] sm:$0xff]
        %v3233 = vld [vmem:[%s716 + $0x3e8] sm:$0xff]
        %v3234 = vld [vmem:[%s716 + $0x3f0] sm:$0xff]
        %v3235 = vld [vmem:[%s716 + $0x3f8] sm:$0xf]
        %v3236 = vld [vmem:[%s716 + $0x3fc] sm:$0xff]
        %v3237 = vld [vmem:[%s716 + $0x404] sm:$0xff]
        %v3238 = vld [vmem:[%s716 + $0x40c] sm:$0xff]
        %v3239 = vld [vmem:[%s716 + $0x414] sm:$0xff]
        %v3240 = vld [vmem:[%s716 + $0x41c] sm:$0xff]
        %v3241 = vld [vmem:[%s716 + $0x424] sm:$0xff]
        %v3242 = vld [vmem:[%s716 + $0x42c] sm:$0xff]
        %v3243 = vld [vmem:[%s716 + $0x434] sm:$0xf]
        %v3244 = vld [vmem:[%s716 + $0x438] sm:$0xff]
        %v3245 = vld [vmem:[%s716 + $0x440] sm:$0xff]
        %v3246 = vld [vmem:[%s716 + $0x448] sm:$0xff]
        %v3247 = vld [vmem:[%s716 + $0x450] sm:$0xff]
        %v3248 = vld [vmem:[%s716 + $0x458] sm:$0xff]
        %v3249 = vld [vmem:[%s716 + $0x460] sm:$0xff]
        %v3250 = vld [vmem:[%s716 + $0x468] sm:$0xff]
        %v3251 = vld [vmem:[%s716 + $0x470] sm:$0xf]
        %v3252 = vld [vmem:[%s716 + $0x474] sm:$0xff]
        %v3253 = vld [vmem:[%s716 + $0x47c] sm:$0xff]
        %v3254 = vld [vmem:[%s716 + $0x484] sm:$0xff]
        %v3255 = vld [vmem:[%s716 + $0x48c] sm:$0xff]
        %v3256 = vld [vmem:[%s716 + $0x494] sm:$0xff]
        %v3257 = vld [vmem:[%s716 + $0x49c] sm:$0xff]
        %v3258 = vld [vmem:[%s716 + $0x4a4] sm:$0xff]
        %v3259 = vld [vmem:[%s716 + $0x4ac] sm:$0xf]
        %v3260 = vld [vmem:[%s716 + $0x4b0] sm:$0xff]
        %v3261 = vld [vmem:[%s716 + $0x4b8] sm:$0xff]
        %v3262 = vld [vmem:[%s716 + $0x4c0] sm:$0xff]
        %v3263 = vld [vmem:[%s716 + $0x4c8] sm:$0xff]
        %v3264 = vld [vmem:[%s716 + $0x4d0] sm:$0xff]
        %v3265 = vld [vmem:[%s716 + $0x4d8] sm:$0xff]
        %v3266 = vld [vmem:[%s716 + $0x4e0] sm:$0xff]
        %v3267 = vld [vmem:[%s716 + $0x4e8] sm:$0xf]
        %v3268 = vld [vmem:[%s716 + $0x4ec] sm:$0xff]
        %v3269 = vld [vmem:[%s716 + $0x4f4] sm:$0xff]
        %v3270 = vld [vmem:[%s716 + $0x4fc] sm:$0xff]
        %v3271 = vld [vmem:[%s716 + $0x504] sm:$0xff]
        %v3272 = vld [vmem:[%s716 + $0x50c] sm:$0xff]
        %v3273 = vld [vmem:[%s716 + $0x514] sm:$0xff]
        %v3274 = vld [vmem:[%s716 + $0x51c] sm:$0xff]
        %v3275 = vld [vmem:[%s716 + $0x524] sm:$0xf]
        %v3276 = vld [vmem:[%s716 + $0x528] sm:$0xff]
        %v3277 = vld [vmem:[%s716 + $0x530] sm:$0xff]
        %v3278 = vld [vmem:[%s716 + $0x538] sm:$0xff]
        %v3279 = vld [vmem:[%s716 + $0x540] sm:$0xff]
        %v3280 = vld [vmem:[%s716 + $0x548] sm:$0xff]
        %v3281 = vld [vmem:[%s716 + $0x550] sm:$0xff]
        %v3282 = vld [vmem:[%s716 + $0x558] sm:$0xff]
        %v3283 = vld [vmem:[%s716 + $0x560] sm:$0xf]
        %v3284 = vld [vmem:[%s716 + $0x564] sm:$0xff]
        %v3285 = vld [vmem:[%s716 + $0x56c] sm:$0xff]
        %v3286 = vld [vmem:[%s716 + $0x574] sm:$0xff]
        %v3287 = vld [vmem:[%s716 + $0x57c] sm:$0xff]
        %v3288 = vld [vmem:[%s716 + $0x584] sm:$0xff]
        %v3289 = vld [vmem:[%s716 + $0x58c] sm:$0xff]
        %v3290 = vld [vmem:[%s716 + $0x594] sm:$0xff]
        %v3291 = vld [vmem:[%s716 + $0x59c] sm:$0xf]
        %v3292 = vld [vmem:[%s716 + $0x5a0] sm:$0xff]
        %v3293 = vld [vmem:[%s716 + $0x5a8] sm:$0xff]
        %v3294 = vld [vmem:[%s716 + $0x5b0] sm:$0xff]
        %v3295 = vld [vmem:[%s716 + $0x5b8] sm:$0xff]
        %v3296 = vld [vmem:[%s716 + $0x5c0] sm:$0xff]
        %v3297 = vld [vmem:[%s716 + $0x5c8] sm:$0xff]
        %v3298 = vld [vmem:[%s716 + $0x5d0] sm:$0xff]
        %v3299 = vld [vmem:[%s716 + $0x5d8] sm:$0xf]
        %v3300 = vld [vmem:[%s716 + $0x5dc] sm:$0xff]
        %v3301 = vld [vmem:[%s716 + $0x5e4] sm:$0xff]
        %v3302 = vld [vmem:[%s716 + $0x5ec] sm:$0xff]
        %v3303 = vld [vmem:[%s716 + $0x5f4] sm:$0xff]
        %v3304 = vld [vmem:[%s716 + $0x5fc] sm:$0xff]
        %v3305 = vld [vmem:[%s716 + $0x604] sm:$0xff]
        %v3306 = vld [vmem:[%s716 + $0x60c] sm:$0xff]
        %v3307 = vld [vmem:[%s716 + $0x614] sm:$0xf]
        %v3308 = vld [vmem:[%s716 + $0x618] sm:$0xff]
        %v3309 = vld [vmem:[%s716 + $0x620] sm:$0xff]
        %v3310 = vld [vmem:[%s716 + $0x628] sm:$0xff]
        %v3311 = vld [vmem:[%s716 + $0x630] sm:$0xff]
        %v3312 = vld [vmem:[%s716 + $0x638] sm:$0xff]
        %v3313 = vld [vmem:[%s716 + $0x640] sm:$0xff]
        %v3314 = vld [vmem:[%s716 + $0x648] sm:$0xff]
        %v3315 = vld [vmem:[%s716 + $0x650] sm:$0xf]
        %v3316 = vld [vmem:[%s716 + $0x654] sm:$0xff]
        %v3317 = vld [vmem:[%s716 + $0x65c] sm:$0xff]
        %v3318 = vld [vmem:[%s716 + $0x664] sm:$0xff]
        %v3319 = vld [vmem:[%s716 + $0x66c] sm:$0xff]
        %v3320 = vld [vmem:[%s716 + $0x674] sm:$0xff]
        %v3321 = vld [vmem:[%s716 + $0x67c] sm:$0xff]
        %v3322 = vld [vmem:[%s716 + $0x684] sm:$0xff]
        %v3323 = vld [vmem:[%s716 + $0x68c] sm:$0xf]
        %v3324 = vld [vmem:[%s716 + $0x690] sm:$0xff]
        %v3325 = vld [vmem:[%s716 + $0x698] sm:$0xff]
        %v3326 = vld [vmem:[%s716 + $0x6a0] sm:$0xff]
        %v3327 = vld [vmem:[%s716 + $0x6a8] sm:$0xff]
        %v3328 = vld [vmem:[%s716 + $0x6b0] sm:$0xff]
        %v3329 = vld [vmem:[%s716 + $0x6b8] sm:$0xff]
        %v3330 = vld [vmem:[%s716 + $0x6c0] sm:$0xff]
        %v3331 = vld [vmem:[%s716 + $0x6c8] sm:$0xf]
        %v3332 = vld [vmem:[%s716 + $0x6cc] sm:$0xff]
        %v3333 = vld [vmem:[%s716 + $0x6d4] sm:$0xff]
        %v3334 = vld [vmem:[%s716 + $0x6dc] sm:$0xff]
        %v3335 = vld [vmem:[%s716 + $0x6e4] sm:$0xff]
        %v3336 = vld [vmem:[%s716 + $0x6ec] sm:$0xff]
        %v3337 = vld [vmem:[%s716 + $0x6f4] sm:$0xff]
        %v3338 = vld [vmem:[%s716 + $0x6fc] sm:$0xff]
        %v3339 = vld [vmem:[%s716 + $0x704] sm:$0xf]
        %v3340 = vld [vmem:[%s716 + $0x708] sm:$0xff]
        %v3341 = vld [vmem:[%s716 + $0x710] sm:$0xff]
        %v3342 = vld [vmem:[%s716 + $0x718] sm:$0xff]
        %v3343 = vld [vmem:[%s716 + $0x720] sm:$0xff]
        %v3344 = vld [vmem:[%s716 + $0x728] sm:$0xff]
        %v3345 = vld [vmem:[%s716 + $0x730] sm:$0xff]
        %v3346 = vld [vmem:[%s716 + $0x738] sm:$0xff]
        %v3347 = vld [vmem:[%s716 + $0x740] sm:$0xf]
        %v3348 = vld [vmem:[%s716 + $0x744] sm:$0xff]
        %v3349 = vld [vmem:[%s716 + $0x74c] sm:$0xff]
        %v3350 = vld [vmem:[%s716 + $0x754] sm:$0xff]
        %v3351 = vld [vmem:[%s716 + $0x75c] sm:$0xff]
        %v3352 = vld [vmem:[%s716 + $0x764] sm:$0xff]
        %v3353 = vld [vmem:[%s716 + $0x76c] sm:$0xff]
        %v3354 = vld [vmem:[%s716 + $0x774] sm:$0xff]
        %v3355 = vld [vmem:[%s716 + $0x77c] sm:$0xf]
        %v3612 = vunpack.c.l.b16 %v3100
        %v3613 = vunpack.c.h.b16 %v3100
        %v3614 = vunpack.c.l.b16 %v3101
        %v3615 = vunpack.c.h.b16 %v3101
        %v3616 = vunpack.c.l.b16 %v3102
        %v3617 = vunpack.c.h.b16 %v3102
        %v3618 = vunpack.c.l.b16 %v3103
        %v3619 = vunpack.c.h.b16 %v3103
        %v3620 = vunpack.c.l.b16 %v3104
        %v3621 = vunpack.c.h.b16 %v3104
        %v3622 = vunpack.c.l.b16 %v3105
        %v3623 = vunpack.c.h.b16 %v3105
        %v3624 = vunpack.c.l.b16 %v3106
        %v3625 = vunpack.c.h.b16 %v3106
        %v3626 = vunpack.c.l.b16 %v3107
        %v3627 = vunpack.c.l.b16 %v3108
        %v3628 = vunpack.c.h.b16 %v3108
        %v3629 = vunpack.c.l.b16 %v3109
        %v3630 = vunpack.c.h.b16 %v3109
        %v3631 = vunpack.c.l.b16 %v3110
        %v3632 = vunpack.c.h.b16 %v3110
        %v3633 = vunpack.c.l.b16 %v3111
        %v3634 = vunpack.c.h.b16 %v3111
        %v3635 = vunpack.c.l.b16 %v3112
        %v3636 = vunpack.c.h.b16 %v3112
        %v3637 = vunpack.c.l.b16 %v3113
        %v3638 = vunpack.c.h.b16 %v3113
        %v3639 = vunpack.c.l.b16 %v3114
        %v3640 = vunpack.c.h.b16 %v3114
        %v3641 = vunpack.c.l.b16 %v3115
        %v3642 = vunpack.c.l.b16 %v3116
        %v3643 = vunpack.c.h.b16 %v3116
        %v3644 = vunpack.c.l.b16 %v3117
        %v3645 = vunpack.c.h.b16 %v3117
        %v3646 = vunpack.c.l.b16 %v3118
        %v3647 = vunpack.c.h.b16 %v3118
        %v3648 = vunpack.c.l.b16 %v3119
        %v3649 = vunpack.c.h.b16 %v3119
        %v3650 = vunpack.c.l.b16 %v3120
        %v3651 = vunpack.c.h.b16 %v3120
        %v3652 = vunpack.c.l.b16 %v3121
        %v3653 = vunpack.c.h.b16 %v3121
        %v3654 = vunpack.c.l.b16 %v3122
        %v3655 = vunpack.c.h.b16 %v3122
        %v3656 = vunpack.c.l.b16 %v3123
        %v3657 = vunpack.c.l.b16 %v3124
        %v3658 = vunpack.c.h.b16 %v3124
        %v3659 = vunpack.c.l.b16 %v3125
        %v3660 = vunpack.c.h.b16 %v3125
        %v3661 = vunpack.c.l.b16 %v3126
        %v3662 = vunpack.c.h.b16 %v3126
        %v3663 = vunpack.c.l.b16 %v3127
        %v3664 = vunpack.c.h.b16 %v3127
        %v3665 = vunpack.c.l.b16 %v3128
        %v3666 = vunpack.c.h.b16 %v3128
        %v3667 = vunpack.c.l.b16 %v3129
        %v3668 = vunpack.c.h.b16 %v3129
        %v3669 = vunpack.c.l.b16 %v3130
        %v3670 = vunpack.c.h.b16 %v3130
        %v3671 = vunpack.c.l.b16 %v3131
        %v3672 = vunpack.c.l.b16 %v3132
        %v3673 = vunpack.c.h.b16 %v3132
        %v3674 = vunpack.c.l.b16 %v3133
        %v3675 = vunpack.c.h.b16 %v3133
        %v3676 = vunpack.c.l.b16 %v3134
        %v3677 = vunpack.c.h.b16 %v3134
        %v3678 = vunpack.c.l.b16 %v3135
        %v3679 = vunpack.c.h.b16 %v3135
        %v3680 = vunpack.c.l.b16 %v3136
        %v3681 = vunpack.c.h.b16 %v3136
        %v3682 = vunpack.c.l.b16 %v3137
        %v3683 = vunpack.c.h.b16 %v3137
        %v3684 = vunpack.c.l.b16 %v3138
        %v3685 = vunpack.c.h.b16 %v3138
        %v3686 = vunpack.c.l.b16 %v3139
        %v3687 = vunpack.c.l.b16 %v3140
        %v3688 = vunpack.c.h.b16 %v3140
        %v3689 = vunpack.c.l.b16 %v3141
        %v3690 = vunpack.c.h.b16 %v3141
        %v3691 = vunpack.c.l.b16 %v3142
        %v3692 = vunpack.c.h.b16 %v3142
        %v3693 = vunpack.c.l.b16 %v3143
        %v3694 = vunpack.c.h.b16 %v3143
        %v3695 = vunpack.c.l.b16 %v3144
        %v3696 = vunpack.c.h.b16 %v3144
        %v3697 = vunpack.c.l.b16 %v3145
        %v3698 = vunpack.c.h.b16 %v3145
        %v3699 = vunpack.c.l.b16 %v3146
        %v3700 = vunpack.c.h.b16 %v3146
        %v3701 = vunpack.c.l.b16 %v3147
        %v3702 = vunpack.c.l.b16 %v3148
        %v3703 = vunpack.c.h.b16 %v3148
        %v3704 = vunpack.c.l.b16 %v3149
        %v3705 = vunpack.c.h.b16 %v3149
        %v3706 = vunpack.c.l.b16 %v3150
        %v3707 = vunpack.c.h.b16 %v3150
        %v3708 = vunpack.c.l.b16 %v3151
        %v3709 = vunpack.c.h.b16 %v3151
        %v3710 = vunpack.c.l.b16 %v3152
        %v3711 = vunpack.c.h.b16 %v3152
        %v3712 = vunpack.c.l.b16 %v3153
        %v3713 = vunpack.c.h.b16 %v3153
        %v3714 = vunpack.c.l.b16 %v3154
        %v3715 = vunpack.c.h.b16 %v3154
        %v3716 = vunpack.c.l.b16 %v3155
        %v3717 = vunpack.c.l.b16 %v3156
        %v3718 = vunpack.c.h.b16 %v3156
        %v3719 = vunpack.c.l.b16 %v3157
        %v3720 = vunpack.c.h.b16 %v3157
        %v3721 = vunpack.c.l.b16 %v3158
        %v3722 = vunpack.c.h.b16 %v3158
        %v3723 = vunpack.c.l.b16 %v3159
        %v3724 = vunpack.c.h.b16 %v3159
        %v3725 = vunpack.c.l.b16 %v3160
        %v3726 = vunpack.c.h.b16 %v3160
        %v3727 = vunpack.c.l.b16 %v3161
        %v3728 = vunpack.c.h.b16 %v3161
        %v3729 = vunpack.c.l.b16 %v3162
        %v3730 = vunpack.c.h.b16 %v3162
        %v3731 = vunpack.c.l.b16 %v3163
        %v3732 = vunpack.c.l.b16 %v3164
        %v3733 = vunpack.c.h.b16 %v3164
        %v3734 = vunpack.c.l.b16 %v3165
        %v3735 = vunpack.c.h.b16 %v3165
        %v3736 = vunpack.c.l.b16 %v3166
        %v3737 = vunpack.c.h.b16 %v3166
        %v3738 = vunpack.c.l.b16 %v3167
        %v3739 = vunpack.c.h.b16 %v3167
        %v3740 = vunpack.c.l.b16 %v3168
        %v3741 = vunpack.c.h.b16 %v3168
        %v3742 = vunpack.c.l.b16 %v3169
        %v3743 = vunpack.c.h.b16 %v3169
        %v3744 = vunpack.c.l.b16 %v3170
        %v3745 = vunpack.c.h.b16 %v3170
        %v3746 = vunpack.c.l.b16 %v3171
        %v3747 = vunpack.c.l.b16 %v3172
        %v3748 = vunpack.c.h.b16 %v3172
        %v3749 = vunpack.c.l.b16 %v3173
        %v3750 = vunpack.c.h.b16 %v3173
        %v3751 = vunpack.c.l.b16 %v3174
        %v3752 = vunpack.c.h.b16 %v3174
        %v3753 = vunpack.c.l.b16 %v3175
        %v3754 = vunpack.c.h.b16 %v3175
        %v3755 = vunpack.c.l.b16 %v3176
        %v3756 = vunpack.c.h.b16 %v3176
        %v3757 = vunpack.c.l.b16 %v3177
        %v3758 = vunpack.c.h.b16 %v3177
        %v3759 = vunpack.c.l.b16 %v3178
        %v3760 = vunpack.c.h.b16 %v3178
        %v3761 = vunpack.c.l.b16 %v3179
        %v3762 = vunpack.c.l.b16 %v3180
        %v3763 = vunpack.c.h.b16 %v3180
        %v3764 = vunpack.c.l.b16 %v3181
        %v3765 = vunpack.c.h.b16 %v3181
        %v3766 = vunpack.c.l.b16 %v3182
        %v3767 = vunpack.c.h.b16 %v3182
        %v3768 = vunpack.c.l.b16 %v3183
        %v3769 = vunpack.c.h.b16 %v3183
        %v3770 = vunpack.c.l.b16 %v3184
        %v3771 = vunpack.c.h.b16 %v3184
        %v3772 = vunpack.c.l.b16 %v3185
        %v3773 = vunpack.c.h.b16 %v3185
        %v3774 = vunpack.c.l.b16 %v3186
        %v3775 = vunpack.c.h.b16 %v3186
        %v3776 = vunpack.c.l.b16 %v3187
        %v3777 = vunpack.c.l.b16 %v3188
        %v3778 = vunpack.c.h.b16 %v3188
        %v3779 = vunpack.c.l.b16 %v3189
        %v3780 = vunpack.c.h.b16 %v3189
        %v3781 = vunpack.c.l.b16 %v3190
        %v3782 = vunpack.c.h.b16 %v3190
        %v3783 = vunpack.c.l.b16 %v3191
        %v3784 = vunpack.c.h.b16 %v3191
        %v3785 = vunpack.c.l.b16 %v3192
        %v3786 = vunpack.c.h.b16 %v3192
        %v3787 = vunpack.c.l.b16 %v3193
        %v3788 = vunpack.c.h.b16 %v3193
        %v3789 = vunpack.c.l.b16 %v3194
        %v3790 = vunpack.c.h.b16 %v3194
        %v3791 = vunpack.c.l.b16 %v3195
        %v3792 = vunpack.c.l.b16 %v3196
        %v3793 = vunpack.c.h.b16 %v3196
        %v3794 = vunpack.c.l.b16 %v3197
        %v3795 = vunpack.c.h.b16 %v3197
        %v3796 = vunpack.c.l.b16 %v3198
        %v3797 = vunpack.c.h.b16 %v3198
        %v3798 = vunpack.c.l.b16 %v3199
        %v3799 = vunpack.c.h.b16 %v3199
        %v3800 = vunpack.c.l.b16 %v3200
        %v3801 = vunpack.c.h.b16 %v3200
        %v3802 = vunpack.c.l.b16 %v3201
        %v3803 = vunpack.c.h.b16 %v3201
        %v3804 = vunpack.c.l.b16 %v3202
        %v3805 = vunpack.c.h.b16 %v3202
        %v3806 = vunpack.c.l.b16 %v3203
        %v3807 = vunpack.c.l.b16 %v3204
        %v3808 = vunpack.c.h.b16 %v3204
        %v3809 = vunpack.c.l.b16 %v3205
        %v3810 = vunpack.c.h.b16 %v3205
        %v3811 = vunpack.c.l.b16 %v3206
        %v3812 = vunpack.c.h.b16 %v3206
        %v3813 = vunpack.c.l.b16 %v3207
        %v3814 = vunpack.c.h.b16 %v3207
        %v3815 = vunpack.c.l.b16 %v3208
        %v3816 = vunpack.c.h.b16 %v3208
        %v3817 = vunpack.c.l.b16 %v3209
        %v3818 = vunpack.c.h.b16 %v3209
        %v3819 = vunpack.c.l.b16 %v3210
        %v3820 = vunpack.c.h.b16 %v3210
        %v3821 = vunpack.c.l.b16 %v3211
        %v3822 = vunpack.c.l.b16 %v3212
        %v3823 = vunpack.c.h.b16 %v3212
        %v3824 = vunpack.c.l.b16 %v3213
        %v3825 = vunpack.c.h.b16 %v3213
        %v3826 = vunpack.c.l.b16 %v3214
        %v3827 = vunpack.c.h.b16 %v3214
        %v3828 = vunpack.c.l.b16 %v3215
        %v3829 = vunpack.c.h.b16 %v3215
        %v3830 = vunpack.c.l.b16 %v3216
        %v3831 = vunpack.c.h.b16 %v3216
        %v3832 = vunpack.c.l.b16 %v3217
        %v3833 = vunpack.c.h.b16 %v3217
        %v3834 = vunpack.c.l.b16 %v3218
        %v3835 = vunpack.c.h.b16 %v3218
        %v3836 = vunpack.c.l.b16 %v3219
        %v3837 = vunpack.c.l.b16 %v3220
        %v3838 = vunpack.c.h.b16 %v3220
        %v3839 = vunpack.c.l.b16 %v3221
        %v3840 = vunpack.c.h.b16 %v3221
        %v3841 = vunpack.c.l.b16 %v3222
        %v3842 = vunpack.c.h.b16 %v3222
        %v3843 = vunpack.c.l.b16 %v3223
        %v3844 = vunpack.c.h.b16 %v3223
        %v3845 = vunpack.c.l.b16 %v3224
        %v3846 = vunpack.c.h.b16 %v3224
        %v3847 = vunpack.c.l.b16 %v3225
        %v3848 = vunpack.c.h.b16 %v3225
        %v3849 = vunpack.c.l.b16 %v3226
        %v3850 = vunpack.c.h.b16 %v3226
        %v3851 = vunpack.c.l.b16 %v3227
        %v3852 = vunpack.c.l.b16 %v3228
        %v3853 = vunpack.c.h.b16 %v3228
        %v3854 = vunpack.c.l.b16 %v3229
        %v3855 = vunpack.c.h.b16 %v3229
        %v3856 = vunpack.c.l.b16 %v3230
        %v3857 = vunpack.c.h.b16 %v3230
        %v3858 = vunpack.c.l.b16 %v3231
        %v3859 = vunpack.c.h.b16 %v3231
        %v3860 = vunpack.c.l.b16 %v3232
        %v3861 = vunpack.c.h.b16 %v3232
        %v3862 = vunpack.c.l.b16 %v3233
        %v3863 = vunpack.c.h.b16 %v3233
        %v3864 = vunpack.c.l.b16 %v3234
        %v3865 = vunpack.c.h.b16 %v3234
        %v3866 = vunpack.c.l.b16 %v3235
        %v3867 = vunpack.c.l.b16 %v3236
        %v3868 = vunpack.c.h.b16 %v3236
        %v3869 = vunpack.c.l.b16 %v3237
        %v3870 = vunpack.c.h.b16 %v3237
        %v3871 = vunpack.c.l.b16 %v3238
        %v3872 = vunpack.c.h.b16 %v3238
        %v3873 = vunpack.c.l.b16 %v3239
        %v3874 = vunpack.c.h.b16 %v3239
        %v3875 = vunpack.c.l.b16 %v3240
        %v3876 = vunpack.c.h.b16 %v3240
        %v3877 = vunpack.c.l.b16 %v3241
        %v3878 = vunpack.c.h.b16 %v3241
        %v3879 = vunpack.c.l.b16 %v3242
        %v3880 = vunpack.c.h.b16 %v3242
        %v3881 = vunpack.c.l.b16 %v3243
        %v3882 = vunpack.c.l.b16 %v3244
        %v3883 = vunpack.c.h.b16 %v3244
        %v3884 = vunpack.c.l.b16 %v3245
        %v3885 = vunpack.c.h.b16 %v3245
        %v3886 = vunpack.c.l.b16 %v3246
        %v3887 = vunpack.c.h.b16 %v3246
        %v3888 = vunpack.c.l.b16 %v3247
        %v3889 = vunpack.c.h.b16 %v3247
        %v3890 = vunpack.c.l.b16 %v3248
        %v3891 = vunpack.c.h.b16 %v3248
        %v3892 = vunpack.c.l.b16 %v3249
        %v3893 = vunpack.c.h.b16 %v3249
        %v3894 = vunpack.c.l.b16 %v3250
        %v3895 = vunpack.c.h.b16 %v3250
        %v3896 = vunpack.c.l.b16 %v3251
        %v3897 = vunpack.c.l.b16 %v3252
        %v3898 = vunpack.c.h.b16 %v3252
        %v3899 = vunpack.c.l.b16 %v3253
        %v3900 = vunpack.c.h.b16 %v3253
        %v3901 = vunpack.c.l.b16 %v3254
        %v3902 = vunpack.c.h.b16 %v3254
        %v3903 = vunpack.c.l.b16 %v3255
        %v3904 = vunpack.c.h.b16 %v3255
        %v3905 = vunpack.c.l.b16 %v3256
        %v3906 = vunpack.c.h.b16 %v3256
        %v3907 = vunpack.c.l.b16 %v3257
        %v3908 = vunpack.c.h.b16 %v3257
        %v3909 = vunpack.c.l.b16 %v3258
        %v3910 = vunpack.c.h.b16 %v3258
        %v3911 = vunpack.c.l.b16 %v3259
        %v3912 = vunpack.c.l.b16 %v3260
        %v3913 = vunpack.c.h.b16 %v3260
        %v3914 = vunpack.c.l.b16 %v3261
        %v3915 = vunpack.c.h.b16 %v3261
        %v3916 = vunpack.c.l.b16 %v3262
        %v3917 = vunpack.c.h.b16 %v3262
        %v3918 = vunpack.c.l.b16 %v3263
        %v3919 = vunpack.c.h.b16 %v3263
        %v3920 = vunpack.c.l.b16 %v3264
        %v3921 = vunpack.c.h.b16 %v3264
        %v3922 = vunpack.c.l.b16 %v3265
        %v3923 = vunpack.c.h.b16 %v3265
        %v3924 = vunpack.c.l.b16 %v3266
        %v3925 = vunpack.c.h.b16 %v3266
        %v3926 = vunpack.c.l.b16 %v3267
        %v3927 = vunpack.c.l.b16 %v3268
        %v3928 = vunpack.c.h.b16 %v3268
        %v3929 = vunpack.c.l.b16 %v3269
        %v3930 = vunpack.c.h.b16 %v3269
        %v3931 = vunpack.c.l.b16 %v3270
        %v3932 = vunpack.c.h.b16 %v3270
        %v3933 = vunpack.c.l.b16 %v3271
        %v3934 = vunpack.c.h.b16 %v3271
        %v3935 = vunpack.c.l.b16 %v3272
        %v3936 = vunpack.c.h.b16 %v3272
        %v3937 = vunpack.c.l.b16 %v3273
        %v3938 = vunpack.c.h.b16 %v3273
        %v3939 = vunpack.c.l.b16 %v3274
        %v3940 = vunpack.c.h.b16 %v3274
        %v3941 = vunpack.c.l.b16 %v3275
        %v3942 = vunpack.c.l.b16 %v3276
        %v3943 = vunpack.c.h.b16 %v3276
        %v3944 = vunpack.c.l.b16 %v3277
        %v3945 = vunpack.c.h.b16 %v3277
        %v3946 = vunpack.c.l.b16 %v3278
        %v3947 = vunpack.c.h.b16 %v3278
        %v3948 = vunpack.c.l.b16 %v3279
        %v3949 = vunpack.c.h.b16 %v3279
        %v3950 = vunpack.c.l.b16 %v3280
        %v3951 = vunpack.c.h.b16 %v3280
        %v3952 = vunpack.c.l.b16 %v3281
        %v3953 = vunpack.c.h.b16 %v3281
        %v3954 = vunpack.c.l.b16 %v3282
        %v3955 = vunpack.c.h.b16 %v3282
        %v3956 = vunpack.c.l.b16 %v3283
        %v3957 = vunpack.c.l.b16 %v3284
        %v3958 = vunpack.c.h.b16 %v3284
        %v3959 = vunpack.c.l.b16 %v3285
        %v3960 = vunpack.c.h.b16 %v3285
        %v3961 = vunpack.c.l.b16 %v3286
        %v3962 = vunpack.c.h.b16 %v3286
        %v3963 = vunpack.c.l.b16 %v3287
        %v3964 = vunpack.c.h.b16 %v3287
        %v3965 = vunpack.c.l.b16 %v3288
        %v3966 = vunpack.c.h.b16 %v3288
        %v3967 = vunpack.c.l.b16 %v3289
        %v3968 = vunpack.c.h.b16 %v3289
        %v3969 = vunpack.c.l.b16 %v3290
        %v3970 = vunpack.c.h.b16 %v3290
        %v3971 = vunpack.c.l.b16 %v3291
        %v3972 = vunpack.c.l.b16 %v3292
        %v3973 = vunpack.c.h.b16 %v3292
        %v3974 = vunpack.c.l.b16 %v3293
        %v3975 = vunpack.c.h.b16 %v3293
        %v3976 = vunpack.c.l.b16 %v3294
        %v3977 = vunpack.c.h.b16 %v3294
        %v3978 = vunpack.c.l.b16 %v3295
        %v3979 = vunpack.c.h.b16 %v3295
        %v3980 = vunpack.c.l.b16 %v3296
        %v3981 = vunpack.c.h.b16 %v3296
        %v3982 = vunpack.c.l.b16 %v3297
        %v3983 = vunpack.c.h.b16 %v3297
        %v3984 = vunpack.c.l.b16 %v3298
        %v3985 = vunpack.c.h.b16 %v3298
        %v3986 = vunpack.c.l.b16 %v3299
        %v3987 = vunpack.c.l.b16 %v3300
        %v3988 = vunpack.c.h.b16 %v3300
        %v3989 = vunpack.c.l.b16 %v3301
        %v3990 = vunpack.c.h.b16 %v3301
        %v3991 = vunpack.c.l.b16 %v3302
        %v3992 = vunpack.c.h.b16 %v3302
        %v3993 = vunpack.c.l.b16 %v3303
        %v3994 = vunpack.c.h.b16 %v3303
        %v3995 = vunpack.c.l.b16 %v3304
        %v3996 = vunpack.c.h.b16 %v3304
        %v3997 = vunpack.c.l.b16 %v3305
        %v3998 = vunpack.c.h.b16 %v3305
        %v3999 = vunpack.c.l.b16 %v3306
        %v4000 = vunpack.c.h.b16 %v3306
        %v4001 = vunpack.c.l.b16 %v3307
        %v4002 = vunpack.c.l.b16 %v3308
        %v4003 = vunpack.c.h.b16 %v3308
        %v4004 = vunpack.c.l.b16 %v3309
        %v4005 = vunpack.c.h.b16 %v3309
        %v4006 = vunpack.c.l.b16 %v3310
        %v4007 = vunpack.c.h.b16 %v3310
        %v4008 = vunpack.c.l.b16 %v3311
        %v4009 = vunpack.c.h.b16 %v3311
        %v4010 = vunpack.c.l.b16 %v3312
        %v4011 = vunpack.c.h.b16 %v3312
        %v4012 = vunpack.c.l.b16 %v3313
        %v4013 = vunpack.c.h.b16 %v3313
        %v4014 = vunpack.c.l.b16 %v3314
        %v4015 = vunpack.c.h.b16 %v3314
        %v4016 = vunpack.c.l.b16 %v3315
        %v4017 = vunpack.c.l.b16 %v3316
        %v4018 = vunpack.c.h.b16 %v3316
        %v4019 = vunpack.c.l.b16 %v3317
        %v4020 = vunpack.c.h.b16 %v3317
        %v4021 = vunpack.c.l.b16 %v3318
        %v4022 = vunpack.c.h.b16 %v3318
        %v4023 = vunpack.c.l.b16 %v3319
        %v4024 = vunpack.c.h.b16 %v3319
        %v4025 = vunpack.c.l.b16 %v3320
        %v4026 = vunpack.c.h.b16 %v3320
        %v4027 = vunpack.c.l.b16 %v3321
        %v4028 = vunpack.c.h.b16 %v3321
        %v4029 = vunpack.c.l.b16 %v3322
        %v4030 = vunpack.c.h.b16 %v3322
        %v4031 = vunpack.c.l.b16 %v3323
        %v4032 = vunpack.c.l.b16 %v3324
        %v4033 = vunpack.c.h.b16 %v3324
        %v4034 = vunpack.c.l.b16 %v3325
        %v4035 = vunpack.c.h.b16 %v3325
        %v4036 = vunpack.c.l.b16 %v3326
        %v4037 = vunpack.c.h.b16 %v3326
        %v4038 = vunpack.c.l.b16 %v3327
        %v4039 = vunpack.c.h.b16 %v3327
        %v4040 = vunpack.c.l.b16 %v3328
        %v4041 = vunpack.c.h.b16 %v3328
        %v4042 = vunpack.c.l.b16 %v3329
        %v4043 = vunpack.c.h.b16 %v3329
        %v4044 = vunpack.c.l.b16 %v3330
        %v4045 = vunpack.c.h.b16 %v3330
        %v4046 = vunpack.c.l.b16 %v3331
        %v4047 = vunpack.c.l.b16 %v3332
        %v4048 = vunpack.c.h.b16 %v3332
        %v4049 = vunpack.c.l.b16 %v3333
        %v4050 = vunpack.c.h.b16 %v3333
        %v4051 = vunpack.c.l.b16 %v3334
        %v4052 = vunpack.c.h.b16 %v3334
        %v4053 = vunpack.c.l.b16 %v3335
        %v4054 = vunpack.c.h.b16 %v3335
        %v4055 = vunpack.c.l.b16 %v3336
        %v4056 = vunpack.c.h.b16 %v3336
        %v4057 = vunpack.c.l.b16 %v3337
        %v4058 = vunpack.c.h.b16 %v3337
        %v4059 = vunpack.c.l.b16 %v3338
        %v4060 = vunpack.c.h.b16 %v3338
        %v4061 = vunpack.c.l.b16 %v3339
        %v4062 = vunpack.c.l.b16 %v3340
        %v4063 = vunpack.c.h.b16 %v3340
        %v4064 = vunpack.c.l.b16 %v3341
        %v4065 = vunpack.c.h.b16 %v3341
        %v4066 = vunpack.c.l.b16 %v3342
        %v4067 = vunpack.c.h.b16 %v3342
        %v4068 = vunpack.c.l.b16 %v3343
        %v4069 = vunpack.c.h.b16 %v3343
        %v4070 = vunpack.c.l.b16 %v3344
        %v4071 = vunpack.c.h.b16 %v3344
        %v4072 = vunpack.c.l.b16 %v3345
        %v4073 = vunpack.c.h.b16 %v3345
        %v4074 = vunpack.c.l.b16 %v3346
        %v4075 = vunpack.c.h.b16 %v3346
        %v4076 = vunpack.c.l.b16 %v3347
        %v4077 = vunpack.c.l.b16 %v3348
        %v4078 = vunpack.c.h.b16 %v3348
        %v4079 = vunpack.c.l.b16 %v3349
        %v4080 = vunpack.c.h.b16 %v3349
        %v4081 = vunpack.c.l.b16 %v3350
        %v4082 = vunpack.c.h.b16 %v3350
        %v4083 = vunpack.c.l.b16 %v3351
        %v4084 = vunpack.c.h.b16 %v3351
        %v4085 = vunpack.c.l.b16 %v3352
        %v4086 = vunpack.c.h.b16 %v3352
        %v4087 = vunpack.c.l.b16 %v3353
        %v4088 = vunpack.c.h.b16 %v3353
        %v4089 = vunpack.c.l.b16 %v3354
        %v4090 = vunpack.c.h.b16 %v3354
        %v4091 = vunpack.c.l.b16 %v3355
        %v4092 = vpack.c.b16 %v3627, %v3612
        %v4093 = vpack.c.b16 %v3628, %v3613
        %v4094 = vpack.c.b16 %v3629, %v3614
        %v4095 = vpack.c.b16 %v3630, %v3615
        %v4096 = vpack.c.b16 %v3631, %v3616
        %v4097 = vpack.c.b16 %v3632, %v3617
        %v4098 = vpack.c.b16 %v3633, %v3618
        %v4099 = vpack.c.b16 %v3634, %v3619
        %v4100 = vpack.c.b16 %v3635, %v3620
        %v4101 = vpack.c.b16 %v3636, %v3621
        %v4102 = vpack.c.b16 %v3637, %v3622
        %v4103 = vpack.c.b16 %v3638, %v3623
        %v4104 = vpack.c.b16 %v3639, %v3624
        %v4105 = vpack.c.b16 %v3640, %v3625
        %v4106 = vpack.c.b16 %v3641, %v3626
        %v4107 = vpack.c.b16 %v3657, %v3642
        %v4108 = vpack.c.b16 %v3658, %v3643
        %v4109 = vpack.c.b16 %v3659, %v3644
        %v4110 = vpack.c.b16 %v3660, %v3645
        %v4111 = vpack.c.b16 %v3661, %v3646
        %v4112 = vpack.c.b16 %v3662, %v3647
        %v4113 = vpack.c.b16 %v3663, %v3648
        %v4114 = vpack.c.b16 %v3664, %v3649
        %v4115 = vpack.c.b16 %v3665, %v3650
        %v4116 = vpack.c.b16 %v3666, %v3651
        %v4117 = vpack.c.b16 %v3667, %v3652
        %v4118 = vpack.c.b16 %v3668, %v3653
        %v4119 = vpack.c.b16 %v3669, %v3654
        %v4120 = vpack.c.b16 %v3670, %v3655
        %v4121 = vpack.c.b16 %v3671, %v3656
        %v4122 = vpack.c.b16 %v3687, %v3672
        %v4123 = vpack.c.b16 %v3688, %v3673
        %v4124 = vpack.c.b16 %v3689, %v3674
        %v4125 = vpack.c.b16 %v3690, %v3675
        %v4126 = vpack.c.b16 %v3691, %v3676
        %v4127 = vpack.c.b16 %v3692, %v3677
        %v4128 = vpack.c.b16 %v3693, %v3678
        %v4129 = vpack.c.b16 %v3694, %v3679
        %v4130 = vpack.c.b16 %v3695, %v3680
        %v4131 = vpack.c.b16 %v3696, %v3681
        %v4132 = vpack.c.b16 %v3697, %v3682
        %v4133 = vpack.c.b16 %v3698, %v3683
        %v4134 = vpack.c.b16 %v3699, %v3684
        %v4135 = vpack.c.b16 %v3700, %v3685
        %v4136 = vpack.c.b16 %v3701, %v3686
        %v4137 = vpack.c.b16 %v3717, %v3702
        %v4138 = vpack.c.b16 %v3718, %v3703
        %v4139 = vpack.c.b16 %v3719, %v3704
        %v4140 = vpack.c.b16 %v3720, %v3705
        %v4141 = vpack.c.b16 %v3721, %v3706
        %v4142 = vpack.c.b16 %v3722, %v3707
        %v4143 = vpack.c.b16 %v3723, %v3708
        %v4144 = vpack.c.b16 %v3724, %v3709
        %v4145 = vpack.c.b16 %v3725, %v3710
        %v4146 = vpack.c.b16 %v3726, %v3711
        %v4147 = vpack.c.b16 %v3727, %v3712
        %v4148 = vpack.c.b16 %v3728, %v3713
        %v4149 = vpack.c.b16 %v3729, %v3714
        %v4150 = vpack.c.b16 %v3730, %v3715
        %v4151 = vpack.c.b16 %v3731, %v3716
        %v4152 = vpack.c.b16 %v3747, %v3732
        %v4153 = vpack.c.b16 %v3748, %v3733
        %v4154 = vpack.c.b16 %v3749, %v3734
        %v4155 = vpack.c.b16 %v3750, %v3735
        %v4156 = vpack.c.b16 %v3751, %v3736
        %v4157 = vpack.c.b16 %v3752, %v3737
        %v4158 = vpack.c.b16 %v3753, %v3738
        %v4159 = vpack.c.b16 %v3754, %v3739
        %v4160 = vpack.c.b16 %v3755, %v3740
        %v4161 = vpack.c.b16 %v3756, %v3741
        %v4162 = vpack.c.b16 %v3757, %v3742
        %v4163 = vpack.c.b16 %v3758, %v3743
        %v4164 = vpack.c.b16 %v3759, %v3744
        %v4165 = vpack.c.b16 %v3760, %v3745
        %v4166 = vpack.c.b16 %v3761, %v3746
        %v4167 = vpack.c.b16 %v3777, %v3762
        %v4168 = vpack.c.b16 %v3778, %v3763
        %v4169 = vpack.c.b16 %v3779, %v3764
        %v4170 = vpack.c.b16 %v3780, %v3765
        %v4171 = vpack.c.b16 %v3781, %v3766
        %v4172 = vpack.c.b16 %v3782, %v3767
        %v4173 = vpack.c.b16 %v3783, %v3768
        %v4174 = vpack.c.b16 %v3784, %v3769
        %v4175 = vpack.c.b16 %v3785, %v3770
        %v4176 = vpack.c.b16 %v3786, %v3771
        %v4177 = vpack.c.b16 %v3787, %v3772
        %v4178 = vpack.c.b16 %v3788, %v3773
        %v4179 = vpack.c.b16 %v3789, %v3774
        %v4180 = vpack.c.b16 %v3790, %v3775
        %v4181 = vpack.c.b16 %v3791, %v3776
        %v4182 = vpack.c.b16 %v3807, %v3792
        %v4183 = vpack.c.b16 %v3808, %v3793
        %v4184 = vpack.c.b16 %v3809, %v3794
        %v4185 = vpack.c.b16 %v3810, %v3795
        %v4186 = vpack.c.b16 %v3811, %v3796
        %v4187 = vpack.c.b16 %v3812, %v3797
        %v4188 = vpack.c.b16 %v3813, %v3798
        %v4189 = vpack.c.b16 %v3814, %v3799
        %v4190 = vpack.c.b16 %v3815, %v3800
        %v4191 = vpack.c.b16 %v3816, %v3801
        %v4192 = vpack.c.b16 %v3817, %v3802
        %v4193 = vpack.c.b16 %v3818, %v3803
        %v4194 = vpack.c.b16 %v3819, %v3804
        %v4195 = vpack.c.b16 %v3820, %v3805
        %v4196 = vpack.c.b16 %v3821, %v3806
        %v4197 = vpack.c.b16 %v3837, %v3822
        %v4198 = vpack.c.b16 %v3838, %v3823
        %v4199 = vpack.c.b16 %v3839, %v3824
        %v4200 = vpack.c.b16 %v3840, %v3825
        %v4201 = vpack.c.b16 %v3841, %v3826
        %v4202 = vpack.c.b16 %v3842, %v3827
        %v4203 = vpack.c.b16 %v3843, %v3828
        %v4204 = vpack.c.b16 %v3844, %v3829
        %v4205 = vpack.c.b16 %v3845, %v3830
        %v4206 = vpack.c.b16 %v3846, %v3831
        %v4207 = vpack.c.b16 %v3847, %v3832
        %v4208 = vpack.c.b16 %v3848, %v3833
        %v4209 = vpack.c.b16 %v3849, %v3834
        %v4210 = vpack.c.b16 %v3850, %v3835
        %v4211 = vpack.c.b16 %v3851, %v3836
        %v4212 = vpack.c.b16 %v3867, %v3852
        %v4213 = vpack.c.b16 %v3868, %v3853
        %v4214 = vpack.c.b16 %v3869, %v3854
        %v4215 = vpack.c.b16 %v3870, %v3855
        %v4216 = vpack.c.b16 %v3871, %v3856
        %v4217 = vpack.c.b16 %v3872, %v3857
        %v4218 = vpack.c.b16 %v3873, %v3858
        %v4219 = vpack.c.b16 %v3874, %v3859
        %v4220 = vpack.c.b16 %v3875, %v3860
        %v4221 = vpack.c.b16 %v3876, %v3861
        %v4222 = vpack.c.b16 %v3877, %v3862
        %v4223 = vpack.c.b16 %v3878, %v3863
        %v4224 = vpack.c.b16 %v3879, %v3864
        %v4225 = vpack.c.b16 %v3880, %v3865
        %v4226 = vpack.c.b16 %v3881, %v3866
        %v4227 = vpack.c.b16 %v3897, %v3882
        %v4228 = vpack.c.b16 %v3898, %v3883
        %v4229 = vpack.c.b16 %v3899, %v3884
        %v4230 = vpack.c.b16 %v3900, %v3885
        %v4231 = vpack.c.b16 %v3901, %v3886
        %v4232 = vpack.c.b16 %v3902, %v3887
        %v4233 = vpack.c.b16 %v3903, %v3888
        %v4234 = vpack.c.b16 %v3904, %v3889
        %v4235 = vpack.c.b16 %v3905, %v3890
        %v4236 = vpack.c.b16 %v3906, %v3891
        %v4237 = vpack.c.b16 %v3907, %v3892
        %v4238 = vpack.c.b16 %v3908, %v3893
        %v4239 = vpack.c.b16 %v3909, %v3894
        %v4240 = vpack.c.b16 %v3910, %v3895
        %v4241 = vpack.c.b16 %v3911, %v3896
        %v4242 = vpack.c.b16 %v3927, %v3912
        %v4243 = vpack.c.b16 %v3928, %v3913
        %v4244 = vpack.c.b16 %v3929, %v3914
        %v4245 = vpack.c.b16 %v3930, %v3915
        %v4246 = vpack.c.b16 %v3931, %v3916
        %v4247 = vpack.c.b16 %v3932, %v3917
        %v4248 = vpack.c.b16 %v3933, %v3918
        %v4249 = vpack.c.b16 %v3934, %v3919
        %v4250 = vpack.c.b16 %v3935, %v3920
        %v4251 = vpack.c.b16 %v3936, %v3921
        %v4252 = vpack.c.b16 %v3937, %v3922
        %v4253 = vpack.c.b16 %v3938, %v3923
        %v4254 = vpack.c.b16 %v3939, %v3924
        %v4255 = vpack.c.b16 %v3940, %v3925
        %v4256 = vpack.c.b16 %v3941, %v3926
        %v4257 = vpack.c.b16 %v3957, %v3942
        %v4258 = vpack.c.b16 %v3958, %v3943
        %v4259 = vpack.c.b16 %v3959, %v3944
        %v4260 = vpack.c.b16 %v3960, %v3945
        %v4261 = vpack.c.b16 %v3961, %v3946
        %v4262 = vpack.c.b16 %v3962, %v3947
        %v4263 = vpack.c.b16 %v3963, %v3948
        %v4264 = vpack.c.b16 %v3964, %v3949
        %v4265 = vpack.c.b16 %v3965, %v3950
        %v4266 = vpack.c.b16 %v3966, %v3951
        %v4267 = vpack.c.b16 %v3967, %v3952
        %v4268 = vpack.c.b16 %v3968, %v3953
        %v4269 = vpack.c.b16 %v3969, %v3954
        %v4270 = vpack.c.b16 %v3970, %v3955
        %v4271 = vpack.c.b16 %v3971, %v3956
        %v4272 = vpack.c.b16 %v3987, %v3972
        %v4273 = vpack.c.b16 %v3988, %v3973
        %v4274 = vpack.c.b16 %v3989, %v3974
        %v4275 = vpack.c.b16 %v3990, %v3975
        %v4276 = vpack.c.b16 %v3991, %v3976
        %v4277 = vpack.c.b16 %v3992, %v3977
        %v4278 = vpack.c.b16 %v3993, %v3978
        %v4279 = vpack.c.b16 %v3994, %v3979
        %v4280 = vpack.c.b16 %v3995, %v3980
        %v4281 = vpack.c.b16 %v3996, %v3981
        %v4282 = vpack.c.b16 %v3997, %v3982
        %v4283 = vpack.c.b16 %v3998, %v3983
        %v4284 = vpack.c.b16 %v3999, %v3984
        %v4285 = vpack.c.b16 %v4000, %v3985
        %v4286 = vpack.c.b16 %v4001, %v3986
        %v4287 = vpack.c.b16 %v4017, %v4002
        %v4288 = vpack.c.b16 %v4018, %v4003
        %v4289 = vpack.c.b16 %v4019, %v4004
        %v4290 = vpack.c.b16 %v4020, %v4005
        %v4291 = vpack.c.b16 %v4021, %v4006
        %v4292 = vpack.c.b16 %v4022, %v4007
        %v4293 = vpack.c.b16 %v4023, %v4008
        %v4294 = vpack.c.b16 %v4024, %v4009
        %v4295 = vpack.c.b16 %v4025, %v4010
        %v4296 = vpack.c.b16 %v4026, %v4011
        %v4297 = vpack.c.b16 %v4027, %v4012
        %v4298 = vpack.c.b16 %v4028, %v4013
        %v4299 = vpack.c.b16 %v4029, %v4014
        %v4300 = vpack.c.b16 %v4030, %v4015
        %v4301 = vpack.c.b16 %v4031, %v4016
        %v4302 = vpack.c.b16 %v4047, %v4032
        %v4303 = vpack.c.b16 %v4048, %v4033
        %v4304 = vpack.c.b16 %v4049, %v4034
        %v4305 = vpack.c.b16 %v4050, %v4035
        %v4306 = vpack.c.b16 %v4051, %v4036
        %v4307 = vpack.c.b16 %v4052, %v4037
        %v4308 = vpack.c.b16 %v4053, %v4038
        %v4309 = vpack.c.b16 %v4054, %v4039
        %v4310 = vpack.c.b16 %v4055, %v4040
        %v4311 = vpack.c.b16 %v4056, %v4041
        %v4312 = vpack.c.b16 %v4057, %v4042
        %v4313 = vpack.c.b16 %v4058, %v4043
        %v4314 = vpack.c.b16 %v4059, %v4044
        %v4315 = vpack.c.b16 %v4060, %v4045
        %v4316 = vpack.c.b16 %v4061, %v4046
        %v4317 = vpack.c.b16 %v4077, %v4062
        %v4318 = vpack.c.b16 %v4078, %v4063
        %v4319 = vpack.c.b16 %v4079, %v4064
        %v4320 = vpack.c.b16 %v4080, %v4065
        %v4321 = vpack.c.b16 %v4081, %v4066
        %v4322 = vpack.c.b16 %v4082, %v4067
        %v4323 = vpack.c.b16 %v4083, %v4068
        %v4324 = vpack.c.b16 %v4084, %v4069
        %v4325 = vpack.c.b16 %v4085, %v4070
        %v4326 = vpack.c.b16 %v4086, %v4071
        %v4327 = vpack.c.b16 %v4087, %v4072
        %v4328 = vpack.c.b16 %v4088, %v4073
        %v4329 = vpack.c.b16 %v4089, %v4074
        %v4330 = vpack.c.b16 %v4090, %v4075
        %v4331 = vpack.c.b16 %v4091, %v4076
        %4572 = vmatprep.subr.bf16.mxu0 %v4198
        %4573 = vmatpush1.bf16.msra.mxu0 %v4197
        %4574 = vmatprep.subr.bf16.mxu0 %v4183
        %4575 = vmatpush1.bf16.msra.mxu0 %v4182
        %4576 = vmatprep.subr.bf16.mxu0 %v4168
        %4577 = vmatpush1.bf16.msra.mxu0 %v4167
        %4578 = vmatprep.subr.bf16.mxu0 %v4153
        %4579 = vmatpush1.bf16.msra.mxu0 %v4152
        %4580 = vmatprep.subr.bf16.mxu0 %v4138
        %4581 = vmatpush1.bf16.msra.mxu0 %v4137
        %4582 = vmatprep.subr.bf16.mxu0 %v4123
        %4583 = vmatpush1.bf16.msra.mxu0 %v4122
        %4584 = vmatprep.subr.bf16.mxu0 %v4108
        %4585 = vmatpush1.bf16.msra.mxu0 %v4107
        %4586 = vmatprep.subr.bf16.mxu0 %v4093
        %4587 = vmatpush1.bf16.msra.mxu0 %v4092
        %4588 = vmatprep.subr.bf16.mxu0 %v4318
        %4589 = vmatpush2.bf16.msra.mxu0 %v4317
        %4590 = vmatprep.subr.bf16.mxu0 %v4303
        %4591 = vmatpush2.bf16.msra.mxu0 %v4302
        %4592 = vmatprep.subr.bf16.mxu0 %v4288
        %4593 = vmatpush2.bf16.msra.mxu0 %v4287
        %4594 = vmatprep.subr.bf16.mxu0 %v4273
        %4595 = vmatpush2.bf16.msra.mxu0 %v4272
        %4596 = vmatprep.subr.bf16.mxu0 %v4258
        %4597 = vmatpush2.bf16.msra.mxu0 %v4257
        %4598 = vmatprep.subr.bf16.mxu0 %v4243
        %4599 = vmatpush2.bf16.msra.mxu0 %v4242
        %4600 = vmatprep.subr.bf16.mxu0 %v4228
        %4601 = vmatpush2.bf16.msra.mxu0 %v4227
        %4602 = vmatprep.subr.bf16.mxu0 %v4213
        %4603 = vmatpush2.bf16.msra.mxu0 %v4212
        %4604 = vmatprep.mubr.bf16.mxu0 %v964
        %4605 = vmatmul.mubr.bf16.gmra.mxu0 %v963
        %v4606 = vpop.f32.mrf.mxu0
        %v4607 = vadd.f32 0.0, %v4606
        %v4608 = vpop.f32.mrf.mxu0
        %v4609 = vadd.f32 0.0, %v4608
        %v4610 = vpop.f32.mrf.mxu0
        %v4611 = vadd.f32 0.0, %v4610
        %v4612 = vpop.f32.mrf.mxu0
        %v4613 = vadd.f32 0.0, %v4612
        %4614 = vmatprep.mubr.bf16.mxu0 %v966
        %4615 = vmatmul.mubr.bf16.gmra.mxu0 %v965
        %v4616 = vpop.f32.mrf.mxu0
        %v4617 = vadd.f32 0.0, %v4616
        %v4618 = vpop.f32.mrf.mxu0
        %v4619 = vadd.f32 0.0, %v4618
        %v4620 = vpop.f32.mrf.mxu0
        %v4621 = vpop.f32.mrf.mxu0
        %4622 = vdwg.mxu0
        %4623 = vmatprep.subr.bf16.mxu0 %v4200
        %4624 = vmatpush1.bf16.msra.mxu0 %v4199
        %4625 = vmatprep.subr.bf16.mxu0 %v4185
        %4626 = vmatpush1.bf16.msra.mxu0 %v4184
        %4627 = vmatprep.subr.bf16.mxu0 %v4170
        %4628 = vmatpush1.bf16.msra.mxu0 %v4169
        %4629 = vmatprep.subr.bf16.mxu0 %v4155
        %4630 = vmatpush1.bf16.msra.mxu0 %v4154
        %4631 = vmatprep.subr.bf16.mxu0 %v4140
        %4632 = vmatpush1.bf16.msra.mxu0 %v4139
        %4633 = vmatprep.subr.bf16.mxu0 %v4125
        %4634 = vmatpush1.bf16.msra.mxu0 %v4124
        %4635 = vmatprep.subr.bf16.mxu0 %v4110
        %4636 = vmatpush1.bf16.msra.mxu0 %v4109
        %4637 = vmatprep.subr.bf16.mxu0 %v4095
        %4638 = vmatpush1.bf16.msra.mxu0 %v4094
        %4639 = vmatprep.subr.bf16.mxu0 %v4320
        %4640 = vmatpush2.bf16.msra.mxu0 %v4319
        %4641 = vmatprep.subr.bf16.mxu0 %v4305
        %4642 = vmatpush2.bf16.msra.mxu0 %v4304
        %4643 = vmatprep.subr.bf16.mxu0 %v4290
        %4644 = vmatpush2.bf16.msra.mxu0 %v4289
        %4645 = vmatprep.subr.bf16.mxu0 %v4275
        %4646 = vmatpush2.bf16.msra.mxu0 %v4274
        %4647 = vmatprep.subr.bf16.mxu0 %v4260
        %4648 = vmatpush2.bf16.msra.mxu0 %v4259
        %4649 = vmatprep.subr.bf16.mxu0 %v4245
        %4650 = vmatpush2.bf16.msra.mxu0 %v4244
        %4651 = vmatprep.subr.bf16.mxu0 %v4230
        %4652 = vmatpush2.bf16.msra.mxu0 %v4229
        %4653 = vmatprep.subr.bf16.mxu0 %v4215
        %4654 = vmatpush2.bf16.msra.mxu0 %v4214
        %4655 = vmatprep.mubr.bf16.mxu0 %v964
        %4656 = vmatmul.mubr.bf16.gmra.mxu0 %v963
        %v4657 = vpop.f32.mrf.mxu0
        %v4658 = vadd.f32 0.0, %v4657
        %v4659 = vpop.f32.mrf.mxu0
        %v4660 = vadd.f32 0.0, %v4659
        %v4661 = vpop.f32.mrf.mxu0
        %v4662 = vadd.f32 0.0, %v4661
        %v4663 = vpop.f32.mrf.mxu0
        %v4664 = vadd.f32 0.0, %v4663
        %4665 = vmatprep.mubr.bf16.mxu0 %v966
        %4666 = vmatmul.mubr.bf16.gmra.mxu0 %v965
        %v4667 = vpop.f32.mrf.mxu0
        %v4668 = vadd.f32 0.0, %v4667
        %v4669 = vpop.f32.mrf.mxu0
        %v4670 = vadd.f32 0.0, %v4669
        %v4671 = vpop.f32.mrf.mxu0
        %v4672 = vpop.f32.mrf.mxu0
        %4673 = vdwg.mxu0
        %4674 = vmatprep.subr.bf16.mxu0 %v4202
        %4675 = vmatpush1.bf16.msra.mxu0 %v4201
        %4676 = vmatprep.subr.bf16.mxu0 %v4187
        %4677 = vmatpush1.bf16.msra.mxu0 %v4186
        %4678 = vmatprep.subr.bf16.mxu0 %v4172
        %4679 = vmatpush1.bf16.msra.mxu0 %v4171
        %4680 = vmatprep.subr.bf16.mxu0 %v4157
        %4681 = vmatpush1.bf16.msra.mxu0 %v4156
        %4682 = vmatprep.subr.bf16.mxu0 %v4142
        %4683 = vmatpush1.bf16.msra.mxu0 %v4141
        %4684 = vmatprep.subr.bf16.mxu0 %v4127
        %4685 = vmatpush1.bf16.msra.mxu0 %v4126
        %4686 = vmatprep.subr.bf16.mxu0 %v4112
        %4687 = vmatpush1.bf16.msra.mxu0 %v4111
        %4688 = vmatprep.subr.bf16.mxu0 %v4097
        %4689 = vmatpush1.bf16.msra.mxu0 %v4096
        %4690 = vmatprep.subr.bf16.mxu0 %v4322
        %4691 = vmatpush2.bf16.msra.mxu0 %v4321
        %4692 = vmatprep.subr.bf16.mxu0 %v4307
        %4693 = vmatpush2.bf16.msra.mxu0 %v4306
        %4694 = vmatprep.subr.bf16.mxu0 %v4292
        %4695 = vmatpush2.bf16.msra.mxu0 %v4291
        %4696 = vmatprep.subr.bf16.mxu0 %v4277
        %4697 = vmatpush2.bf16.msra.mxu0 %v4276
        %4698 = vmatprep.subr.bf16.mxu0 %v4262
        %4699 = vmatpush2.bf16.msra.mxu0 %v4261
        %4700 = vmatprep.subr.bf16.mxu0 %v4247
        %4701 = vmatpush2.bf16.msra.mxu0 %v4246
        %4702 = vmatprep.subr.bf16.mxu0 %v4232
        %4703 = vmatpush2.bf16.msra.mxu0 %v4231
        %4704 = vmatprep.subr.bf16.mxu0 %v4217
        %4705 = vmatpush2.bf16.msra.mxu0 %v4216
        %4706 = vmatprep.mubr.bf16.mxu0 %v964
        %4707 = vmatmul.mubr.bf16.gmra.mxu0 %v963
        %v4708 = vpop.f32.mrf.mxu0
        %v4709 = vadd.f32 0.0, %v4708
        %v4710 = vpop.f32.mrf.mxu0
        %v4711 = vadd.f32 0.0, %v4710
        %v4712 = vpop.f32.mrf.mxu0
        %v4713 = vadd.f32 0.0, %v4712
        %v4714 = vpop.f32.mrf.mxu0
        %v4715 = vadd.f32 0.0, %v4714
        %4716 = vmatprep.mubr.bf16.mxu0 %v966
        %4717 = vmatmul.mubr.bf16.gmra.mxu0 %v965
        %v4718 = vpop.f32.mrf.mxu0
        %v4719 = vadd.f32 0.0, %v4718
        %v4720 = vpop.f32.mrf.mxu0
        %v4721 = vadd.f32 0.0, %v4720
        %v4722 = vpop.f32.mrf.mxu0
        %v4723 = vpop.f32.mrf.mxu0
        %4724 = vdwg.mxu0
        %4725 = vmatprep.subr.bf16.mxu0 %v4204
        %4726 = vmatpush1.bf16.msra.mxu0 %v4203
        %4727 = vmatprep.subr.bf16.mxu0 %v4189
        %4728 = vmatpush1.bf16.msra.mxu0 %v4188
        %4729 = vmatprep.subr.bf16.mxu0 %v4174
        %4730 = vmatpush1.bf16.msra.mxu0 %v4173
        %4731 = vmatprep.subr.bf16.mxu0 %v4159
        %4732 = vmatpush1.bf16.msra.mxu0 %v4158
        %4733 = vmatprep.subr.bf16.mxu0 %v4144
        %4734 = vmatpush1.bf16.msra.mxu0 %v4143
        %4735 = vmatprep.subr.bf16.mxu0 %v4129
        %4736 = vmatpush1.bf16.msra.mxu0 %v4128
        %4737 = vmatprep.subr.bf16.mxu0 %v4114
        %4738 = vmatpush1.bf16.msra.mxu0 %v4113
        %4739 = vmatprep.subr.bf16.mxu0 %v4099
        %4740 = vmatpush1.bf16.msra.mxu0 %v4098
        %4741 = vmatprep.subr.bf16.mxu0 %v4324
        %4742 = vmatpush2.bf16.msra.mxu0 %v4323
        %4743 = vmatprep.subr.bf16.mxu0 %v4309
        %4744 = vmatpush2.bf16.msra.mxu0 %v4308
        %4745 = vmatprep.subr.bf16.mxu0 %v4294
        %4746 = vmatpush2.bf16.msra.mxu0 %v4293
        %4747 = vmatprep.subr.bf16.mxu0 %v4279
        %4748 = vmatpush2.bf16.msra.mxu0 %v4278
        %4749 = vmatprep.subr.bf16.mxu0 %v4264
        %4750 = vmatpush2.bf16.msra.mxu0 %v4263
        %4751 = vmatprep.subr.bf16.mxu0 %v4249
        %4752 = vmatpush2.bf16.msra.mxu0 %v4248
        %4753 = vmatprep.subr.bf16.mxu0 %v4234
        %4754 = vmatpush2.bf16.msra.mxu0 %v4233
        %4755 = vmatprep.subr.bf16.mxu0 %v4219
        %4756 = vmatpush2.bf16.msra.mxu0 %v4218
        %4757 = vmatprep.mubr.bf16.mxu0 %v964
        %4758 = vmatmul.mubr.bf16.gmra.mxu0 %v963
        %v4759 = vpop.f32.mrf.mxu0
        %v4760 = vadd.f32 0.0, %v4759
        %v4761 = vpop.f32.mrf.mxu0
        %v4762 = vadd.f32 0.0, %v4761
        %v4763 = vpop.f32.mrf.mxu0
        %v4764 = vadd.f32 0.0, %v4763
        %v4765 = vpop.f32.mrf.mxu0
        %v4766 = vadd.f32 0.0, %v4765
        %4767 = vmatprep.mubr.bf16.mxu0 %v966
        %4768 = vmatmul.mubr.bf16.gmra.mxu0 %v965
        %v4769 = vpop.f32.mrf.mxu0
        %v4770 = vadd.f32 0.0, %v4769
        %v4771 = vpop.f32.mrf.mxu0
        %v4772 = vadd.f32 0.0, %v4771
        %v4773 = vpop.f32.mrf.mxu0
        %v4774 = vpop.f32.mrf.mxu0
        %4775 = vdwg.mxu0
        %4776 = vmatprep.subr.bf16.mxu0 %v4206
        %4777 = vmatpush1.bf16.msra.mxu0 %v4205
        %4778 = vmatprep.subr.bf16.mxu0 %v4191
        %4779 = vmatpush1.bf16.msra.mxu0 %v4190
        %4780 = vmatprep.subr.bf16.mxu0 %v4176
        %4781 = vmatpush1.bf16.msra.mxu0 %v4175
        %4782 = vmatprep.subr.bf16.mxu0 %v4161
        %4783 = vmatpush1.bf16.msra.mxu0 %v4160
        %4784 = vmatprep.subr.bf16.mxu0 %v4146
        %4785 = vmatpush1.bf16.msra.mxu0 %v4145
        %4786 = vmatprep.subr.bf16.mxu0 %v4131
        %4787 = vmatpush1.bf16.msra.mxu0 %v4130
        %4788 = vmatprep.subr.bf16.mxu0 %v4116
        %4789 = vmatpush1.bf16.msra.mxu0 %v4115
        %4790 = vmatprep.subr.bf16.mxu0 %v4101
        %4791 = vmatpush1.bf16.msra.mxu0 %v4100
        %4792 = vmatprep.subr.bf16.mxu0 %v4326
        %4793 = vmatpush2.bf16.msra.mxu0 %v4325
        %4794 = vmatprep.subr.bf16.mxu0 %v4311
        %4795 = vmatpush2.bf16.msra.mxu0 %v4310
        %4796 = vmatprep.subr.bf16.mxu0 %v4296
        %4797 = vmatpush2.bf16.msra.mxu0 %v4295
        %4798 = vmatprep.subr.bf16.mxu0 %v4281
        %4799 = vmatpush2.bf16.msra.mxu0 %v4280
        %4800 = vmatprep.subr.bf16.mxu0 %v4266
        %4801 = vmatpush2.bf16.msra.mxu0 %v4265
        %4802 = vmatprep.subr.bf16.mxu0 %v4251
        %4803 = vmatpush2.bf16.msra.mxu0 %v4250
        %4804 = vmatprep.subr.bf16.mxu0 %v4236
        %4805 = vmatpush2.bf16.msra.mxu0 %v4235
        %4806 = vmatprep.subr.bf16.mxu0 %v4221
        %4807 = vmatpush2.bf16.msra.mxu0 %v4220
        %4808 = vmatprep.mubr.bf16.mxu0 %v964
        %4809 = vmatmul.mubr.bf16.gmra.mxu0 %v963
        %v4810 = vpop.f32.mrf.mxu0
        %v4811 = vadd.f32 0.0, %v4810
        %v4812 = vpop.f32.mrf.mxu0
        %v4813 = vadd.f32 0.0, %v4812
        %v4814 = vpop.f32.mrf.mxu0
        %v4815 = vadd.f32 0.0, %v4814
        %v4816 = vpop.f32.mrf.mxu0
        %v4817 = vadd.f32 0.0, %v4816
        %4818 = vmatprep.mubr.bf16.mxu0 %v966
        %4819 = vmatmul.mubr.bf16.gmra.mxu0 %v965
        %v4820 = vpop.f32.mrf.mxu0
        %v4821 = vadd.f32 0.0, %v4820
        %v4822 = vpop.f32.mrf.mxu0
        %v4823 = vadd.f32 0.0, %v4822
        %v4824 = vpop.f32.mrf.mxu0
        %v4825 = vpop.f32.mrf.mxu0
        %4826 = vdwg.mxu0
        %4827 = vmatprep.subr.bf16.mxu0 %v4208
        %4828 = vmatpush1.bf16.msra.mxu0 %v4207
        %4829 = vmatprep.subr.bf16.mxu0 %v4193
        %4830 = vmatpush1.bf16.msra.mxu0 %v4192
        %4831 = vmatprep.subr.bf16.mxu0 %v4178
        %4832 = vmatpush1.bf16.msra.mxu0 %v4177
        %4833 = vmatprep.subr.bf16.mxu0 %v4163
        %4834 = vmatpush1.bf16.msra.mxu0 %v4162
        %4835 = vmatprep.subr.bf16.mxu0 %v4148
        %4836 = vmatpush1.bf16.msra.mxu0 %v4147
        %4837 = vmatprep.subr.bf16.mxu0 %v4133
        %4838 = vmatpush1.bf16.msra.mxu0 %v4132
        %4839 = vmatprep.subr.bf16.mxu0 %v4118
        %4840 = vmatpush1.bf16.msra.mxu0 %v4117
        %4841 = vmatprep.subr.bf16.mxu0 %v4103
        %4842 = vmatpush1.bf16.msra.mxu0 %v4102
        %4843 = vmatprep.subr.bf16.mxu0 %v4328
        %4844 = vmatpush2.bf16.msra.mxu0 %v4327
        %4845 = vmatprep.subr.bf16.mxu0 %v4313
        %4846 = vmatpush2.bf16.msra.mxu0 %v4312
        %4847 = vmatprep.subr.bf16.mxu0 %v4298
        %4848 = vmatpush2.bf16.msra.mxu0 %v4297
        %4849 = vmatprep.subr.bf16.mxu0 %v4283
        %4850 = vmatpush2.bf16.msra.mxu0 %v4282
        %4851 = vmatprep.subr.bf16.mxu0 %v4268
        %4852 = vmatpush2.bf16.msra.mxu0 %v4267
        %4853 = vmatprep.subr.bf16.mxu0 %v4253
        %4854 = vmatpush2.bf16.msra.mxu0 %v4252
        %4855 = vmatprep.subr.bf16.mxu0 %v4238
        %4856 = vmatpush2.bf16.msra.mxu0 %v4237
        %4857 = vmatprep.subr.bf16.mxu0 %v4223
        %4858 = vmatpush2.bf16.msra.mxu0 %v4222
        %4859 = vmatprep.mubr.bf16.mxu0 %v964
        %4860 = vmatmul.mubr.bf16.gmra.mxu0 %v963
        %v4861 = vpop.f32.mrf.mxu0
        %v4862 = vadd.f32 0.0, %v4861
        %v4863 = vpop.f32.mrf.mxu0
        %v4864 = vadd.f32 0.0, %v4863
        %v4865 = vpop.f32.mrf.mxu0
        %v4866 = vadd.f32 0.0, %v4865
        %v4867 = vpop.f32.mrf.mxu0
        %v4868 = vadd.f32 0.0, %v4867
        %4869 = vmatprep.mubr.bf16.mxu0 %v966
        %4870 = vmatmul.mubr.bf16.gmra.mxu0 %v965
        %v4871 = vpop.f32.mrf.mxu0
        %v4872 = vadd.f32 0.0, %v4871
        %v4873 = vpop.f32.mrf.mxu0
        %v4874 = vadd.f32 0.0, %v4873
        %v4875 = vpop.f32.mrf.mxu0
        %v4876 = vpop.f32.mrf.mxu0
        %4877 = vdwg.mxu0
        %4878 = vmatprep.subr.bf16.mxu0 %v4210
        %4879 = vmatpush1.bf16.msra.mxu0 %v4209
        %4880 = vmatprep.subr.bf16.mxu0 %v4195
        %4881 = vmatpush1.bf16.msra.mxu0 %v4194
        %4882 = vmatprep.subr.bf16.mxu0 %v4180
        %4883 = vmatpush1.bf16.msra.mxu0 %v4179
        %4884 = vmatprep.subr.bf16.mxu0 %v4165
        %4885 = vmatpush1.bf16.msra.mxu0 %v4164
        %4886 = vmatprep.subr.bf16.mxu0 %v4150
        %4887 = vmatpush1.bf16.msra.mxu0 %v4149
        %4888 = vmatprep.subr.bf16.mxu0 %v4135
        %4889 = vmatpush1.bf16.msra.mxu0 %v4134
        %4890 = vmatprep.subr.bf16.mxu0 %v4120
        %4891 = vmatpush1.bf16.msra.mxu0 %v4119
        %4892 = vmatprep.subr.bf16.mxu0 %v4105
        %4893 = vmatpush1.bf16.msra.mxu0 %v4104
        %4894 = vmatprep.subr.bf16.mxu0 %v4330
        %4895 = vmatpush2.bf16.msra.mxu0 %v4329
        %4896 = vmatprep.subr.bf16.mxu0 %v4315
        %4897 = vmatpush2.bf16.msra.mxu0 %v4314
        %4898 = vmatprep.subr.bf16.mxu0 %v4300
        %4899 = vmatpush2.bf16.msra.mxu0 %v4299
        %4900 = vmatprep.subr.bf16.mxu0 %v4285
        %4901 = vmatpush2.bf16.msra.mxu0 %v4284
        %4902 = vmatprep.subr.bf16.mxu0 %v4270
        %4903 = vmatpush2.bf16.msra.mxu0 %v4269
        %4904 = vmatprep.subr.bf16.mxu0 %v4255
        %4905 = vmatpush2.bf16.msra.mxu0 %v4254
        %4906 = vmatprep.subr.bf16.mxu0 %v4240
        %4907 = vmatpush2.bf16.msra.mxu0 %v4239
        %4908 = vmatprep.subr.bf16.mxu0 %v4225
        %4909 = vmatpush2.bf16.msra.mxu0 %v4224
        %4910 = vmatprep.mubr.bf16.mxu0 %v964
        %4911 = vmatmul.mubr.bf16.gmra.mxu0 %v963
        %v4912 = vpop.f32.mrf.mxu0
        %v4913 = vadd.f32 0.0, %v4912
        %v4914 = vpop.f32.mrf.mxu0
        %v4915 = vadd.f32 0.0, %v4914
        %v4916 = vpop.f32.mrf.mxu0
        %v4917 = vadd.f32 0.0, %v4916
        %v4918 = vpop.f32.mrf.mxu0
        %v4919 = vadd.f32 0.0, %v4918
        %4920 = vmatprep.mubr.bf16.mxu0 %v966
        %4921 = vmatmul.mubr.bf16.gmra.mxu0 %v965
        %v4922 = vpop.f32.mrf.mxu0
        %v4923 = vadd.f32 0.0, %v4922
        %v4924 = vpop.f32.mrf.mxu0
        %v4925 = vadd.f32 0.0, %v4924
        %v4926 = vpop.f32.mrf.mxu0
        %v4927 = vpop.f32.mrf.mxu0
        %4928 = vdwg.mxu0
        %4929 = vmatprep.subr.bf16.mxu0 0
        %4930 = vmatpush1.bf16.msra.mxu0 %v4211
        %4931 = vmatprep.subr.bf16.mxu0 0
        %4932 = vmatpush1.bf16.msra.mxu0 %v4196
        %4933 = vmatprep.subr.bf16.mxu0 0
        %4934 = vmatpush1.bf16.msra.mxu0 %v4181
        %4935 = vmatprep.subr.bf16.mxu0 0
        %4936 = vmatpush1.bf16.msra.mxu0 %v4166
        %4937 = vmatprep.subr.bf16.mxu0 0
        %4938 = vmatpush1.bf16.msra.mxu0 %v4151
        %4939 = vmatprep.subr.bf16.mxu0 0
        %4940 = vmatpush1.bf16.msra.mxu0 %v4136
        %4941 = vmatprep.subr.bf16.mxu0 0
        %4942 = vmatpush1.bf16.msra.mxu0 %v4121
        %4943 = vmatprep.subr.bf16.mxu0 0
        %4944 = vmatpush1.bf16.msra.mxu0 %v4106
        %4945 = vmatprep.subr.bf16.mxu0 0
        %4946 = vmatpush2.bf16.msra.mxu0 %v4331
        %4947 = vmatprep.subr.bf16.mxu0 0
        %4948 = vmatpush2.bf16.msra.mxu0 %v4316
        %4949 = vmatprep.subr.bf16.mxu0 0
        %4950 = vmatpush2.bf16.msra.mxu0 %v4301
        %4951 = vmatprep.subr.bf16.mxu0 0
        %4952 = vmatpush2.bf16.msra.mxu0 %v4286
        %4953 = vmatprep.subr.bf16.mxu0 0
        %4954 = vmatpush2.bf16.msra.mxu0 %v4271
        %4955 = vmatprep.subr.bf16.mxu0 0
        %4956 = vmatpush2.bf16.msra.mxu0 %v4256
        %4957 = vmatprep.subr.bf16.mxu0 0
        %4958 = vmatpush2.bf16.msra.mxu0 %v4241
        %4959 = vmatprep.subr.bf16.mxu0 0
        %4960 = vmatpush2.bf16.msra.mxu0 %v4226
        %4961 = vmatprep.mubr.bf16.mxu0 %v964
        %4962 = vmatmul.mubr.bf16.gmra.mxu0 %v963
        %v4963 = vpop.f32.mrf.mxu0
        %v4964 = vadd.f32 0.0, %v4963
        %v4965 = vpop.f32.mrf.mxu0
        %v4966 = vpop.f32.mrf.mxu0
        %v4967 = vadd.f32 0.0, %v4966
        %v4968 = vpop.f32.mrf.mxu0
        %4969 = vmatprep.mubr.bf16.mxu0 %v966
        %4970 = vmatmul.mubr.bf16.gmra.mxu0 %v965
        %v4971 = vpop.f32.mrf.mxu0
        %v4972 = vadd.f32 0.0, %v4971
        %v4973 = vpop.f32.mrf.mxu0
        %v4974 = vpop.f32.mrf.mxu0
        %v4975 = vpop.f32.mrf.mxu0
        %4976 = vdwg.mxu0
        %v4977 = vadd.f32 %v3055, %v4607
        %v4978 = vadd.f32 %v3056, %v4609
        %v4979 = vadd.f32 %v3057, %v4658
        %v4980 = vadd.f32 %v3058, %v4660
        %v4981 = vadd.f32 %v3059, %v4709
        %v4982 = vadd.f32 %v3060, %v4711
        %v4983 = vadd.f32 %v3061, %v4760
        %v4984 = vadd.f32 %v3062, %v4762
        %v4985 = vadd.f32 %v3063, %v4811
        %v4986 = vadd.f32 %v3064, %v4813
        %v4987 = vadd.f32 %v3065, %v4862
        %v4988 = vadd.f32 %v3066, %v4864
        %v4989 = vadd.f32 %v3067, %v4913
        %v4990 = vadd.f32 %v3068, %v4915
        %v4991 = vadd.f32 %v3069, %v4964
        %v4992 = vadd.f32 %v3070, %v4611
        %v4993 = vadd.f32 %v3071, %v4613
        %v4994 = vadd.f32 %v3072, %v4662
        %v4995 = vadd.f32 %v3073, %v4664
        %v4996 = vadd.f32 %v3074, %v4713
        %v4997 = vadd.f32 %v3075, %v4715
        %v4998 = vadd.f32 %v3076, %v4764
        %v4999 = vadd.f32 %v3077, %v4766
        %v5000 = vadd.f32 %v3078, %v4815
        %v5001 = vadd.f32 %v3079, %v4817
        %v5002 = vadd.f32 %v3080, %v4866
        %v5003 = vadd.f32 %v3081, %v4868
        %v5004 = vadd.f32 %v3082, %v4917
        %v5005 = vadd.f32 %v3083, %v4919
        %v5006 = vadd.f32 %v3084, %v4967
        %v5007 = vadd.f32 %v3085, %v4617
        %v5008 = vadd.f32 %v3086, %v4619
        %v5009 = vadd.f32 %v3087, %v4668
        %v5010 = vadd.f32 %v3088, %v4670
        %v5011 = vadd.f32 %v3089, %v4719
        %v5012 = vadd.f32 %v3090, %v4721
        %v5013 = vadd.f32 %v3091, %v4770
        %v5014 = vadd.f32 %v3092, %v4772
        %v5015 = vadd.f32 %v3093, %v4821
        %v5016 = vadd.f32 %v3094, %v4823
        %v5017 = vadd.f32 %v3095, %v4872
        %v5018 = vadd.f32 %v3096, %v4874
        %v5019 = vadd.f32 %v3097, %v4923
        %v5020 = vadd.f32 %v3098, %v4925
        %v5021 = vadd.f32 %v3099, %v4972
        %5022 = vst [vmem:[#allocation3] sm:$0xff] %v4977
        %5023 = vst [vmem:[#allocation3 + $0x8] sm:$0xff] %v4978
        %5024 = vst [vmem:[#allocation3 + $0x10] sm:$0xff] %v4979
        %5025 = vst [vmem:[#allocation3 + $0x18] sm:$0xff] %v4980
        %5026 = vst [vmem:[#allocation3 + $0x20] sm:$0xff] %v4981
        %5027 = vst [vmem:[#allocation3 + $0x28] sm:$0xff] %v4982
        %5028 = vst [vmem:[#allocation3 + $0x30] sm:$0xff] %v4983
        %5029 = vst [vmem:[#allocation3 + $0x38] sm:$0xff] %v4984
        %5030 = vst [vmem:[#allocation3 + $0x40] sm:$0xff] %v4985
        %5031 = vst [vmem:[#allocation3 + $0x48] sm:$0xff] %v4986
        %5032 = vst [vmem:[#allocation3 + $0x50] sm:$0xff] %v4987
        %5033 = vst [vmem:[#allocation3 + $0x58] sm:$0xff] %v4988
        %5034 = vst [vmem:[#allocation3 + $0x60] sm:$0xff] %v4989
        %5035 = vst [vmem:[#allocation3 + $0x68] sm:$0xff] %v4990
        %5036 = vst [vmem:[#allocation3 + $0x70] sm:$0xff] %v4991
        %5037 = vst [vmem:[#allocation3 + $0x78] sm:$0xff] %v4992
        %5038 = vst [vmem:[#allocation3 + $0x80] sm:$0xff] %v4993
        %5039 = vst [vmem:[#allocation3 + $0x88] sm:$0xff] %v4994
        %5040 = vst [vmem:[#allocation3 + $0x90] sm:$0xff] %v4995
        %5041 = vst [vmem:[#allocation3 + $0x98] sm:$0xff] %v4996
        %5042 = vst [vmem:[#allocation3 + $0xa0] sm:$0xff] %v4997
        %5043 = vst [vmem:[#allocation3 + $0xa8] sm:$0xff] %v4998
        %5044 = vst [vmem:[#allocation3 + $0xb0] sm:$0xff] %v4999
        %5045 = vst [vmem:[#allocation3 + $0xb8] sm:$0xff] %v5000
        %5046 = vst [vmem:[#allocation3 + $0xc0] sm:$0xff] %v5001
        %5047 = vst [vmem:[#allocation3 + $0xc8] sm:$0xff] %v5002
        %5048 = vst [vmem:[#allocation3 + $0xd0] sm:$0xff] %v5003
        %5049 = vst [vmem:[#allocation3 + $0xd8] sm:$0xff] %v5004
        %5050 = vst [vmem:[#allocation3 + $0xe0] sm:$0xff] %v5005
        %5051 = vst [vmem:[#allocation3 + $0xe8] sm:$0xff] %v5006
        %5052 = vst [vmem:[#allocation3 + $0xf0] sm:$0xff] %v5007
        %5053 = vst [vmem:[#allocation3 + $0xf8] sm:$0xff] %v5008
        %5054 = vst [vmem:[#allocation3 + $0x100] sm:$0xff] %v5009
        %5055 = vst [vmem:[#allocation3 + $0x108] sm:$0xff] %v5010
        %5056 = vst [vmem:[#allocation3 + $0x110] sm:$0xff] %v5011
        %5057 = vst [vmem:[#allocation3 + $0x118] sm:$0xff] %v5012
        %5058 = vst [vmem:[#allocation3 + $0x120] sm:$0xff] %v5013
        %5059 = vst [vmem:[#allocation3 + $0x128] sm:$0xff] %v5014
        %5060 = vst [vmem:[#allocation3 + $0x130] sm:$0xff] %v5015
        %5061 = vst [vmem:[#allocation3 + $0x138] sm:$0xff] %v5016
        %5062 = vst [vmem:[#allocation3 + $0x140] sm:$0xff] %v5017
        %5063 = vst [vmem:[#allocation3 + $0x148] sm:$0xff] %v5018
        %5064 = vst [vmem:[#allocation3 + $0x150] sm:$0xff] %v5019
        %5065 = vst [vmem:[#allocation3 + $0x158] sm:$0xff] %v5020
        %5066 = vst [vmem:[#allocation3 + $0x160] sm:$0xff] %v5021
        %v5067 = vld [vmem:[#allocation4] sm:$0xff]
        %v5068 = vld [vmem:[#allocation4 + $0x8] sm:$0xff]
        %v5069 = vld [vmem:[#allocation4 + $0x10] sm:$0xff]
        %v5070 = vld [vmem:[#allocation4 + $0x18] sm:$0xff]
        %v5071 = vld [vmem:[#allocation4 + $0x20] sm:$0xff]
        %v5072 = vld [vmem:[#allocation4 + $0x28] sm:$0xff]
        %v5073 = vld [vmem:[#allocation4 + $0x30] sm:$0xff]
        %v5074 = vld [vmem:[#allocation4 + $0x38] sm:$0xff]
        %v5075 = vld [vmem:[#allocation4 + $0x40] sm:$0xff]
        %v5076 = vld [vmem:[#allocation4 + $0x48] sm:$0xff]
        %v5077 = vld [vmem:[#allocation4 + $0x50] sm:$0xff]
        %v5078 = vld [vmem:[#allocation4 + $0x58] sm:$0xff]
        %v5079 = vld [vmem:[#allocation4 + $0x60] sm:$0xff]
        %v5080 = vld [vmem:[#allocation4 + $0x68] sm:$0xff]
        %v5081 = vld [vmem:[#allocation4 + $0x70] sm:$0xff]
        %v5082 = vld [vmem:[#allocation4 + $0x78] sm:$0xff]
        %v5083 = vld [vmem:[#allocation4 + $0x80] sm:$0xff]
        %v5084 = vld [vmem:[#allocation4 + $0x88] sm:$0xff]
        %v5085 = vld [vmem:[#allocation4 + $0x90] sm:$0xff]
        %v5086 = vld [vmem:[#allocation4 + $0x98] sm:$0xff]
        %v5087 = vld [vmem:[#allocation4 + $0xa0] sm:$0xff]
        %v5088 = vld [vmem:[#allocation4 + $0xa8] sm:$0xff]
        %v5089 = vld [vmem:[#allocation4 + $0xb0] sm:$0xff]
        %v5090 = vld [vmem:[#allocation4 + $0xb8] sm:$0xff]
        %v5091 = vld [vmem:[%s832] sm:$0xff]
        %v5092 = vld [vmem:[%s832 + $0x8] sm:$0xff]
        %v5093 = vld [vmem:[%s832 + $0x10] sm:$0xff]
        %v5094 = vld [vmem:[%s832 + $0x18] sm:$0xff]
        %v5095 = vld [vmem:[%s832 + $0x20] sm:$0xff]
        %v5096 = vld [vmem:[%s832 + $0x28] sm:$0xff]
        %v5097 = vld [vmem:[%s832 + $0x30] sm:$0xff]
        %v5098 = vld [vmem:[%s832 + $0x38] sm:$0xff]
        %v5099 = vld [vmem:[%s832 + $0x40] sm:$0xff]
        %v5100 = vld [vmem:[%s832 + $0x48] sm:$0xff]
        %v5101 = vld [vmem:[%s832 + $0x50] sm:$0xff]
        %v5102 = vld [vmem:[%s832 + $0x58] sm:$0xff]
        %v5103 = vld [vmem:[%s832 + $0x60] sm:$0xff]
        %v5104 = vld [vmem:[%s832 + $0x68] sm:$0xff]
        %v5105 = vld [vmem:[%s832 + $0x70] sm:$0xff]
        %v5106 = vld [vmem:[%s832 + $0x78] sm:$0xff]
        %v5107 = vld [vmem:[%s832 + $0x80] sm:$0xff]
        %v5108 = vld [vmem:[%s832 + $0x88] sm:$0xff]
        %v5109 = vld [vmem:[%s832 + $0x90] sm:$0xff]
        %v5110 = vld [vmem:[%s832 + $0x98] sm:$0xff]
        %v5111 = vld [vmem:[%s832 + $0xa0] sm:$0xff]
        %v5112 = vld [vmem:[%s832 + $0xa8] sm:$0xff]
        %v5113 = vld [vmem:[%s832 + $0xb0] sm:$0xff]
        %v5114 = vld [vmem:[%s832 + $0xb8] sm:$0xff]
        %v5115 = vld [vmem:[%s832 + $0xc0] sm:$0xff]
        %v5116 = vld [vmem:[%s832 + $0xc8] sm:$0xff]
        %v5117 = vld [vmem:[%s832 + $0xd0] sm:$0xff]
        %v5118 = vld [vmem:[%s832 + $0xd8] sm:$0xff]
        %v5119 = vld [vmem:[%s832 + $0xe0] sm:$0xff]
        %v5120 = vld [vmem:[%s832 + $0xe8] sm:$0xff]
        %v5121 = vld [vmem:[%s832 + $0xf0] sm:$0xff]
        %v5122 = vld [vmem:[%s832 + $0xf8] sm:$0xff]
        %v5123 = vld [vmem:[%s832 + $0x100] sm:$0xff]
        %v5124 = vld [vmem:[%s832 + $0x108] sm:$0xff]
        %v5125 = vld [vmem:[%s832 + $0x110] sm:$0xff]
        %v5126 = vld [vmem:[%s832 + $0x118] sm:$0xff]
        %v5127 = vld [vmem:[%s832 + $0x120] sm:$0xff]
        %v5128 = vld [vmem:[%s832 + $0x128] sm:$0xff]
        %v5129 = vld [vmem:[%s832 + $0x130] sm:$0xff]
        %v5130 = vld [vmem:[%s832 + $0x138] sm:$0xff]
        %v5131 = vld [vmem:[%s832 + $0x140] sm:$0xff]
        %v5132 = vld [vmem:[%s832 + $0x148] sm:$0xff]
        %v5133 = vld [vmem:[%s832 + $0x150] sm:$0xff]
        %v5134 = vld [vmem:[%s832 + $0x158] sm:$0xff]
        %v5135 = vld [vmem:[%s832 + $0x160] sm:$0xff]
        %v5136 = vld [vmem:[%s832 + $0x168] sm:$0xff]
        %v5137 = vld [vmem:[%s832 + $0x170] sm:$0xff]
        %v5138 = vld [vmem:[%s832 + $0x178] sm:$0xff]
        %v5139 = vld [vmem:[%s832 + $0x180] sm:$0xff]
        %v5140 = vld [vmem:[%s832 + $0x188] sm:$0xff]
        %v5141 = vld [vmem:[%s832 + $0x190] sm:$0xff]
        %v5142 = vld [vmem:[%s832 + $0x198] sm:$0xff]
        %v5143 = vld [vmem:[%s832 + $0x1a0] sm:$0xff]
        %v5144 = vld [vmem:[%s832 + $0x1a8] sm:$0xff]
        %v5145 = vld [vmem:[%s832 + $0x1b0] sm:$0xff]
        %v5146 = vld [vmem:[%s832 + $0x1b8] sm:$0xff]
        %v5147 = vld [vmem:[%s832 + $0x1c0] sm:$0xff]
        %v5148 = vld [vmem:[%s832 + $0x1c8] sm:$0xff]
        %v5149 = vld [vmem:[%s832 + $0x1d0] sm:$0xff]
        %v5150 = vld [vmem:[%s832 + $0x1d8] sm:$0xff]
        %v5151 = vld [vmem:[%s832 + $0x1e0] sm:$0xff]
        %v5152 = vld [vmem:[%s832 + $0x1e8] sm:$0xff]
        %v5153 = vld [vmem:[%s832 + $0x1f0] sm:$0xff]
        %v5154 = vld [vmem:[%s832 + $0x1f8] sm:$0xff]
        %v5155 = vld [vmem:[%s832 + $0x200] sm:$0xff]
        %v5156 = vld [vmem:[%s832 + $0x208] sm:$0xff]
        %v5157 = vld [vmem:[%s832 + $0x210] sm:$0xff]
        %v5158 = vld [vmem:[%s832 + $0x218] sm:$0xff]
        %v5159 = vld [vmem:[%s832 + $0x220] sm:$0xff]
        %v5160 = vld [vmem:[%s832 + $0x228] sm:$0xff]
        %v5161 = vld [vmem:[%s832 + $0x230] sm:$0xff]
        %v5162 = vld [vmem:[%s832 + $0x238] sm:$0xff]
        %v5163 = vld [vmem:[%s832 + $0x240] sm:$0xff]
        %v5164 = vld [vmem:[%s832 + $0x248] sm:$0xff]
        %v5165 = vld [vmem:[%s832 + $0x250] sm:$0xff]
        %v5166 = vld [vmem:[%s832 + $0x258] sm:$0xff]
        %v5167 = vld [vmem:[%s832 + $0x260] sm:$0xff]
        %v5168 = vld [vmem:[%s832 + $0x268] sm:$0xff]
        %v5169 = vld [vmem:[%s832 + $0x270] sm:$0xff]
        %v5170 = vld [vmem:[%s832 + $0x278] sm:$0xff]
        %v5171 = vld [vmem:[%s832 + $0x280] sm:$0xff]
        %v5172 = vld [vmem:[%s832 + $0x288] sm:$0xff]
        %v5173 = vld [vmem:[%s832 + $0x290] sm:$0xff]
        %v5174 = vld [vmem:[%s832 + $0x298] sm:$0xff]
        %v5175 = vld [vmem:[%s832 + $0x2a0] sm:$0xff]
        %v5176 = vld [vmem:[%s832 + $0x2a8] sm:$0xff]
        %v5177 = vld [vmem:[%s832 + $0x2b0] sm:$0xff]
        %v5178 = vld [vmem:[%s832 + $0x2b8] sm:$0xff]
        %v5179 = vld [vmem:[%s832 + $0x2c0] sm:$0xff]
        %v5180 = vld [vmem:[%s832 + $0x2c8] sm:$0xff]
        %v5181 = vld [vmem:[%s832 + $0x2d0] sm:$0xff]
        %v5182 = vld [vmem:[%s832 + $0x2d8] sm:$0xff]
        %v5183 = vld [vmem:[%s832 + $0x2e0] sm:$0xff]
        %v5184 = vld [vmem:[%s832 + $0x2e8] sm:$0xff]
        %v5185 = vld [vmem:[%s832 + $0x2f0] sm:$0xff]
        %v5186 = vld [vmem:[%s832 + $0x2f8] sm:$0xff]
        %v5187 = vld [vmem:[%s832 + $0x300] sm:$0xff]
        %v5188 = vld [vmem:[%s832 + $0x308] sm:$0xff]
        %v5189 = vld [vmem:[%s832 + $0x310] sm:$0xff]
        %v5190 = vld [vmem:[%s832 + $0x318] sm:$0xff]
        %v5191 = vld [vmem:[%s832 + $0x320] sm:$0xff]
        %v5192 = vld [vmem:[%s832 + $0x328] sm:$0xff]
        %v5193 = vld [vmem:[%s832 + $0x330] sm:$0xff]
        %v5194 = vld [vmem:[%s832 + $0x338] sm:$0xff]
        %v5195 = vld [vmem:[%s832 + $0x340] sm:$0xff]
        %v5196 = vld [vmem:[%s832 + $0x348] sm:$0xff]
        %v5197 = vld [vmem:[%s832 + $0x350] sm:$0xff]
        %v5198 = vld [vmem:[%s832 + $0x358] sm:$0xff]
        %v5199 = vld [vmem:[%s832 + $0x360] sm:$0xff]
        %v5200 = vld [vmem:[%s832 + $0x368] sm:$0xff]
        %v5201 = vld [vmem:[%s832 + $0x370] sm:$0xff]
        %v5202 = vld [vmem:[%s832 + $0x378] sm:$0xff]
        %v5203 = vld [vmem:[%s832 + $0x380] sm:$0xff]
        %v5204 = vld [vmem:[%s832 + $0x388] sm:$0xff]
        %v5205 = vld [vmem:[%s832 + $0x390] sm:$0xff]
        %v5206 = vld [vmem:[%s832 + $0x398] sm:$0xff]
        %v5207 = vld [vmem:[%s832 + $0x3a0] sm:$0xff]
        %v5208 = vld [vmem:[%s832 + $0x3a8] sm:$0xff]
        %v5209 = vld [vmem:[%s832 + $0x3b0] sm:$0xff]
        %v5210 = vld [vmem:[%s832 + $0x3b8] sm:$0xff]
        %v5211 = vld [vmem:[%s832 + $0x3c0] sm:$0xff]
        %v5212 = vld [vmem:[%s832 + $0x3c8] sm:$0xff]
        %v5213 = vld [vmem:[%s832 + $0x3d0] sm:$0xff]
        %v5214 = vld [vmem:[%s832 + $0x3d8] sm:$0xff]
        %v5215 = vld [vmem:[%s832 + $0x3e0] sm:$0xff]
        %v5216 = vld [vmem:[%s832 + $0x3e8] sm:$0xff]
        %v5217 = vld [vmem:[%s832 + $0x3f0] sm:$0xff]
        %v5218 = vld [vmem:[%s832 + $0x3f8] sm:$0xff]
        %v5347 = vunpack.c.l.b16 %v5091
        %v5348 = vunpack.c.h.b16 %v5091
        %v5349 = vunpack.c.l.b16 %v5092
        %v5350 = vunpack.c.h.b16 %v5092
        %v5351 = vunpack.c.l.b16 %v5093
        %v5352 = vunpack.c.h.b16 %v5093
        %v5353 = vunpack.c.l.b16 %v5094
        %v5354 = vunpack.c.h.b16 %v5094
        %v5355 = vunpack.c.l.b16 %v5095
        %v5356 = vunpack.c.h.b16 %v5095
        %v5357 = vunpack.c.l.b16 %v5096
        %v5358 = vunpack.c.h.b16 %v5096
        %v5359 = vunpack.c.l.b16 %v5097
        %v5360 = vunpack.c.h.b16 %v5097
        %v5361 = vunpack.c.l.b16 %v5098
        %v5362 = vunpack.c.h.b16 %v5098
        %v5363 = vunpack.c.l.b16 %v5099
        %v5364 = vunpack.c.h.b16 %v5099
        %v5365 = vunpack.c.l.b16 %v5100
        %v5366 = vunpack.c.h.b16 %v5100
        %v5367 = vunpack.c.l.b16 %v5101
        %v5368 = vunpack.c.h.b16 %v5101
        %v5369 = vunpack.c.l.b16 %v5102
        %v5370 = vunpack.c.h.b16 %v5102
        %v5371 = vunpack.c.l.b16 %v5103
        %v5372 = vunpack.c.h.b16 %v5103
        %v5373 = vunpack.c.l.b16 %v5104
        %v5374 = vunpack.c.h.b16 %v5104
        %v5375 = vunpack.c.l.b16 %v5105
        %v5376 = vunpack.c.h.b16 %v5105
        %v5377 = vunpack.c.l.b16 %v5106
        %v5378 = vunpack.c.h.b16 %v5106
        %v5379 = vunpack.c.l.b16 %v5107
        %v5380 = vunpack.c.h.b16 %v5107
        %v5381 = vunpack.c.l.b16 %v5108
        %v5382 = vunpack.c.h.b16 %v5108
        %v5383 = vunpack.c.l.b16 %v5109
        %v5384 = vunpack.c.h.b16 %v5109
        %v5385 = vunpack.c.l.b16 %v5110
        %v5386 = vunpack.c.h.b16 %v5110
        %v5387 = vunpack.c.l.b16 %v5111
        %v5388 = vunpack.c.h.b16 %v5111
        %v5389 = vunpack.c.l.b16 %v5112
        %v5390 = vunpack.c.h.b16 %v5112
        %v5391 = vunpack.c.l.b16 %v5113
        %v5392 = vunpack.c.h.b16 %v5113
        %v5393 = vunpack.c.l.b16 %v5114
        %v5394 = vunpack.c.h.b16 %v5114
        %v5395 = vunpack.c.l.b16 %v5115
        %v5396 = vunpack.c.h.b16 %v5115
        %v5397 = vunpack.c.l.b16 %v5116
        %v5398 = vunpack.c.h.b16 %v5116
        %v5399 = vunpack.c.l.b16 %v5117
        %v5400 = vunpack.c.h.b16 %v5117
        %v5401 = vunpack.c.l.b16 %v5118
        %v5402 = vunpack.c.h.b16 %v5118
        %v5403 = vunpack.c.l.b16 %v5119
        %v5404 = vunpack.c.h.b16 %v5119
        %v5405 = vunpack.c.l.b16 %v5120
        %v5406 = vunpack.c.h.b16 %v5120
        %v5407 = vunpack.c.l.b16 %v5121
        %v5408 = vunpack.c.h.b16 %v5121
        %v5409 = vunpack.c.l.b16 %v5122
        %v5410 = vunpack.c.h.b16 %v5122
        %v5411 = vunpack.c.l.b16 %v5123
        %v5412 = vunpack.c.h.b16 %v5123
        %v5413 = vunpack.c.l.b16 %v5124
        %v5414 = vunpack.c.h.b16 %v5124
        %v5415 = vunpack.c.l.b16 %v5125
        %v5416 = vunpack.c.h.b16 %v5125
        %v5417 = vunpack.c.l.b16 %v5126
        %v5418 = vunpack.c.h.b16 %v5126
        %v5419 = vunpack.c.l.b16 %v5127
        %v5420 = vunpack.c.h.b16 %v5127
        %v5421 = vunpack.c.l.b16 %v5128
        %v5422 = vunpack.c.h.b16 %v5128
        %v5423 = vunpack.c.l.b16 %v5129
        %v5424 = vunpack.c.h.b16 %v5129
        %v5425 = vunpack.c.l.b16 %v5130
        %v5426 = vunpack.c.h.b16 %v5130
        %v5427 = vunpack.c.l.b16 %v5131
        %v5428 = vunpack.c.h.b16 %v5131
        %v5429 = vunpack.c.l.b16 %v5132
        %v5430 = vunpack.c.h.b16 %v5132
        %v5431 = vunpack.c.l.b16 %v5133
        %v5432 = vunpack.c.h.b16 %v5133
        %v5433 = vunpack.c.l.b16 %v5134
        %v5434 = vunpack.c.h.b16 %v5134
        %v5435 = vunpack.c.l.b16 %v5135
        %v5436 = vunpack.c.h.b16 %v5135
        %v5437 = vunpack.c.l.b16 %v5136
        %v5438 = vunpack.c.h.b16 %v5136
        %v5439 = vunpack.c.l.b16 %v5137
        %v5440 = vunpack.c.h.b16 %v5137
        %v5441 = vunpack.c.l.b16 %v5138
        %v5442 = vunpack.c.h.b16 %v5138
        %v5443 = vunpack.c.l.b16 %v5139
        %v5444 = vunpack.c.h.b16 %v5139
        %v5445 = vunpack.c.l.b16 %v5140
        %v5446 = vunpack.c.h.b16 %v5140
        %v5447 = vunpack.c.l.b16 %v5141
        %v5448 = vunpack.c.h.b16 %v5141
        %v5449 = vunpack.c.l.b16 %v5142
        %v5450 = vunpack.c.h.b16 %v5142
        %v5451 = vunpack.c.l.b16 %v5143
        %v5452 = vunpack.c.h.b16 %v5143
        %v5453 = vunpack.c.l.b16 %v5144
        %v5454 = vunpack.c.h.b16 %v5144
        %v5455 = vunpack.c.l.b16 %v5145
        %v5456 = vunpack.c.h.b16 %v5145
        %v5457 = vunpack.c.l.b16 %v5146
        %v5458 = vunpack.c.h.b16 %v5146
        %v5459 = vunpack.c.l.b16 %v5147
        %v5460 = vunpack.c.h.b16 %v5147
        %v5461 = vunpack.c.l.b16 %v5148
        %v5462 = vunpack.c.h.b16 %v5148
        %v5463 = vunpack.c.l.b16 %v5149
        %v5464 = vunpack.c.h.b16 %v5149
        %v5465 = vunpack.c.l.b16 %v5150
        %v5466 = vunpack.c.h.b16 %v5150
        %v5467 = vunpack.c.l.b16 %v5151
        %v5468 = vunpack.c.h.b16 %v5151
        %v5469 = vunpack.c.l.b16 %v5152
        %v5470 = vunpack.c.h.b16 %v5152
        %v5471 = vunpack.c.l.b16 %v5153
        %v5472 = vunpack.c.h.b16 %v5153
        %v5473 = vunpack.c.l.b16 %v5154
        %v5474 = vunpack.c.h.b16 %v5154
        %v5475 = vunpack.c.l.b16 %v5155
        %v5476 = vunpack.c.h.b16 %v5155
        %v5477 = vunpack.c.l.b16 %v5156
        %v5478 = vunpack.c.h.b16 %v5156
        %v5479 = vunpack.c.l.b16 %v5157
        %v5480 = vunpack.c.h.b16 %v5157
        %v5481 = vunpack.c.l.b16 %v5158
        %v5482 = vunpack.c.h.b16 %v5158
        %v5483 = vunpack.c.l.b16 %v5159
        %v5484 = vunpack.c.h.b16 %v5159
        %v5485 = vunpack.c.l.b16 %v5160
        %v5486 = vunpack.c.h.b16 %v5160
        %v5487 = vunpack.c.l.b16 %v5161
        %v5488 = vunpack.c.h.b16 %v5161
        %v5489 = vunpack.c.l.b16 %v5162
        %v5490 = vunpack.c.h.b16 %v5162
        %v5491 = vunpack.c.l.b16 %v5163
        %v5492 = vunpack.c.h.b16 %v5163
        %v5493 = vunpack.c.l.b16 %v5164
        %v5494 = vunpack.c.h.b16 %v5164
        %v5495 = vunpack.c.l.b16 %v5165
        %v5496 = vunpack.c.h.b16 %v5165
        %v5497 = vunpack.c.l.b16 %v5166
        %v5498 = vunpack.c.h.b16 %v5166
        %v5499 = vunpack.c.l.b16 %v5167
        %v5500 = vunpack.c.h.b16 %v5167
        %v5501 = vunpack.c.l.b16 %v5168
        %v5502 = vunpack.c.h.b16 %v5168
        %v5503 = vunpack.c.l.b16 %v5169
        %v5504 = vunpack.c.h.b16 %v5169
        %v5505 = vunpack.c.l.b16 %v5170
        %v5506 = vunpack.c.h.b16 %v5170
        %v5507 = vunpack.c.l.b16 %v5171
        %v5508 = vunpack.c.h.b16 %v5171
        %v5509 = vunpack.c.l.b16 %v5172
        %v5510 = vunpack.c.h.b16 %v5172
        %v5511 = vunpack.c.l.b16 %v5173
        %v5512 = vunpack.c.h.b16 %v5173
        %v5513 = vunpack.c.l.b16 %v5174
        %v5514 = vunpack.c.h.b16 %v5174
        %v5515 = vunpack.c.l.b16 %v5175
        %v5516 = vunpack.c.h.b16 %v5175
        %v5517 = vunpack.c.l.b16 %v5176
        %v5518 = vunpack.c.h.b16 %v5176
        %v5519 = vunpack.c.l.b16 %v5177
        %v5520 = vunpack.c.h.b16 %v5177
        %v5521 = vunpack.c.l.b16 %v5178
        %v5522 = vunpack.c.h.b16 %v5178
        %v5523 = vunpack.c.l.b16 %v5179
        %v5524 = vunpack.c.h.b16 %v5179
        %v5525 = vunpack.c.l.b16 %v5180
        %v5526 = vunpack.c.h.b16 %v5180
        %v5527 = vunpack.c.l.b16 %v5181
        %v5528 = vunpack.c.h.b16 %v5181
        %v5529 = vunpack.c.l.b16 %v5182
        %v5530 = vunpack.c.h.b16 %v5182
        %v5531 = vunpack.c.l.b16 %v5183
        %v5532 = vunpack.c.h.b16 %v5183
        %v5533 = vunpack.c.l.b16 %v5184
        %v5534 = vunpack.c.h.b16 %v5184
        %v5535 = vunpack.c.l.b16 %v5185
        %v5536 = vunpack.c.h.b16 %v5185
        %v5537 = vunpack.c.l.b16 %v5186
        %v5538 = vunpack.c.h.b16 %v5186
        %v5539 = vunpack.c.l.b16 %v5187
        %v5540 = vunpack.c.h.b16 %v5187
        %v5541 = vunpack.c.l.b16 %v5188
        %v5542 = vunpack.c.h.b16 %v5188
        %v5543 = vunpack.c.l.b16 %v5189
        %v5544 = vunpack.c.h.b16 %v5189
        %v5545 = vunpack.c.l.b16 %v5190
        %v5546 = vunpack.c.h.b16 %v5190
        %v5547 = vunpack.c.l.b16 %v5191
        %v5548 = vunpack.c.h.b16 %v5191
        %v5549 = vunpack.c.l.b16 %v5192
        %v5550 = vunpack.c.h.b16 %v5192
        %v5551 = vunpack.c.l.b16 %v5193
        %v5552 = vunpack.c.h.b16 %v5193
        %v5553 = vunpack.c.l.b16 %v5194
        %v5554 = vunpack.c.h.b16 %v5194
        %v5555 = vunpack.c.l.b16 %v5195
        %v5556 = vunpack.c.h.b16 %v5195
        %v5557 = vunpack.c.l.b16 %v5196
        %v5558 = vunpack.c.h.b16 %v5196
        %v5559 = vunpack.c.l.b16 %v5197
        %v5560 = vunpack.c.h.b16 %v5197
        %v5561 = vunpack.c.l.b16 %v5198
        %v5562 = vunpack.c.h.b16 %v5198
        %v5563 = vunpack.c.l.b16 %v5199
        %v5564 = vunpack.c.h.b16 %v5199
        %v5565 = vunpack.c.l.b16 %v5200
        %v5566 = vunpack.c.h.b16 %v5200
        %v5567 = vunpack.c.l.b16 %v5201
        %v5568 = vunpack.c.h.b16 %v5201
        %v5569 = vunpack.c.l.b16 %v5202
        %v5570 = vunpack.c.h.b16 %v5202
        %v5571 = vunpack.c.l.b16 %v5203
        %v5572 = vunpack.c.h.b16 %v5203
        %v5573 = vunpack.c.l.b16 %v5204
        %v5574 = vunpack.c.h.b16 %v5204
        %v5575 = vunpack.c.l.b16 %v5205
        %v5576 = vunpack.c.h.b16 %v5205
        %v5577 = vunpack.c.l.b16 %v5206
        %v5578 = vunpack.c.h.b16 %v5206
        %v5579 = vunpack.c.l.b16 %v5207
        %v5580 = vunpack.c.h.b16 %v5207
        %v5581 = vunpack.c.l.b16 %v5208
        %v5582 = vunpack.c.h.b16 %v5208
        %v5583 = vunpack.c.l.b16 %v5209
        %v5584 = vunpack.c.h.b16 %v5209
        %v5585 = vunpack.c.l.b16 %v5210
        %v5586 = vunpack.c.h.b16 %v5210
        %v5587 = vunpack.c.l.b16 %v5211
        %v5588 = vunpack.c.h.b16 %v5211
        %v5589 = vunpack.c.l.b16 %v5212
        %v5590 = vunpack.c.h.b16 %v5212
        %v5591 = vunpack.c.l.b16 %v5213
        %v5592 = vunpack.c.h.b16 %v5213
        %v5593 = vunpack.c.l.b16 %v5214
        %v5594 = vunpack.c.h.b16 %v5214
        %v5595 = vunpack.c.l.b16 %v5215
        %v5596 = vunpack.c.h.b16 %v5215
        %v5597 = vunpack.c.l.b16 %v5216
        %v5598 = vunpack.c.h.b16 %v5216
        %v5599 = vunpack.c.l.b16 %v5217
        %v5600 = vunpack.c.h.b16 %v5217
        %v5601 = vunpack.c.l.b16 %v5218
        %v5602 = vunpack.c.h.b16 %v5218
        %v5603 = vpack.c.b16 %v5355, %v5347
        %v5604 = vpack.c.b16 %v5356, %v5348
        %v5605 = vpack.c.b16 %v5357, %v5349
        %v5606 = vpack.c.b16 %v5358, %v5350
        %v5607 = vpack.c.b16 %v5359, %v5351
        %v5608 = vpack.c.b16 %v5360, %v5352
        %v5609 = vpack.c.b16 %v5361, %v5353
        %v5610 = vpack.c.b16 %v5362, %v5354
        %v5611 = vpack.c.b16 %v5371, %v5363
        %v5612 = vpack.c.b16 %v5372, %v5364
        %v5613 = vpack.c.b16 %v5373, %v5365
        %v5614 = vpack.c.b16 %v5374, %v5366
        %v5615 = vpack.c.b16 %v5375, %v5367
        %v5616 = vpack.c.b16 %v5376, %v5368
        %v5617 = vpack.c.b16 %v5377, %v5369
        %v5618 = vpack.c.b16 %v5378, %v5370
        %v5619 = vpack.c.b16 %v5387, %v5379
        %v5620 = vpack.c.b16 %v5388, %v5380
        %v5621 = vpack.c.b16 %v5389, %v5381
        %v5622 = vpack.c.b16 %v5390, %v5382
        %v5623 = vpack.c.b16 %v5391, %v5383
        %v5624 = vpack.c.b16 %v5392, %v5384
        %v5625 = vpack.c.b16 %v5393, %v5385
        %v5626 = vpack.c.b16 %v5394, %v5386
        %v5627 = vpack.c.b16 %v5403, %v5395
        %v5628 = vpack.c.b16 %v5404, %v5396
        %v5629 = vpack.c.b16 %v5405, %v5397
        %v5630 = vpack.c.b16 %v5406, %v5398
        %v5631 = vpack.c.b16 %v5407, %v5399
        %v5632 = vpack.c.b16 %v5408, %v5400
        %v5633 = vpack.c.b16 %v5409, %v5401
        %v5634 = vpack.c.b16 %v5410, %v5402
        %v5635 = vpack.c.b16 %v5419, %v5411
        %v5636 = vpack.c.b16 %v5420, %v5412
        %v5637 = vpack.c.b16 %v5421, %v5413
        %v5638 = vpack.c.b16 %v5422, %v5414
        %v5639 = vpack.c.b16 %v5423, %v5415
        %v5640 = vpack.c.b16 %v5424, %v5416
        %v5641 = vpack.c.b16 %v5425, %v5417
        %v5642 = vpack.c.b16 %v5426, %v5418
        %v5643 = vpack.c.b16 %v5435, %v5427
        %v5644 = vpack.c.b16 %v5436, %v5428
        %v5645 = vpack.c.b16 %v5437, %v5429
        %v5646 = vpack.c.b16 %v5438, %v5430
        %v5647 = vpack.c.b16 %v5439, %v5431
        %v5648 = vpack.c.b16 %v5440, %v5432
        %v5649 = vpack.c.b16 %v5441, %v5433
        %v5650 = vpack.c.b16 %v5442, %v5434
        %v5651 = vpack.c.b16 %v5451, %v5443
        %v5652 = vpack.c.b16 %v5452, %v5444
        %v5653 = vpack.c.b16 %v5453, %v5445
        %v5654 = vpack.c.b16 %v5454, %v5446
        %v5655 = vpack.c.b16 %v5455, %v5447
        %v5656 = vpack.c.b16 %v5456, %v5448
        %v5657 = vpack.c.b16 %v5457, %v5449
        %v5658 = vpack.c.b16 %v5458, %v5450
        %v5659 = vpack.c.b16 %v5467, %v5459
        %v5660 = vpack.c.b16 %v5468, %v5460
        %v5661 = vpack.c.b16 %v5469, %v5461
        %v5662 = vpack.c.b16 %v5470, %v5462
        %v5663 = vpack.c.b16 %v5471, %v5463
        %v5664 = vpack.c.b16 %v5472, %v5464
        %v5665 = vpack.c.b16 %v5473, %v5465
        %v5666 = vpack.c.b16 %v5474, %v5466
        %v5667 = vpack.c.b16 %v5483, %v5475
        %v5668 = vpack.c.b16 %v5484, %v5476
        %v5669 = vpack.c.b16 %v5485, %v5477
        %v5670 = vpack.c.b16 %v5486, %v5478
        %v5671 = vpack.c.b16 %v5487, %v5479
        %v5672 = vpack.c.b16 %v5488, %v5480
        %v5673 = vpack.c.b16 %v5489, %v5481
        %v5674 = vpack.c.b16 %v5490, %v5482
        %v5675 = vpack.c.b16 %v5499, %v5491
        %v5676 = vpack.c.b16 %v5500, %v5492
        %v5677 = vpack.c.b16 %v5501, %v5493
        %v5678 = vpack.c.b16 %v5502, %v5494
        %v5679 = vpack.c.b16 %v5503, %v5495
        %v5680 = vpack.c.b16 %v5504, %v5496
        %v5681 = vpack.c.b16 %v5505, %v5497
        %v5682 = vpack.c.b16 %v5506, %v5498
        %v5683 = vpack.c.b16 %v5515, %v5507
        %v5684 = vpack.c.b16 %v5516, %v5508
        %v5685 = vpack.c.b16 %v5517, %v5509
        %v5686 = vpack.c.b16 %v5518, %v5510
        %v5687 = vpack.c.b16 %v5519, %v5511
        %v5688 = vpack.c.b16 %v5520, %v5512
        %v5689 = vpack.c.b16 %v5521, %v5513
        %v5690 = vpack.c.b16 %v5522, %v5514
        %v5691 = vpack.c.b16 %v5531, %v5523
        %v5692 = vpack.c.b16 %v5532, %v5524
        %v5693 = vpack.c.b16 %v5533, %v5525
        %v5694 = vpack.c.b16 %v5534, %v5526
        %v5695 = vpack.c.b16 %v5535, %v5527
        %v5696 = vpack.c.b16 %v5536, %v5528
        %v5697 = vpack.c.b16 %v5537, %v5529
        %v5698 = vpack.c.b16 %v5538, %v5530
        %v5699 = vpack.c.b16 %v5547, %v5539
        %v5700 = vpack.c.b16 %v5548, %v5540
        %v5701 = vpack.c.b16 %v5549, %v5541
        %v5702 = vpack.c.b16 %v5550, %v5542
        %v5703 = vpack.c.b16 %v5551, %v5543
        %v5704 = vpack.c.b16 %v5552, %v5544
        %v5705 = vpack.c.b16 %v5553, %v5545
        %v5706 = vpack.c.b16 %v5554, %v5546
        %v5707 = vpack.c.b16 %v5563, %v5555
        %v5708 = vpack.c.b16 %v5564, %v5556
        %v5709 = vpack.c.b16 %v5565, %v5557
        %v5710 = vpack.c.b16 %v5566, %v5558
        %v5711 = vpack.c.b16 %v5567, %v5559
        %v5712 = vpack.c.b16 %v5568, %v5560
        %v5713 = vpack.c.b16 %v5569, %v5561
        %v5714 = vpack.c.b16 %v5570, %v5562
        %v5715 = vpack.c.b16 %v5579, %v5571
        %v5716 = vpack.c.b16 %v5580, %v5572
        %v5717 = vpack.c.b16 %v5581, %v5573
        %v5718 = vpack.c.b16 %v5582, %v5574
        %v5719 = vpack.c.b16 %v5583, %v5575
        %v5720 = vpack.c.b16 %v5584, %v5576
        %v5721 = vpack.c.b16 %v5585, %v5577
        %v5722 = vpack.c.b16 %v5586, %v5578
        %v5723 = vpack.c.b16 %v5595, %v5587
        %v5724 = vpack.c.b16 %v5596, %v5588
        %v5725 = vpack.c.b16 %v5597, %v5589
        %v5726 = vpack.c.b16 %v5598, %v5590
        %v5727 = vpack.c.b16 %v5599, %v5591
        %v5728 = vpack.c.b16 %v5600, %v5592
        %v5729 = vpack.c.b16 %v5601, %v5593
        %v5730 = vpack.c.b16 %v5602, %v5594
        %5859 = vmatprep.subr.bf16.mxu0 %v5660
        %5860 = vmatpush1.bf16.msra.mxu0 %v5659
        %5861 = vmatprep.subr.bf16.mxu0 %v5652
        %5862 = vmatpush1.bf16.msra.mxu0 %v5651
        %5863 = vmatprep.subr.bf16.mxu0 %v5644
        %5864 = vmatpush1.bf16.msra.mxu0 %v5643
        %5865 = vmatprep.subr.bf16.mxu0 %v5636
        %5866 = vmatpush1.bf16.msra.mxu0 %v5635
        %5867 = vmatprep.subr.bf16.mxu0 %v5628
        %5868 = vmatpush1.bf16.msra.mxu0 %v5627
        %5869 = vmatprep.subr.bf16.mxu0 %v5620
        %5870 = vmatpush1.bf16.msra.mxu0 %v5619
        %5871 = vmatprep.subr.bf16.mxu0 %v5612
        %5872 = vmatpush1.bf16.msra.mxu0 %v5611
        %5873 = vmatprep.subr.bf16.mxu0 %v5604
        %5874 = vmatpush1.bf16.msra.mxu0 %v5603
        %5875 = vmatprep.subr.bf16.mxu0 %v5724
        %5876 = vmatpush2.bf16.msra.mxu0 %v5723
        %5877 = vmatprep.subr.bf16.mxu0 %v5716
        %5878 = vmatpush2.bf16.msra.mxu0 %v5715
        %5879 = vmatprep.subr.bf16.mxu0 %v5708
        %5880 = vmatpush2.bf16.msra.mxu0 %v5707
        %5881 = vmatprep.subr.bf16.mxu0 %v5700
        %5882 = vmatpush2.bf16.msra.mxu0 %v5699
        %5883 = vmatprep.subr.bf16.mxu0 %v5692
        %5884 = vmatpush2.bf16.msra.mxu0 %v5691
        %5885 = vmatprep.subr.bf16.mxu0 %v5684
        %5886 = vmatpush2.bf16.msra.mxu0 %v5683
        %5887 = vmatprep.subr.bf16.mxu0 %v5676
        %5888 = vmatpush2.bf16.msra.mxu0 %v5675
        %5889 = vmatprep.subr.bf16.mxu0 %v5668
        %5890 = vmatpush2.bf16.msra.mxu0 %v5667
        %5891 = vmatprep.mubr.bf16.mxu0 %v964
        %5892 = vmatmul.mubr.bf16.gmra.mxu0 %v963
        %v5893 = vpop.f32.mrf.mxu0
        %v5894 = vadd.f32 0.0, %v5893
        %v5895 = vpop.f32.mrf.mxu0
        %v5896 = vadd.f32 0.0, %v5895
        %v5897 = vpop.f32.mrf.mxu0
        %v5898 = vadd.f32 0.0, %v5897
        %v5899 = vpop.f32.mrf.mxu0
        %v5900 = vadd.f32 0.0, %v5899
        %5901 = vmatprep.mubr.bf16.mxu0 %v966
        %5902 = vmatmul.mubr.bf16.gmra.mxu0 %v965
        %v5903 = vpop.f32.mrf.mxu0
        %v5904 = vadd.f32 0.0, %v5903
        %v5905 = vpop.f32.mrf.mxu0
        %v5906 = vadd.f32 0.0, %v5905
        %v5907 = vpop.f32.mrf.mxu0
        %v5908 = vpop.f32.mrf.mxu0
        %5909 = vdwg.mxu0
        %5910 = vmatprep.subr.bf16.mxu0 %v5662
        %5911 = vmatpush1.bf16.msra.mxu0 %v5661
        %5912 = vmatprep.subr.bf16.mxu0 %v5654
        %5913 = vmatpush1.bf16.msra.mxu0 %v5653
        %5914 = vmatprep.subr.bf16.mxu0 %v5646
        %5915 = vmatpush1.bf16.msra.mxu0 %v5645
        %5916 = vmatprep.subr.bf16.mxu0 %v5638
        %5917 = vmatpush1.bf16.msra.mxu0 %v5637
        %5918 = vmatprep.subr.bf16.mxu0 %v5630
        %5919 = vmatpush1.bf16.msra.mxu0 %v5629
        %5920 = vmatprep.subr.bf16.mxu0 %v5622
        %5921 = vmatpush1.bf16.msra.mxu0 %v5621
        %5922 = vmatprep.subr.bf16.mxu0 %v5614
        %5923 = vmatpush1.bf16.msra.mxu0 %v5613
        %5924 = vmatprep.subr.bf16.mxu0 %v5606
        %5925 = vmatpush1.bf16.msra.mxu0 %v5605
        %5926 = vmatprep.subr.bf16.mxu0 %v5726
        %5927 = vmatpush2.bf16.msra.mxu0 %v5725
        %5928 = vmatprep.subr.bf16.mxu0 %v5718
        %5929 = vmatpush2.bf16.msra.mxu0 %v5717
        %5930 = vmatprep.subr.bf16.mxu0 %v5710
        %5931 = vmatpush2.bf16.msra.mxu0 %v5709
        %5932 = vmatprep.subr.bf16.mxu0 %v5702
        %5933 = vmatpush2.bf16.msra.mxu0 %v5701
        %5934 = vmatprep.subr.bf16.mxu0 %v5694
        %5935 = vmatpush2.bf16.msra.mxu0 %v5693
        %5936 = vmatprep.subr.bf16.mxu0 %v5686
        %5937 = vmatpush2.bf16.msra.mxu0 %v5685
        %5938 = vmatprep.subr.bf16.mxu0 %v5678
        %5939 = vmatpush2.bf16.msra.mxu0 %v5677
        %5940 = vmatprep.subr.bf16.mxu0 %v5670
        %5941 = vmatpush2.bf16.msra.mxu0 %v5669
        %5942 = vmatprep.mubr.bf16.mxu0 %v964
        %5943 = vmatmul.mubr.bf16.gmra.mxu0 %v963
        %v5944 = vpop.f32.mrf.mxu0
        %v5945 = vadd.f32 0.0, %v5944
        %v5946 = vpop.f32.mrf.mxu0
        %v5947 = vadd.f32 0.0, %v5946
        %v5948 = vpop.f32.mrf.mxu0
        %v5949 = vadd.f32 0.0, %v5948
        %v5950 = vpop.f32.mrf.mxu0
        %v5951 = vadd.f32 0.0, %v5950
        %5952 = vmatprep.mubr.bf16.mxu0 %v966
        %5953 = vmatmul.mubr.bf16.gmra.mxu0 %v965
        %v5954 = vpop.f32.mrf.mxu0
        %v5955 = vadd.f32 0.0, %v5954
        %v5956 = vpop.f32.mrf.mxu0
        %v5957 = vadd.f32 0.0, %v5956
        %v5958 = vpop.f32.mrf.mxu0
        %v5959 = vpop.f32.mrf.mxu0
        %5960 = vdwg.mxu0
        %5961 = vmatprep.subr.bf16.mxu0 %v5664
        %5962 = vmatpush1.bf16.msra.mxu0 %v5663
        %5963 = vmatprep.subr.bf16.mxu0 %v5656
        %5964 = vmatpush1.bf16.msra.mxu0 %v5655
        %5965 = vmatprep.subr.bf16.mxu0 %v5648
        %5966 = vmatpush1.bf16.msra.mxu0 %v5647
        %5967 = vmatprep.subr.bf16.mxu0 %v5640
        %5968 = vmatpush1.bf16.msra.mxu0 %v5639
        %5969 = vmatprep.subr.bf16.mxu0 %v5632
        %5970 = vmatpush1.bf16.msra.mxu0 %v5631
        %5971 = vmatprep.subr.bf16.mxu0 %v5624
        %5972 = vmatpush1.bf16.msra.mxu0 %v5623
        %5973 = vmatprep.subr.bf16.mxu0 %v5616
        %5974 = vmatpush1.bf16.msra.mxu0 %v5615
        %5975 = vmatprep.subr.bf16.mxu0 %v5608
        %5976 = vmatpush1.bf16.msra.mxu0 %v5607
        %5977 = vmatprep.subr.bf16.mxu0 %v5728
        %5978 = vmatpush2.bf16.msra.mxu0 %v5727
        %5979 = vmatprep.subr.bf16.mxu0 %v5720
        %5980 = vmatpush2.bf16.msra.mxu0 %v5719
        %5981 = vmatprep.subr.bf16.mxu0 %v5712
        %5982 = vmatpush2.bf16.msra.mxu0 %v5711
        %5983 = vmatprep.subr.bf16.mxu0 %v5704
        %5984 = vmatpush2.bf16.msra.mxu0 %v5703
        %5985 = vmatprep.subr.bf16.mxu0 %v5696
        %5986 = vmatpush2.bf16.msra.mxu0 %v5695
        %5987 = vmatprep.subr.bf16.mxu0 %v5688
        %5988 = vmatpush2.bf16.msra.mxu0 %v5687
        %5989 = vmatprep.subr.bf16.mxu0 %v5680
        %5990 = vmatpush2.bf16.msra.mxu0 %v5679
        %5991 = vmatprep.subr.bf16.mxu0 %v5672
        %5992 = vmatpush2.bf16.msra.mxu0 %v5671
        %5993 = vmatprep.mubr.bf16.mxu0 %v964
        %5994 = vmatmul.mubr.bf16.gmra.mxu0 %v963
        %v5995 = vpop.f32.mrf.mxu0
        %v5996 = vadd.f32 0.0, %v5995
        %v5997 = vpop.f32.mrf.mxu0
        %v5998 = vadd.f32 0.0, %v5997
        %v5999 = vpop.f32.mrf.mxu0
        %v6000 = vadd.f32 0.0, %v5999
        %v6001 = vpop.f32.mrf.mxu0
        %v6002 = vadd.f32 0.0, %v6001
        %6003 = vmatprep.mubr.bf16.mxu0 %v966
        %6004 = vmatmul.mubr.bf16.gmra.mxu0 %v965
        %v6005 = vpop.f32.mrf.mxu0
        %v6006 = vadd.f32 0.0, %v6005
        %v6007 = vpop.f32.mrf.mxu0
        %v6008 = vadd.f32 0.0, %v6007
        %v6009 = vpop.f32.mrf.mxu0
        %v6010 = vpop.f32.mrf.mxu0
        %6011 = vdwg.mxu0
        %6012 = vmatprep.subr.bf16.mxu0 %v5666
        %6013 = vmatpush1.bf16.msra.mxu0 %v5665
        %6014 = vmatprep.subr.bf16.mxu0 %v5658
        %6015 = vmatpush1.bf16.msra.mxu0 %v5657
        %6016 = vmatprep.subr.bf16.mxu0 %v5650
        %6017 = vmatpush1.bf16.msra.mxu0 %v5649
        %6018 = vmatprep.subr.bf16.mxu0 %v5642
        %6019 = vmatpush1.bf16.msra.mxu0 %v5641
        %6020 = vmatprep.subr.bf16.mxu0 %v5634
        %6021 = vmatpush1.bf16.msra.mxu0 %v5633
        %6022 = vmatprep.subr.bf16.mxu0 %v5626
        %6023 = vmatpush1.bf16.msra.mxu0 %v5625
        %6024 = vmatprep.subr.bf16.mxu0 %v5618
        %6025 = vmatpush1.bf16.msra.mxu0 %v5617
        %6026 = vmatprep.subr.bf16.mxu0 %v5610
        %6027 = vmatpush1.bf16.msra.mxu0 %v5609
        %6028 = vmatprep.subr.bf16.mxu0 %v5730
        %6029 = vmatpush2.bf16.msra.mxu0 %v5729
        %6030 = vmatprep.subr.bf16.mxu0 %v5722
        %6031 = vmatpush2.bf16.msra.mxu0 %v5721
        %6032 = vmatprep.subr.bf16.mxu0 %v5714
        %6033 = vmatpush2.bf16.msra.mxu0 %v5713
        %6034 = vmatprep.subr.bf16.mxu0 %v5706
        %6035 = vmatpush2.bf16.msra.mxu0 %v5705
        %6036 = vmatprep.subr.bf16.mxu0 %v5698
        %6037 = vmatpush2.bf16.msra.mxu0 %v5697
        %6038 = vmatprep.subr.bf16.mxu0 %v5690
        %6039 = vmatpush2.bf16.msra.mxu0 %v5689
        %6040 = vmatprep.subr.bf16.mxu0 %v5682
        %6041 = vmatpush2.bf16.msra.mxu0 %v5681
        %6042 = vmatprep.subr.bf16.mxu0 %v5674
        %6043 = vmatpush2.bf16.msra.mxu0 %v5673
        %6044 = vmatprep.mubr.bf16.mxu0 %v964
        %6045 = vmatmul.mubr.bf16.gmra.mxu0 %v963
        %v6046 = vpop.f32.mrf.mxu0
        %v6047 = vadd.f32 0.0, %v6046
        %v6048 = vpop.f32.mrf.mxu0
        %v6049 = vadd.f32 0.0, %v6048
        %v6050 = vpop.f32.mrf.mxu0
        %v6051 = vadd.f32 0.0, %v6050
        %v6052 = vpop.f32.mrf.mxu0
        %v6053 = vadd.f32 0.0, %v6052
        %6054 = vmatprep.mubr.bf16.mxu0 %v966
        %6055 = vmatmul.mubr.bf16.gmra.mxu0 %v965
        %v6056 = vpop.f32.mrf.mxu0
        %v6057 = vadd.f32 0.0, %v6056
        %v6058 = vpop.f32.mrf.mxu0
        %v6059 = vadd.f32 0.0, %v6058
        %v6060 = vpop.f32.mrf.mxu0
        %v6061 = vpop.f32.mrf.mxu0
        %6062 = vdwg.mxu0
        %v6063 = vadd.f32 %v5067, %v5894
        %v6064 = vadd.f32 %v5068, %v5896
        %v6065 = vadd.f32 %v5069, %v5945
        %v6066 = vadd.f32 %v5070, %v5947
        %v6067 = vadd.f32 %v5071, %v5996
        %v6068 = vadd.f32 %v5072, %v5998
        %v6069 = vadd.f32 %v5073, %v6047
        %v6070 = vadd.f32 %v5074, %v6049
        %v6071 = vadd.f32 %v5075, %v5898
        %v6072 = vadd.f32 %v5076, %v5900
        %v6073 = vadd.f32 %v5077, %v5949
        %v6074 = vadd.f32 %v5078, %v5951
        %v6075 = vadd.f32 %v5079, %v6000
        %v6076 = vadd.f32 %v5080, %v6002
        %v6077 = vadd.f32 %v5081, %v6051
        %v6078 = vadd.f32 %v5082, %v6053
        %v6079 = vadd.f32 %v5083, %v5904
        %v6080 = vadd.f32 %v5084, %v5906
        %v6081 = vadd.f32 %v5085, %v5955
        %v6082 = vadd.f32 %v5086, %v5957
        %v6083 = vadd.f32 %v5087, %v6006
        %v6084 = vadd.f32 %v5088, %v6008
        %v6085 = vadd.f32 %v5089, %v6057
        %v6086 = vadd.f32 %v5090, %v6059
        %6087 = vst [vmem:[#allocation4] sm:$0xff] %v6063
        %6088 = vst [vmem:[#allocation4 + $0x8] sm:$0xff] %v6064
        %6089 = vst [vmem:[#allocation4 + $0x10] sm:$0xff] %v6065
        %6090 = vst [vmem:[#allocation4 + $0x18] sm:$0xff] %v6066
        %6091 = vst [vmem:[#allocation4 + $0x20] sm:$0xff] %v6067
        %6092 = vst [vmem:[#allocation4 + $0x28] sm:$0xff] %v6068
        %6093 = vst [vmem:[#allocation4 + $0x30] sm:$0xff] %v6069
        %vm6094 = vcmask 850944
        %6095 = vst.msk [vmem:[#allocation4 + $0x38] sm:$0xff] %vm6094, %v6070
        %6096 = vst [vmem:[#allocation4 + $0x40] sm:$0xff] %v6071
        %6097 = vst [vmem:[#allocation4 + $0x48] sm:$0xff] %v6072
        %6098 = vst [vmem:[#allocation4 + $0x50] sm:$0xff] %v6073
        %6099 = vst [vmem:[#allocation4 + $0x58] sm:$0xff] %v6074
        %6100 = vst [vmem:[#allocation4 + $0x60] sm:$0xff] %v6075
        %6101 = vst [vmem:[#allocation4 + $0x68] sm:$0xff] %v6076
        %6102 = vst [vmem:[#allocation4 + $0x70] sm:$0xff] %v6077
        %6103 = vst.msk [vmem:[#allocation4 + $0x78] sm:$0xff] %vm6094, %v6078
        %6104 = vst [vmem:[#allocation4 + $0x80] sm:$0xff] %v6079
        %6105 = vst [vmem:[#allocation4 + $0x88] sm:$0xff] %v6080
        %6106 = vst [vmem:[#allocation4 + $0x90] sm:$0xff] %v6081
        %6107 = vst [vmem:[#allocation4 + $0x98] sm:$0xff] %v6082
        %6108 = vst [vmem:[#allocation4 + $0xa0] sm:$0xff] %v6083
        %6109 = vst [vmem:[#allocation4 + $0xa8] sm:$0xff] %v6084
        %6110 = vst [vmem:[#allocation4 + $0xb0] sm:$0xff] %v6085
        %6111 = vst.msk [vmem:[#allocation4 + $0xb8] sm:$0xff] %vm6094, %v6086
        %p6112 = scmp.eq.s32.totalorder %s37, 2
        // Predicated region
        $region121: #{smile_classifier_forward.1} parent=111 // pred_check
          %p6113 = pneg %p6112
        $region122: #{smile_classifier_forward.1} parent=111 // pred_check_branch
          %6115 = sbr.rel (%p6113) target = $region124
        $region123: #{smile_classifier_forward.1} parent=111 // pred_region
          %v6116 = vld [vmem:[#allocation2] sm:$0xff]
          %v6117 = vld [vmem:[#allocation2 + $0x8] sm:$0xff]
          %v6118 = vld [vmem:[#allocation2 + $0x10] sm:$0xff]
          %v6119 = vld [vmem:[#allocation2 + $0x18] sm:$0xff]
          %v6120 = vld [vmem:[#allocation2 + $0x20] sm:$0xff]
          %v6121 = vld [vmem:[#allocation2 + $0x28] sm:$0xff]
          %v6122 = vld [vmem:[#allocation2 + $0x30] sm:$0xff]
          %v6123 = vld [vmem:[#allocation2 + $0x38] sm:$0xff]
          %v6124 = vld [vmem:[#allocation2 + $0x40] sm:$0xff]
          %v6125 = vld [vmem:[#allocation2 + $0x48] sm:$0xff]
          %v6126 = vld [vmem:[#allocation2 + $0x50] sm:$0xff]
          %v6127 = vld [vmem:[#allocation2 + $0x58] sm:$0xff]
          %v6128 = vld [vmem:[#allocation2 + $0x60] sm:$0xff]
          %v6129 = vld [vmem:[#allocation2 + $0x68] sm:$0xff]
          %v6130 = vld [vmem:[#allocation2 + $0x70] sm:$0xff]
          %v6131 = vld [vmem:[#allocation2 + $0x78] sm:$0xff]
          %v6132 = vld [vmem:[#allocation2 + $0x80] sm:$0xff]
          %v6133 = vld [vmem:[#allocation2 + $0x88] sm:$0xff]
          %v6134 = vld [vmem:[#allocation2 + $0x90] sm:$0xff]
          %v6135 = vld [vmem:[#allocation2 + $0x98] sm:$0xff]
          %v6136 = vld [vmem:[#allocation2 + $0xa0] sm:$0xff]
          %v6137 = vld [vmem:[#allocation2 + $0xa8] sm:$0xff]
          %v6138 = vld [vmem:[#allocation2 + $0xb0] sm:$0xff]
          %v6139 = vld [vmem:[#allocation2 + $0xb8] sm:$0xff]
          %v6140 = vld [vmem:[#allocation2 + $0xc0] sm:$0xff]
          %v6141 = vld [vmem:[#allocation2 + $0xc8] sm:$0xff]
          %v6142 = vld [vmem:[#allocation2 + $0xd0] sm:$0xff]
          %v6143 = vld [vmem:[#allocation2 + $0xd8] sm:$0xff]
          %v6144 = vld [vmem:[#allocation2 + $0xe0] sm:$0xff]
          %v6145 = vld [vmem:[#allocation2 + $0xe8] sm:$0xff]
          %v6146 = vld [vmem:[#allocation2 + $0xf0] sm:$0xff]
          %v6147 = vld [vmem:[#allocation2 + $0xf8] sm:$0xff]
          %v6148 = vld [vmem:[#allocation2 + $0x100] sm:$0xff]
          %v6149 = vld [vmem:[#allocation2 + $0x108] sm:$0xff]
          %v6150 = vld [vmem:[#allocation2 + $0x110] sm:$0xff]
          %v6151 = vld [vmem:[#allocation2 + $0x118] sm:$0xff]
          %v6152 = vld [vmem:[#allocation2 + $0x120] sm:$0xff]
          %v6153 = vld [vmem:[#allocation2 + $0x128] sm:$0xff]
          %v6154 = vld [vmem:[#allocation2 + $0x130] sm:$0xff]
          %v6155 = vld [vmem:[#allocation2 + $0x138] sm:$0xff]
          %v6156 = vld [vmem:[#allocation2 + $0x140] sm:$0xff]
          %v6157 = vld [vmem:[#allocation2 + $0x148] sm:$0xff]
          %v6158 = vld [vmem:[#allocation2 + $0x150] sm:$0xff]
          %v6159 = vld [vmem:[#allocation2 + $0x158] sm:$0xff]
          %v6160 = vld [vmem:[#allocation2 + $0x160] sm:$0xff]
          %v6161 = vld [vmem:[#allocation2 + $0x168] sm:$0xff]
          %v6162 = vld [vmem:[#allocation2 + $0x170] sm:$0xff]
          %v6163 = vld [vmem:[#allocation2 + $0x178] sm:$0xff]
          %v6164 = vld [vmem:[%s4] sm:$0xff]
          %v6165 = vld [vmem:[%s4 + $0x8] sm:$0xff]
          %v6168 = vlaneseq
          %v6169 = vshrl.u32 %v6168, 7
          %v6170 = vsub.s32 0, %v6169
          %v6171 = vrot.slane %v6164, %v6170
          %v6172 = vlaneseq
          %v6173 = vshrl.u32 %v6172, 7
          %v6174 = vsub.s32 1, %v6173
          %v6175 = vrot.slane %v6164, %v6174
          %v6176 = vlaneseq
          %v6177 = vshrl.u32 %v6176, 7
          %v6178 = vsub.s32 2, %v6177
          %v6179 = vrot.slane %v6164, %v6178
          %v6180 = vlaneseq
          %v6181 = vshrl.u32 %v6180, 7
          %v6182 = vsub.s32 3, %v6181
          %v6183 = vrot.slane %v6164, %v6182
          %v6184 = vlaneseq
          %v6185 = vshrl.u32 %v6184, 7
          %v6186 = vsub.s32 4, %v6185
          %v6187 = vrot.slane %v6164, %v6186
          %v6188 = vlaneseq
          %v6189 = vshrl.u32 %v6188, 7
          %v6190 = vsub.s32 5, %v6189
          %v6191 = vrot.slane %v6164, %v6190
          %v6192 = vlaneseq
          %v6193 = vshrl.u32 %v6192, 7
          %v6194 = vsub.s32 6, %v6193
          %v6195 = vrot.slane %v6164, %v6194
          %v6196 = vlaneseq
          %v6197 = vshrl.u32 %v6196, 7
          %v6198 = vsub.s32 7, %v6197
          %v6199 = vrot.slane %v6164, %v6198
          %v6200 = vlaneseq
          %v6201 = vshrl.u32 %v6200, 7
          %v6202 = vsub.s32 0, %v6201
          %v6203 = vrot.slane %v6165, %v6202
          %v6204 = vlaneseq
          %v6205 = vshrl.u32 %v6204, 7
          %v6206 = vsub.s32 1, %v6205
          %v6207 = vrot.slane %v6165, %v6206
          %v6208 = vlaneseq
          %v6209 = vshrl.u32 %v6208, 7
          %v6210 = vsub.s32 2, %v6209
          %v6211 = vrot.slane %v6165, %v6210
          %v6212 = vlaneseq
          %v6213 = vshrl.u32 %v6212, 7
          %v6214 = vsub.s32 3, %v6213
          %v6215 = vrot.slane %v6165, %v6214
          %v6216 = vlaneseq
          %v6217 = vshrl.u32 %v6216, 7
          %v6218 = vsub.s32 4, %v6217
          %v6219 = vrot.slane %v6165, %v6218
          %v6220 = vlaneseq
          %v6221 = vshrl.u32 %v6220, 7
          %v6222 = vsub.s32 5, %v6221
          %v6223 = vrot.slane %v6165, %v6222
          %v6224 = vlaneseq
          %v6225 = vshrl.u32 %v6224, 7
          %v6226 = vsub.s32 6, %v6225
          %v6227 = vrot.slane %v6165, %v6226
          %v6228 = vlaneseq
          %v6229 = vshrl.u32 %v6228, 7
          %v6230 = vsub.s32 7, %v6229
          %v6231 = vrot.slane %v6165, %v6230
          %v6248 = vadd.f32 %v6116, %v6171
          %v6249 = vadd.f32 %v6117, %v6175
          %v6250 = vadd.f32 %v6118, %v6179
          %v6251 = vadd.f32 %v6119, %v6183
          %v6252 = vadd.f32 %v6120, %v6187
          %v6253 = vadd.f32 %v6121, %v6191
          %v6254 = vadd.f32 %v6122, %v6195
          %v6255 = vadd.f32 %v6123, %v6199
          %v6256 = vadd.f32 %v6124, %v6203
          %v6257 = vadd.f32 %v6125, %v6207
          %v6258 = vadd.f32 %v6126, %v6211
          %v6259 = vadd.f32 %v6127, %v6215
          %v6260 = vadd.f32 %v6128, %v6219
          %v6261 = vadd.f32 %v6129, %v6223
          %v6262 = vadd.f32 %v6130, %v6227
          %v6263 = vadd.f32 %v6131, %v6231
          %v6264 = vadd.f32 %v6132, %v6171
          %v6265 = vadd.f32 %v6133, %v6175
          %v6266 = vadd.f32 %v6134, %v6179
          %v6267 = vadd.f32 %v6135, %v6183
          %v6268 = vadd.f32 %v6136, %v6187
          %v6269 = vadd.f32 %v6137, %v6191
          %v6270 = vadd.f32 %v6138, %v6195
          %v6271 = vadd.f32 %v6139, %v6199
          %v6272 = vadd.f32 %v6140, %v6203
          %v6273 = vadd.f32 %v6141, %v6207
          %v6274 = vadd.f32 %v6142, %v6211
          %v6275 = vadd.f32 %v6143, %v6215
          %v6276 = vadd.f32 %v6144, %v6219
          %v6277 = vadd.f32 %v6145, %v6223
          %v6278 = vadd.f32 %v6146, %v6227
          %v6279 = vadd.f32 %v6147, %v6231
          %v6280 = vadd.f32 %v6148, %v6171
          %v6281 = vadd.f32 %v6149, %v6175
          %v6282 = vadd.f32 %v6150, %v6179
          %v6283 = vadd.f32 %v6151, %v6183
          %v6284 = vadd.f32 %v6152, %v6187
          %v6285 = vadd.f32 %v6153, %v6191
          %v6286 = vadd.f32 %v6154, %v6195
          %v6287 = vadd.f32 %v6155, %v6199
          %v6288 = vadd.f32 %v6156, %v6203
          %v6289 = vadd.f32 %v6157, %v6207
          %v6290 = vadd.f32 %v6158, %v6211
          %v6291 = vadd.f32 %v6159, %v6215
          %v6292 = vadd.f32 %v6160, %v6219
          %v6293 = vadd.f32 %v6161, %v6223
          %v6294 = vadd.f32 %v6162, %v6227
          %v6295 = vadd.f32 %v6163, %v6231
          %v6296 = vmax.f32 %v6248, 0.0
          %v6297 = vmax.f32 %v6249, 0.0
          %v6298 = vmax.f32 %v6250, 0.0
          %v6299 = vmax.f32 %v6251, 0.0
          %v6300 = vmax.f32 %v6252, 0.0
          %v6301 = vmax.f32 %v6253, 0.0
          %v6302 = vmax.f32 %v6254, 0.0
          %v6303 = vmax.f32 %v6255, 0.0
          %v6304 = vmax.f32 %v6256, 0.0
          %v6305 = vmax.f32 %v6257, 0.0
          %v6306 = vmax.f32 %v6258, 0.0
          %v6307 = vmax.f32 %v6259, 0.0
          %v6308 = vmax.f32 %v6260, 0.0
          %v6309 = vmax.f32 %v6261, 0.0
          %v6310 = vmax.f32 %v6262, 0.0
          %v6311 = vmax.f32 %v6263, 0.0
          %v6312 = vmax.f32 %v6264, 0.0
          %v6313 = vmax.f32 %v6265, 0.0
          %v6314 = vmax.f32 %v6266, 0.0
          %v6315 = vmax.f32 %v6267, 0.0
          %v6316 = vmax.f32 %v6268, 0.0
          %v6317 = vmax.f32 %v6269, 0.0
          %v6318 = vmax.f32 %v6270, 0.0
          %v6319 = vmax.f32 %v6271, 0.0
          %v6320 = vmax.f32 %v6272, 0.0
          %v6321 = vmax.f32 %v6273, 0.0
          %v6322 = vmax.f32 %v6274, 0.0
          %v6323 = vmax.f32 %v6275, 0.0
          %v6324 = vmax.f32 %v6276, 0.0
          %v6325 = vmax.f32 %v6277, 0.0
          %v6326 = vmax.f32 %v6278, 0.0
          %v6327 = vmax.f32 %v6279, 0.0
          %v6328 = vmax.f32 %v6280, 0.0
          %v6329 = vmax.f32 %v6281, 0.0
          %v6330 = vmax.f32 %v6282, 0.0
          %v6331 = vmax.f32 %v6283, 0.0
          %v6332 = vmax.f32 %v6284, 0.0
          %v6333 = vmax.f32 %v6285, 0.0
          %v6334 = vmax.f32 %v6286, 0.0
          %v6335 = vmax.f32 %v6287, 0.0
          %v6336 = vmax.f32 %v6288, 0.0
          %v6337 = vmax.f32 %v6289, 0.0
          %v6338 = vmax.f32 %v6290, 0.0
          %v6339 = vmax.f32 %v6291, 0.0
          %v6340 = vmax.f32 %v6292, 0.0
          %v6341 = vmax.f32 %v6293, 0.0
          %v6342 = vmax.f32 %v6294, 0.0
          %v6343 = vmax.f32 %v6295, 0.0
          %v6344 = vpack.c.bf16 %v6312, %v6296
          %v6345 = vpack.c.bf16 %v6313, %v6297
          %v6346 = vpack.c.bf16 %v6314, %v6298
          %v6347 = vpack.c.bf16 %v6315, %v6299
          %v6348 = vpack.c.bf16 %v6316, %v6300
          %v6349 = vpack.c.bf16 %v6317, %v6301
          %v6350 = vpack.c.bf16 %v6318, %v6302
          %v6351 = vpack.c.bf16 %v6319, %v6303
          %v6352 = vpack.c.bf16 %v6320, %v6304
          %v6353 = vpack.c.bf16 %v6321, %v6305
          %v6354 = vpack.c.bf16 %v6322, %v6306
          %v6355 = vpack.c.bf16 %v6323, %v6307
          %v6356 = vpack.c.bf16 %v6324, %v6308
          %v6357 = vpack.c.bf16 %v6325, %v6309
          %v6358 = vpack.c.bf16 %v6326, %v6310
          %v6359 = vpack.c.bf16 %v6327, %v6311
          %v6360 = vpack.c.bf16 %v6328, %v6328
          %v6361 = vpack.c.bf16 %v6329, %v6329
          %v6362 = vpack.c.bf16 %v6330, %v6330
          %v6363 = vpack.c.bf16 %v6331, %v6331
          %v6364 = vpack.c.bf16 %v6332, %v6332
          %v6365 = vpack.c.bf16 %v6333, %v6333
          %v6366 = vpack.c.bf16 %v6334, %v6334
          %v6367 = vpack.c.bf16 %v6335, %v6335
          %v6368 = vpack.c.bf16 %v6336, %v6336
          %v6369 = vpack.c.bf16 %v6337, %v6337
          %v6370 = vpack.c.bf16 %v6338, %v6338
          %v6371 = vpack.c.bf16 %v6339, %v6339
          %v6372 = vpack.c.bf16 %v6340, %v6340
          %v6373 = vpack.c.bf16 %v6341, %v6341
          %v6374 = vpack.c.bf16 %v6342, %v6342
          %v6375 = vpack.c.bf16 %v6343, %v6343
          %v6376 = vld [vmem:[#allocation3] sm:$0xff]
          %v6377 = vld [vmem:[#allocation3 + $0x8] sm:$0xff]
          %v6378 = vld [vmem:[#allocation3 + $0x10] sm:$0xff]
          %v6379 = vld [vmem:[#allocation3 + $0x18] sm:$0xff]
          %v6380 = vld [vmem:[#allocation3 + $0x20] sm:$0xff]
          %v6381 = vld [vmem:[#allocation3 + $0x28] sm:$0xff]
          %v6382 = vld [vmem:[#allocation3 + $0x30] sm:$0xff]
          %v6383 = vld [vmem:[#allocation3 + $0x38] sm:$0xff]
          %v6384 = vld [vmem:[#allocation3 + $0x40] sm:$0xff]
          %v6385 = vld [vmem:[#allocation3 + $0x48] sm:$0xff]
          %v6386 = vld [vmem:[#allocation3 + $0x50] sm:$0xff]
          %v6387 = vld [vmem:[#allocation3 + $0x58] sm:$0xff]
          %v6388 = vld [vmem:[#allocation3 + $0x60] sm:$0xff]
          %v6389 = vld [vmem:[#allocation3 + $0x68] sm:$0xff]
          %v6390 = vld [vmem:[#allocation3 + $0x70] sm:$0xff]
          %v6391 = vld [vmem:[#allocation3 + $0x78] sm:$0xff]
          %v6392 = vld [vmem:[#allocation3 + $0x80] sm:$0xff]
          %v6393 = vld [vmem:[#allocation3 + $0x88] sm:$0xff]
          %v6394 = vld [vmem:[#allocation3 + $0x90] sm:$0xff]
          %v6395 = vld [vmem:[#allocation3 + $0x98] sm:$0xff]
          %v6396 = vld [vmem:[#allocation3 + $0xa0] sm:$0xff]
          %v6397 = vld [vmem:[#allocation3 + $0xa8] sm:$0xff]
          %v6398 = vld [vmem:[#allocation3 + $0xb0] sm:$0xff]
          %v6399 = vld [vmem:[#allocation3 + $0xb8] sm:$0xff]
          %v6400 = vld [vmem:[#allocation3 + $0xc0] sm:$0xff]
          %v6401 = vld [vmem:[#allocation3 + $0xc8] sm:$0xff]
          %v6402 = vld [vmem:[#allocation3 + $0xd0] sm:$0xff]
          %v6403 = vld [vmem:[#allocation3 + $0xd8] sm:$0xff]
          %v6404 = vld [vmem:[#allocation3 + $0xe0] sm:$0xff]
          %v6405 = vld [vmem:[#allocation3 + $0xe8] sm:$0xff]
          %v6406 = vld [vmem:[#allocation3 + $0xf0] sm:$0xff]
          %v6407 = vld [vmem:[#allocation3 + $0xf8] sm:$0xff]
          %v6408 = vld [vmem:[#allocation3 + $0x100] sm:$0xff]
          %v6409 = vld [vmem:[#allocation3 + $0x108] sm:$0xff]
          %v6410 = vld [vmem:[#allocation3 + $0x110] sm:$0xff]
          %v6411 = vld [vmem:[#allocation3 + $0x118] sm:$0xff]
          %v6412 = vld [vmem:[#allocation3 + $0x120] sm:$0xff]
          %v6413 = vld [vmem:[#allocation3 + $0x128] sm:$0xff]
          %v6414 = vld [vmem:[#allocation3 + $0x130] sm:$0xff]
          %v6415 = vld [vmem:[#allocation3 + $0x138] sm:$0xff]
          %v6416 = vld [vmem:[#allocation3 + $0x140] sm:$0xff]
          %v6417 = vld [vmem:[#allocation3 + $0x148] sm:$0xff]
          %v6418 = vld [vmem:[#allocation3 + $0x150] sm:$0xff]
          %v6419 = vld [vmem:[#allocation3 + $0x158] sm:$0xff]
          %v6420 = vld [vmem:[#allocation3 + $0x160] sm:$0xff]
          %v6421 = vld [vmem:[%s6] sm:$0xff]
          %v6422 = vld [vmem:[%s6 + $0x8] sm:$0xff]
          %v6425 = vlaneseq
          %v6426 = vshrl.u32 %v6425, 7
          %v6427 = vsub.s32 0, %v6426
          %v6428 = vrot.slane %v6421, %v6427
          %v6429 = vlaneseq
          %v6430 = vshrl.u32 %v6429, 7
          %v6431 = vsub.s32 1, %v6430
          %v6432 = vrot.slane %v6421, %v6431
          %v6433 = vlaneseq
          %v6434 = vshrl.u32 %v6433, 7
          %v6435 = vsub.s32 2, %v6434
          %v6436 = vrot.slane %v6421, %v6435
          %v6437 = vlaneseq
          %v6438 = vshrl.u32 %v6437, 7
          %v6439 = vsub.s32 3, %v6438
          %v6440 = vrot.slane %v6421, %v6439
          %v6441 = vlaneseq
          %v6442 = vshrl.u32 %v6441, 7
          %v6443 = vsub.s32 4, %v6442
          %v6444 = vrot.slane %v6421, %v6443
          %v6445 = vlaneseq
          %v6446 = vshrl.u32 %v6445, 7
          %v6447 = vsub.s32 5, %v6446
          %v6448 = vrot.slane %v6421, %v6447
          %v6449 = vlaneseq
          %v6450 = vshrl.u32 %v6449, 7
          %v6451 = vsub.s32 6, %v6450
          %v6452 = vrot.slane %v6421, %v6451
          %v6453 = vlaneseq
          %v6454 = vshrl.u32 %v6453, 7
          %v6455 = vsub.s32 7, %v6454
          %v6456 = vrot.slane %v6421, %v6455
          %v6457 = vlaneseq
          %v6458 = vshrl.u32 %v6457, 7
          %v6459 = vsub.s32 0, %v6458
          %v6460 = vrot.slane %v6422, %v6459
          %v6461 = vlaneseq
          %v6462 = vshrl.u32 %v6461, 7
          %v6463 = vsub.s32 1, %v6462
          %v6464 = vrot.slane %v6422, %v6463
          %v6465 = vlaneseq
          %v6466 = vshrl.u32 %v6465, 7
          %v6467 = vsub.s32 2, %v6466
          %v6468 = vrot.slane %v6422, %v6467
          %v6469 = vlaneseq
          %v6470 = vshrl.u32 %v6469, 7
          %v6471 = vsub.s32 3, %v6470
          %v6472 = vrot.slane %v6422, %v6471
          %v6473 = vlaneseq
          %v6474 = vshrl.u32 %v6473, 7
          %v6475 = vsub.s32 4, %v6474
          %v6476 = vrot.slane %v6422, %v6475
          %v6477 = vlaneseq
          %v6478 = vshrl.u32 %v6477, 7
          %v6479 = vsub.s32 5, %v6478
          %v6480 = vrot.slane %v6422, %v6479
          %v6481 = vlaneseq
          %v6482 = vshrl.u32 %v6481, 7
          %v6483 = vsub.s32 6, %v6482
          %v6484 = vrot.slane %v6422, %v6483
          %v6500 = vadd.f32 %v6376, %v6428
          %v6501 = vadd.f32 %v6377, %v6432
          %v6502 = vadd.f32 %v6378, %v6436
          %v6503 = vadd.f32 %v6379, %v6440
          %v6504 = vadd.f32 %v6380, %v6444
          %v6505 = vadd.f32 %v6381, %v6448
          %v6506 = vadd.f32 %v6382, %v6452
          %v6507 = vadd.f32 %v6383, %v6456
          %v6508 = vadd.f32 %v6384, %v6460
          %v6509 = vadd.f32 %v6385, %v6464
          %v6510 = vadd.f32 %v6386, %v6468
          %v6511 = vadd.f32 %v6387, %v6472
          %v6512 = vadd.f32 %v6388, %v6476
          %v6513 = vadd.f32 %v6389, %v6480
          %v6514 = vadd.f32 %v6390, %v6484
          %v6515 = vadd.f32 %v6391, %v6428
          %v6516 = vadd.f32 %v6392, %v6432
          %v6517 = vadd.f32 %v6393, %v6436
          %v6518 = vadd.f32 %v6394, %v6440
          %v6519 = vadd.f32 %v6395, %v6444
          %v6520 = vadd.f32 %v6396, %v6448
          %v6521 = vadd.f32 %v6397, %v6452
          %v6522 = vadd.f32 %v6398, %v6456
          %v6523 = vadd.f32 %v6399, %v6460
          %v6524 = vadd.f32 %v6400, %v6464
          %v6525 = vadd.f32 %v6401, %v6468
          %v6526 = vadd.f32 %v6402, %v6472
          %v6527 = vadd.f32 %v6403, %v6476
          %v6528 = vadd.f32 %v6404, %v6480
          %v6529 = vadd.f32 %v6405, %v6484
          %v6530 = vadd.f32 %v6406, %v6428
          %v6531 = vadd.f32 %v6407, %v6432
          %v6532 = vadd.f32 %v6408, %v6436
          %v6533 = vadd.f32 %v6409, %v6440
          %v6534 = vadd.f32 %v6410, %v6444
          %v6535 = vadd.f32 %v6411, %v6448
          %v6536 = vadd.f32 %v6412, %v6452
          %v6537 = vadd.f32 %v6413, %v6456
          %v6538 = vadd.f32 %v6414, %v6460
          %v6539 = vadd.f32 %v6415, %v6464
          %v6540 = vadd.f32 %v6416, %v6468
          %v6541 = vadd.f32 %v6417, %v6472
          %v6542 = vadd.f32 %v6418, %v6476
          %v6543 = vadd.f32 %v6419, %v6480
          %v6544 = vadd.f32 %v6420, %v6484
          %v6545 = vmax.f32 %v6500, 0.0
          %v6546 = vmax.f32 %v6501, 0.0
          %v6547 = vmax.f32 %v6502, 0.0
          %v6548 = vmax.f32 %v6503, 0.0
          %v6549 = vmax.f32 %v6504, 0.0
          %v6550 = vmax.f32 %v6505, 0.0
          %v6551 = vmax.f32 %v6506, 0.0
          %v6552 = vmax.f32 %v6507, 0.0
          %v6553 = vmax.f32 %v6508, 0.0
          %v6554 = vmax.f32 %v6509, 0.0
          %v6555 = vmax.f32 %v6510, 0.0
          %v6556 = vmax.f32 %v6511, 0.0
          %v6557 = vmax.f32 %v6512, 0.0
          %v6558 = vmax.f32 %v6513, 0.0
          %v6559 = vmax.f32 %v6514, 0.0
          %v6560 = vmax.f32 %v6515, 0.0
          %v6561 = vmax.f32 %v6516, 0.0
          %v6562 = vmax.f32 %v6517, 0.0
          %v6563 = vmax.f32 %v6518, 0.0
          %v6564 = vmax.f32 %v6519, 0.0
          %v6565 = vmax.f32 %v6520, 0.0
          %v6566 = vmax.f32 %v6521, 0.0
          %v6567 = vmax.f32 %v6522, 0.0
          %v6568 = vmax.f32 %v6523, 0.0
          %v6569 = vmax.f32 %v6524, 0.0
          %v6570 = vmax.f32 %v6525, 0.0
          %v6571 = vmax.f32 %v6526, 0.0
          %v6572 = vmax.f32 %v6527, 0.0
          %v6573 = vmax.f32 %v6528, 0.0
          %v6574 = vmax.f32 %v6529, 0.0
          %v6575 = vmax.f32 %v6530, 0.0
          %v6576 = vmax.f32 %v6531, 0.0
          %v6577 = vmax.f32 %v6532, 0.0
          %v6578 = vmax.f32 %v6533, 0.0
          %v6579 = vmax.f32 %v6534, 0.0
          %v6580 = vmax.f32 %v6535, 0.0
          %v6581 = vmax.f32 %v6536, 0.0
          %v6582 = vmax.f32 %v6537, 0.0
          %v6583 = vmax.f32 %v6538, 0.0
          %v6584 = vmax.f32 %v6539, 0.0
          %v6585 = vmax.f32 %v6540, 0.0
          %v6586 = vmax.f32 %v6541, 0.0
          %v6587 = vmax.f32 %v6542, 0.0
          %v6588 = vmax.f32 %v6543, 0.0
          %v6589 = vmax.f32 %v6544, 0.0
          %v6590 = vpack.c.bf16 %v6560, %v6545
          %v6591 = vpack.c.bf16 %v6561, %v6546
          %v6592 = vpack.c.bf16 %v6562, %v6547
          %v6593 = vpack.c.bf16 %v6563, %v6548
          %v6594 = vpack.c.bf16 %v6564, %v6549
          %v6595 = vpack.c.bf16 %v6565, %v6550
          %v6596 = vpack.c.bf16 %v6566, %v6551
          %v6597 = vpack.c.bf16 %v6567, %v6552
          %v6598 = vpack.c.bf16 %v6568, %v6553
          %v6599 = vpack.c.bf16 %v6569, %v6554
          %v6600 = vpack.c.bf16 %v6570, %v6555
          %v6601 = vpack.c.bf16 %v6571, %v6556
          %v6602 = vpack.c.bf16 %v6572, %v6557
          %v6603 = vpack.c.bf16 %v6573, %v6558
          %v6604 = vpack.c.bf16 %v6574, %v6559
          %v6605 = vpack.c.bf16 %v6575, %v6575
          %v6606 = vpack.c.bf16 %v6576, %v6576
          %v6607 = vpack.c.bf16 %v6577, %v6577
          %v6608 = vpack.c.bf16 %v6578, %v6578
          %v6609 = vpack.c.bf16 %v6579, %v6579
          %v6610 = vpack.c.bf16 %v6580, %v6580
          %v6611 = vpack.c.bf16 %v6581, %v6581
          %v6612 = vpack.c.bf16 %v6582, %v6582
          %v6613 = vpack.c.bf16 %v6583, %v6583
          %v6614 = vpack.c.bf16 %v6584, %v6584
          %v6615 = vpack.c.bf16 %v6585, %v6585
          %v6616 = vpack.c.bf16 %v6586, %v6586
          %v6617 = vpack.c.bf16 %v6587, %v6587
          %v6618 = vpack.c.bf16 %v6588, %v6588
          %v6619 = vpack.c.bf16 %v6589, %v6589
          %v6620 = vld [vmem:[#allocation4] sm:$0xff]
          %v6621 = vld [vmem:[#allocation4 + $0x8] sm:$0xff]
          %v6622 = vld [vmem:[#allocation4 + $0x10] sm:$0xff]
          %v6623 = vld [vmem:[#allocation4 + $0x18] sm:$0xff]
          %v6624 = vld [vmem:[#allocation4 + $0x20] sm:$0xff]
          %v6625 = vld [vmem:[#allocation4 + $0x28] sm:$0xff]
          %v6626 = vld [vmem:[#allocation4 + $0x30] sm:$0xff]
          %v6627 = vld [vmem:[#allocation4 + $0x38] sm:$0xff]
          %v6628 = vld [vmem:[#allocation4 + $0x40] sm:$0xff]
          %v6629 = vld [vmem:[#allocation4 + $0x48] sm:$0xff]
          %v6630 = vld [vmem:[#allocation4 + $0x50] sm:$0xff]
          %v6631 = vld [vmem:[#allocation4 + $0x58] sm:$0xff]
          %v6632 = vld [vmem:[#allocation4 + $0x60] sm:$0xff]
          %v6633 = vld [vmem:[#allocation4 + $0x68] sm:$0xff]
          %v6634 = vld [vmem:[#allocation4 + $0x70] sm:$0xff]
          %v6635 = vld [vmem:[#allocation4 + $0x78] sm:$0xff]
          %v6636 = vld [vmem:[#allocation4 + $0x80] sm:$0xff]
          %v6637 = vld [vmem:[#allocation4 + $0x88] sm:$0xff]
          %v6638 = vld [vmem:[#allocation4 + $0x90] sm:$0xff]
          %v6639 = vld [vmem:[#allocation4 + $0x98] sm:$0xff]
          %v6640 = vld [vmem:[#allocation4 + $0xa0] sm:$0xff]
          %v6641 = vld [vmem:[#allocation4 + $0xa8] sm:$0xff]
          %v6642 = vld [vmem:[#allocation4 + $0xb0] sm:$0xff]
          %v6643 = vld [vmem:[#allocation4 + $0xb8] sm:$0xff]
          %v6644 = vld [vmem:[%s8] sm:$0xff]
          %v6646 = vlaneseq
          %v6647 = vshrl.u32 %v6646, 7
          %v6648 = vsub.s32 0, %v6647
          %v6649 = vrot.slane %v6644, %v6648
          %v6650 = vlaneseq
          %v6651 = vshrl.u32 %v6650, 7
          %v6652 = vsub.s32 1, %v6651
          %v6653 = vrot.slane %v6644, %v6652
          %v6654 = vlaneseq
          %v6655 = vshrl.u32 %v6654, 7
          %v6656 = vsub.s32 2, %v6655
          %v6657 = vrot.slane %v6644, %v6656
          %v6658 = vlaneseq
          %v6659 = vshrl.u32 %v6658, 7
          %v6660 = vsub.s32 3, %v6659
          %v6661 = vrot.slane %v6644, %v6660
          %v6662 = vlaneseq
          %v6663 = vshrl.u32 %v6662, 7
          %v6664 = vsub.s32 4, %v6663
          %v6665 = vrot.slane %v6644, %v6664
          %v6666 = vlaneseq
          %v6667 = vshrl.u32 %v6666, 7
          %v6668 = vsub.s32 5, %v6667
          %v6669 = vrot.slane %v6644, %v6668
          %v6670 = vlaneseq
          %v6671 = vshrl.u32 %v6670, 7
          %v6672 = vsub.s32 6, %v6671
          %v6673 = vrot.slane %v6644, %v6672
          %v6674 = vlaneseq
          %v6675 = vshrl.u32 %v6674, 7
          %v6676 = vsub.s32 7, %v6675
          %v6677 = vrot.slane %v6644, %v6676
          %v6686 = vadd.f32 %v6620, %v6649
          %v6687 = vadd.f32 %v6621, %v6653
          %v6688 = vadd.f32 %v6622, %v6657
          %v6689 = vadd.f32 %v6623, %v6661
          %v6690 = vadd.f32 %v6624, %v6665
          %v6691 = vadd.f32 %v6625, %v6669
          %v6692 = vadd.f32 %v6626, %v6673
          %v6693 = vadd.f32 %v6627, %v6677
          %v6694 = vadd.f32 %v6628, %v6649
          %v6695 = vadd.f32 %v6629, %v6653
          %v6696 = vadd.f32 %v6630, %v6657
          %v6697 = vadd.f32 %v6631, %v6661
          %v6698 = vadd.f32 %v6632, %v6665
          %v6699 = vadd.f32 %v6633, %v6669
          %v6700 = vadd.f32 %v6634, %v6673
          %v6701 = vadd.f32 %v6635, %v6677
          %v6702 = vadd.f32 %v6636, %v6649
          %v6703 = vadd.f32 %v6637, %v6653
          %v6704 = vadd.f32 %v6638, %v6657
          %v6705 = vadd.f32 %v6639, %v6661
          %v6706 = vadd.f32 %v6640, %v6665
          %v6707 = vadd.f32 %v6641, %v6669
          %v6708 = vadd.f32 %v6642, %v6673
          %v6709 = vadd.f32 %v6643, %v6677
          %v6710 = vmax.f32 %v6686, 0.0
          %v6711 = vmax.f32 %v6687, 0.0
          %v6712 = vmax.f32 %v6688, 0.0
          %v6713 = vmax.f32 %v6689, 0.0
          %v6714 = vmax.f32 %v6690, 0.0
          %v6715 = vmax.f32 %v6691, 0.0
          %v6716 = vmax.f32 %v6692, 0.0
          %v6717 = vmax.f32 %v6693, 0.0
          %v6718 = vmax.f32 %v6694, 0.0
          %v6719 = vmax.f32 %v6695, 0.0
          %v6720 = vmax.f32 %v6696, 0.0
          %v6721 = vmax.f32 %v6697, 0.0
          %v6722 = vmax.f32 %v6698, 0.0
          %v6723 = vmax.f32 %v6699, 0.0
          %v6724 = vmax.f32 %v6700, 0.0
          %v6725 = vmax.f32 %v6701, 0.0
          %v6726 = vmax.f32 %v6702, 0.0
          %v6727 = vmax.f32 %v6703, 0.0
          %v6728 = vmax.f32 %v6704, 0.0
          %v6729 = vmax.f32 %v6705, 0.0
          %v6730 = vmax.f32 %v6706, 0.0
          %v6731 = vmax.f32 %v6707, 0.0
          %v6732 = vmax.f32 %v6708, 0.0
          %v6733 = vmax.f32 %v6709, 0.0
          %v6734 = vpack.c.bf16 %v6718, %v6710
          %v6735 = vpack.c.bf16 %v6719, %v6711
          %v6736 = vpack.c.bf16 %v6720, %v6712
          %v6737 = vpack.c.bf16 %v6721, %v6713
          %v6738 = vpack.c.bf16 %v6722, %v6714
          %v6739 = vpack.c.bf16 %v6723, %v6715
          %v6740 = vpack.c.bf16 %v6724, %v6716
          %v6741 = vpack.c.bf16 %v6725, %v6717
          %v6742 = vpack.c.bf16 %v6726, %v6726
          %v6743 = vpack.c.bf16 %v6727, %v6727
          %v6744 = vpack.c.bf16 %v6728, %v6728
          %v6745 = vpack.c.bf16 %v6729, %v6729
          %v6746 = vpack.c.bf16 %v6730, %v6730
          %v6747 = vpack.c.bf16 %v6731, %v6731
          %v6748 = vpack.c.bf16 %v6732, %v6732
          %v6749 = vpack.c.bf16 %v6733, %v6733
          %v6750 = vld [vmem:[%s9] sm:$0xf]
          %v6751 = vld [vmem:[%s9 + $0x4] sm:$0xf]
          %v6752 = vld [vmem:[%s9 + $0x8] sm:$0xf]
          %v6753 = vld [vmem:[%s9 + $0xc] sm:$0xf]
          %v6754 = vld [vmem:[%s9 + $0x10] sm:$0xf]
          %v6755 = vld [vmem:[%s9 + $0x14] sm:$0xf]
          %v6756 = vld [vmem:[%s9 + $0x18] sm:$0xf]
          %v6757 = vld [vmem:[%s9 + $0x1c] sm:$0xf]
          %v6758 = vld [vmem:[%s9 + $0x20] sm:$0xf]
          %v6759 = vld [vmem:[%s9 + $0x24] sm:$0xf]
          %v6760 = vld [vmem:[%s9 + $0x28] sm:$0xf]
          %v6761 = vld [vmem:[%s9 + $0x2c] sm:$0xf]
          %v6762 = vld [vmem:[%s9 + $0x30] sm:$0xf]
          %v6763 = vld [vmem:[%s9 + $0x34] sm:$0xf]
          %v6764 = vld [vmem:[%s9 + $0x38] sm:$0xf]
          %v6765 = vld [vmem:[%s9 + $0x3c] sm:$0xf]
          %v6766 = vld [vmem:[%s9 + $0x40] sm:$0xf]
          %v6767 = vld [vmem:[%s9 + $0x44] sm:$0xf]
          %v6768 = vld [vmem:[%s9 + $0x48] sm:$0xf]
          %v6769 = vld [vmem:[%s9 + $0x4c] sm:$0xf]
          %v6770 = vld [vmem:[%s9 + $0x50] sm:$0xf]
          %v6771 = vld [vmem:[%s9 + $0x54] sm:$0xf]
          %v6772 = vld [vmem:[%s9 + $0x58] sm:$0xf]
          %v6773 = vld [vmem:[%s9 + $0x5c] sm:$0xf]
          %v6774 = vld [vmem:[%s9 + $0x60] sm:$0xf]
          %v6775 = vld [vmem:[%s9 + $0x64] sm:$0xf]
          %v6776 = vld [vmem:[%s9 + $0x68] sm:$0xf]
          %v6777 = vld [vmem:[%s9 + $0x6c] sm:$0xf]
          %v6778 = vld [vmem:[%s9 + $0x70] sm:$0xf]
          %v6779 = vld [vmem:[%s9 + $0x74] sm:$0xf]
          %v6780 = vld [vmem:[%s9 + $0x78] sm:$0xf]
          %v6781 = vld [vmem:[%s9 + $0x7c] sm:$0xf]
          %v6782 = vld [vmem:[%s9 + $0x80] sm:$0xf]
          %v6783 = vld [vmem:[%s9 + $0x84] sm:$0xf]
          %v6784 = vld [vmem:[%s9 + $0x88] sm:$0xf]
          %v6785 = vld [vmem:[%s9 + $0x8c] sm:$0xf]
          %v6786 = vld [vmem:[%s9 + $0x90] sm:$0xf]
          %v6787 = vld [vmem:[%s9 + $0x94] sm:$0xf]
          %v6788 = vld [vmem:[%s9 + $0x98] sm:$0xf]
          %v6789 = vld [vmem:[%s9 + $0x9c] sm:$0xf]
          %v6790 = vld [vmem:[%s9 + $0xa0] sm:$0xf]
          %v6791 = vld [vmem:[%s9 + $0xa4] sm:$0xf]
          %v6792 = vld [vmem:[%s9 + $0xa8] sm:$0xf]
          %v6793 = vld [vmem:[%s9 + $0xac] sm:$0xf]
          %v6794 = vld [vmem:[%s9 + $0xb0] sm:$0xf]
          %v6795 = vld [vmem:[%s9 + $0xb4] sm:$0xf]
          %v6796 = vld [vmem:[%s9 + $0xb8] sm:$0xf]
          %v6797 = vld [vmem:[%s9 + $0xbc] sm:$0xf]
          %v6798 = vld [vmem:[%s9 + $0xc0] sm:$0xf]
          %v6799 = vld [vmem:[%s9 + $0xc4] sm:$0xf]
          %v6800 = vld [vmem:[%s9 + $0xc8] sm:$0xf]
          %v6801 = vld [vmem:[%s9 + $0xcc] sm:$0xf]
          %v6802 = vld [vmem:[%s9 + $0xd0] sm:$0xf]
          %v6803 = vld [vmem:[%s9 + $0xd4] sm:$0xf]
          %v6804 = vld [vmem:[%s9 + $0xd8] sm:$0xf]
          %v6805 = vld [vmem:[%s9 + $0xdc] sm:$0xf]
          %v6806 = vld [vmem:[%s9 + $0xe0] sm:$0xf]
          %v6807 = vld [vmem:[%s9 + $0xe4] sm:$0xf]
          %v6808 = vld [vmem:[%s9 + $0xe8] sm:$0xf]
          %v6809 = vld [vmem:[%s9 + $0xec] sm:$0xf]
          %v6810 = vld [vmem:[%s9 + $0xf0] sm:$0xf]
          %v6811 = vld [vmem:[%s9 + $0xf4] sm:$0xf]
          %v6812 = vld [vmem:[%s9 + $0xf8] sm:$0xf]
          %v6813 = vld [vmem:[%s9 + $0xfc] sm:$0xf]
          %v6814 = vld [vmem:[%s9 + $0x100] sm:$0xf]
          %v6815 = vld [vmem:[%s9 + $0x104] sm:$0xf]
          %v6816 = vld [vmem:[%s9 + $0x108] sm:$0xf]
          %v6817 = vld [vmem:[%s9 + $0x10c] sm:$0xf]
          %v6818 = vld [vmem:[%s9 + $0x110] sm:$0xf]
          %v6819 = vld [vmem:[%s9 + $0x114] sm:$0xf]
          %v6820 = vld [vmem:[%s9 + $0x118] sm:$0xf]
          %v6821 = vld [vmem:[%s9 + $0x11c] sm:$0xf]
          %v6822 = vld [vmem:[%s9 + $0x120] sm:$0xf]
          %v6823 = vld [vmem:[%s9 + $0x124] sm:$0xf]
          %v6824 = vld [vmem:[%s9 + $0x128] sm:$0xf]
          %v6825 = vld [vmem:[%s9 + $0x12c] sm:$0xf]
          %v6826 = vld [vmem:[%s9 + $0x130] sm:$0xf]
          %v6827 = vld [vmem:[%s9 + $0x134] sm:$0xf]
          %v6828 = vld [vmem:[%s9 + $0x138] sm:$0xf]
          %v6829 = vld [vmem:[%s9 + $0x13c] sm:$0xf]
          %v6830 = vld [vmem:[%s9 + $0x140] sm:$0xf]
          %v6831 = vld [vmem:[%s9 + $0x144] sm:$0xf]
          %v6832 = vld [vmem:[%s9 + $0x148] sm:$0xf]
          %v6833 = vld [vmem:[%s9 + $0x14c] sm:$0xf]
          %v6834 = vld [vmem:[%s9 + $0x150] sm:$0xf]
          %v6835 = vld [vmem:[%s9 + $0x154] sm:$0xf]
          %v6836 = vld [vmem:[%s9 + $0x158] sm:$0xf]
          %v6837 = vld [vmem:[%s9 + $0x15c] sm:$0xf]
          %v6838 = vld [vmem:[%s9 + $0x160] sm:$0xf]
          %v6839 = vld [vmem:[%s9 + $0x164] sm:$0xf]
          %v6840 = vld [vmem:[%s9 + $0x168] sm:$0xf]
          %v6841 = vld [vmem:[%s9 + $0x16c] sm:$0xf]
          %v6842 = vld [vmem:[%s9 + $0x170] sm:$0xf]
          %v6843 = vld [vmem:[%s9 + $0x174] sm:$0xf]
          %v6844 = vld [vmem:[%s9 + $0x178] sm:$0xf]
          %v6845 = vld [vmem:[%s9 + $0x17c] sm:$0xf]
          %v6846 = vld [vmem:[%s9 + $0x180] sm:$0xf]
          %v6847 = vld [vmem:[%s9 + $0x184] sm:$0xf]
          %v6848 = vld [vmem:[%s9 + $0x188] sm:$0xf]
          %v6849 = vld [vmem:[%s9 + $0x18c] sm:$0xf]
          %v6850 = vld [vmem:[%s9 + $0x190] sm:$0xf]
          %v6851 = vld [vmem:[%s9 + $0x194] sm:$0xf]
          %v6852 = vld [vmem:[%s9 + $0x198] sm:$0xf]
          %v6853 = vld [vmem:[%s9 + $0x19c] sm:$0xf]
          %v6854 = vld [vmem:[%s9 + $0x1a0] sm:$0xf]
          %v6855 = vld [vmem:[%s9 + $0x1a4] sm:$0xf]
          %v6856 = vld [vmem:[%s9 + $0x1a8] sm:$0xf]
          %v6857 = vld [vmem:[%s9 + $0x1ac] sm:$0xf]
          %v6858 = vld [vmem:[%s9 + $0x1b0] sm:$0xf]
          %v6859 = vld [vmem:[%s9 + $0x1b4] sm:$0xf]
          %v6860 = vld [vmem:[%s9 + $0x1b8] sm:$0xf]
          %v6861 = vld [vmem:[%s9 + $0x1bc] sm:$0xf]
          %v6862 = vld [vmem:[%s9 + $0x1c0] sm:$0xf]
          %v6863 = vld [vmem:[%s9 + $0x1c4] sm:$0xf]
          %v6864 = vld [vmem:[%s9 + $0x1c8] sm:$0xf]
          %v6865 = vld [vmem:[%s9 + $0x1cc] sm:$0xf]
          %v6866 = vld [vmem:[%s9 + $0x1d0] sm:$0xf]
          %v6867 = vld [vmem:[%s9 + $0x1d4] sm:$0xf]
          %v6868 = vld [vmem:[%s9 + $0x1d8] sm:$0xf]
          %v6869 = vld [vmem:[%s9 + $0x1dc] sm:$0xf]
          %v6870 = vld [vmem:[%s9 + $0x1e0] sm:$0xf]
          %v6871 = vld [vmem:[%s9 + $0x1e4] sm:$0xf]
          %v6872 = vld [vmem:[%s9 + $0x1e8] sm:$0xf]
          %v6873 = vld [vmem:[%s9 + $0x1ec] sm:$0xf]
          %v6874 = vld [vmem:[%s9 + $0x1f0] sm:$0xf]
          %v6875 = vld [vmem:[%s9 + $0x1f4] sm:$0xf]
          %v6876 = vld [vmem:[%s9 + $0x1f8] sm:$0xf]
          %v6877 = vld [vmem:[%s9 + $0x1fc] sm:$0xf]
          %v6878 = vld [vmem:[%s9 + $0x200] sm:$0xf]
          %v6879 = vld [vmem:[%s9 + $0x204] sm:$0xf]
          %v6880 = vld [vmem:[%s9 + $0x208] sm:$0xf]
          %v6881 = vld [vmem:[%s9 + $0x20c] sm:$0xf]
          %v6882 = vld [vmem:[%s9 + $0x210] sm:$0xf]
          %v6883 = vld [vmem:[%s9 + $0x214] sm:$0xf]
          %v6884 = vld [vmem:[%s9 + $0x218] sm:$0xf]
          %v6885 = vld [vmem:[%s9 + $0x21c] sm:$0xf]
          %v6886 = vld [vmem:[%s9 + $0x220] sm:$0xf]
          %v6887 = vld [vmem:[%s9 + $0x224] sm:$0xf]
          %v6888 = vld [vmem:[%s9 + $0x228] sm:$0xf]
          %v6889 = vld [vmem:[%s9 + $0x22c] sm:$0xf]
          %v6890 = vld [vmem:[%s9 + $0x230] sm:$0xf]
          %v6891 = vld [vmem:[%s9 + $0x234] sm:$0xf]
          %v6892 = vld [vmem:[%s9 + $0x238] sm:$0xf]
          %v6893 = vld [vmem:[%s9 + $0x23c] sm:$0xf]
          %v6894 = vld [vmem:[%s9 + $0x240] sm:$0xf]
          %v6895 = vld [vmem:[%s9 + $0x244] sm:$0xf]
          %v6896 = vld [vmem:[%s9 + $0x248] sm:$0xf]
          %v6897 = vld [vmem:[%s9 + $0x24c] sm:$0xf]
          %v6898 = vld [vmem:[%s9 + $0x250] sm:$0xf]
          %v6899 = vld [vmem:[%s9 + $0x254] sm:$0xf]
          %v6900 = vld [vmem:[%s9 + $0x258] sm:$0xf]
          %v6901 = vld [vmem:[%s9 + $0x25c] sm:$0xf]
          %v6902 = vld [vmem:[%s9 + $0x260] sm:$0xf]
          %v6903 = vld [vmem:[%s9 + $0x264] sm:$0xf]
          %v6904 = vld [vmem:[%s9 + $0x268] sm:$0xf]
          %v6905 = vld [vmem:[%s9 + $0x26c] sm:$0xf]
          %v6906 = vld [vmem:[%s9 + $0x270] sm:$0xf]
          %v6907 = vld [vmem:[%s9 + $0x274] sm:$0xf]
          %v6908 = vld [vmem:[%s9 + $0x278] sm:$0xf]
          %v6909 = vld [vmem:[%s9 + $0x27c] sm:$0xf]
          %v6910 = vld [vmem:[%s9 + $0x280] sm:$0xf]
          %v6911 = vld [vmem:[%s9 + $0x284] sm:$0xf]
          %v6912 = vld [vmem:[%s9 + $0x288] sm:$0xf]
          %v6913 = vld [vmem:[%s9 + $0x28c] sm:$0xf]
          %v6914 = vld [vmem:[%s9 + $0x290] sm:$0xf]
          %v6915 = vld [vmem:[%s9 + $0x294] sm:$0xf]
          %v6916 = vld [vmem:[%s9 + $0x298] sm:$0xf]
          %v6917 = vld [vmem:[%s9 + $0x29c] sm:$0xf]
          %v6918 = vld [vmem:[%s9 + $0x2a0] sm:$0xf]
          %v6919 = vld [vmem:[%s9 + $0x2a4] sm:$0xf]
          %v6920 = vld [vmem:[%s9 + $0x2a8] sm:$0xf]
          %v6921 = vld [vmem:[%s9 + $0x2ac] sm:$0xf]
          %v6922 = vld [vmem:[%s9 + $0x2b0] sm:$0xf]
          %v6923 = vld [vmem:[%s9 + $0x2b4] sm:$0xf]
          %v6924 = vld [vmem:[%s9 + $0x2b8] sm:$0xf]
          %v6925 = vld [vmem:[%s9 + $0x2bc] sm:$0xf]
          %v6926 = vld [vmem:[%s9 + $0x2c0] sm:$0xf]
          %v6927 = vld [vmem:[%s9 + $0x2c4] sm:$0xf]
          %v6928 = vld [vmem:[%s9 + $0x2c8] sm:$0xf]
          %v6929 = vld [vmem:[%s9 + $0x2cc] sm:$0xf]
          %v6930 = vld [vmem:[%s9 + $0x2d0] sm:$0xf]
          %v6931 = vld [vmem:[%s9 + $0x2d4] sm:$0xf]
          %v6932 = vld [vmem:[%s9 + $0x2d8] sm:$0xf]
          %v6933 = vld [vmem:[%s9 + $0x2dc] sm:$0xf]
          %v6934 = vld [vmem:[%s9 + $0x2e0] sm:$0xf]
          %v6935 = vld [vmem:[%s9 + $0x2e4] sm:$0xf]
          %v6936 = vld [vmem:[%s9 + $0x2e8] sm:$0xf]
          %v6937 = vld [vmem:[%s9 + $0x2ec] sm:$0xf]
          %v6938 = vld [vmem:[%s9 + $0x2f0] sm:$0xf]
          %v6939 = vld [vmem:[%s9 + $0x2f4] sm:$0xf]
          %v6940 = vld [vmem:[%s9 + $0x2f8] sm:$0xf]
          %v6941 = vld [vmem:[%s9 + $0x2fc] sm:$0xf]
          %v6942 = vld [vmem:[%s9 + $0x300] sm:$0xf]
          %v6943 = vld [vmem:[%s9 + $0x304] sm:$0xf]
          %v6944 = vld [vmem:[%s9 + $0x308] sm:$0xf]
          %v6945 = vld [vmem:[%s9 + $0x30c] sm:$0xf]
          %v6946 = vld [vmem:[%s9 + $0x310] sm:$0xf]
          %v6947 = vld [vmem:[%s9 + $0x314] sm:$0xf]
          %v6948 = vld [vmem:[%s9 + $0x318] sm:$0xf]
          %v6949 = vld [vmem:[%s9 + $0x31c] sm:$0xf]
          %v6950 = vld [vmem:[%s9 + $0x320] sm:$0xf]
          %v6951 = vld [vmem:[%s9 + $0x324] sm:$0xf]
          %v6952 = vld [vmem:[%s9 + $0x328] sm:$0xf]
          %v6953 = vld [vmem:[%s9 + $0x32c] sm:$0xf]
          %v6954 = vld [vmem:[%s9 + $0x330] sm:$0xf]
          %v6955 = vld [vmem:[%s9 + $0x334] sm:$0xf]
          %v6956 = vld [vmem:[%s9 + $0x338] sm:$0xf]
          %v6957 = vld [vmem:[%s9 + $0x33c] sm:$0xf]
          %v6958 = vld [vmem:[%s9 + $0x340] sm:$0xf]
          %v6959 = vld [vmem:[%s9 + $0x344] sm:$0xf]
          %v6960 = vld [vmem:[%s9 + $0x348] sm:$0xf]
          %v6961 = vld [vmem:[%s9 + $0x34c] sm:$0xf]
          %v6962 = vld [vmem:[%s9 + $0x350] sm:$0xf]
          %v6963 = vld [vmem:[%s9 + $0x354] sm:$0xf]
          %v6964 = vld [vmem:[%s9 + $0x358] sm:$0xf]
          %v6965 = vld [vmem:[%s9 + $0x35c] sm:$0xf]
          %v6966 = vld [vmem:[%s9 + $0x360] sm:$0xf]
          %v6967 = vld [vmem:[%s9 + $0x364] sm:$0xf]
          %v6968 = vld [vmem:[%s9 + $0x368] sm:$0xf]
          %v6969 = vld [vmem:[%s9 + $0x36c] sm:$0xf]
          %v6970 = vld [vmem:[%s9 + $0x370] sm:$0xf]
          %v6971 = vld [vmem:[%s9 + $0x374] sm:$0xf]
          %v6972 = vld [vmem:[%s9 + $0x378] sm:$0xf]
          %v6973 = vld [vmem:[%s9 + $0x37c] sm:$0xf]
          %v6974 = vld [vmem:[%s9 + $0x380] sm:$0xf]
          %v6975 = vld [vmem:[%s9 + $0x384] sm:$0xf]
          %v6976 = vld [vmem:[%s9 + $0x388] sm:$0xf]
          %v6977 = vld [vmem:[%s9 + $0x38c] sm:$0xf]
          %v6978 = vld [vmem:[%s9 + $0x390] sm:$0xf]
          %v6979 = vld [vmem:[%s9 + $0x394] sm:$0xf]
          %v6980 = vld [vmem:[%s9 + $0x398] sm:$0xf]
          %v6981 = vld [vmem:[%s9 + $0x39c] sm:$0xf]
          %v6982 = vld [vmem:[%s9 + $0x3a0] sm:$0xf]
          %v6983 = vld [vmem:[%s9 + $0x3a4] sm:$0xf]
          %v6984 = vld [vmem:[%s9 + $0x3a8] sm:$0xf]
          %v6985 = vld [vmem:[%s9 + $0x3ac] sm:$0xf]
          %v6986 = vld [vmem:[%s9 + $0x3b0] sm:$0xf]
          %v6987 = vld [vmem:[%s9 + $0x3b4] sm:$0xf]
          %v6988 = vld [vmem:[%s9 + $0x3b8] sm:$0xf]
          %v6989 = vld [vmem:[%s9 + $0x3bc] sm:$0xf]
          %v6990 = vld [vmem:[%s9 + $0x3c0] sm:$0xf]
          %v6991 = vld [vmem:[%s9 + $0x3c4] sm:$0xf]
          %v6992 = vld [vmem:[%s9 + $0x3c8] sm:$0xf]
          %v6993 = vld [vmem:[%s9 + $0x3cc] sm:$0xf]
          %v6994 = vld [vmem:[%s9 + $0x3d0] sm:$0xf]
          %v6995 = vld [vmem:[%s9 + $0x3d4] sm:$0xf]
          %v6996 = vld [vmem:[%s9 + $0x3d8] sm:$0xf]
          %v6997 = vld [vmem:[%s9 + $0x3dc] sm:$0xf]
          %v6998 = vld [vmem:[%s9 + $0x3e0] sm:$0xf]
          %v6999 = vld [vmem:[%s9 + $0x3e4] sm:$0xf]
          %v7000 = vld [vmem:[%s9 + $0x3e8] sm:$0xf]
          %v7001 = vld [vmem:[%s9 + $0x3ec] sm:$0xf]
          %v7002 = vld [vmem:[%s9 + $0x3f0] sm:$0xf]
          %v7003 = vld [vmem:[%s9 + $0x3f4] sm:$0xf]
          %v7004 = vld [vmem:[%s9 + $0x3f8] sm:$0xf]
          %v7005 = vld [vmem:[%s9 + $0x3fc] sm:$0xf]
          %v7006 = vld [vmem:[%s10] sm:$0x1]
          %v7008 = vlaneseq
          %v7009 = vshrl.u32 %v7008, 7
          %v7010 = vsub.s32 0, %v7009
          %v7011 = vrot.slane %v7006, %v7010
          %v7269 = vunpack.c.l.b16 %v6750
          %v7270 = vunpack.c.l.b16 %v6751
          %v7271 = vunpack.c.l.b16 %v6752
          %v7272 = vunpack.c.l.b16 %v6753
          %v7273 = vunpack.c.l.b16 %v6754
          %v7274 = vunpack.c.l.b16 %v6755
          %v7275 = vunpack.c.l.b16 %v6756
          %v7276 = vunpack.c.l.b16 %v6757
          %v7277 = vunpack.c.l.b16 %v6758
          %v7278 = vunpack.c.l.b16 %v6759
          %v7279 = vunpack.c.l.b16 %v6760
          %v7280 = vunpack.c.l.b16 %v6761
          %v7281 = vunpack.c.l.b16 %v6762
          %v7282 = vunpack.c.l.b16 %v6763
          %v7283 = vunpack.c.l.b16 %v6764
          %v7284 = vunpack.c.l.b16 %v6765
          %v7285 = vunpack.c.l.b16 %v6766
          %v7286 = vunpack.c.l.b16 %v6767
          %v7287 = vunpack.c.l.b16 %v6768
          %v7288 = vunpack.c.l.b16 %v6769
          %v7289 = vunpack.c.l.b16 %v6770
          %v7290 = vunpack.c.l.b16 %v6771
          %v7291 = vunpack.c.l.b16 %v6772
          %v7292 = vunpack.c.l.b16 %v6773
          %v7293 = vunpack.c.l.b16 %v6774
          %v7294 = vunpack.c.l.b16 %v6775
          %v7295 = vunpack.c.l.b16 %v6776
          %v7296 = vunpack.c.l.b16 %v6777
          %v7297 = vunpack.c.l.b16 %v6778
          %v7298 = vunpack.c.l.b16 %v6779
          %v7299 = vunpack.c.l.b16 %v6780
          %v7300 = vunpack.c.l.b16 %v6781
          %v7301 = vunpack.c.l.b16 %v6782
          %v7302 = vunpack.c.l.b16 %v6783
          %v7303 = vunpack.c.l.b16 %v6784
          %v7304 = vunpack.c.l.b16 %v6785
          %v7305 = vunpack.c.l.b16 %v6786
          %v7306 = vunpack.c.l.b16 %v6787
          %v7307 = vunpack.c.l.b16 %v6788
          %v7308 = vunpack.c.l.b16 %v6789
          %v7309 = vunpack.c.l.b16 %v6790
          %v7310 = vunpack.c.l.b16 %v6791
          %v7311 = vunpack.c.l.b16 %v6792
          %v7312 = vunpack.c.l.b16 %v6793
          %v7313 = vunpack.c.l.b16 %v6794
          %v7314 = vunpack.c.l.b16 %v6795
          %v7315 = vunpack.c.l.b16 %v6796
          %v7316 = vunpack.c.l.b16 %v6797
          %v7317 = vunpack.c.l.b16 %v6798
          %v7318 = vunpack.c.l.b16 %v6799
          %v7319 = vunpack.c.l.b16 %v6800
          %v7320 = vunpack.c.l.b16 %v6801
          %v7321 = vunpack.c.l.b16 %v6802
          %v7322 = vunpack.c.l.b16 %v6803
          %v7323 = vunpack.c.l.b16 %v6804
          %v7324 = vunpack.c.l.b16 %v6805
          %v7325 = vunpack.c.l.b16 %v6806
          %v7326 = vunpack.c.l.b16 %v6807
          %v7327 = vunpack.c.l.b16 %v6808
          %v7328 = vunpack.c.l.b16 %v6809
          %v7329 = vunpack.c.l.b16 %v6810
          %v7330 = vunpack.c.l.b16 %v6811
          %v7331 = vunpack.c.l.b16 %v6812
          %v7332 = vunpack.c.l.b16 %v6813
          %v7333 = vunpack.c.l.b16 %v6814
          %v7334 = vunpack.c.l.b16 %v6815
          %v7335 = vunpack.c.l.b16 %v6816
          %v7336 = vunpack.c.l.b16 %v6817
          %v7337 = vunpack.c.l.b16 %v6818
          %v7338 = vunpack.c.l.b16 %v6819
          %v7339 = vunpack.c.l.b16 %v6820
          %v7340 = vunpack.c.l.b16 %v6821
          %v7341 = vunpack.c.l.b16 %v6822
          %v7342 = vunpack.c.l.b16 %v6823
          %v7343 = vunpack.c.l.b16 %v6824
          %v7344 = vunpack.c.l.b16 %v6825
          %v7345 = vunpack.c.l.b16 %v6826
          %v7346 = vunpack.c.l.b16 %v6827
          %v7347 = vunpack.c.l.b16 %v6828
          %v7348 = vunpack.c.l.b16 %v6829
          %v7349 = vunpack.c.l.b16 %v6830
          %v7350 = vunpack.c.l.b16 %v6831
          %v7351 = vunpack.c.l.b16 %v6832
          %v7352 = vunpack.c.l.b16 %v6833
          %v7353 = vunpack.c.l.b16 %v6834
          %v7354 = vunpack.c.l.b16 %v6835
          %v7355 = vunpack.c.l.b16 %v6836
          %v7356 = vunpack.c.l.b16 %v6837
          %v7357 = vunpack.c.l.b16 %v6838
          %v7358 = vunpack.c.l.b16 %v6839
          %v7359 = vunpack.c.l.b16 %v6840
          %v7360 = vunpack.c.l.b16 %v6841
          %v7361 = vunpack.c.l.b16 %v6842
          %v7362 = vunpack.c.l.b16 %v6843
          %v7363 = vunpack.c.l.b16 %v6844
          %v7364 = vunpack.c.l.b16 %v6845
          %v7365 = vunpack.c.l.b16 %v6846
          %v7366 = vunpack.c.l.b16 %v6847
          %v7367 = vunpack.c.l.b16 %v6848
          %v7368 = vunpack.c.l.b16 %v6849
          %v7369 = vunpack.c.l.b16 %v6850
          %v7370 = vunpack.c.l.b16 %v6851
          %v7371 = vunpack.c.l.b16 %v6852
          %v7372 = vunpack.c.l.b16 %v6853
          %v7373 = vunpack.c.l.b16 %v6854
          %v7374 = vunpack.c.l.b16 %v6855
          %v7375 = vunpack.c.l.b16 %v6856
          %v7376 = vunpack.c.l.b16 %v6857
          %v7377 = vunpack.c.l.b16 %v6858
          %v7378 = vunpack.c.l.b16 %v6859
          %v7379 = vunpack.c.l.b16 %v6860
          %v7380 = vunpack.c.l.b16 %v6861
          %v7381 = vunpack.c.l.b16 %v6862
          %v7382 = vunpack.c.l.b16 %v6863
          %v7383 = vunpack.c.l.b16 %v6864
          %v7384 = vunpack.c.l.b16 %v6865
          %v7385 = vunpack.c.l.b16 %v6866
          %v7386 = vunpack.c.l.b16 %v6867
          %v7387 = vunpack.c.l.b16 %v6868
          %v7388 = vunpack.c.l.b16 %v6869
          %v7389 = vunpack.c.l.b16 %v6870
          %v7390 = vunpack.c.l.b16 %v6871
          %v7391 = vunpack.c.l.b16 %v6872
          %v7392 = vunpack.c.l.b16 %v6873
          %v7393 = vunpack.c.l.b16 %v6874
          %v7394 = vunpack.c.l.b16 %v6875
          %v7395 = vunpack.c.l.b16 %v6876
          %v7396 = vunpack.c.l.b16 %v6877
          %v7397 = vunpack.c.l.b16 %v6878
          %v7398 = vunpack.c.l.b16 %v6879
          %v7399 = vunpack.c.l.b16 %v6880
          %v7400 = vunpack.c.l.b16 %v6881
          %v7401 = vunpack.c.l.b16 %v6882
          %v7402 = vunpack.c.l.b16 %v6883
          %v7403 = vunpack.c.l.b16 %v6884
          %v7404 = vunpack.c.l.b16 %v6885
          %v7405 = vunpack.c.l.b16 %v6886
          %v7406 = vunpack.c.l.b16 %v6887
          %v7407 = vunpack.c.l.b16 %v6888
          %v7408 = vunpack.c.l.b16 %v6889
          %v7409 = vunpack.c.l.b16 %v6890
          %v7410 = vunpack.c.l.b16 %v6891
          %v7411 = vunpack.c.l.b16 %v6892
          %v7412 = vunpack.c.l.b16 %v6893
          %v7413 = vunpack.c.l.b16 %v6894
          %v7414 = vunpack.c.l.b16 %v6895
          %v7415 = vunpack.c.l.b16 %v6896
          %v7416 = vunpack.c.l.b16 %v6897
          %v7417 = vunpack.c.l.b16 %v6898
          %v7418 = vunpack.c.l.b16 %v6899
          %v7419 = vunpack.c.l.b16 %v6900
          %v7420 = vunpack.c.l.b16 %v6901
          %v7421 = vunpack.c.l.b16 %v6902
          %v7422 = vunpack.c.l.b16 %v6903
          %v7423 = vunpack.c.l.b16 %v6904
          %v7424 = vunpack.c.l.b16 %v6905
          %v7425 = vunpack.c.l.b16 %v6906
          %v7426 = vunpack.c.l.b16 %v6907
          %v7427 = vunpack.c.l.b16 %v6908
          %v7428 = vunpack.c.l.b16 %v6909
          %v7429 = vunpack.c.l.b16 %v6910
          %v7430 = vunpack.c.l.b16 %v6911
          %v7431 = vunpack.c.l.b16 %v6912
          %v7432 = vunpack.c.l.b16 %v6913
          %v7433 = vunpack.c.l.b16 %v6914
          %v7434 = vunpack.c.l.b16 %v6915
          %v7435 = vunpack.c.l.b16 %v6916
          %v7436 = vunpack.c.l.b16 %v6917
          %v7437 = vunpack.c.l.b16 %v6918
          %v7438 = vunpack.c.l.b16 %v6919
          %v7439 = vunpack.c.l.b16 %v6920
          %v7440 = vunpack.c.l.b16 %v6921
          %v7441 = vunpack.c.l.b16 %v6922
          %v7442 = vunpack.c.l.b16 %v6923
          %v7443 = vunpack.c.l.b16 %v6924
          %v7444 = vunpack.c.l.b16 %v6925
          %v7445 = vunpack.c.l.b16 %v6926
          %v7446 = vunpack.c.l.b16 %v6927
          %v7447 = vunpack.c.l.b16 %v6928
          %v7448 = vunpack.c.l.b16 %v6929
          %v7449 = vunpack.c.l.b16 %v6930
          %v7450 = vunpack.c.l.b16 %v6931
          %v7451 = vunpack.c.l.b16 %v6932
          %v7452 = vunpack.c.l.b16 %v6933
          %v7453 = vunpack.c.l.b16 %v6934
          %v7454 = vunpack.c.l.b16 %v6935
          %v7455 = vunpack.c.l.b16 %v6936
          %v7456 = vunpack.c.l.b16 %v6937
          %v7457 = vunpack.c.l.b16 %v6938
          %v7458 = vunpack.c.l.b16 %v6939
          %v7459 = vunpack.c.l.b16 %v6940
          %v7460 = vunpack.c.l.b16 %v6941
          %v7461 = vunpack.c.l.b16 %v6942
          %v7462 = vunpack.c.l.b16 %v6943
          %v7463 = vunpack.c.l.b16 %v6944
          %v7464 = vunpack.c.l.b16 %v6945
          %v7465 = vunpack.c.l.b16 %v6946
          %v7466 = vunpack.c.l.b16 %v6947
          %v7467 = vunpack.c.l.b16 %v6948
          %v7468 = vunpack.c.l.b16 %v6949
          %v7469 = vunpack.c.l.b16 %v6950
          %v7470 = vunpack.c.l.b16 %v6951
          %v7471 = vunpack.c.l.b16 %v6952
          %v7472 = vunpack.c.l.b16 %v6953
          %v7473 = vunpack.c.l.b16 %v6954
          %v7474 = vunpack.c.l.b16 %v6955
          %v7475 = vunpack.c.l.b16 %v6956
          %v7476 = vunpack.c.l.b16 %v6957
          %v7477 = vunpack.c.l.b16 %v6958
          %v7478 = vunpack.c.l.b16 %v6959
          %v7479 = vunpack.c.l.b16 %v6960
          %v7480 = vunpack.c.l.b16 %v6961
          %v7481 = vunpack.c.l.b16 %v6962
          %v7482 = vunpack.c.l.b16 %v6963
          %v7483 = vunpack.c.l.b16 %v6964
          %v7484 = vunpack.c.l.b16 %v6965
          %v7485 = vunpack.c.l.b16 %v6966
          %v7486 = vunpack.c.l.b16 %v6967
          %v7487 = vunpack.c.l.b16 %v6968
          %v7488 = vunpack.c.l.b16 %v6969
          %v7489 = vunpack.c.l.b16 %v6970
          %v7490 = vunpack.c.l.b16 %v6971
          %v7491 = vunpack.c.l.b16 %v6972
          %v7492 = vunpack.c.l.b16 %v6973
          %v7493 = vunpack.c.l.b16 %v6974
          %v7494 = vunpack.c.l.b16 %v6975
          %v7495 = vunpack.c.l.b16 %v6976
          %v7496 = vunpack.c.l.b16 %v6977
          %v7497 = vunpack.c.l.b16 %v6978
          %v7498 = vunpack.c.l.b16 %v6979
          %v7499 = vunpack.c.l.b16 %v6980
          %v7500 = vunpack.c.l.b16 %v6981
          %v7501 = vunpack.c.l.b16 %v6982
          %v7502 = vunpack.c.l.b16 %v6983
          %v7503 = vunpack.c.l.b16 %v6984
          %v7504 = vunpack.c.l.b16 %v6985
          %v7505 = vunpack.c.l.b16 %v6986
          %v7506 = vunpack.c.l.b16 %v6987
          %v7507 = vunpack.c.l.b16 %v6988
          %v7508 = vunpack.c.l.b16 %v6989
          %v7509 = vunpack.c.l.b16 %v6990
          %v7510 = vunpack.c.l.b16 %v6991
          %v7511 = vunpack.c.l.b16 %v6992
          %v7512 = vunpack.c.l.b16 %v6993
          %v7513 = vunpack.c.l.b16 %v6994
          %v7514 = vunpack.c.l.b16 %v6995
          %v7515 = vunpack.c.l.b16 %v6996
          %v7516 = vunpack.c.l.b16 %v6997
          %v7517 = vunpack.c.l.b16 %v6998
          %v7518 = vunpack.c.l.b16 %v6999
          %v7519 = vunpack.c.l.b16 %v7000
          %v7520 = vunpack.c.l.b16 %v7001
          %v7521 = vunpack.c.l.b16 %v7002
          %v7522 = vunpack.c.l.b16 %v7003
          %v7523 = vunpack.c.l.b16 %v7004
          %v7524 = vunpack.c.l.b16 %v7005
          %v7525 = vpack.c.b16 %v7270, %v7269
          %v7526 = vpack.c.b16 %v7272, %v7271
          %v7527 = vpack.c.b16 %v7274, %v7273
          %v7528 = vpack.c.b16 %v7276, %v7275
          %v7529 = vpack.c.b16 %v7278, %v7277
          %v7530 = vpack.c.b16 %v7280, %v7279
          %v7531 = vpack.c.b16 %v7282, %v7281
          %v7532 = vpack.c.b16 %v7284, %v7283
          %v7533 = vpack.c.b16 %v7286, %v7285
          %v7534 = vpack.c.b16 %v7288, %v7287
          %v7535 = vpack.c.b16 %v7290, %v7289
          %v7536 = vpack.c.b16 %v7292, %v7291
          %v7537 = vpack.c.b16 %v7294, %v7293
          %v7538 = vpack.c.b16 %v7296, %v7295
          %v7539 = vpack.c.b16 %v7298, %v7297
          %v7540 = vpack.c.b16 %v7300, %v7299
          %v7541 = vpack.c.b16 %v7302, %v7301
          %v7542 = vpack.c.b16 %v7304, %v7303
          %v7543 = vpack.c.b16 %v7306, %v7305
          %v7544 = vpack.c.b16 %v7308, %v7307
          %v7545 = vpack.c.b16 %v7310, %v7309
          %v7546 = vpack.c.b16 %v7312, %v7311
          %v7547 = vpack.c.b16 %v7314, %v7313
          %v7548 = vpack.c.b16 %v7316, %v7315
          %v7549 = vpack.c.b16 %v7318, %v7317
          %v7550 = vpack.c.b16 %v7320, %v7319
          %v7551 = vpack.c.b16 %v7322, %v7321
          %v7552 = vpack.c.b16 %v7324, %v7323
          %v7553 = vpack.c.b16 %v7326, %v7325
          %v7554 = vpack.c.b16 %v7328, %v7327
          %v7555 = vpack.c.b16 %v7330, %v7329
          %v7556 = vpack.c.b16 %v7332, %v7331
          %v7557 = vpack.c.b16 %v7334, %v7333
          %v7558 = vpack.c.b16 %v7336, %v7335
          %v7559 = vpack.c.b16 %v7338, %v7337
          %v7560 = vpack.c.b16 %v7340, %v7339
          %v7561 = vpack.c.b16 %v7342, %v7341
          %v7562 = vpack.c.b16 %v7344, %v7343
          %v7563 = vpack.c.b16 %v7346, %v7345
          %v7564 = vpack.c.b16 %v7348, %v7347
          %v7565 = vpack.c.b16 %v7350, %v7349
          %v7566 = vpack.c.b16 %v7352, %v7351
          %v7567 = vpack.c.b16 %v7354, %v7353
          %v7568 = vpack.c.b16 %v7356, %v7355
          %v7569 = vpack.c.b16 %v7358, %v7357
          %v7570 = vpack.c.b16 %v7360, %v7359
          %v7571 = vpack.c.b16 %v7362, %v7361
          %v7572 = vpack.c.b16 %v7364, %v7363
          %v7573 = vpack.c.b16 %v7366, %v7365
          %v7574 = vpack.c.b16 %v7368, %v7367
          %v7575 = vpack.c.b16 %v7370, %v7369
          %v7576 = vpack.c.b16 %v7372, %v7371
          %v7577 = vpack.c.b16 %v7374, %v7373
          %v7578 = vpack.c.b16 %v7376, %v7375
          %v7579 = vpack.c.b16 %v7378, %v7377
          %v7580 = vpack.c.b16 %v7380, %v7379
          %v7581 = vpack.c.b16 %v7382, %v7381
          %v7582 = vpack.c.b16 %v7384, %v7383
          %v7583 = vpack.c.b16 %v7386, %v7385
          %v7584 = vpack.c.b16 %v7388, %v7387
          %v7585 = vpack.c.b16 %v7390, %v7389
          %v7586 = vpack.c.b16 %v7392, %v7391
          %v7587 = vpack.c.b16 %v7394, %v7393
          %v7588 = vpack.c.b16 %v7396, %v7395
          %v7589 = vpack.c.b16 %v7398, %v7397
          %v7590 = vpack.c.b16 %v7400, %v7399
          %v7591 = vpack.c.b16 %v7402, %v7401
          %v7592 = vpack.c.b16 %v7404, %v7403
          %v7593 = vpack.c.b16 %v7406, %v7405
          %v7594 = vpack.c.b16 %v7408, %v7407
          %v7595 = vpack.c.b16 %v7410, %v7409
          %v7596 = vpack.c.b16 %v7412, %v7411
          %v7597 = vpack.c.b16 %v7414, %v7413
          %v7598 = vpack.c.b16 %v7416, %v7415
          %v7599 = vpack.c.b16 %v7418, %v7417
          %v7600 = vpack.c.b16 %v7420, %v7419
          %v7601 = vpack.c.b16 %v7422, %v7421
          %v7602 = vpack.c.b16 %v7424, %v7423
          %v7603 = vpack.c.b16 %v7426, %v7425
          %v7604 = vpack.c.b16 %v7428, %v7427
          %v7605 = vpack.c.b16 %v7430, %v7429
          %v7606 = vpack.c.b16 %v7432, %v7431
          %v7607 = vpack.c.b16 %v7434, %v7433
          %v7608 = vpack.c.b16 %v7436, %v7435
          %v7609 = vpack.c.b16 %v7438, %v7437
          %v7610 = vpack.c.b16 %v7440, %v7439
          %v7611 = vpack.c.b16 %v7442, %v7441
          %v7612 = vpack.c.b16 %v7444, %v7443
          %v7613 = vpack.c.b16 %v7446, %v7445
          %v7614 = vpack.c.b16 %v7448, %v7447
          %v7615 = vpack.c.b16 %v7450, %v7449
          %v7616 = vpack.c.b16 %v7452, %v7451
          %v7617 = vpack.c.b16 %v7454, %v7453
          %v7618 = vpack.c.b16 %v7456, %v7455
          %v7619 = vpack.c.b16 %v7458, %v7457
          %v7620 = vpack.c.b16 %v7460, %v7459
          %v7621 = vpack.c.b16 %v7462, %v7461
          %v7622 = vpack.c.b16 %v7464, %v7463
          %v7623 = vpack.c.b16 %v7466, %v7465
          %v7624 = vpack.c.b16 %v7468, %v7467
          %v7625 = vpack.c.b16 %v7470, %v7469
          %v7626 = vpack.c.b16 %v7472, %v7471
          %v7627 = vpack.c.b16 %v7474, %v7473
          %v7628 = vpack.c.b16 %v7476, %v7475
          %v7629 = vpack.c.b16 %v7478, %v7477
          %v7630 = vpack.c.b16 %v7480, %v7479
          %v7631 = vpack.c.b16 %v7482, %v7481
          %v7632 = vpack.c.b16 %v7484, %v7483
          %v7633 = vpack.c.b16 %v7486, %v7485
          %v7634 = vpack.c.b16 %v7488, %v7487
          %v7635 = vpack.c.b16 %v7490, %v7489
          %v7636 = vpack.c.b16 %v7492, %v7491
          %v7637 = vpack.c.b16 %v7494, %v7493
          %v7638 = vpack.c.b16 %v7496, %v7495
          %v7639 = vpack.c.b16 %v7498, %v7497
          %v7640 = vpack.c.b16 %v7500, %v7499
          %v7641 = vpack.c.b16 %v7502, %v7501
          %v7642 = vpack.c.b16 %v7504, %v7503
          %v7643 = vpack.c.b16 %v7506, %v7505
          %v7644 = vpack.c.b16 %v7508, %v7507
          %v7645 = vpack.c.b16 %v7510, %v7509
          %v7646 = vpack.c.b16 %v7512, %v7511
          %v7647 = vpack.c.b16 %v7514, %v7513
          %v7648 = vpack.c.b16 %v7516, %v7515
          %v7649 = vpack.c.b16 %v7518, %v7517
          %v7650 = vpack.c.b16 %v7520, %v7519
          %v7651 = vpack.c.b16 %v7522, %v7521
          %v7652 = vpack.c.b16 %v7524, %v7523
          %7781 = vmatprep.subr.bf16.mxu0 0
          %7782 = vmatpush1.bf16.msra.mxu0 %v7532
          %7783 = vmatprep.subr.bf16.mxu0 0
          %7784 = vmatpush1.bf16.msra.mxu0 %v7531
          %7785 = vmatprep.subr.bf16.mxu0 0
          %7786 = vmatpush1.bf16.msra.mxu0 %v7530
          %7787 = vmatprep.subr.bf16.mxu0 0
          %7788 = vmatpush1.bf16.msra.mxu0 %v7529
          %7789 = vmatprep.subr.bf16.mxu0 0
          %7790 = vmatpush1.bf16.msra.mxu0 %v7528
          %7791 = vmatprep.subr.bf16.mxu0 0
          %7792 = vmatpush1.bf16.msra.mxu0 %v7527
          %7793 = vmatprep.subr.bf16.mxu0 0
          %7794 = vmatpush1.bf16.msra.mxu0 %v7526
          %7795 = vmatprep.subr.bf16.mxu0 0
          %7796 = vmatpush1.bf16.msra.mxu0 %v7525
          %7797 = vmatprep.subr.bf16.mxu0 0
          %7798 = vmatpush2.bf16.msra.mxu0 %v7540
          %7799 = vmatprep.subr.bf16.mxu0 0
          %7800 = vmatpush2.bf16.msra.mxu0 %v7539
          %7801 = vmatprep.subr.bf16.mxu0 0
          %7802 = vmatpush2.bf16.msra.mxu0 %v7538
          %7803 = vmatprep.subr.bf16.mxu0 0
          %7804 = vmatpush2.bf16.msra.mxu0 %v7537
          %7805 = vmatprep.subr.bf16.mxu0 0
          %7806 = vmatpush2.bf16.msra.mxu0 %v7536
          %7807 = vmatprep.subr.bf16.mxu0 0
          %7808 = vmatpush2.bf16.msra.mxu0 %v7535
          %7809 = vmatprep.subr.bf16.mxu0 0
          %7810 = vmatpush2.bf16.msra.mxu0 %v7534
          %7811 = vmatprep.subr.bf16.mxu0 0
          %7812 = vmatpush2.bf16.msra.mxu0 %v7533
          %7813 = vmatprep.mubr.bf16.mxu0 %v6345
          %7814 = vmatmul.mubr.bf16.gmra.mxu0 %v6344
          %v7815 = vpop.f32.mrf.mxu0
          %v7816 = vadd.f32 %v7011, %v7815
          %v7817 = vpop.f32.mrf.mxu0
          %v7818 = vpop.f32.mrf.mxu0
          %v7819 = vadd.f32 %v7011, %v7818
          %v7820 = vpop.f32.mrf.mxu0
          %7821 = vmatprep.mubr.bf16.mxu0 %v6361
          %7822 = vmatmul.mubr.bf16.gmra.mxu0 %v6360
          %v7823 = vpop.f32.mrf.mxu0
          %v7824 = vadd.f32 %v7011, %v7823
          %v7825 = vpop.f32.mrf.mxu0
          %v7826 = vpop.f32.mrf.mxu0
          %v7827 = vpop.f32.mrf.mxu0
          %7828 = vdwg.mxu0
          %7829 = vmatprep.subr.bf16.mxu0 0
          %7830 = vmatpush1.bf16.msra.mxu0 %v7548
          %7831 = vmatprep.subr.bf16.mxu0 0
          %7832 = vmatpush1.bf16.msra.mxu0 %v7547
          %7833 = vmatprep.subr.bf16.mxu0 0
          %7834 = vmatpush1.bf16.msra.mxu0 %v7546
          %7835 = vmatprep.subr.bf16.mxu0 0
          %7836 = vmatpush1.bf16.msra.mxu0 %v7545
          %7837 = vmatprep.subr.bf16.mxu0 0
          %7838 = vmatpush1.bf16.msra.mxu0 %v7544
          %7839 = vmatprep.subr.bf16.mxu0 0
          %7840 = vmatpush1.bf16.msra.mxu0 %v7543
          %7841 = vmatprep.subr.bf16.mxu0 0
          %7842 = vmatpush1.bf16.msra.mxu0 %v7542
          %7843 = vmatprep.subr.bf16.mxu0 0
          %7844 = vmatpush1.bf16.msra.mxu0 %v7541
          %7845 = vmatprep.subr.bf16.mxu0 0
          %7846 = vmatpush2.bf16.msra.mxu0 %v7556
          %7847 = vmatprep.subr.bf16.mxu0 0
          %7848 = vmatpush2.bf16.msra.mxu0 %v7555
          %7849 = vmatprep.subr.bf16.mxu0 0
          %7850 = vmatpush2.bf16.msra.mxu0 %v7554
          %7851 = vmatprep.subr.bf16.mxu0 0
          %7852 = vmatpush2.bf16.msra.mxu0 %v7553
          %7853 = vmatprep.subr.bf16.mxu0 0
          %7854 = vmatpush2.bf16.msra.mxu0 %v7552
          %7855 = vmatprep.subr.bf16.mxu0 0
          %7856 = vmatpush2.bf16.msra.mxu0 %v7551
          %7857 = vmatprep.subr.bf16.mxu0 0
          %7858 = vmatpush2.bf16.msra.mxu0 %v7550
          %7859 = vmatprep.subr.bf16.mxu0 0
          %7860 = vmatpush2.bf16.msra.mxu0 %v7549
          %7861 = vmatprep.mubr.bf16.mxu0 %v6347
          %7862 = vmatmul.mubr.bf16.gmra.mxu0 %v6346
          %v7863 = vpop.f32.mrf.mxu0
          %v7864 = vadd.f32 %v7816, %v7863
          %v7865 = vpop.f32.mrf.mxu0
          %v7866 = vpop.f32.mrf.mxu0
          %v7867 = vadd.f32 %v7819, %v7866
          %v7868 = vpop.f32.mrf.mxu0
          %7869 = vmatprep.mubr.bf16.mxu0 %v6363
          %7870 = vmatmul.mubr.bf16.gmra.mxu0 %v6362
          %v7871 = vpop.f32.mrf.mxu0
          %v7872 = vadd.f32 %v7824, %v7871
          %v7873 = vpop.f32.mrf.mxu0
          %v7874 = vpop.f32.mrf.mxu0
          %v7875 = vpop.f32.mrf.mxu0
          %7876 = vdwg.mxu0
          %7877 = vmatprep.subr.bf16.mxu0 0
          %7878 = vmatpush1.bf16.msra.mxu0 %v7564
          %7879 = vmatprep.subr.bf16.mxu0 0
          %7880 = vmatpush1.bf16.msra.mxu0 %v7563
          %7881 = vmatprep.subr.bf16.mxu0 0
          %7882 = vmatpush1.bf16.msra.mxu0 %v7562
          %7883 = vmatprep.subr.bf16.mxu0 0
          %7884 = vmatpush1.bf16.msra.mxu0 %v7561
          %7885 = vmatprep.subr.bf16.mxu0 0
          %7886 = vmatpush1.bf16.msra.mxu0 %v7560
          %7887 = vmatprep.subr.bf16.mxu0 0
          %7888 = vmatpush1.bf16.msra.mxu0 %v7559
          %7889 = vmatprep.subr.bf16.mxu0 0
          %7890 = vmatpush1.bf16.msra.mxu0 %v7558
          %7891 = vmatprep.subr.bf16.mxu0 0
          %7892 = vmatpush1.bf16.msra.mxu0 %v7557
          %7893 = vmatprep.subr.bf16.mxu0 0
          %7894 = vmatpush2.bf16.msra.mxu0 %v7572
          %7895 = vmatprep.subr.bf16.mxu0 0
          %7896 = vmatpush2.bf16.msra.mxu0 %v7571
          %7897 = vmatprep.subr.bf16.mxu0 0
          %7898 = vmatpush2.bf16.msra.mxu0 %v7570
          %7899 = vmatprep.subr.bf16.mxu0 0
          %7900 = vmatpush2.bf16.msra.mxu0 %v7569
          %7901 = vmatprep.subr.bf16.mxu0 0
          %7902 = vmatpush2.bf16.msra.mxu0 %v7568
          %7903 = vmatprep.subr.bf16.mxu0 0
          %7904 = vmatpush2.bf16.msra.mxu0 %v7567
          %7905 = vmatprep.subr.bf16.mxu0 0
          %7906 = vmatpush2.bf16.msra.mxu0 %v7566
          %7907 = vmatprep.subr.bf16.mxu0 0
          %7908 = vmatpush2.bf16.msra.mxu0 %v7565
          %7909 = vmatprep.mubr.bf16.mxu0 %v6349
          %7910 = vmatmul.mubr.bf16.gmra.mxu0 %v6348
          %v7911 = vpop.f32.mrf.mxu0
          %v7912 = vadd.f32 %v7864, %v7911
          %v7913 = vpop.f32.mrf.mxu0
          %v7914 = vpop.f32.mrf.mxu0
          %v7915 = vadd.f32 %v7867, %v7914
          %v7916 = vpop.f32.mrf.mxu0
          %7917 = vmatprep.mubr.bf16.mxu0 %v6365
          %7918 = vmatmul.mubr.bf16.gmra.mxu0 %v6364
          %v7919 = vpop.f32.mrf.mxu0
          %v7920 = vadd.f32 %v7872, %v7919
          %v7921 = vpop.f32.mrf.mxu0
          %v7922 = vpop.f32.mrf.mxu0
          %v7923 = vpop.f32.mrf.mxu0
          %7924 = vdwg.mxu0
          %7925 = vmatprep.subr.bf16.mxu0 0
          %7926 = vmatpush1.bf16.msra.mxu0 %v7580
          %7927 = vmatprep.subr.bf16.mxu0 0
          %7928 = vmatpush1.bf16.msra.mxu0 %v7579
          %7929 = vmatprep.subr.bf16.mxu0 0
          %7930 = vmatpush1.bf16.msra.mxu0 %v7578
          %7931 = vmatprep.subr.bf16.mxu0 0
          %7932 = vmatpush1.bf16.msra.mxu0 %v7577
          %7933 = vmatprep.subr.bf16.mxu0 0
          %7934 = vmatpush1.bf16.msra.mxu0 %v7576
          %7935 = vmatprep.subr.bf16.mxu0 0
          %7936 = vmatpush1.bf16.msra.mxu0 %v7575
          %7937 = vmatprep.subr.bf16.mxu0 0
          %7938 = vmatpush1.bf16.msra.mxu0 %v7574
          %7939 = vmatprep.subr.bf16.mxu0 0
          %7940 = vmatpush1.bf16.msra.mxu0 %v7573
          %7941 = vmatprep.subr.bf16.mxu0 0
          %7942 = vmatpush2.bf16.msra.mxu0 %v7588
          %7943 = vmatprep.subr.bf16.mxu0 0
          %7944 = vmatpush2.bf16.msra.mxu0 %v7587
          %7945 = vmatprep.subr.bf16.mxu0 0
          %7946 = vmatpush2.bf16.msra.mxu0 %v7586
          %7947 = vmatprep.subr.bf16.mxu0 0
          %7948 = vmatpush2.bf16.msra.mxu0 %v7585
          %7949 = vmatprep.subr.bf16.mxu0 0
          %7950 = vmatpush2.bf16.msra.mxu0 %v7584
          %7951 = vmatprep.subr.bf16.mxu0 0
          %7952 = vmatpush2.bf16.msra.mxu0 %v7583
          %7953 = vmatprep.subr.bf16.mxu0 0
          %7954 = vmatpush2.bf16.msra.mxu0 %v7582
          %7955 = vmatprep.subr.bf16.mxu0 0
          %7956 = vmatpush2.bf16.msra.mxu0 %v7581
          %7957 = vmatprep.mubr.bf16.mxu0 %v6351
          %7958 = vmatmul.mubr.bf16.gmra.mxu0 %v6350
          %v7959 = vpop.f32.mrf.mxu0
          %v7960 = vadd.f32 %v7912, %v7959
          %v7961 = vpop.f32.mrf.mxu0
          %v7962 = vpop.f32.mrf.mxu0
          %v7963 = vadd.f32 %v7915, %v7962
          %v7964 = vpop.f32.mrf.mxu0
          %7965 = vmatprep.mubr.bf16.mxu0 %v6367
          %7966 = vmatmul.mubr.bf16.gmra.mxu0 %v6366
          %v7967 = vpop.f32.mrf.mxu0
          %v7968 = vadd.f32 %v7920, %v7967
          %v7969 = vpop.f32.mrf.mxu0
          %v7970 = vpop.f32.mrf.mxu0
          %v7971 = vpop.f32.mrf.mxu0
          %7972 = vdwg.mxu0
          %7973 = vmatprep.subr.bf16.mxu0 0
          %7974 = vmatpush1.bf16.msra.mxu0 %v7596
          %7975 = vmatprep.subr.bf16.mxu0 0
          %7976 = vmatpush1.bf16.msra.mxu0 %v7595
          %7977 = vmatprep.subr.bf16.mxu0 0
          %7978 = vmatpush1.bf16.msra.mxu0 %v7594
          %7979 = vmatprep.subr.bf16.mxu0 0
          %7980 = vmatpush1.bf16.msra.mxu0 %v7593
          %7981 = vmatprep.subr.bf16.mxu0 0
          %7982 = vmatpush1.bf16.msra.mxu0 %v7592
          %7983 = vmatprep.subr.bf16.mxu0 0
          %7984 = vmatpush1.bf16.msra.mxu0 %v7591
          %7985 = vmatprep.subr.bf16.mxu0 0
          %7986 = vmatpush1.bf16.msra.mxu0 %v7590
          %7987 = vmatprep.subr.bf16.mxu0 0
          %7988 = vmatpush1.bf16.msra.mxu0 %v7589
          %7989 = vmatprep.subr.bf16.mxu0 0
          %7990 = vmatpush2.bf16.msra.mxu0 %v7604
          %7991 = vmatprep.subr.bf16.mxu0 0
          %7992 = vmatpush2.bf16.msra.mxu0 %v7603
          %7993 = vmatprep.subr.bf16.mxu0 0
          %7994 = vmatpush2.bf16.msra.mxu0 %v7602
          %7995 = vmatprep.subr.bf16.mxu0 0
          %7996 = vmatpush2.bf16.msra.mxu0 %v7601
          %7997 = vmatprep.subr.bf16.mxu0 0
          %7998 = vmatpush2.bf16.msra.mxu0 %v7600
          %7999 = vmatprep.subr.bf16.mxu0 0
          %8000 = vmatpush2.bf16.msra.mxu0 %v7599
          %8001 = vmatprep.subr.bf16.mxu0 0
          %8002 = vmatpush2.bf16.msra.mxu0 %v7598
          %8003 = vmatprep.subr.bf16.mxu0 0
          %8004 = vmatpush2.bf16.msra.mxu0 %v7597
          %8005 = vmatprep.mubr.bf16.mxu0 %v6353
          %8006 = vmatmul.mubr.bf16.gmra.mxu0 %v6352
          %v8007 = vpop.f32.mrf.mxu0
          %v8008 = vadd.f32 %v7960, %v8007
          %v8009 = vpop.f32.mrf.mxu0
          %v8010 = vpop.f32.mrf.mxu0
          %v8011 = vadd.f32 %v7963, %v8010
          %v8012 = vpop.f32.mrf.mxu0
          %8013 = vmatprep.mubr.bf16.mxu0 %v6369
          %8014 = vmatmul.mubr.bf16.gmra.mxu0 %v6368
          %v8015 = vpop.f32.mrf.mxu0
          %v8016 = vadd.f32 %v7968, %v8015
          %v8017 = vpop.f32.mrf.mxu0
          %v8018 = vpop.f32.mrf.mxu0
          %v8019 = vpop.f32.mrf.mxu0
          %8020 = vdwg.mxu0
          %8021 = vmatprep.subr.bf16.mxu0 0
          %8022 = vmatpush1.bf16.msra.mxu0 %v7612
          %8023 = vmatprep.subr.bf16.mxu0 0
          %8024 = vmatpush1.bf16.msra.mxu0 %v7611
          %8025 = vmatprep.subr.bf16.mxu0 0
          %8026 = vmatpush1.bf16.msra.mxu0 %v7610
          %8027 = vmatprep.subr.bf16.mxu0 0
          %8028 = vmatpush1.bf16.msra.mxu0 %v7609
          %8029 = vmatprep.subr.bf16.mxu0 0
          %8030 = vmatpush1.bf16.msra.mxu0 %v7608
          %8031 = vmatprep.subr.bf16.mxu0 0
          %8032 = vmatpush1.bf16.msra.mxu0 %v7607
          %8033 = vmatprep.subr.bf16.mxu0 0
          %8034 = vmatpush1.bf16.msra.mxu0 %v7606
          %8035 = vmatprep.subr.bf16.mxu0 0
          %8036 = vmatpush1.bf16.msra.mxu0 %v7605
          %8037 = vmatprep.subr.bf16.mxu0 0
          %8038 = vmatpush2.bf16.msra.mxu0 %v7620
          %8039 = vmatprep.subr.bf16.mxu0 0
          %8040 = vmatpush2.bf16.msra.mxu0 %v7619
          %8041 = vmatprep.subr.bf16.mxu0 0
          %8042 = vmatpush2.bf16.msra.mxu0 %v7618
          %8043 = vmatprep.subr.bf16.mxu0 0
          %8044 = vmatpush2.bf16.msra.mxu0 %v7617
          %8045 = vmatprep.subr.bf16.mxu0 0
          %8046 = vmatpush2.bf16.msra.mxu0 %v7616
          %8047 = vmatprep.subr.bf16.mxu0 0
          %8048 = vmatpush2.bf16.msra.mxu0 %v7615
          %8049 = vmatprep.subr.bf16.mxu0 0
          %8050 = vmatpush2.bf16.msra.mxu0 %v7614
          %8051 = vmatprep.subr.bf16.mxu0 0
          %8052 = vmatpush2.bf16.msra.mxu0 %v7613
          %8053 = vmatprep.mubr.bf16.mxu0 %v6355
          %8054 = vmatmul.mubr.bf16.gmra.mxu0 %v6354
          %v8055 = vpop.f32.mrf.mxu0
          %v8056 = vadd.f32 %v8008, %v8055
          %v8057 = vpop.f32.mrf.mxu0
          %v8058 = vpop.f32.mrf.mxu0
          %v8059 = vadd.f32 %v8011, %v8058
          %v8060 = vpop.f32.mrf.mxu0
          %8061 = vmatprep.mubr.bf16.mxu0 %v6371
          %8062 = vmatmul.mubr.bf16.gmra.mxu0 %v6370
          %v8063 = vpop.f32.mrf.mxu0
          %v8064 = vadd.f32 %v8016, %v8063
          %v8065 = vpop.f32.mrf.mxu0
          %v8066 = vpop.f32.mrf.mxu0
          %v8067 = vpop.f32.mrf.mxu0
          %8068 = vdwg.mxu0
          %8069 = vmatprep.subr.bf16.mxu0 0
          %8070 = vmatpush1.bf16.msra.mxu0 %v7628
          %8071 = vmatprep.subr.bf16.mxu0 0
          %8072 = vmatpush1.bf16.msra.mxu0 %v7627
          %8073 = vmatprep.subr.bf16.mxu0 0
          %8074 = vmatpush1.bf16.msra.mxu0 %v7626
          %8075 = vmatprep.subr.bf16.mxu0 0
          %8076 = vmatpush1.bf16.msra.mxu0 %v7625
          %8077 = vmatprep.subr.bf16.mxu0 0
          %8078 = vmatpush1.bf16.msra.mxu0 %v7624
          %8079 = vmatprep.subr.bf16.mxu0 0
          %8080 = vmatpush1.bf16.msra.mxu0 %v7623
          %8081 = vmatprep.subr.bf16.mxu0 0
          %8082 = vmatpush1.bf16.msra.mxu0 %v7622
          %8083 = vmatprep.subr.bf16.mxu0 0
          %8084 = vmatpush1.bf16.msra.mxu0 %v7621
          %8085 = vmatprep.subr.bf16.mxu0 0
          %8086 = vmatpush2.bf16.msra.mxu0 %v7636
          %8087 = vmatprep.subr.bf16.mxu0 0
          %8088 = vmatpush2.bf16.msra.mxu0 %v7635
          %8089 = vmatprep.subr.bf16.mxu0 0
          %8090 = vmatpush2.bf16.msra.mxu0 %v7634
          %8091 = vmatprep.subr.bf16.mxu0 0
          %8092 = vmatpush2.bf16.msra.mxu0 %v7633
          %8093 = vmatprep.subr.bf16.mxu0 0
          %8094 = vmatpush2.bf16.msra.mxu0 %v7632
          %8095 = vmatprep.subr.bf16.mxu0 0
          %8096 = vmatpush2.bf16.msra.mxu0 %v7631
          %8097 = vmatprep.subr.bf16.mxu0 0
          %8098 = vmatpush2.bf16.msra.mxu0 %v7630
          %8099 = vmatprep.subr.bf16.mxu0 0
          %8100 = vmatpush2.bf16.msra.mxu0 %v7629
          %8101 = vmatprep.mubr.bf16.mxu0 %v6357
          %8102 = vmatmul.mubr.bf16.gmra.mxu0 %v6356
          %v8103 = vpop.f32.mrf.mxu0
          %v8104 = vadd.f32 %v8056, %v8103
          %v8105 = vpop.f32.mrf.mxu0
          %v8106 = vpop.f32.mrf.mxu0
          %v8107 = vadd.f32 %v8059, %v8106
          %v8108 = vpop.f32.mrf.mxu0
          %8109 = vmatprep.mubr.bf16.mxu0 %v6373
          %8110 = vmatmul.mubr.bf16.gmra.mxu0 %v6372
          %v8111 = vpop.f32.mrf.mxu0
          %v8112 = vadd.f32 %v8064, %v8111
          %v8113 = vpop.f32.mrf.mxu0
          %v8114 = vpop.f32.mrf.mxu0
          %v8115 = vpop.f32.mrf.mxu0
          %8116 = vdwg.mxu0
          %8117 = vmatprep.subr.bf16.mxu0 0
          %8118 = vmatpush1.bf16.msra.mxu0 %v7644
          %8119 = vmatprep.subr.bf16.mxu0 0
          %8120 = vmatpush1.bf16.msra.mxu0 %v7643
          %8121 = vmatprep.subr.bf16.mxu0 0
          %8122 = vmatpush1.bf16.msra.mxu0 %v7642
          %8123 = vmatprep.subr.bf16.mxu0 0
          %8124 = vmatpush1.bf16.msra.mxu0 %v7641
          %8125 = vmatprep.subr.bf16.mxu0 0
          %8126 = vmatpush1.bf16.msra.mxu0 %v7640
          %8127 = vmatprep.subr.bf16.mxu0 0
          %8128 = vmatpush1.bf16.msra.mxu0 %v7639
          %8129 = vmatprep.subr.bf16.mxu0 0
          %8130 = vmatpush1.bf16.msra.mxu0 %v7638
          %8131 = vmatprep.subr.bf16.mxu0 0
          %8132 = vmatpush1.bf16.msra.mxu0 %v7637
          %8133 = vmatprep.subr.bf16.mxu0 0
          %8134 = vmatpush2.bf16.msra.mxu0 %v7652
          %8135 = vmatprep.subr.bf16.mxu0 0
          %8136 = vmatpush2.bf16.msra.mxu0 %v7651
          %8137 = vmatprep.subr.bf16.mxu0 0
          %8138 = vmatpush2.bf16.msra.mxu0 %v7650
          %8139 = vmatprep.subr.bf16.mxu0 0
          %8140 = vmatpush2.bf16.msra.mxu0 %v7649
          %8141 = vmatprep.subr.bf16.mxu0 0
          %8142 = vmatpush2.bf16.msra.mxu0 %v7648
          %8143 = vmatprep.subr.bf16.mxu0 0
          %8144 = vmatpush2.bf16.msra.mxu0 %v7647
          %8145 = vmatprep.subr.bf16.mxu0 0
          %8146 = vmatpush2.bf16.msra.mxu0 %v7646
          %8147 = vmatprep.subr.bf16.mxu0 0
          %8148 = vmatpush2.bf16.msra.mxu0 %v7645
          %8149 = vmatprep.mubr.bf16.mxu0 %v6359
          %8150 = vmatmul.mubr.bf16.gmra.mxu0 %v6358
          %v8151 = vpop.f32.mrf.mxu0
          %v8152 = vadd.f32 %v8104, %v8151
          %v8153 = vpop.f32.mrf.mxu0
          %v8154 = vpop.f32.mrf.mxu0
          %v8155 = vadd.f32 %v8107, %v8154
          %v8156 = vpop.f32.mrf.mxu0
          %8157 = vmatprep.mubr.bf16.mxu0 %v6375
          %8158 = vmatmul.mubr.bf16.gmra.mxu0 %v6374
          %v8159 = vpop.f32.mrf.mxu0
          %v8160 = vadd.f32 %v8112, %v8159
          %v8161 = vpop.f32.mrf.mxu0
          %v8162 = vpop.f32.mrf.mxu0
          %v8163 = vpop.f32.mrf.mxu0
          %8164 = vdwg.mxu0
          %v8165 = vmax.f32 %v8152, 0.0
          %v8166 = vmax.f32 %v8155, 0.0
          %v8167 = vmax.f32 %v8160, 0.0
          %v8168 = vld [vmem:[%s11] sm:$0xf]
          %v8169 = vld [vmem:[%s11 + $0x4] sm:$0xf]
          %v8170 = vld [vmem:[%s11 + $0x8] sm:$0xf]
          %v8171 = vld [vmem:[%s11 + $0xc] sm:$0xf]
          %v8172 = vld [vmem:[%s11 + $0x10] sm:$0xf]
          %v8173 = vld [vmem:[%s11 + $0x14] sm:$0xf]
          %v8174 = vld [vmem:[%s11 + $0x18] sm:$0xf]
          %v8175 = vld [vmem:[%s11 + $0x1c] sm:$0xf]
          %v8176 = vld [vmem:[%s11 + $0x20] sm:$0xf]
          %v8177 = vld [vmem:[%s11 + $0x24] sm:$0xf]
          %v8178 = vld [vmem:[%s11 + $0x28] sm:$0xf]
          %v8179 = vld [vmem:[%s11 + $0x2c] sm:$0xf]
          %v8180 = vld [vmem:[%s11 + $0x30] sm:$0xf]
          %v8181 = vld [vmem:[%s11 + $0x34] sm:$0xf]
          %v8182 = vld [vmem:[%s11 + $0x38] sm:$0xf]
          %v8183 = vld [vmem:[%s11 + $0x3c] sm:$0xf]
          %v8184 = vld [vmem:[%s11 + $0x40] sm:$0xf]
          %v8185 = vld [vmem:[%s11 + $0x44] sm:$0xf]
          %v8186 = vld [vmem:[%s11 + $0x48] sm:$0xf]
          %v8187 = vld [vmem:[%s11 + $0x4c] sm:$0xf]
          %v8188 = vld [vmem:[%s11 + $0x50] sm:$0xf]
          %v8189 = vld [vmem:[%s11 + $0x54] sm:$0xf]
          %v8190 = vld [vmem:[%s11 + $0x58] sm:$0xf]
          %v8191 = vld [vmem:[%s11 + $0x5c] sm:$0xf]
          %v8192 = vld [vmem:[%s11 + $0x60] sm:$0xf]
          %v8193 = vld [vmem:[%s11 + $0x64] sm:$0xf]
          %v8194 = vld [vmem:[%s11 + $0x68] sm:$0xf]
          %v8195 = vld [vmem:[%s11 + $0x6c] sm:$0xf]
          %v8196 = vld [vmem:[%s11 + $0x70] sm:$0xf]
          %v8197 = vld [vmem:[%s11 + $0x74] sm:$0xf]
          %v8198 = vld [vmem:[%s11 + $0x78] sm:$0xf]
          %v8199 = vld [vmem:[%s11 + $0x7c] sm:$0xf]
          %v8200 = vld [vmem:[%s11 + $0x80] sm:$0xf]
          %v8201 = vld [vmem:[%s11 + $0x84] sm:$0xf]
          %v8202 = vld [vmem:[%s11 + $0x88] sm:$0xf]
          %v8203 = vld [vmem:[%s11 + $0x8c] sm:$0xf]
          %v8204 = vld [vmem:[%s11 + $0x90] sm:$0xf]
          %v8205 = vld [vmem:[%s11 + $0x94] sm:$0xf]
          %v8206 = vld [vmem:[%s11 + $0x98] sm:$0xf]
          %v8207 = vld [vmem:[%s11 + $0x9c] sm:$0xf]
          %v8208 = vld [vmem:[%s11 + $0xa0] sm:$0xf]
          %v8209 = vld [vmem:[%s11 + $0xa4] sm:$0xf]
          %v8210 = vld [vmem:[%s11 + $0xa8] sm:$0xf]
          %v8211 = vld [vmem:[%s11 + $0xac] sm:$0xf]
          %v8212 = vld [vmem:[%s11 + $0xb0] sm:$0xf]
          %v8213 = vld [vmem:[%s11 + $0xb4] sm:$0xf]
          %v8214 = vld [vmem:[%s11 + $0xb8] sm:$0xf]
          %v8215 = vld [vmem:[%s11 + $0xbc] sm:$0xf]
          %v8216 = vld [vmem:[%s11 + $0xc0] sm:$0xf]
          %v8217 = vld [vmem:[%s11 + $0xc4] sm:$0xf]
          %v8218 = vld [vmem:[%s11 + $0xc8] sm:$0xf]
          %v8219 = vld [vmem:[%s11 + $0xcc] sm:$0xf]
          %v8220 = vld [vmem:[%s11 + $0xd0] sm:$0xf]
          %v8221 = vld [vmem:[%s11 + $0xd4] sm:$0xf]
          %v8222 = vld [vmem:[%s11 + $0xd8] sm:$0xf]
          %v8223 = vld [vmem:[%s11 + $0xdc] sm:$0xf]
          %v8224 = vld [vmem:[%s11 + $0xe0] sm:$0xf]
          %v8225 = vld [vmem:[%s11 + $0xe4] sm:$0xf]
          %v8226 = vld [vmem:[%s11 + $0xe8] sm:$0xf]
          %v8227 = vld [vmem:[%s11 + $0xec] sm:$0xf]
          %v8228 = vld [vmem:[%s11 + $0xf0] sm:$0xf]
          %v8229 = vld [vmem:[%s11 + $0xf4] sm:$0xf]
          %v8230 = vld [vmem:[%s11 + $0xf8] sm:$0xf]
          %v8231 = vld [vmem:[%s11 + $0xfc] sm:$0xf]
          %v8232 = vld [vmem:[%s11 + $0x100] sm:$0xf]
          %v8233 = vld [vmem:[%s11 + $0x104] sm:$0xf]
          %v8234 = vld [vmem:[%s11 + $0x108] sm:$0xf]
          %v8235 = vld [vmem:[%s11 + $0x10c] sm:$0xf]
          %v8236 = vld [vmem:[%s11 + $0x110] sm:$0xf]
          %v8237 = vld [vmem:[%s11 + $0x114] sm:$0xf]
          %v8238 = vld [vmem:[%s11 + $0x118] sm:$0xf]
          %v8239 = vld [vmem:[%s11 + $0x11c] sm:$0xf]
          %v8240 = vld [vmem:[%s11 + $0x120] sm:$0xf]
          %v8241 = vld [vmem:[%s11 + $0x124] sm:$0xf]
          %v8242 = vld [vmem:[%s11 + $0x128] sm:$0xf]
          %v8243 = vld [vmem:[%s11 + $0x12c] sm:$0xf]
          %v8244 = vld [vmem:[%s11 + $0x130] sm:$0xf]
          %v8245 = vld [vmem:[%s11 + $0x134] sm:$0xf]
          %v8246 = vld [vmem:[%s11 + $0x138] sm:$0xf]
          %v8247 = vld [vmem:[%s11 + $0x13c] sm:$0xf]
          %v8248 = vld [vmem:[%s11 + $0x140] sm:$0xf]
          %v8249 = vld [vmem:[%s11 + $0x144] sm:$0xf]
          %v8250 = vld [vmem:[%s11 + $0x148] sm:$0xf]
          %v8251 = vld [vmem:[%s11 + $0x14c] sm:$0xf]
          %v8252 = vld [vmem:[%s11 + $0x150] sm:$0xf]
          %v8253 = vld [vmem:[%s11 + $0x154] sm:$0xf]
          %v8254 = vld [vmem:[%s11 + $0x158] sm:$0xf]
          %v8255 = vld [vmem:[%s11 + $0x15c] sm:$0xf]
          %v8256 = vld [vmem:[%s11 + $0x160] sm:$0xf]
          %v8257 = vld [vmem:[%s11 + $0x164] sm:$0xf]
          %v8258 = vld [vmem:[%s11 + $0x168] sm:$0xf]
          %v8259 = vld [vmem:[%s11 + $0x16c] sm:$0xf]
          %v8260 = vld [vmem:[%s11 + $0x170] sm:$0xf]
          %v8261 = vld [vmem:[%s11 + $0x174] sm:$0xf]
          %v8262 = vld [vmem:[%s11 + $0x178] sm:$0xf]
          %v8263 = vld [vmem:[%s11 + $0x17c] sm:$0xf]
          %v8264 = vld [vmem:[%s11 + $0x180] sm:$0xf]
          %v8265 = vld [vmem:[%s11 + $0x184] sm:$0xf]
          %v8266 = vld [vmem:[%s11 + $0x188] sm:$0xf]
          %v8267 = vld [vmem:[%s11 + $0x18c] sm:$0xf]
          %v8268 = vld [vmem:[%s11 + $0x190] sm:$0xf]
          %v8269 = vld [vmem:[%s11 + $0x194] sm:$0xf]
          %v8270 = vld [vmem:[%s11 + $0x198] sm:$0xf]
          %v8271 = vld [vmem:[%s11 + $0x19c] sm:$0xf]
          %v8272 = vld [vmem:[%s11 + $0x1a0] sm:$0xf]
          %v8273 = vld [vmem:[%s11 + $0x1a4] sm:$0xf]
          %v8274 = vld [vmem:[%s11 + $0x1a8] sm:$0xf]
          %v8275 = vld [vmem:[%s11 + $0x1ac] sm:$0xf]
          %v8276 = vld [vmem:[%s11 + $0x1b0] sm:$0xf]
          %v8277 = vld [vmem:[%s11 + $0x1b4] sm:$0xf]
          %v8278 = vld [vmem:[%s11 + $0x1b8] sm:$0xf]
          %v8279 = vld [vmem:[%s11 + $0x1bc] sm:$0xf]
          %v8280 = vld [vmem:[%s11 + $0x1c0] sm:$0xf]
          %v8281 = vld [vmem:[%s11 + $0x1c4] sm:$0xf]
          %v8282 = vld [vmem:[%s11 + $0x1c8] sm:$0xf]
          %v8283 = vld [vmem:[%s11 + $0x1cc] sm:$0xf]
          %v8284 = vld [vmem:[%s11 + $0x1d0] sm:$0xf]
          %v8285 = vld [vmem:[%s11 + $0x1d4] sm:$0xf]
          %v8286 = vld [vmem:[%s11 + $0x1d8] sm:$0xf]
          %v8287 = vld [vmem:[%s11 + $0x1dc] sm:$0xf]
          %v8288 = vld [vmem:[%s11 + $0x1e0] sm:$0xf]
          %v8289 = vld [vmem:[%s11 + $0x1e4] sm:$0xf]
          %v8290 = vld [vmem:[%s11 + $0x1e8] sm:$0xf]
          %v8291 = vld [vmem:[%s11 + $0x1ec] sm:$0xf]
          %v8292 = vld [vmem:[%s11 + $0x1f0] sm:$0xf]
          %v8293 = vld [vmem:[%s11 + $0x1f4] sm:$0xf]
          %v8294 = vld [vmem:[%s11 + $0x1f8] sm:$0xf]
          %v8295 = vld [vmem:[%s11 + $0x1fc] sm:$0xf]
          %v8296 = vld [vmem:[%s11 + $0x200] sm:$0xf]
          %v8297 = vld [vmem:[%s11 + $0x204] sm:$0xf]
          %v8298 = vld [vmem:[%s11 + $0x208] sm:$0xf]
          %v8299 = vld [vmem:[%s11 + $0x20c] sm:$0xf]
          %v8300 = vld [vmem:[%s11 + $0x210] sm:$0xf]
          %v8301 = vld [vmem:[%s11 + $0x214] sm:$0xf]
          %v8302 = vld [vmem:[%s11 + $0x218] sm:$0xf]
          %v8303 = vld [vmem:[%s11 + $0x21c] sm:$0xf]
          %v8304 = vld [vmem:[%s11 + $0x220] sm:$0xf]
          %v8305 = vld [vmem:[%s11 + $0x224] sm:$0xf]
          %v8306 = vld [vmem:[%s11 + $0x228] sm:$0xf]
          %v8307 = vld [vmem:[%s11 + $0x22c] sm:$0xf]
          %v8308 = vld [vmem:[%s11 + $0x230] sm:$0xf]
          %v8309 = vld [vmem:[%s11 + $0x234] sm:$0xf]
          %v8310 = vld [vmem:[%s11 + $0x238] sm:$0xf]
          %v8311 = vld [vmem:[%s11 + $0x23c] sm:$0xf]
          %v8312 = vld [vmem:[%s11 + $0x240] sm:$0xf]
          %v8313 = vld [vmem:[%s11 + $0x244] sm:$0xf]
          %v8314 = vld [vmem:[%s11 + $0x248] sm:$0xf]
          %v8315 = vld [vmem:[%s11 + $0x24c] sm:$0xf]
          %v8316 = vld [vmem:[%s11 + $0x250] sm:$0xf]
          %v8317 = vld [vmem:[%s11 + $0x254] sm:$0xf]
          %v8318 = vld [vmem:[%s11 + $0x258] sm:$0xf]
          %v8319 = vld [vmem:[%s11 + $0x25c] sm:$0xf]
          %v8320 = vld [vmem:[%s11 + $0x260] sm:$0xf]
          %v8321 = vld [vmem:[%s11 + $0x264] sm:$0xf]
          %v8322 = vld [vmem:[%s11 + $0x268] sm:$0xf]
          %v8323 = vld [vmem:[%s11 + $0x26c] sm:$0xf]
          %v8324 = vld [vmem:[%s11 + $0x270] sm:$0xf]
          %v8325 = vld [vmem:[%s11 + $0x274] sm:$0xf]
          %v8326 = vld [vmem:[%s11 + $0x278] sm:$0xf]
          %v8327 = vld [vmem:[%s11 + $0x27c] sm:$0xf]
          %v8328 = vld [vmem:[%s11 + $0x280] sm:$0xf]
          %v8329 = vld [vmem:[%s11 + $0x284] sm:$0xf]
          %v8330 = vld [vmem:[%s11 + $0x288] sm:$0xf]
          %v8331 = vld [vmem:[%s11 + $0x28c] sm:$0xf]
          %v8332 = vld [vmem:[%s11 + $0x290] sm:$0xf]
          %v8333 = vld [vmem:[%s11 + $0x294] sm:$0xf]
          %v8334 = vld [vmem:[%s11 + $0x298] sm:$0xf]
          %v8335 = vld [vmem:[%s11 + $0x29c] sm:$0xf]
          %v8336 = vld [vmem:[%s11 + $0x2a0] sm:$0xf]
          %v8337 = vld [vmem:[%s11 + $0x2a4] sm:$0xf]
          %v8338 = vld [vmem:[%s11 + $0x2a8] sm:$0xf]
          %v8339 = vld [vmem:[%s11 + $0x2ac] sm:$0xf]
          %v8340 = vld [vmem:[%s11 + $0x2b0] sm:$0xf]
          %v8341 = vld [vmem:[%s11 + $0x2b4] sm:$0xf]
          %v8342 = vld [vmem:[%s11 + $0x2b8] sm:$0xf]
          %v8343 = vld [vmem:[%s11 + $0x2bc] sm:$0xf]
          %v8344 = vld [vmem:[%s11 + $0x2c0] sm:$0xf]
          %v8345 = vld [vmem:[%s11 + $0x2c4] sm:$0xf]
          %v8346 = vld [vmem:[%s11 + $0x2c8] sm:$0xf]
          %v8347 = vld [vmem:[%s11 + $0x2cc] sm:$0xf]
          %v8348 = vld [vmem:[%s11 + $0x2d0] sm:$0xf]
          %v8349 = vld [vmem:[%s11 + $0x2d4] sm:$0xf]
          %v8350 = vld [vmem:[%s11 + $0x2d8] sm:$0xf]
          %v8351 = vld [vmem:[%s11 + $0x2dc] sm:$0xf]
          %v8352 = vld [vmem:[%s11 + $0x2e0] sm:$0xf]
          %v8353 = vld [vmem:[%s11 + $0x2e4] sm:$0xf]
          %v8354 = vld [vmem:[%s11 + $0x2e8] sm:$0xf]
          %v8355 = vld [vmem:[%s11 + $0x2ec] sm:$0xf]
          %v8356 = vld [vmem:[%s11 + $0x2f0] sm:$0xf]
          %v8357 = vld [vmem:[%s11 + $0x2f4] sm:$0xf]
          %v8358 = vld [vmem:[%s11 + $0x2f8] sm:$0xf]
          %v8359 = vld [vmem:[%s11 + $0x2fc] sm:$0xf]
          %v8360 = vld [vmem:[%s11 + $0x300] sm:$0xf]
          %v8361 = vld [vmem:[%s11 + $0x304] sm:$0xf]
          %v8362 = vld [vmem:[%s11 + $0x308] sm:$0xf]
          %v8363 = vld [vmem:[%s11 + $0x30c] sm:$0xf]
          %v8364 = vld [vmem:[%s11 + $0x310] sm:$0xf]
          %v8365 = vld [vmem:[%s11 + $0x314] sm:$0xf]
          %v8366 = vld [vmem:[%s11 + $0x318] sm:$0xf]
          %v8367 = vld [vmem:[%s11 + $0x31c] sm:$0xf]
          %v8368 = vld [vmem:[%s11 + $0x320] sm:$0xf]
          %v8369 = vld [vmem:[%s11 + $0x324] sm:$0xf]
          %v8370 = vld [vmem:[%s11 + $0x328] sm:$0xf]
          %v8371 = vld [vmem:[%s11 + $0x32c] sm:$0xf]
          %v8372 = vld [vmem:[%s11 + $0x330] sm:$0xf]
          %v8373 = vld [vmem:[%s11 + $0x334] sm:$0xf]
          %v8374 = vld [vmem:[%s11 + $0x338] sm:$0xf]
          %v8375 = vld [vmem:[%s11 + $0x33c] sm:$0xf]
          %v8376 = vld [vmem:[%s11 + $0x340] sm:$0xf]
          %v8377 = vld [vmem:[%s11 + $0x344] sm:$0xf]
          %v8378 = vld [vmem:[%s11 + $0x348] sm:$0xf]
          %v8379 = vld [vmem:[%s11 + $0x34c] sm:$0xf]
          %v8380 = vld [vmem:[%s11 + $0x350] sm:$0xf]
          %v8381 = vld [vmem:[%s11 + $0x354] sm:$0xf]
          %v8382 = vld [vmem:[%s11 + $0x358] sm:$0xf]
          %v8383 = vld [vmem:[%s11 + $0x35c] sm:$0xf]
          %v8384 = vld [vmem:[%s11 + $0x360] sm:$0xf]
          %v8385 = vld [vmem:[%s11 + $0x364] sm:$0xf]
          %v8386 = vld [vmem:[%s11 + $0x368] sm:$0xf]
          %v8387 = vld [vmem:[%s11 + $0x36c] sm:$0xf]
          %v8388 = vld [vmem:[%s11 + $0x370] sm:$0xf]
          %v8389 = vld [vmem:[%s11 + $0x374] sm:$0xf]
          %v8390 = vld [vmem:[%s11 + $0x378] sm:$0xf]
          %v8391 = vld [vmem:[%s11 + $0x37c] sm:$0xf]
          %v8392 = vld [vmem:[%s11 + $0x380] sm:$0xf]
          %v8393 = vld [vmem:[%s11 + $0x384] sm:$0xf]
          %v8394 = vld [vmem:[%s11 + $0x388] sm:$0xf]
          %v8395 = vld [vmem:[%s11 + $0x38c] sm:$0xf]
          %v8396 = vld [vmem:[%s11 + $0x390] sm:$0xf]
          %v8397 = vld [vmem:[%s11 + $0x394] sm:$0xf]
          %v8398 = vld [vmem:[%s11 + $0x398] sm:$0xf]
          %v8399 = vld [vmem:[%s11 + $0x39c] sm:$0xf]
          %v8400 = vld [vmem:[%s11 + $0x3a0] sm:$0xf]
          %v8401 = vld [vmem:[%s11 + $0x3a4] sm:$0xf]
          %v8402 = vld [vmem:[%s11 + $0x3a8] sm:$0xf]
          %v8403 = vld [vmem:[%s11 + $0x3ac] sm:$0xf]
          %v8404 = vld [vmem:[%s11 + $0x3b0] sm:$0xf]
          %v8405 = vld [vmem:[%s11 + $0x3b4] sm:$0xf]
          %v8406 = vld [vmem:[%s11 + $0x3b8] sm:$0xf]
          %v8407 = vld [vmem:[%s11 + $0x3bc] sm:$0xf]
          %v8408 = vld [vmem:[%s12] sm:$0x1]
          %v8410 = vlaneseq
          %v8411 = vshrl.u32 %v8410, 7
          %v8412 = vsub.s32 0, %v8411
          %v8413 = vrot.slane %v8408, %v8412
          %v8655 = vunpack.c.l.b16 %v8168
          %v8656 = vunpack.c.l.b16 %v8169
          %v8657 = vunpack.c.l.b16 %v8170
          %v8658 = vunpack.c.l.b16 %v8171
          %v8659 = vunpack.c.l.b16 %v8172
          %v8660 = vunpack.c.l.b16 %v8173
          %v8661 = vunpack.c.l.b16 %v8174
          %v8662 = vunpack.c.l.b16 %v8175
          %v8663 = vunpack.c.l.b16 %v8176
          %v8664 = vunpack.c.l.b16 %v8177
          %v8665 = vunpack.c.l.b16 %v8178
          %v8666 = vunpack.c.l.b16 %v8179
          %v8667 = vunpack.c.l.b16 %v8180
          %v8668 = vunpack.c.l.b16 %v8181
          %v8669 = vunpack.c.l.b16 %v8182
          %v8670 = vunpack.c.l.b16 %v8183
          %v8671 = vunpack.c.l.b16 %v8184
          %v8672 = vunpack.c.l.b16 %v8185
          %v8673 = vunpack.c.l.b16 %v8186
          %v8674 = vunpack.c.l.b16 %v8187
          %v8675 = vunpack.c.l.b16 %v8188
          %v8676 = vunpack.c.l.b16 %v8189
          %v8677 = vunpack.c.l.b16 %v8190
          %v8678 = vunpack.c.l.b16 %v8191
          %v8679 = vunpack.c.l.b16 %v8192
          %v8680 = vunpack.c.l.b16 %v8193
          %v8681 = vunpack.c.l.b16 %v8194
          %v8682 = vunpack.c.l.b16 %v8195
          %v8683 = vunpack.c.l.b16 %v8196
          %v8684 = vunpack.c.l.b16 %v8197
          %v8685 = vunpack.c.l.b16 %v8198
          %v8686 = vunpack.c.l.b16 %v8199
          %v8687 = vunpack.c.l.b16 %v8200
          %v8688 = vunpack.c.l.b16 %v8201
          %v8689 = vunpack.c.l.b16 %v8202
          %v8690 = vunpack.c.l.b16 %v8203
          %v8691 = vunpack.c.l.b16 %v8204
          %v8692 = vunpack.c.l.b16 %v8205
          %v8693 = vunpack.c.l.b16 %v8206
          %v8694 = vunpack.c.l.b16 %v8207
          %v8695 = vunpack.c.l.b16 %v8208
          %v8696 = vunpack.c.l.b16 %v8209
          %v8697 = vunpack.c.l.b16 %v8210
          %v8698 = vunpack.c.l.b16 %v8211
          %v8699 = vunpack.c.l.b16 %v8212
          %v8700 = vunpack.c.l.b16 %v8213
          %v8701 = vunpack.c.l.b16 %v8214
          %v8702 = vunpack.c.l.b16 %v8215
          %v8703 = vunpack.c.l.b16 %v8216
          %v8704 = vunpack.c.l.b16 %v8217
          %v8705 = vunpack.c.l.b16 %v8218
          %v8706 = vunpack.c.l.b16 %v8219
          %v8707 = vunpack.c.l.b16 %v8220
          %v8708 = vunpack.c.l.b16 %v8221
          %v8709 = vunpack.c.l.b16 %v8222
          %v8710 = vunpack.c.l.b16 %v8223
          %v8711 = vunpack.c.l.b16 %v8224
          %v8712 = vunpack.c.l.b16 %v8225
          %v8713 = vunpack.c.l.b16 %v8226
          %v8714 = vunpack.c.l.b16 %v8227
          %v8715 = vunpack.c.l.b16 %v8228
          %v8716 = vunpack.c.l.b16 %v8229
          %v8717 = vunpack.c.l.b16 %v8230
          %v8718 = vunpack.c.l.b16 %v8231
          %v8719 = vunpack.c.l.b16 %v8232
          %v8720 = vunpack.c.l.b16 %v8233
          %v8721 = vunpack.c.l.b16 %v8234
          %v8722 = vunpack.c.l.b16 %v8235
          %v8723 = vunpack.c.l.b16 %v8236
          %v8724 = vunpack.c.l.b16 %v8237
          %v8725 = vunpack.c.l.b16 %v8238
          %v8726 = vunpack.c.l.b16 %v8239
          %v8727 = vunpack.c.l.b16 %v8240
          %v8728 = vunpack.c.l.b16 %v8241
          %v8729 = vunpack.c.l.b16 %v8242
          %v8730 = vunpack.c.l.b16 %v8243
          %v8731 = vunpack.c.l.b16 %v8244
          %v8732 = vunpack.c.l.b16 %v8245
          %v8733 = vunpack.c.l.b16 %v8246
          %v8734 = vunpack.c.l.b16 %v8247
          %v8735 = vunpack.c.l.b16 %v8248
          %v8736 = vunpack.c.l.b16 %v8249
          %v8737 = vunpack.c.l.b16 %v8250
          %v8738 = vunpack.c.l.b16 %v8251
          %v8739 = vunpack.c.l.b16 %v8252
          %v8740 = vunpack.c.l.b16 %v8253
          %v8741 = vunpack.c.l.b16 %v8254
          %v8742 = vunpack.c.l.b16 %v8255
          %v8743 = vunpack.c.l.b16 %v8256
          %v8744 = vunpack.c.l.b16 %v8257
          %v8745 = vunpack.c.l.b16 %v8258
          %v8746 = vunpack.c.l.b16 %v8259
          %v8747 = vunpack.c.l.b16 %v8260
          %v8748 = vunpack.c.l.b16 %v8261
          %v8749 = vunpack.c.l.b16 %v8262
          %v8750 = vunpack.c.l.b16 %v8263
          %v8751 = vunpack.c.l.b16 %v8264
          %v8752 = vunpack.c.l.b16 %v8265
          %v8753 = vunpack.c.l.b16 %v8266
          %v8754 = vunpack.c.l.b16 %v8267
          %v8755 = vunpack.c.l.b16 %v8268
          %v8756 = vunpack.c.l.b16 %v8269
          %v8757 = vunpack.c.l.b16 %v8270
          %v8758 = vunpack.c.l.b16 %v8271
          %v8759 = vunpack.c.l.b16 %v8272
          %v8760 = vunpack.c.l.b16 %v8273
          %v8761 = vunpack.c.l.b16 %v8274
          %v8762 = vunpack.c.l.b16 %v8275
          %v8763 = vunpack.c.l.b16 %v8276
          %v8764 = vunpack.c.l.b16 %v8277
          %v8765 = vunpack.c.l.b16 %v8278
          %v8766 = vunpack.c.l.b16 %v8279
          %v8767 = vunpack.c.l.b16 %v8280
          %v8768 = vunpack.c.l.b16 %v8281
          %v8769 = vunpack.c.l.b16 %v8282
          %v8770 = vunpack.c.l.b16 %v8283
          %v8771 = vunpack.c.l.b16 %v8284
          %v8772 = vunpack.c.l.b16 %v8285
          %v8773 = vunpack.c.l.b16 %v8286
          %v8774 = vunpack.c.l.b16 %v8287
          %v8775 = vunpack.c.l.b16 %v8288
          %v8776 = vunpack.c.l.b16 %v8289
          %v8777 = vunpack.c.l.b16 %v8290
          %v8778 = vunpack.c.l.b16 %v8291
          %v8779 = vunpack.c.l.b16 %v8292
          %v8780 = vunpack.c.l.b16 %v8293
          %v8781 = vunpack.c.l.b16 %v8294
          %v8782 = vunpack.c.l.b16 %v8295
          %v8783 = vunpack.c.l.b16 %v8296
          %v8784 = vunpack.c.l.b16 %v8297
          %v8785 = vunpack.c.l.b16 %v8298
          %v8786 = vunpack.c.l.b16 %v8299
          %v8787 = vunpack.c.l.b16 %v8300
          %v8788 = vunpack.c.l.b16 %v8301
          %v8789 = vunpack.c.l.b16 %v8302
          %v8790 = vunpack.c.l.b16 %v8303
          %v8791 = vunpack.c.l.b16 %v8304
          %v8792 = vunpack.c.l.b16 %v8305
          %v8793 = vunpack.c.l.b16 %v8306
          %v8794 = vunpack.c.l.b16 %v8307
          %v8795 = vunpack.c.l.b16 %v8308
          %v8796 = vunpack.c.l.b16 %v8309
          %v8797 = vunpack.c.l.b16 %v8310
          %v8798 = vunpack.c.l.b16 %v8311
          %v8799 = vunpack.c.l.b16 %v8312
          %v8800 = vunpack.c.l.b16 %v8313
          %v8801 = vunpack.c.l.b16 %v8314
          %v8802 = vunpack.c.l.b16 %v8315
          %v8803 = vunpack.c.l.b16 %v8316
          %v8804 = vunpack.c.l.b16 %v8317
          %v8805 = vunpack.c.l.b16 %v8318
          %v8806 = vunpack.c.l.b16 %v8319
          %v8807 = vunpack.c.l.b16 %v8320
          %v8808 = vunpack.c.l.b16 %v8321
          %v8809 = vunpack.c.l.b16 %v8322
          %v8810 = vunpack.c.l.b16 %v8323
          %v8811 = vunpack.c.l.b16 %v8324
          %v8812 = vunpack.c.l.b16 %v8325
          %v8813 = vunpack.c.l.b16 %v8326
          %v8814 = vunpack.c.l.b16 %v8327
          %v8815 = vunpack.c.l.b16 %v8328
          %v8816 = vunpack.c.l.b16 %v8329
          %v8817 = vunpack.c.l.b16 %v8330
          %v8818 = vunpack.c.l.b16 %v8331
          %v8819 = vunpack.c.l.b16 %v8332
          %v8820 = vunpack.c.l.b16 %v8333
          %v8821 = vunpack.c.l.b16 %v8334
          %v8822 = vunpack.c.l.b16 %v8335
          %v8823 = vunpack.c.l.b16 %v8336
          %v8824 = vunpack.c.l.b16 %v8337
          %v8825 = vunpack.c.l.b16 %v8338
          %v8826 = vunpack.c.l.b16 %v8339
          %v8827 = vunpack.c.l.b16 %v8340
          %v8828 = vunpack.c.l.b16 %v8341
          %v8829 = vunpack.c.l.b16 %v8342
          %v8830 = vunpack.c.l.b16 %v8343
          %v8831 = vunpack.c.l.b16 %v8344
          %v8832 = vunpack.c.l.b16 %v8345
          %v8833 = vunpack.c.l.b16 %v8346
          %v8834 = vunpack.c.l.b16 %v8347
          %v8835 = vunpack.c.l.b16 %v8348
          %v8836 = vunpack.c.l.b16 %v8349
          %v8837 = vunpack.c.l.b16 %v8350
          %v8838 = vunpack.c.l.b16 %v8351
          %v8839 = vunpack.c.l.b16 %v8352
          %v8840 = vunpack.c.l.b16 %v8353
          %v8841 = vunpack.c.l.b16 %v8354
          %v8842 = vunpack.c.l.b16 %v8355
          %v8843 = vunpack.c.l.b16 %v8356
          %v8844 = vunpack.c.l.b16 %v8357
          %v8845 = vunpack.c.l.b16 %v8358
          %v8846 = vunpack.c.l.b16 %v8359
          %v8847 = vunpack.c.l.b16 %v8360
          %v8848 = vunpack.c.l.b16 %v8361
          %v8849 = vunpack.c.l.b16 %v8362
          %v8850 = vunpack.c.l.b16 %v8363
          %v8851 = vunpack.c.l.b16 %v8364
          %v8852 = vunpack.c.l.b16 %v8365
          %v8853 = vunpack.c.l.b16 %v8366
          %v8854 = vunpack.c.l.b16 %v8367
          %v8855 = vunpack.c.l.b16 %v8368
          %v8856 = vunpack.c.l.b16 %v8369
          %v8857 = vunpack.c.l.b16 %v8370
          %v8858 = vunpack.c.l.b16 %v8371
          %v8859 = vunpack.c.l.b16 %v8372
          %v8860 = vunpack.c.l.b16 %v8373
          %v8861 = vunpack.c.l.b16 %v8374
          %v8862 = vunpack.c.l.b16 %v8375
          %v8863 = vunpack.c.l.b16 %v8376
          %v8864 = vunpack.c.l.b16 %v8377
          %v8865 = vunpack.c.l.b16 %v8378
          %v8866 = vunpack.c.l.b16 %v8379
          %v8867 = vunpack.c.l.b16 %v8380
          %v8868 = vunpack.c.l.b16 %v8381
          %v8869 = vunpack.c.l.b16 %v8382
          %v8870 = vunpack.c.l.b16 %v8383
          %v8871 = vunpack.c.l.b16 %v8384
          %v8872 = vunpack.c.l.b16 %v8385
          %v8873 = vunpack.c.l.b16 %v8386
          %v8874 = vunpack.c.l.b16 %v8387
          %v8875 = vunpack.c.l.b16 %v8388
          %v8876 = vunpack.c.l.b16 %v8389
          %v8877 = vunpack.c.l.b16 %v8390
          %v8878 = vunpack.c.l.b16 %v8391
          %v8879 = vunpack.c.l.b16 %v8392
          %v8880 = vunpack.c.l.b16 %v8393
          %v8881 = vunpack.c.l.b16 %v8394
          %v8882 = vunpack.c.l.b16 %v8395
          %v8883 = vunpack.c.l.b16 %v8396
          %v8884 = vunpack.c.l.b16 %v8397
          %v8885 = vunpack.c.l.b16 %v8398
          %v8886 = vunpack.c.l.b16 %v8399
          %v8887 = vunpack.c.l.b16 %v8400
          %v8888 = vunpack.c.l.b16 %v8401
          %v8889 = vunpack.c.l.b16 %v8402
          %v8890 = vunpack.c.l.b16 %v8403
          %v8891 = vunpack.c.l.b16 %v8404
          %v8892 = vunpack.c.l.b16 %v8405
          %v8893 = vunpack.c.l.b16 %v8406
          %v8894 = vunpack.c.l.b16 %v8407
          %v8895 = vpack.c.b16 %v8656, %v8655
          %v8896 = vpack.c.b16 %v8658, %v8657
          %v8897 = vpack.c.b16 %v8660, %v8659
          %v8898 = vpack.c.b16 %v8662, %v8661
          %v8899 = vpack.c.b16 %v8664, %v8663
          %v8900 = vpack.c.b16 %v8666, %v8665
          %v8901 = vpack.c.b16 %v8668, %v8667
          %v8902 = vpack.c.b16 %v8670, %v8669
          %v8903 = vpack.c.b16 %v8672, %v8671
          %v8904 = vpack.c.b16 %v8674, %v8673
          %v8905 = vpack.c.b16 %v8676, %v8675
          %v8906 = vpack.c.b16 %v8678, %v8677
          %v8907 = vpack.c.b16 %v8680, %v8679
          %v8908 = vpack.c.b16 %v8682, %v8681
          %v8909 = vpack.c.b16 %v8684, %v8683
          %v8910 = vpack.c.b16 %v8686, %v8685
          %v8911 = vpack.c.b16 %v8688, %v8687
          %v8912 = vpack.c.b16 %v8690, %v8689
          %v8913 = vpack.c.b16 %v8692, %v8691
          %v8914 = vpack.c.b16 %v8694, %v8693
          %v8915 = vpack.c.b16 %v8696, %v8695
          %v8916 = vpack.c.b16 %v8698, %v8697
          %v8917 = vpack.c.b16 %v8700, %v8699
          %v8918 = vpack.c.b16 %v8702, %v8701
          %v8919 = vpack.c.b16 %v8704, %v8703
          %v8920 = vpack.c.b16 %v8706, %v8705
          %v8921 = vpack.c.b16 %v8708, %v8707
          %v8922 = vpack.c.b16 %v8710, %v8709
          %v8923 = vpack.c.b16 %v8712, %v8711
          %v8924 = vpack.c.b16 %v8714, %v8713
          %v8925 = vpack.c.b16 %v8716, %v8715
          %v8926 = vpack.c.b16 %v8718, %v8717
          %v8927 = vpack.c.b16 %v8720, %v8719
          %v8928 = vpack.c.b16 %v8722, %v8721
          %v8929 = vpack.c.b16 %v8724, %v8723
          %v8930 = vpack.c.b16 %v8726, %v8725
          %v8931 = vpack.c.b16 %v8728, %v8727
          %v8932 = vpack.c.b16 %v8730, %v8729
          %v8933 = vpack.c.b16 %v8732, %v8731
          %v8934 = vpack.c.b16 %v8734, %v8733
          %v8935 = vpack.c.b16 %v8736, %v8735
          %v8936 = vpack.c.b16 %v8738, %v8737
          %v8937 = vpack.c.b16 %v8740, %v8739
          %v8938 = vpack.c.b16 %v8742, %v8741
          %v8939 = vpack.c.b16 %v8744, %v8743
          %v8940 = vpack.c.b16 %v8746, %v8745
          %v8941 = vpack.c.b16 %v8748, %v8747
          %v8942 = vpack.c.b16 %v8750, %v8749
          %v8943 = vpack.c.b16 %v8752, %v8751
          %v8944 = vpack.c.b16 %v8754, %v8753
          %v8945 = vpack.c.b16 %v8756, %v8755
          %v8946 = vpack.c.b16 %v8758, %v8757
          %v8947 = vpack.c.b16 %v8760, %v8759
          %v8948 = vpack.c.b16 %v8762, %v8761
          %v8949 = vpack.c.b16 %v8764, %v8763
          %v8950 = vpack.c.b16 %v8766, %v8765
          %v8951 = vpack.c.b16 %v8768, %v8767
          %v8952 = vpack.c.b16 %v8770, %v8769
          %v8953 = vpack.c.b16 %v8772, %v8771
          %v8954 = vpack.c.b16 %v8774, %v8773
          %v8955 = vpack.c.b16 %v8776, %v8775
          %v8956 = vpack.c.b16 %v8778, %v8777
          %v8957 = vpack.c.b16 %v8780, %v8779
          %v8958 = vpack.c.b16 %v8782, %v8781
          %v8959 = vpack.c.b16 %v8784, %v8783
          %v8960 = vpack.c.b16 %v8786, %v8785
          %v8961 = vpack.c.b16 %v8788, %v8787
          %v8962 = vpack.c.b16 %v8790, %v8789
          %v8963 = vpack.c.b16 %v8792, %v8791
          %v8964 = vpack.c.b16 %v8794, %v8793
          %v8965 = vpack.c.b16 %v8796, %v8795
          %v8966 = vpack.c.b16 %v8798, %v8797
          %v8967 = vpack.c.b16 %v8800, %v8799
          %v8968 = vpack.c.b16 %v8802, %v8801
          %v8969 = vpack.c.b16 %v8804, %v8803
          %v8970 = vpack.c.b16 %v8806, %v8805
          %v8971 = vpack.c.b16 %v8808, %v8807
          %v8972 = vpack.c.b16 %v8810, %v8809
          %v8973 = vpack.c.b16 %v8812, %v8811
          %v8974 = vpack.c.b16 %v8814, %v8813
          %v8975 = vpack.c.b16 %v8816, %v8815
          %v8976 = vpack.c.b16 %v8818, %v8817
          %v8977 = vpack.c.b16 %v8820, %v8819
          %v8978 = vpack.c.b16 %v8822, %v8821
          %v8979 = vpack.c.b16 %v8824, %v8823
          %v8980 = vpack.c.b16 %v8826, %v8825
          %v8981 = vpack.c.b16 %v8828, %v8827
          %v8982 = vpack.c.b16 %v8830, %v8829
          %v8983 = vpack.c.b16 %v8832, %v8831
          %v8984 = vpack.c.b16 %v8834, %v8833
          %v8985 = vpack.c.b16 %v8836, %v8835
          %v8986 = vpack.c.b16 %v8838, %v8837
          %v8987 = vpack.c.b16 %v8840, %v8839
          %v8988 = vpack.c.b16 %v8842, %v8841
          %v8989 = vpack.c.b16 %v8844, %v8843
          %v8990 = vpack.c.b16 %v8846, %v8845
          %v8991 = vpack.c.b16 %v8848, %v8847
          %v8992 = vpack.c.b16 %v8850, %v8849
          %v8993 = vpack.c.b16 %v8852, %v8851
          %v8994 = vpack.c.b16 %v8854, %v8853
          %v8995 = vpack.c.b16 %v8856, %v8855
          %v8996 = vpack.c.b16 %v8858, %v8857
          %v8997 = vpack.c.b16 %v8860, %v8859
          %v8998 = vpack.c.b16 %v8862, %v8861
          %v8999 = vpack.c.b16 %v8864, %v8863
          %v9000 = vpack.c.b16 %v8866, %v8865
          %v9001 = vpack.c.b16 %v8868, %v8867
          %v9002 = vpack.c.b16 %v8870, %v8869
          %v9003 = vpack.c.b16 %v8872, %v8871
          %v9004 = vpack.c.b16 %v8874, %v8873
          %v9005 = vpack.c.b16 %v8876, %v8875
          %v9006 = vpack.c.b16 %v8878, %v8877
          %v9007 = vpack.c.b16 %v8880, %v8879
          %v9008 = vpack.c.b16 %v8882, %v8881
          %v9009 = vpack.c.b16 %v8884, %v8883
          %v9010 = vpack.c.b16 %v8886, %v8885
          %v9011 = vpack.c.b16 %v8888, %v8887
          %v9012 = vpack.c.b16 %v8890, %v8889
          %v9013 = vpack.c.b16 %v8892, %v8891
          %v9014 = vpack.c.b16 %v8894, %v8893
          %9135 = vmatprep.subr.bf16.mxu0 0
          %9136 = vmatpush1.bf16.msra.mxu0 %v8902
          %9137 = vmatprep.subr.bf16.mxu0 0
          %9138 = vmatpush1.bf16.msra.mxu0 %v8901
          %9139 = vmatprep.subr.bf16.mxu0 0
          %9140 = vmatpush1.bf16.msra.mxu0 %v8900
          %9141 = vmatprep.subr.bf16.mxu0 0
          %9142 = vmatpush1.bf16.msra.mxu0 %v8899
          %9143 = vmatprep.subr.bf16.mxu0 0
          %9144 = vmatpush1.bf16.msra.mxu0 %v8898
          %9145 = vmatprep.subr.bf16.mxu0 0
          %9146 = vmatpush1.bf16.msra.mxu0 %v8897
          %9147 = vmatprep.subr.bf16.mxu0 0
          %9148 = vmatpush1.bf16.msra.mxu0 %v8896
          %9149 = vmatprep.subr.bf16.mxu0 0
          %9150 = vmatpush1.bf16.msra.mxu0 %v8895
          %9151 = vmatprep.subr.bf16.mxu0 0
          %9152 = vmatpush2.bf16.msra.mxu0 %v8910
          %9153 = vmatprep.subr.bf16.mxu0 0
          %9154 = vmatpush2.bf16.msra.mxu0 %v8909
          %9155 = vmatprep.subr.bf16.mxu0 0
          %9156 = vmatpush2.bf16.msra.mxu0 %v8908
          %9157 = vmatprep.subr.bf16.mxu0 0
          %9158 = vmatpush2.bf16.msra.mxu0 %v8907
          %9159 = vmatprep.subr.bf16.mxu0 0
          %9160 = vmatpush2.bf16.msra.mxu0 %v8906
          %9161 = vmatprep.subr.bf16.mxu0 0
          %9162 = vmatpush2.bf16.msra.mxu0 %v8905
          %9163 = vmatprep.subr.bf16.mxu0 0
          %9164 = vmatpush2.bf16.msra.mxu0 %v8904
          %9165 = vmatprep.subr.bf16.mxu0 0
          %9166 = vmatpush2.bf16.msra.mxu0 %v8903
          %9167 = vmatprep.mubr.bf16.mxu0 %v6591
          %9168 = vmatmul.mubr.bf16.gmra.mxu0 %v6590
          %v9169 = vpop.f32.mrf.mxu0
          %v9170 = vadd.f32 %v8413, %v9169
          %v9171 = vpop.f32.mrf.mxu0
          %v9172 = vpop.f32.mrf.mxu0
          %v9173 = vadd.f32 %v8413, %v9172
          %v9174 = vpop.f32.mrf.mxu0
          %9175 = vmatprep.mubr.bf16.mxu0 %v6606
          %9176 = vmatmul.mubr.bf16.gmra.mxu0 %v6605
          %v9177 = vpop.f32.mrf.mxu0
          %v9178 = vadd.f32 %v8413, %v9177
          %v9179 = vpop.f32.mrf.mxu0
          %v9180 = vpop.f32.mrf.mxu0
          %v9181 = vpop.f32.mrf.mxu0
          %9182 = vdwg.mxu0
          %9183 = vmatprep.subr.bf16.mxu0 0
          %9184 = vmatpush1.bf16.msra.mxu0 %v8918
          %9185 = vmatprep.subr.bf16.mxu0 0
          %9186 = vmatpush1.bf16.msra.mxu0 %v8917
          %9187 = vmatprep.subr.bf16.mxu0 0
          %9188 = vmatpush1.bf16.msra.mxu0 %v8916
          %9189 = vmatprep.subr.bf16.mxu0 0
          %9190 = vmatpush1.bf16.msra.mxu0 %v8915
          %9191 = vmatprep.subr.bf16.mxu0 0
          %9192 = vmatpush1.bf16.msra.mxu0 %v8914
          %9193 = vmatprep.subr.bf16.mxu0 0
          %9194 = vmatpush1.bf16.msra.mxu0 %v8913
          %9195 = vmatprep.subr.bf16.mxu0 0
          %9196 = vmatpush1.bf16.msra.mxu0 %v8912
          %9197 = vmatprep.subr.bf16.mxu0 0
          %9198 = vmatpush1.bf16.msra.mxu0 %v8911
          %9199 = vmatprep.subr.bf16.mxu0 0
          %9200 = vmatpush2.bf16.msra.mxu0 %v8926
          %9201 = vmatprep.subr.bf16.mxu0 0
          %9202 = vmatpush2.bf16.msra.mxu0 %v8925
          %9203 = vmatprep.subr.bf16.mxu0 0
          %9204 = vmatpush2.bf16.msra.mxu0 %v8924
          %9205 = vmatprep.subr.bf16.mxu0 0
          %9206 = vmatpush2.bf16.msra.mxu0 %v8923
          %9207 = vmatprep.subr.bf16.mxu0 0
          %9208 = vmatpush2.bf16.msra.mxu0 %v8922
          %9209 = vmatprep.subr.bf16.mxu0 0
          %9210 = vmatpush2.bf16.msra.mxu0 %v8921
          %9211 = vmatprep.subr.bf16.mxu0 0
          %9212 = vmatpush2.bf16.msra.mxu0 %v8920
          %9213 = vmatprep.subr.bf16.mxu0 0
          %9214 = vmatpush2.bf16.msra.mxu0 %v8919
          %9215 = vmatprep.mubr.bf16.mxu0 %v6593
          %9216 = vmatmul.mubr.bf16.gmra.mxu0 %v6592
          %v9217 = vpop.f32.mrf.mxu0
          %v9218 = vadd.f32 %v9170, %v9217
          %v9219 = vpop.f32.mrf.mxu0
          %v9220 = vpop.f32.mrf.mxu0
          %v9221 = vadd.f32 %v9173, %v9220
          %v9222 = vpop.f32.mrf.mxu0
          %9223 = vmatprep.mubr.bf16.mxu0 %v6608
          %9224 = vmatmul.mubr.bf16.gmra.mxu0 %v6607
          %v9225 = vpop.f32.mrf.mxu0
          %v9226 = vadd.f32 %v9178, %v9225
          %v9227 = vpop.f32.mrf.mxu0
          %v9228 = vpop.f32.mrf.mxu0
          %v9229 = vpop.f32.mrf.mxu0
          %9230 = vdwg.mxu0
          %9231 = vmatprep.subr.bf16.mxu0 0
          %9232 = vmatpush1.bf16.msra.mxu0 %v8934
          %9233 = vmatprep.subr.bf16.mxu0 0
          %9234 = vmatpush1.bf16.msra.mxu0 %v8933
          %9235 = vmatprep.subr.bf16.mxu0 0
          %9236 = vmatpush1.bf16.msra.mxu0 %v8932
          %9237 = vmatprep.subr.bf16.mxu0 0
          %9238 = vmatpush1.bf16.msra.mxu0 %v8931
          %9239 = vmatprep.subr.bf16.mxu0 0
          %9240 = vmatpush1.bf16.msra.mxu0 %v8930
          %9241 = vmatprep.subr.bf16.mxu0 0
          %9242 = vmatpush1.bf16.msra.mxu0 %v8929
          %9243 = vmatprep.subr.bf16.mxu0 0
          %9244 = vmatpush1.bf16.msra.mxu0 %v8928
          %9245 = vmatprep.subr.bf16.mxu0 0
          %9246 = vmatpush1.bf16.msra.mxu0 %v8927
          %9247 = vmatprep.subr.bf16.mxu0 0
          %9248 = vmatpush2.bf16.msra.mxu0 %v8942
          %9249 = vmatprep.subr.bf16.mxu0 0
          %9250 = vmatpush2.bf16.msra.mxu0 %v8941
          %9251 = vmatprep.subr.bf16.mxu0 0
          %9252 = vmatpush2.bf16.msra.mxu0 %v8940
          %9253 = vmatprep.subr.bf16.mxu0 0
          %9254 = vmatpush2.bf16.msra.mxu0 %v8939
          %9255 = vmatprep.subr.bf16.mxu0 0
          %9256 = vmatpush2.bf16.msra.mxu0 %v8938
          %9257 = vmatprep.subr.bf16.mxu0 0
          %9258 = vmatpush2.bf16.msra.mxu0 %v8937
          %9259 = vmatprep.subr.bf16.mxu0 0
          %9260 = vmatpush2.bf16.msra.mxu0 %v8936
          %9261 = vmatprep.subr.bf16.mxu0 0
          %9262 = vmatpush2.bf16.msra.mxu0 %v8935
          %9263 = vmatprep.mubr.bf16.mxu0 %v6595
          %9264 = vmatmul.mubr.bf16.gmra.mxu0 %v6594
          %v9265 = vpop.f32.mrf.mxu0
          %v9266 = vadd.f32 %v9218, %v9265
          %v9267 = vpop.f32.mrf.mxu0
          %v9268 = vpop.f32.mrf.mxu0
          %v9269 = vadd.f32 %v9221, %v9268
          %v9270 = vpop.f32.mrf.mxu0
          %9271 = vmatprep.mubr.bf16.mxu0 %v6610
          %9272 = vmatmul.mubr.bf16.gmra.mxu0 %v6609
          %v9273 = vpop.f32.mrf.mxu0
          %v9274 = vadd.f32 %v9226, %v9273
          %v9275 = vpop.f32.mrf.mxu0
          %v9276 = vpop.f32.mrf.mxu0
          %v9277 = vpop.f32.mrf.mxu0
          %9278 = vdwg.mxu0
          %9279 = vmatprep.subr.bf16.mxu0 0
          %9280 = vmatpush1.bf16.msra.mxu0 %v8950
          %9281 = vmatprep.subr.bf16.mxu0 0
          %9282 = vmatpush1.bf16.msra.mxu0 %v8949
          %9283 = vmatprep.subr.bf16.mxu0 0
          %9284 = vmatpush1.bf16.msra.mxu0 %v8948
          %9285 = vmatprep.subr.bf16.mxu0 0
          %9286 = vmatpush1.bf16.msra.mxu0 %v8947
          %9287 = vmatprep.subr.bf16.mxu0 0
          %9288 = vmatpush1.bf16.msra.mxu0 %v8946
          %9289 = vmatprep.subr.bf16.mxu0 0
          %9290 = vmatpush1.bf16.msra.mxu0 %v8945
          %9291 = vmatprep.subr.bf16.mxu0 0
          %9292 = vmatpush1.bf16.msra.mxu0 %v8944
          %9293 = vmatprep.subr.bf16.mxu0 0
          %9294 = vmatpush1.bf16.msra.mxu0 %v8943
          %9295 = vmatprep.subr.bf16.mxu0 0
          %9296 = vmatpush2.bf16.msra.mxu0 %v8958
          %9297 = vmatprep.subr.bf16.mxu0 0
          %9298 = vmatpush2.bf16.msra.mxu0 %v8957
          %9299 = vmatprep.subr.bf16.mxu0 0
          %9300 = vmatpush2.bf16.msra.mxu0 %v8956
          %9301 = vmatprep.subr.bf16.mxu0 0
          %9302 = vmatpush2.bf16.msra.mxu0 %v8955
          %9303 = vmatprep.subr.bf16.mxu0 0
          %9304 = vmatpush2.bf16.msra.mxu0 %v8954
          %9305 = vmatprep.subr.bf16.mxu0 0
          %9306 = vmatpush2.bf16.msra.mxu0 %v8953
          %9307 = vmatprep.subr.bf16.mxu0 0
          %9308 = vmatpush2.bf16.msra.mxu0 %v8952
          %9309 = vmatprep.subr.bf16.mxu0 0
          %9310 = vmatpush2.bf16.msra.mxu0 %v8951
          %9311 = vmatprep.mubr.bf16.mxu0 %v6597
          %9312 = vmatmul.mubr.bf16.gmra.mxu0 %v6596
          %v9313 = vpop.f32.mrf.mxu0
          %v9314 = vadd.f32 %v9266, %v9313
          %v9315 = vpop.f32.mrf.mxu0
          %v9316 = vpop.f32.mrf.mxu0
          %v9317 = vadd.f32 %v9269, %v9316
          %v9318 = vpop.f32.mrf.mxu0
          %9319 = vmatprep.mubr.bf16.mxu0 %v6612
          %9320 = vmatmul.mubr.bf16.gmra.mxu0 %v6611
          %v9321 = vpop.f32.mrf.mxu0
          %v9322 = vadd.f32 %v9274, %v9321
          %v9323 = vpop.f32.mrf.mxu0
          %v9324 = vpop.f32.mrf.mxu0
          %v9325 = vpop.f32.mrf.mxu0
          %9326 = vdwg.mxu0
          %9327 = vmatprep.subr.bf16.mxu0 0
          %9328 = vmatpush1.bf16.msra.mxu0 %v8966
          %9329 = vmatprep.subr.bf16.mxu0 0
          %9330 = vmatpush1.bf16.msra.mxu0 %v8965
          %9331 = vmatprep.subr.bf16.mxu0 0
          %9332 = vmatpush1.bf16.msra.mxu0 %v8964
          %9333 = vmatprep.subr.bf16.mxu0 0
          %9334 = vmatpush1.bf16.msra.mxu0 %v8963
          %9335 = vmatprep.subr.bf16.mxu0 0
          %9336 = vmatpush1.bf16.msra.mxu0 %v8962
          %9337 = vmatprep.subr.bf16.mxu0 0
          %9338 = vmatpush1.bf16.msra.mxu0 %v8961
          %9339 = vmatprep.subr.bf16.mxu0 0
          %9340 = vmatpush1.bf16.msra.mxu0 %v8960
          %9341 = vmatprep.subr.bf16.mxu0 0
          %9342 = vmatpush1.bf16.msra.mxu0 %v8959
          %9343 = vmatprep.subr.bf16.mxu0 0
          %9344 = vmatpush2.bf16.msra.mxu0 %v8974
          %9345 = vmatprep.subr.bf16.mxu0 0
          %9346 = vmatpush2.bf16.msra.mxu0 %v8973
          %9347 = vmatprep.subr.bf16.mxu0 0
          %9348 = vmatpush2.bf16.msra.mxu0 %v8972
          %9349 = vmatprep.subr.bf16.mxu0 0
          %9350 = vmatpush2.bf16.msra.mxu0 %v8971
          %9351 = vmatprep.subr.bf16.mxu0 0
          %9352 = vmatpush2.bf16.msra.mxu0 %v8970
          %9353 = vmatprep.subr.bf16.mxu0 0
          %9354 = vmatpush2.bf16.msra.mxu0 %v8969
          %9355 = vmatprep.subr.bf16.mxu0 0
          %9356 = vmatpush2.bf16.msra.mxu0 %v8968
          %9357 = vmatprep.subr.bf16.mxu0 0
          %9358 = vmatpush2.bf16.msra.mxu0 %v8967
          %9359 = vmatprep.mubr.bf16.mxu0 %v6599
          %9360 = vmatmul.mubr.bf16.gmra.mxu0 %v6598
          %v9361 = vpop.f32.mrf.mxu0
          %v9362 = vadd.f32 %v9314, %v9361
          %v9363 = vpop.f32.mrf.mxu0
          %v9364 = vpop.f32.mrf.mxu0
          %v9365 = vadd.f32 %v9317, %v9364
          %v9366 = vpop.f32.mrf.mxu0
          %9367 = vmatprep.mubr.bf16.mxu0 %v6614
          %9368 = vmatmul.mubr.bf16.gmra.mxu0 %v6613
          %v9369 = vpop.f32.mrf.mxu0
          %v9370 = vadd.f32 %v9322, %v9369
          %v9371 = vpop.f32.mrf.mxu0
          %v9372 = vpop.f32.mrf.mxu0
          %v9373 = vpop.f32.mrf.mxu0
          %9374 = vdwg.mxu0
          %9375 = vmatprep.subr.bf16.mxu0 0
          %9376 = vmatpush1.bf16.msra.mxu0 %v8982
          %9377 = vmatprep.subr.bf16.mxu0 0
          %9378 = vmatpush1.bf16.msra.mxu0 %v8981
          %9379 = vmatprep.subr.bf16.mxu0 0
          %9380 = vmatpush1.bf16.msra.mxu0 %v8980
          %9381 = vmatprep.subr.bf16.mxu0 0
          %9382 = vmatpush1.bf16.msra.mxu0 %v8979
          %9383 = vmatprep.subr.bf16.mxu0 0
          %9384 = vmatpush1.bf16.msra.mxu0 %v8978
          %9385 = vmatprep.subr.bf16.mxu0 0
          %9386 = vmatpush1.bf16.msra.mxu0 %v8977
          %9387 = vmatprep.subr.bf16.mxu0 0
          %9388 = vmatpush1.bf16.msra.mxu0 %v8976
          %9389 = vmatprep.subr.bf16.mxu0 0
          %9390 = vmatpush1.bf16.msra.mxu0 %v8975
          %9391 = vmatprep.subr.bf16.mxu0 0
          %9392 = vmatpush2.bf16.msra.mxu0 %v8990
          %9393 = vmatprep.subr.bf16.mxu0 0
          %9394 = vmatpush2.bf16.msra.mxu0 %v8989
          %9395 = vmatprep.subr.bf16.mxu0 0
          %9396 = vmatpush2.bf16.msra.mxu0 %v8988
          %9397 = vmatprep.subr.bf16.mxu0 0
          %9398 = vmatpush2.bf16.msra.mxu0 %v8987
          %9399 = vmatprep.subr.bf16.mxu0 0
          %9400 = vmatpush2.bf16.msra.mxu0 %v8986
          %9401 = vmatprep.subr.bf16.mxu0 0
          %9402 = vmatpush2.bf16.msra.mxu0 %v8985
          %9403 = vmatprep.subr.bf16.mxu0 0
          %9404 = vmatpush2.bf16.msra.mxu0 %v8984
          %9405 = vmatprep.subr.bf16.mxu0 0
          %9406 = vmatpush2.bf16.msra.mxu0 %v8983
          %9407 = vmatprep.mubr.bf16.mxu0 %v6601
          %9408 = vmatmul.mubr.bf16.gmra.mxu0 %v6600
          %v9409 = vpop.f32.mrf.mxu0
          %v9410 = vadd.f32 %v9362, %v9409
          %v9411 = vpop.f32.mrf.mxu0
          %v9412 = vpop.f32.mrf.mxu0
          %v9413 = vadd.f32 %v9365, %v9412
          %v9414 = vpop.f32.mrf.mxu0
          %9415 = vmatprep.mubr.bf16.mxu0 %v6616
          %9416 = vmatmul.mubr.bf16.gmra.mxu0 %v6615
          %v9417 = vpop.f32.mrf.mxu0
          %v9418 = vadd.f32 %v9370, %v9417
          %v9419 = vpop.f32.mrf.mxu0
          %v9420 = vpop.f32.mrf.mxu0
          %v9421 = vpop.f32.mrf.mxu0
          %9422 = vdwg.mxu0
          %9423 = vmatprep.subr.bf16.mxu0 0
          %9424 = vmatpush1.bf16.msra.mxu0 %v8998
          %9425 = vmatprep.subr.bf16.mxu0 0
          %9426 = vmatpush1.bf16.msra.mxu0 %v8997
          %9427 = vmatprep.subr.bf16.mxu0 0
          %9428 = vmatpush1.bf16.msra.mxu0 %v8996
          %9429 = vmatprep.subr.bf16.mxu0 0
          %9430 = vmatpush1.bf16.msra.mxu0 %v8995
          %9431 = vmatprep.subr.bf16.mxu0 0
          %9432 = vmatpush1.bf16.msra.mxu0 %v8994
          %9433 = vmatprep.subr.bf16.mxu0 0
          %9434 = vmatpush1.bf16.msra.mxu0 %v8993
          %9435 = vmatprep.subr.bf16.mxu0 0
          %9436 = vmatpush1.bf16.msra.mxu0 %v8992
          %9437 = vmatprep.subr.bf16.mxu0 0
          %9438 = vmatpush1.bf16.msra.mxu0 %v8991
          %9439 = vmatprep.subr.bf16.mxu0 0
          %9440 = vmatpush2.bf16.msra.mxu0 %v9006
          %9441 = vmatprep.subr.bf16.mxu0 0
          %9442 = vmatpush2.bf16.msra.mxu0 %v9005
          %9443 = vmatprep.subr.bf16.mxu0 0
          %9444 = vmatpush2.bf16.msra.mxu0 %v9004
          %9445 = vmatprep.subr.bf16.mxu0 0
          %9446 = vmatpush2.bf16.msra.mxu0 %v9003
          %9447 = vmatprep.subr.bf16.mxu0 0
          %9448 = vmatpush2.bf16.msra.mxu0 %v9002
          %9449 = vmatprep.subr.bf16.mxu0 0
          %9450 = vmatpush2.bf16.msra.mxu0 %v9001
          %9451 = vmatprep.subr.bf16.mxu0 0
          %9452 = vmatpush2.bf16.msra.mxu0 %v9000
          %9453 = vmatprep.subr.bf16.mxu0 0
          %9454 = vmatpush2.bf16.msra.mxu0 %v8999
          %9455 = vmatprep.mubr.bf16.mxu0 %v6603
          %9456 = vmatmul.mubr.bf16.gmra.mxu0 %v6602
          %v9457 = vpop.f32.mrf.mxu0
          %v9458 = vadd.f32 %v9410, %v9457
          %v9459 = vpop.f32.mrf.mxu0
          %v9460 = vpop.f32.mrf.mxu0
          %v9461 = vadd.f32 %v9413, %v9460
          %v9462 = vpop.f32.mrf.mxu0
          %9463 = vmatprep.mubr.bf16.mxu0 %v6618
          %9464 = vmatmul.mubr.bf16.gmra.mxu0 %v6617
          %v9465 = vpop.f32.mrf.mxu0
          %v9466 = vadd.f32 %v9418, %v9465
          %v9467 = vpop.f32.mrf.mxu0
          %v9468 = vpop.f32.mrf.mxu0
          %v9469 = vpop.f32.mrf.mxu0
          %9470 = vdwg.mxu0
          %9471 = vmatprep.subr.bf16.mxu0 0
          %9472 = vmatpush1.bf16.msra.mxu0 %v9014
          %9473 = vmatprep.subr.bf16.mxu0 0
          %9474 = vmatpush1.bf16.msra.mxu0 %v9013
          %9475 = vmatprep.subr.bf16.mxu0 0
          %9476 = vmatpush1.bf16.msra.mxu0 %v9012
          %9477 = vmatprep.subr.bf16.mxu0 0
          %9478 = vmatpush1.bf16.msra.mxu0 %v9011
          %9479 = vmatprep.subr.bf16.mxu0 0
          %9480 = vmatpush1.bf16.msra.mxu0 %v9010
          %9481 = vmatprep.subr.bf16.mxu0 0
          %9482 = vmatpush1.bf16.msra.mxu0 %v9009
          %9483 = vmatprep.subr.bf16.mxu0 0
          %9484 = vmatpush1.bf16.msra.mxu0 %v9008
          %9485 = vmatprep.subr.bf16.mxu0 0
          %9486 = vmatpush1.bf16.msra.mxu0 %v9007
          %9487 = vmatprep.subr.bf16.mxu0 0
          %9488 = vmatpush2.bf16.msra.mxu0 0
          %9489 = vmatprep.subr.bf16.mxu0 0
          %9490 = vmatpush2.bf16.msra.mxu0 0
          %9491 = vmatprep.subr.bf16.mxu0 0
          %9492 = vmatpush2.bf16.msra.mxu0 0
          %9493 = vmatprep.subr.bf16.mxu0 0
          %9494 = vmatpush2.bf16.msra.mxu0 0
          %9495 = vmatprep.subr.bf16.mxu0 0
          %9496 = vmatpush2.bf16.msra.mxu0 0
          %9497 = vmatprep.subr.bf16.mxu0 0
          %9498 = vmatpush2.bf16.msra.mxu0 0
          %9499 = vmatprep.subr.bf16.mxu0 0
          %9500 = vmatpush2.bf16.msra.mxu0 0
          %9501 = vmatprep.subr.bf16.mxu0 0
          %9502 = vmatpush2.bf16.msra.mxu0 0
          %9503 = vmatprep.mubr.bf16.mxu0 0
          %9504 = vmatmul.mubr.bf16.gmra.mxu0 %v6604
          %v9505 = vpop.f32.mrf.mxu0
          %v9506 = vadd.f32 %v9458, %v9505
          %v9507 = vpop.f32.mrf.mxu0
          %v9508 = vpop.f32.mrf.mxu0
          %v9509 = vadd.f32 %v9461, %v9508
          %v9510 = vpop.f32.mrf.mxu0
          %9511 = vmatprep.mubr.bf16.mxu0 0
          %9512 = vmatmul.mubr.bf16.gmra.mxu0 %v6619
          %v9513 = vpop.f32.mrf.mxu0
          %v9514 = vadd.f32 %v9466, %v9513
          %v9515 = vpop.f32.mrf.mxu0
          %v9516 = vpop.f32.mrf.mxu0
          %v9517 = vpop.f32.mrf.mxu0
          %9518 = vdwg.mxu0
          %v9519 = vmax.f32 %v9506, 0.0
          %v9520 = vmax.f32 %v9509, 0.0
          %v9521 = vmax.f32 %v9514, 0.0
          %v9522 = vld [vmem:[%s13] sm:$0xf]
          %v9523 = vld [vmem:[%s13 + $0x4] sm:$0xf]
          %v9524 = vld [vmem:[%s13 + $0x8] sm:$0xf]
          %v9525 = vld [vmem:[%s13 + $0xc] sm:$0xf]
          %v9526 = vld [vmem:[%s13 + $0x10] sm:$0xf]
          %v9527 = vld [vmem:[%s13 + $0x14] sm:$0xf]
          %v9528 = vld [vmem:[%s13 + $0x18] sm:$0xf]
          %v9529 = vld [vmem:[%s13 + $0x1c] sm:$0xf]
          %v9530 = vld [vmem:[%s13 + $0x20] sm:$0xf]
          %v9531 = vld [vmem:[%s13 + $0x24] sm:$0xf]
          %v9532 = vld [vmem:[%s13 + $0x28] sm:$0xf]
          %v9533 = vld [vmem:[%s13 + $0x2c] sm:$0xf]
          %v9534 = vld [vmem:[%s13 + $0x30] sm:$0xf]
          %v9535 = vld [vmem:[%s13 + $0x34] sm:$0xf]
          %v9536 = vld [vmem:[%s13 + $0x38] sm:$0xf]
          %v9537 = vld [vmem:[%s13 + $0x3c] sm:$0xf]
          %v9538 = vld [vmem:[%s13 + $0x40] sm:$0xf]
          %v9539 = vld [vmem:[%s13 + $0x44] sm:$0xf]
          %v9540 = vld [vmem:[%s13 + $0x48] sm:$0xf]
          %v9541 = vld [vmem:[%s13 + $0x4c] sm:$0xf]
          %v9542 = vld [vmem:[%s13 + $0x50] sm:$0xf]
          %v9543 = vld [vmem:[%s13 + $0x54] sm:$0xf]
          %v9544 = vld [vmem:[%s13 + $0x58] sm:$0xf]
          %v9545 = vld [vmem:[%s13 + $0x5c] sm:$0xf]
          %v9546 = vld [vmem:[%s13 + $0x60] sm:$0xf]
          %v9547 = vld [vmem:[%s13 + $0x64] sm:$0xf]
          %v9548 = vld [vmem:[%s13 + $0x68] sm:$0xf]
          %v9549 = vld [vmem:[%s13 + $0x6c] sm:$0xf]
          %v9550 = vld [vmem:[%s13 + $0x70] sm:$0xf]
          %v9551 = vld [vmem:[%s13 + $0x74] sm:$0xf]
          %v9552 = vld [vmem:[%s13 + $0x78] sm:$0xf]
          %v9553 = vld [vmem:[%s13 + $0x7c] sm:$0xf]
          %v9554 = vld [vmem:[%s13 + $0x80] sm:$0xf]
          %v9555 = vld [vmem:[%s13 + $0x84] sm:$0xf]
          %v9556 = vld [vmem:[%s13 + $0x88] sm:$0xf]
          %v9557 = vld [vmem:[%s13 + $0x8c] sm:$0xf]
          %v9558 = vld [vmem:[%s13 + $0x90] sm:$0xf]
          %v9559 = vld [vmem:[%s13 + $0x94] sm:$0xf]
          %v9560 = vld [vmem:[%s13 + $0x98] sm:$0xf]
          %v9561 = vld [vmem:[%s13 + $0x9c] sm:$0xf]
          %v9562 = vld [vmem:[%s13 + $0xa0] sm:$0xf]
          %v9563 = vld [vmem:[%s13 + $0xa4] sm:$0xf]
          %v9564 = vld [vmem:[%s13 + $0xa8] sm:$0xf]
          %v9565 = vld [vmem:[%s13 + $0xac] sm:$0xf]
          %v9566 = vld [vmem:[%s13 + $0xb0] sm:$0xf]
          %v9567 = vld [vmem:[%s13 + $0xb4] sm:$0xf]
          %v9568 = vld [vmem:[%s13 + $0xb8] sm:$0xf]
          %v9569 = vld [vmem:[%s13 + $0xbc] sm:$0xf]
          %v9570 = vld [vmem:[%s13 + $0xc0] sm:$0xf]
          %v9571 = vld [vmem:[%s13 + $0xc4] sm:$0xf]
          %v9572 = vld [vmem:[%s13 + $0xc8] sm:$0xf]
          %v9573 = vld [vmem:[%s13 + $0xcc] sm:$0xf]
          %v9574 = vld [vmem:[%s13 + $0xd0] sm:$0xf]
          %v9575 = vld [vmem:[%s13 + $0xd4] sm:$0xf]
          %v9576 = vld [vmem:[%s13 + $0xd8] sm:$0xf]
          %v9577 = vld [vmem:[%s13 + $0xdc] sm:$0xf]
          %v9578 = vld [vmem:[%s13 + $0xe0] sm:$0xf]
          %v9579 = vld [vmem:[%s13 + $0xe4] sm:$0xf]
          %v9580 = vld [vmem:[%s13 + $0xe8] sm:$0xf]
          %v9581 = vld [vmem:[%s13 + $0xec] sm:$0xf]
          %v9582 = vld [vmem:[%s13 + $0xf0] sm:$0xf]
          %v9583 = vld [vmem:[%s13 + $0xf4] sm:$0xf]
          %v9584 = vld [vmem:[%s13 + $0xf8] sm:$0xf]
          %v9585 = vld [vmem:[%s13 + $0xfc] sm:$0xf]
          %v9586 = vld [vmem:[%s13 + $0x100] sm:$0xf]
          %v9587 = vld [vmem:[%s13 + $0x104] sm:$0xf]
          %v9588 = vld [vmem:[%s13 + $0x108] sm:$0xf]
          %v9589 = vld [vmem:[%s13 + $0x10c] sm:$0xf]
          %v9590 = vld [vmem:[%s13 + $0x110] sm:$0xf]
          %v9591 = vld [vmem:[%s13 + $0x114] sm:$0xf]
          %v9592 = vld [vmem:[%s13 + $0x118] sm:$0xf]
          %v9593 = vld [vmem:[%s13 + $0x11c] sm:$0xf]
          %v9594 = vld [vmem:[%s13 + $0x120] sm:$0xf]
          %v9595 = vld [vmem:[%s13 + $0x124] sm:$0xf]
          %v9596 = vld [vmem:[%s13 + $0x128] sm:$0xf]
          %v9597 = vld [vmem:[%s13 + $0x12c] sm:$0xf]
          %v9598 = vld [vmem:[%s13 + $0x130] sm:$0xf]
          %v9599 = vld [vmem:[%s13 + $0x134] sm:$0xf]
          %v9600 = vld [vmem:[%s13 + $0x138] sm:$0xf]
          %v9601 = vld [vmem:[%s13 + $0x13c] sm:$0xf]
          %v9602 = vld [vmem:[%s13 + $0x140] sm:$0xf]
          %v9603 = vld [vmem:[%s13 + $0x144] sm:$0xf]
          %v9604 = vld [vmem:[%s13 + $0x148] sm:$0xf]
          %v9605 = vld [vmem:[%s13 + $0x14c] sm:$0xf]
          %v9606 = vld [vmem:[%s13 + $0x150] sm:$0xf]
          %v9607 = vld [vmem:[%s13 + $0x154] sm:$0xf]
          %v9608 = vld [vmem:[%s13 + $0x158] sm:$0xf]
          %v9609 = vld [vmem:[%s13 + $0x15c] sm:$0xf]
          %v9610 = vld [vmem:[%s13 + $0x160] sm:$0xf]
          %v9611 = vld [vmem:[%s13 + $0x164] sm:$0xf]
          %v9612 = vld [vmem:[%s13 + $0x168] sm:$0xf]
          %v9613 = vld [vmem:[%s13 + $0x16c] sm:$0xf]
          %v9614 = vld [vmem:[%s13 + $0x170] sm:$0xf]
          %v9615 = vld [vmem:[%s13 + $0x174] sm:$0xf]
          %v9616 = vld [vmem:[%s13 + $0x178] sm:$0xf]
          %v9617 = vld [vmem:[%s13 + $0x17c] sm:$0xf]
          %v9618 = vld [vmem:[%s13 + $0x180] sm:$0xf]
          %v9619 = vld [vmem:[%s13 + $0x184] sm:$0xf]
          %v9620 = vld [vmem:[%s13 + $0x188] sm:$0xf]
          %v9621 = vld [vmem:[%s13 + $0x18c] sm:$0xf]
          %v9622 = vld [vmem:[%s13 + $0x190] sm:$0xf]
          %v9623 = vld [vmem:[%s13 + $0x194] sm:$0xf]
          %v9624 = vld [vmem:[%s13 + $0x198] sm:$0xf]
          %v9625 = vld [vmem:[%s13 + $0x19c] sm:$0xf]
          %v9626 = vld [vmem:[%s13 + $0x1a0] sm:$0xf]
          %v9627 = vld [vmem:[%s13 + $0x1a4] sm:$0xf]
          %v9628 = vld [vmem:[%s13 + $0x1a8] sm:$0xf]
          %v9629 = vld [vmem:[%s13 + $0x1ac] sm:$0xf]
          %v9630 = vld [vmem:[%s13 + $0x1b0] sm:$0xf]
          %v9631 = vld [vmem:[%s13 + $0x1b4] sm:$0xf]
          %v9632 = vld [vmem:[%s13 + $0x1b8] sm:$0xf]
          %v9633 = vld [vmem:[%s13 + $0x1bc] sm:$0xf]
          %v9634 = vld [vmem:[%s13 + $0x1c0] sm:$0xf]
          %v9635 = vld [vmem:[%s13 + $0x1c4] sm:$0xf]
          %v9636 = vld [vmem:[%s13 + $0x1c8] sm:$0xf]
          %v9637 = vld [vmem:[%s13 + $0x1cc] sm:$0xf]
          %v9638 = vld [vmem:[%s13 + $0x1d0] sm:$0xf]
          %v9639 = vld [vmem:[%s13 + $0x1d4] sm:$0xf]
          %v9640 = vld [vmem:[%s13 + $0x1d8] sm:$0xf]
          %v9641 = vld [vmem:[%s13 + $0x1dc] sm:$0xf]
          %v9642 = vld [vmem:[%s13 + $0x1e0] sm:$0xf]
          %v9643 = vld [vmem:[%s13 + $0x1e4] sm:$0xf]
          %v9644 = vld [vmem:[%s13 + $0x1e8] sm:$0xf]
          %v9645 = vld [vmem:[%s13 + $0x1ec] sm:$0xf]
          %v9646 = vld [vmem:[%s13 + $0x1f0] sm:$0xf]
          %v9647 = vld [vmem:[%s14] sm:$0x1]
          %v9649 = vlaneseq
          %v9650 = vshrl.u32 %v9649, 7
          %v9651 = vsub.s32 0, %v9650
          %v9652 = vrot.slane %v9647, %v9651
          %v9779 = vunpack.c.l.b16 %v9522
          %v9780 = vunpack.c.l.b16 %v9523
          %v9781 = vunpack.c.l.b16 %v9524
          %v9782 = vunpack.c.l.b16 %v9525
          %v9783 = vunpack.c.l.b16 %v9526
          %v9784 = vunpack.c.l.b16 %v9527
          %v9785 = vunpack.c.l.b16 %v9528
          %v9786 = vunpack.c.l.b16 %v9529
          %v9787 = vunpack.c.l.b16 %v9530
          %v9788 = vunpack.c.l.b16 %v9531
          %v9789 = vunpack.c.l.b16 %v9532
          %v9790 = vunpack.c.l.b16 %v9533
          %v9791 = vunpack.c.l.b16 %v9534
          %v9792 = vunpack.c.l.b16 %v9535
          %v9793 = vunpack.c.l.b16 %v9536
          %v9794 = vunpack.c.l.b16 %v9537
          %v9795 = vunpack.c.l.b16 %v9538
          %v9796 = vunpack.c.l.b16 %v9539
          %v9797 = vunpack.c.l.b16 %v9540
          %v9798 = vunpack.c.l.b16 %v9541
          %v9799 = vunpack.c.l.b16 %v9542
          %v9800 = vunpack.c.l.b16 %v9543
          %v9801 = vunpack.c.l.b16 %v9544
          %v9802 = vunpack.c.l.b16 %v9545
          %v9803 = vunpack.c.l.b16 %v9546
          %v9804 = vunpack.c.l.b16 %v9547
          %v9805 = vunpack.c.l.b16 %v9548
          %v9806 = vunpack.c.l.b16 %v9549
          %v9807 = vunpack.c.l.b16 %v9550
          %v9808 = vunpack.c.l.b16 %v9551
          %v9809 = vunpack.c.l.b16 %v9552
          %v9810 = vunpack.c.l.b16 %v9553
          %v9811 = vunpack.c.l.b16 %v9554
          %v9812 = vunpack.c.l.b16 %v9555
          %v9813 = vunpack.c.l.b16 %v9556
          %v9814 = vunpack.c.l.b16 %v9557
          %v9815 = vunpack.c.l.b16 %v9558
          %v9816 = vunpack.c.l.b16 %v9559
          %v9817 = vunpack.c.l.b16 %v9560
          %v9818 = vunpack.c.l.b16 %v9561
          %v9819 = vunpack.c.l.b16 %v9562
          %v9820 = vunpack.c.l.b16 %v9563
          %v9821 = vunpack.c.l.b16 %v9564
          %v9822 = vunpack.c.l.b16 %v9565
          %v9823 = vunpack.c.l.b16 %v9566
          %v9824 = vunpack.c.l.b16 %v9567
          %v9825 = vunpack.c.l.b16 %v9568
          %v9826 = vunpack.c.l.b16 %v9569
          %v9827 = vunpack.c.l.b16 %v9570
          %v9828 = vunpack.c.l.b16 %v9571
          %v9829 = vunpack.c.l.b16 %v9572
          %v9830 = vunpack.c.l.b16 %v9573
          %v9831 = vunpack.c.l.b16 %v9574
          %v9832 = vunpack.c.l.b16 %v9575
          %v9833 = vunpack.c.l.b16 %v9576
          %v9834 = vunpack.c.l.b16 %v9577
          %v9835 = vunpack.c.l.b16 %v9578
          %v9836 = vunpack.c.l.b16 %v9579
          %v9837 = vunpack.c.l.b16 %v9580
          %v9838 = vunpack.c.l.b16 %v9581
          %v9839 = vunpack.c.l.b16 %v9582
          %v9840 = vunpack.c.l.b16 %v9583
          %v9841 = vunpack.c.l.b16 %v9584
          %v9842 = vunpack.c.l.b16 %v9585
          %v9843 = vunpack.c.l.b16 %v9586
          %v9844 = vunpack.c.l.b16 %v9587
          %v9845 = vunpack.c.l.b16 %v9588
          %v9846 = vunpack.c.l.b16 %v9589
          %v9847 = vunpack.c.l.b16 %v9590
          %v9848 = vunpack.c.l.b16 %v9591
          %v9849 = vunpack.c.l.b16 %v9592
          %v9850 = vunpack.c.l.b16 %v9593
          %v9851 = vunpack.c.l.b16 %v9594
          %v9852 = vunpack.c.l.b16 %v9595
          %v9853 = vunpack.c.l.b16 %v9596
          %v9854 = vunpack.c.l.b16 %v9597
          %v9855 = vunpack.c.l.b16 %v9598
          %v9856 = vunpack.c.l.b16 %v9599
          %v9857 = vunpack.c.l.b16 %v9600
          %v9858 = vunpack.c.l.b16 %v9601
          %v9859 = vunpack.c.l.b16 %v9602
          %v9860 = vunpack.c.l.b16 %v9603
          %v9861 = vunpack.c.l.b16 %v9604
          %v9862 = vunpack.c.l.b16 %v9605
          %v9863 = vunpack.c.l.b16 %v9606
          %v9864 = vunpack.c.l.b16 %v9607
          %v9865 = vunpack.c.l.b16 %v9608
          %v9866 = vunpack.c.l.b16 %v9609
          %v9867 = vunpack.c.l.b16 %v9610
          %v9868 = vunpack.c.l.b16 %v9611
          %v9869 = vunpack.c.l.b16 %v9612
          %v9870 = vunpack.c.l.b16 %v9613
          %v9871 = vunpack.c.l.b16 %v9614
          %v9872 = vunpack.c.l.b16 %v9615
          %v9873 = vunpack.c.l.b16 %v9616
          %v9874 = vunpack.c.l.b16 %v9617
          %v9875 = vunpack.c.l.b16 %v9618
          %v9876 = vunpack.c.l.b16 %v9619
          %v9877 = vunpack.c.l.b16 %v9620
          %v9878 = vunpack.c.l.b16 %v9621
          %v9879 = vunpack.c.l.b16 %v9622
          %v9880 = vunpack.c.l.b16 %v9623
          %v9881 = vunpack.c.l.b16 %v9624
          %v9882 = vunpack.c.l.b16 %v9625
          %v9883 = vunpack.c.l.b16 %v9626
          %v9884 = vunpack.c.l.b16 %v9627
          %v9885 = vunpack.c.l.b16 %v9628
          %v9886 = vunpack.c.l.b16 %v9629
          %v9887 = vunpack.c.l.b16 %v9630
          %v9888 = vunpack.c.l.b16 %v9631
          %v9889 = vunpack.c.l.b16 %v9632
          %v9890 = vunpack.c.l.b16 %v9633
          %v9891 = vunpack.c.l.b16 %v9634
          %v9892 = vunpack.c.l.b16 %v9635
          %v9893 = vunpack.c.l.b16 %v9636
          %v9894 = vunpack.c.l.b16 %v9637
          %v9895 = vunpack.c.l.b16 %v9638
          %v9896 = vunpack.c.l.b16 %v9639
          %v9897 = vunpack.c.l.b16 %v9640
          %v9898 = vunpack.c.l.b16 %v9641
          %v9899 = vunpack.c.l.b16 %v9642
          %v9900 = vunpack.c.l.b16 %v9643
          %v9901 = vunpack.c.l.b16 %v9644
          %v9902 = vunpack.c.l.b16 %v9645
          %v9903 = vunpack.c.l.b16 %v9646
          %v9904 = vpack.c.b16 %v9780, %v9779
          %v9905 = vpack.c.b16 %v9782, %v9781
          %v9906 = vpack.c.b16 %v9784, %v9783
          %v9907 = vpack.c.b16 %v9786, %v9785
          %v9908 = vpack.c.b16 %v9788, %v9787
          %v9909 = vpack.c.b16 %v9790, %v9789
          %v9910 = vpack.c.b16 %v9792, %v9791
          %v9911 = vpack.c.b16 %v9794, %v9793
          %v9912 = vpack.c.b16 %v9796, %v9795
          %v9913 = vpack.c.b16 %v9798, %v9797
          %v9914 = vpack.c.b16 %v9800, %v9799
          %v9915 = vpack.c.b16 %v9802, %v9801
          %v9916 = vpack.c.b16 %v9804, %v9803
          %v9917 = vpack.c.b16 %v9806, %v9805
          %v9918 = vpack.c.b16 %v9808, %v9807
          %v9919 = vpack.c.b16 %v9810, %v9809
          %v9920 = vpack.c.b16 %v9812, %v9811
          %v9921 = vpack.c.b16 %v9814, %v9813
          %v9922 = vpack.c.b16 %v9816, %v9815
          %v9923 = vpack.c.b16 %v9818, %v9817
          %v9924 = vpack.c.b16 %v9820, %v9819
          %v9925 = vpack.c.b16 %v9822, %v9821
          %v9926 = vpack.c.b16 %v9824, %v9823
          %v9927 = vpack.c.b16 %v9826, %v9825
          %v9928 = vpack.c.b16 %v9828, %v9827
          %v9929 = vpack.c.b16 %v9830, %v9829
          %v9930 = vpack.c.b16 %v9832, %v9831
          %v9931 = vpack.c.b16 %v9834, %v9833
          %v9932 = vpack.c.b16 %v9836, %v9835
          %v9933 = vpack.c.b16 %v9838, %v9837
          %v9934 = vpack.c.b16 %v9840, %v9839
          %v9935 = vpack.c.b16 %v9842, %v9841
          %v9936 = vpack.c.b16 %v9844, %v9843
          %v9937 = vpack.c.b16 %v9846, %v9845
          %v9938 = vpack.c.b16 %v9848, %v9847
          %v9939 = vpack.c.b16 %v9850, %v9849
          %v9940 = vpack.c.b16 %v9852, %v9851
          %v9941 = vpack.c.b16 %v9854, %v9853
          %v9942 = vpack.c.b16 %v9856, %v9855
          %v9943 = vpack.c.b16 %v9858, %v9857
          %v9944 = vpack.c.b16 %v9860, %v9859
          %v9945 = vpack.c.b16 %v9862, %v9861
          %v9946 = vpack.c.b16 %v9864, %v9863
          %v9947 = vpack.c.b16 %v9866, %v9865
          %v9948 = vpack.c.b16 %v9868, %v9867
          %v9949 = vpack.c.b16 %v9870, %v9869
          %v9950 = vpack.c.b16 %v9872, %v9871
          %v9951 = vpack.c.b16 %v9874, %v9873
          %v9952 = vpack.c.b16 %v9876, %v9875
          %v9953 = vpack.c.b16 %v9878, %v9877
          %v9954 = vpack.c.b16 %v9880, %v9879
          %v9955 = vpack.c.b16 %v9882, %v9881
          %v9956 = vpack.c.b16 %v9884, %v9883
          %v9957 = vpack.c.b16 %v9886, %v9885
          %v9958 = vpack.c.b16 %v9888, %v9887
          %v9959 = vpack.c.b16 %v9890, %v9889
          %v9960 = vpack.c.b16 %v9892, %v9891
          %v9961 = vpack.c.b16 %v9894, %v9893
          %v9962 = vpack.c.b16 %v9896, %v9895
          %v9963 = vpack.c.b16 %v9898, %v9897
          %v9964 = vpack.c.b16 %v9900, %v9899
          %v9965 = vpack.c.b16 %v9902, %v9901
          %v9966 = vpack.c.b16 %v9903, %v9903
          %v10030 = vsel %vm6094, %v6741, 0
          %v10033 = vsel %vm6094, %v6749, 0
          %vm10035 = vcmask 1043456
          %v10037 = vsel %vm10035, %v9966, 0
          %10039 = vmatprep.subr.bf16.mxu0 0
          %10040 = vmatpush1.bf16.msra.mxu0 %v9911
          %10041 = vmatprep.subr.bf16.mxu0 0
          %10042 = vmatpush1.bf16.msra.mxu0 %v9910
          %10043 = vmatprep.subr.bf16.mxu0 0
          %10044 = vmatpush1.bf16.msra.mxu0 %v9909
          %10045 = vmatprep.subr.bf16.mxu0 0
          %10046 = vmatpush1.bf16.msra.mxu0 %v9908
          %10047 = vmatprep.subr.bf16.mxu0 0
          %10048 = vmatpush1.bf16.msra.mxu0 %v9907
          %10049 = vmatprep.subr.bf16.mxu0 0
          %10050 = vmatpush1.bf16.msra.mxu0 %v9906
          %10051 = vmatprep.subr.bf16.mxu0 0
          %10052 = vmatpush1.bf16.msra.mxu0 %v9905
          %10053 = vmatprep.subr.bf16.mxu0 0
          %10054 = vmatpush1.bf16.msra.mxu0 %v9904
          %10055 = vmatprep.subr.bf16.mxu0 0
          %10056 = vmatpush2.bf16.msra.mxu0 %v9919
          %10057 = vmatprep.subr.bf16.mxu0 0
          %10058 = vmatpush2.bf16.msra.mxu0 %v9918
          %10059 = vmatprep.subr.bf16.mxu0 0
          %10060 = vmatpush2.bf16.msra.mxu0 %v9917
          %10061 = vmatprep.subr.bf16.mxu0 0
          %10062 = vmatpush2.bf16.msra.mxu0 %v9916
          %10063 = vmatprep.subr.bf16.mxu0 0
          %10064 = vmatpush2.bf16.msra.mxu0 %v9915
          %10065 = vmatprep.subr.bf16.mxu0 0
          %10066 = vmatpush2.bf16.msra.mxu0 %v9914
          %10067 = vmatprep.subr.bf16.mxu0 0
          %10068 = vmatpush2.bf16.msra.mxu0 %v9913
          %10069 = vmatprep.subr.bf16.mxu0 0
          %10070 = vmatpush2.bf16.msra.mxu0 %v9912
          %10071 = vmatprep.mubr.bf16.mxu0 %v6735
          %10072 = vmatmul.mubr.bf16.gmra.mxu0 %v6734
          %v10073 = vpop.f32.mrf.mxu0
          %v10074 = vadd.f32 %v9652, %v10073
          %v10075 = vpop.f32.mrf.mxu0
          %v10076 = vpop.f32.mrf.mxu0
          %v10077 = vadd.f32 %v9652, %v10076
          %v10078 = vpop.f32.mrf.mxu0
          %10079 = vmatprep.mubr.bf16.mxu0 %v6743
          %10080 = vmatmul.mubr.bf16.gmra.mxu0 %v6742
          %v10081 = vpop.f32.mrf.mxu0
          %v10082 = vadd.f32 %v9652, %v10081
          %v10083 = vpop.f32.mrf.mxu0
          %v10084 = vpop.f32.mrf.mxu0
          %v10085 = vpop.f32.mrf.mxu0
          %10086 = vdwg.mxu0
          %10087 = vmatprep.subr.bf16.mxu0 0
          %10088 = vmatpush1.bf16.msra.mxu0 %v9927
          %10089 = vmatprep.subr.bf16.mxu0 0
          %10090 = vmatpush1.bf16.msra.mxu0 %v9926
          %10091 = vmatprep.subr.bf16.mxu0 0
          %10092 = vmatpush1.bf16.msra.mxu0 %v9925
          %10093 = vmatprep.subr.bf16.mxu0 0
          %10094 = vmatpush1.bf16.msra.mxu0 %v9924
          %10095 = vmatprep.subr.bf16.mxu0 0
          %10096 = vmatpush1.bf16.msra.mxu0 %v9923
          %10097 = vmatprep.subr.bf16.mxu0 0
          %10098 = vmatpush1.bf16.msra.mxu0 %v9922
          %10099 = vmatprep.subr.bf16.mxu0 0
          %10100 = vmatpush1.bf16.msra.mxu0 %v9921
          %10101 = vmatprep.subr.bf16.mxu0 0
          %10102 = vmatpush1.bf16.msra.mxu0 %v9920
          %10103 = vmatprep.subr.bf16.mxu0 0
          %10104 = vmatpush2.bf16.msra.mxu0 %v9935
          %10105 = vmatprep.subr.bf16.mxu0 0
          %10106 = vmatpush2.bf16.msra.mxu0 %v9934
          %10107 = vmatprep.subr.bf16.mxu0 0
          %10108 = vmatpush2.bf16.msra.mxu0 %v9933
          %10109 = vmatprep.subr.bf16.mxu0 0
          %10110 = vmatpush2.bf16.msra.mxu0 %v9932
          %10111 = vmatprep.subr.bf16.mxu0 0
          %10112 = vmatpush2.bf16.msra.mxu0 %v9931
          %10113 = vmatprep.subr.bf16.mxu0 0
          %10114 = vmatpush2.bf16.msra.mxu0 %v9930
          %10115 = vmatprep.subr.bf16.mxu0 0
          %10116 = vmatpush2.bf16.msra.mxu0 %v9929
          %10117 = vmatprep.subr.bf16.mxu0 0
          %10118 = vmatpush2.bf16.msra.mxu0 %v9928
          %10119 = vmatprep.mubr.bf16.mxu0 %v6737
          %10120 = vmatmul.mubr.bf16.gmra.mxu0 %v6736
          %v10121 = vpop.f32.mrf.mxu0
          %v10122 = vadd.f32 %v10074, %v10121
          %v10123 = vpop.f32.mrf.mxu0
          %v10124 = vpop.f32.mrf.mxu0
          %v10125 = vadd.f32 %v10077, %v10124
          %v10126 = vpop.f32.mrf.mxu0
          %10127 = vmatprep.mubr.bf16.mxu0 %v6745
          %10128 = vmatmul.mubr.bf16.gmra.mxu0 %v6744
          %v10129 = vpop.f32.mrf.mxu0
          %v10130 = vadd.f32 %v10082, %v10129
          %v10131 = vpop.f32.mrf.mxu0
          %v10132 = vpop.f32.mrf.mxu0
          %v10133 = vpop.f32.mrf.mxu0
          %10134 = vdwg.mxu0
          %10135 = vmatprep.subr.bf16.mxu0 0
          %10136 = vmatpush1.bf16.msra.mxu0 %v9943
          %10137 = vmatprep.subr.bf16.mxu0 0
          %10138 = vmatpush1.bf16.msra.mxu0 %v9942
          %10139 = vmatprep.subr.bf16.mxu0 0
          %10140 = vmatpush1.bf16.msra.mxu0 %v9941
          %10141 = vmatprep.subr.bf16.mxu0 0
          %10142 = vmatpush1.bf16.msra.mxu0 %v9940
          %10143 = vmatprep.subr.bf16.mxu0 0
          %10144 = vmatpush1.bf16.msra.mxu0 %v9939
          %10145 = vmatprep.subr.bf16.mxu0 0
          %10146 = vmatpush1.bf16.msra.mxu0 %v9938
          %10147 = vmatprep.subr.bf16.mxu0 0
          %10148 = vmatpush1.bf16.msra.mxu0 %v9937
          %10149 = vmatprep.subr.bf16.mxu0 0
          %10150 = vmatpush1.bf16.msra.mxu0 %v9936
          %10151 = vmatprep.subr.bf16.mxu0 0
          %10152 = vmatpush2.bf16.msra.mxu0 %v9951
          %10153 = vmatprep.subr.bf16.mxu0 0
          %10154 = vmatpush2.bf16.msra.mxu0 %v9950
          %10155 = vmatprep.subr.bf16.mxu0 0
          %10156 = vmatpush2.bf16.msra.mxu0 %v9949
          %10157 = vmatprep.subr.bf16.mxu0 0
          %10158 = vmatpush2.bf16.msra.mxu0 %v9948
          %10159 = vmatprep.subr.bf16.mxu0 0
          %10160 = vmatpush2.bf16.msra.mxu0 %v9947
          %10161 = vmatprep.subr.bf16.mxu0 0
          %10162 = vmatpush2.bf16.msra.mxu0 %v9946
          %10163 = vmatprep.subr.bf16.mxu0 0
          %10164 = vmatpush2.bf16.msra.mxu0 %v9945
          %10165 = vmatprep.subr.bf16.mxu0 0
          %10166 = vmatpush2.bf16.msra.mxu0 %v9944
          %10167 = vmatprep.mubr.bf16.mxu0 %v6739
          %10168 = vmatmul.mubr.bf16.gmra.mxu0 %v6738
          %v10169 = vpop.f32.mrf.mxu0
          %v10170 = vadd.f32 %v10122, %v10169
          %v10171 = vpop.f32.mrf.mxu0
          %v10172 = vpop.f32.mrf.mxu0
          %v10173 = vadd.f32 %v10125, %v10172
          %v10174 = vpop.f32.mrf.mxu0
          %10175 = vmatprep.mubr.bf16.mxu0 %v6747
          %10176 = vmatmul.mubr.bf16.gmra.mxu0 %v6746
          %v10177 = vpop.f32.mrf.mxu0
          %v10178 = vadd.f32 %v10130, %v10177
          %v10179 = vpop.f32.mrf.mxu0
          %v10180 = vpop.f32.mrf.mxu0
          %v10181 = vpop.f32.mrf.mxu0
          %10182 = vdwg.mxu0
          %10183 = vmatprep.subr.bf16.mxu0 0
          %10184 = vmatpush1.bf16.msra.mxu0 %v9959
          %10185 = vmatprep.subr.bf16.mxu0 0
          %10186 = vmatpush1.bf16.msra.mxu0 %v9958
          %10187 = vmatprep.subr.bf16.mxu0 0
          %10188 = vmatpush1.bf16.msra.mxu0 %v9957
          %10189 = vmatprep.subr.bf16.mxu0 0
          %10190 = vmatpush1.bf16.msra.mxu0 %v9956
          %10191 = vmatprep.subr.bf16.mxu0 0
          %10192 = vmatpush1.bf16.msra.mxu0 %v9955
          %10193 = vmatprep.subr.bf16.mxu0 0
          %10194 = vmatpush1.bf16.msra.mxu0 %v9954
          %10195 = vmatprep.subr.bf16.mxu0 0
          %10196 = vmatpush1.bf16.msra.mxu0 %v9953
          %10197 = vmatprep.subr.bf16.mxu0 0
          %10198 = vmatpush1.bf16.msra.mxu0 %v9952
          %10199 = vmatprep.subr.bf16.mxu0 0
          %10200 = vmatpush2.bf16.msra.mxu0 0
          %10201 = vmatprep.subr.bf16.mxu0 0
          %10202 = vmatpush2.bf16.msra.mxu0 %v10037
          %10203 = vmatprep.subr.bf16.mxu0 0
          %10204 = vmatpush2.bf16.msra.mxu0 %v9965
          %10205 = vmatprep.subr.bf16.mxu0 0
          %10206 = vmatpush2.bf16.msra.mxu0 %v9964
          %10207 = vmatprep.subr.bf16.mxu0 0
          %10208 = vmatpush2.bf16.msra.mxu0 %v9963
          %10209 = vmatprep.subr.bf16.mxu0 0
          %10210 = vmatpush2.bf16.msra.mxu0 %v9962
          %10211 = vmatprep.subr.bf16.mxu0 0
          %10212 = vmatpush2.bf16.msra.mxu0 %v9961
          %10213 = vmatprep.subr.bf16.mxu0 0
          %10214 = vmatpush2.bf16.msra.mxu0 %v9960
          %10215 = vmatprep.mubr.bf16.mxu0 %v10030
          %10216 = vmatmul.mubr.bf16.gmra.mxu0 %v6740
          %v10217 = vpop.f32.mrf.mxu0
          %v10218 = vadd.f32 %v10170, %v10217
          %v10219 = vpop.f32.mrf.mxu0
          %v10220 = vpop.f32.mrf.mxu0
          %v10221 = vadd.f32 %v10173, %v10220
          %v10222 = vpop.f32.mrf.mxu0
          %10223 = vmatprep.mubr.bf16.mxu0 %v10033
          %10224 = vmatmul.mubr.bf16.gmra.mxu0 %v6748
          %v10225 = vpop.f32.mrf.mxu0
          %v10226 = vadd.f32 %v10178, %v10225
          %v10227 = vpop.f32.mrf.mxu0
          %v10228 = vpop.f32.mrf.mxu0
          %v10229 = vpop.f32.mrf.mxu0
          %10230 = vdwg.mxu0
          %v10231 = vld [vmem:[%s15] sm:$0xff]
          %v10232 = vld [vmem:[%s15 + $0x8] sm:$0xff]
          %v10233 = vld [vmem:[%s15 + $0x10] sm:$0xff]
          %v10234 = vld [vmem:[%s15 + $0x18] sm:$0xff]
          %v10235 = vld [vmem:[%s15 + $0x20] sm:$0xff]
          %v10236 = vld [vmem:[%s15 + $0x28] sm:$0xff]
          %v10237 = vld [vmem:[%s15 + $0x30] sm:$0xff]
          %v10238 = vld [vmem:[%s15 + $0x38] sm:$0xff]
          %v10239 = vld [vmem:[%s15 + $0x40] sm:$0xff]
          %v10240 = vld [vmem:[%s15 + $0x48] sm:$0xff]
          %v10241 = vld [vmem:[%s15 + $0x50] sm:$0xff]
          %v10242 = vld [vmem:[%s15 + $0x58] sm:$0xff]
          %10244 = vrot.lane.b32.xlu0 %v8166, 96
          %v10245 = vpop.permute.xlu0 %10244
          %vm10246 = vcmask 261120
          %v10247 = vsel %vm10246, %v10245, 0
          %10249 = vmatprep.subr.mxu0 0.0
          %10250 = vmatpush1.msra.mxu0 0.0
          %10251 = vmatprep.subr.mxu0 0.0
          %10252 = vmatpush1.msra.mxu0 0.0
          %10253 = vmatprep.subr.mxu0 0.0
          %10254 = vmatpush1.msra.mxu0 0.0
          %10255 = vmatprep.subr.mxu0 0.0
          %10256 = vmatpush1.msra.mxu0 0.0
          %10257 = vmatprep.subr.mxu0 0.0
          %10258 = vmatpush1.msra.mxu0 0.0
          %10259 = vmatprep.subr.mxu0 0.0
          %10260 = vmatpush1.msra.mxu0 0.0
          %10261 = vmatprep.subr.mxu0 0.0
          %10262 = vmatpush1.msra.mxu0 0.0
          %10263 = vmatprep.subr.mxu0 0.0
          %10264 = vmatpush1.msra.mxu0 0.0
          %10265 = vmatprep.subr.mxu0 0.0
          %10266 = vmatpush1.msra.mxu0 0.0
          %10267 = vmatprep.subr.mxu0 0.0
          %10268 = vmatpush1.msra.mxu0 0.0
          %10269 = vmatprep.subr.mxu0 0.0
          %10270 = vmatpush1.msra.mxu0 0.0
          %10271 = vmatprep.subr.mxu0 0.0
          %10272 = vmatpush1.msra.mxu0 0.0
          %10273 = vmatprep.subr.mxu0 0.0
          %10274 = vmatpush1.msra.mxu0 %v10238
          %10275 = vmatprep.subr.mxu0 0.0
          %10276 = vmatpush1.msra.mxu0 %v10237
          %10277 = vmatprep.subr.mxu0 0.0
          %10278 = vmatpush1.msra.mxu0 %v10236
          %10279 = vmatprep.subr.mxu0 0.0
          %10280 = vmatpush1.msra.mxu0 %v10235
          %10281 = vmatprep.subr.mxu0 0.0
          %10282 = vmatpush2.msra.mxu0 0.0
          %10283 = vmatprep.subr.mxu0 0.0
          %10284 = vmatpush2.msra.mxu0 0.0
          %10285 = vmatprep.subr.mxu0 0.0
          %10286 = vmatpush2.msra.mxu0 0.0
          %10287 = vmatprep.subr.mxu0 0.0
          %10288 = vmatpush2.msra.mxu0 0.0
          %10289 = vmatprep.subr.mxu0 0.0
          %10290 = vmatpush2.msra.mxu0 0.0
          %10291 = vmatprep.subr.mxu0 0.0
          %10292 = vmatpush2.msra.mxu0 0.0
          %10293 = vmatprep.subr.mxu0 0.0
          %10294 = vmatpush2.msra.mxu0 0.0
          %10295 = vmatprep.subr.mxu0 0.0
          %10296 = vmatpush2.msra.mxu0 0.0
          %10297 = vmatprep.subr.mxu0 0.0
          %10298 = vmatpush2.msra.mxu0 0.0
          %10299 = vmatprep.subr.mxu0 0.0
          %10300 = vmatpush2.msra.mxu0 0.0
          %10301 = vmatprep.subr.mxu0 0.0
          %10302 = vmatpush2.msra.mxu0 0.0
          %10303 = vmatprep.subr.mxu0 0.0
          %10304 = vmatpush2.msra.mxu0 0.0
          %10305 = vmatprep.subr.mxu0 0.0
          %10306 = vmatpush2.msra.mxu0 0.0
          %10307 = vmatprep.subr.mxu0 0.0
          %10308 = vmatpush2.msra.mxu0 0.0
          %10309 = vmatprep.subr.mxu0 0.0
          %10310 = vmatpush2.msra.mxu0 0.0
          %10311 = vmatprep.subr.mxu0 0.0
          %10312 = vmatpush2.msra.mxu0 0.0
          %10313 = vmatprep.mubr.f32.mxu0 0.0
          %10314 = vmatmul.mubr.f32.gmra.mxu0 %v10247
          %v10315 = vpop.f32.mrf.mxu0
          %v10316 = vadd.f32 0.0, %v10315
          %v10317 = vpop.f32.mrf.mxu0
          %10318 = vdwg.mxu0
          %v10320 = vsel %vm10246, %v8165, 0
          %10322 = vmatprep.subr.mxu0 0.0
          %10323 = vmatpush1.msra.mxu0 0.0
          %10324 = vmatprep.subr.mxu0 0.0
          %10325 = vmatpush1.msra.mxu0 0.0
          %10326 = vmatprep.subr.mxu0 0.0
          %10327 = vmatpush1.msra.mxu0 0.0
          %10328 = vmatprep.subr.mxu0 0.0
          %10329 = vmatpush1.msra.mxu0 0.0
          %10330 = vmatprep.subr.mxu0 0.0
          %10331 = vmatpush1.msra.mxu0 0.0
          %10332 = vmatprep.subr.mxu0 0.0
          %10333 = vmatpush1.msra.mxu0 0.0
          %10334 = vmatprep.subr.mxu0 0.0
          %10335 = vmatpush1.msra.mxu0 0.0
          %10336 = vmatprep.subr.mxu0 0.0
          %10337 = vmatpush1.msra.mxu0 0.0
          %10338 = vmatprep.subr.mxu0 0.0
          %10339 = vmatpush1.msra.mxu0 0.0
          %10340 = vmatprep.subr.mxu0 0.0
          %10341 = vmatpush1.msra.mxu0 0.0
          %10342 = vmatprep.subr.mxu0 0.0
          %10343 = vmatpush1.msra.mxu0 0.0
          %10344 = vmatprep.subr.mxu0 0.0
          %10345 = vmatpush1.msra.mxu0 0.0
          %10346 = vmatprep.subr.mxu0 0.0
          %10347 = vmatpush1.msra.mxu0 %v10234
          %10348 = vmatprep.subr.mxu0 0.0
          %10349 = vmatpush1.msra.mxu0 %v10233
          %10350 = vmatprep.subr.mxu0 0.0
          %10351 = vmatpush1.msra.mxu0 %v10232
          %10352 = vmatprep.subr.mxu0 0.0
          %10353 = vmatpush1.msra.mxu0 %v10231
          %10354 = vmatprep.subr.mxu0 0.0
          %10355 = vmatpush2.msra.mxu0 0.0
          %10356 = vmatprep.subr.mxu0 0.0
          %10357 = vmatpush2.msra.mxu0 0.0
          %10358 = vmatprep.subr.mxu0 0.0
          %10359 = vmatpush2.msra.mxu0 0.0
          %10360 = vmatprep.subr.mxu0 0.0
          %10361 = vmatpush2.msra.mxu0 0.0
          %10362 = vmatprep.subr.mxu0 0.0
          %10363 = vmatpush2.msra.mxu0 0.0
          %10364 = vmatprep.subr.mxu0 0.0
          %10365 = vmatpush2.msra.mxu0 0.0
          %10366 = vmatprep.subr.mxu0 0.0
          %10367 = vmatpush2.msra.mxu0 0.0
          %10368 = vmatprep.subr.mxu0 0.0
          %10369 = vmatpush2.msra.mxu0 0.0
          %10370 = vmatprep.subr.mxu0 0.0
          %10371 = vmatpush2.msra.mxu0 0.0
          %10372 = vmatprep.subr.mxu0 0.0
          %10373 = vmatpush2.msra.mxu0 0.0
          %10374 = vmatprep.subr.mxu0 0.0
          %10375 = vmatpush2.msra.mxu0 0.0
          %10376 = vmatprep.subr.mxu0 0.0
          %10377 = vmatpush2.msra.mxu0 0.0
          %10378 = vmatprep.subr.mxu0 0.0
          %10379 = vmatpush2.msra.mxu0 0.0
          %10380 = vmatprep.subr.mxu0 0.0
          %10381 = vmatpush2.msra.mxu0 0.0
          %10382 = vmatprep.subr.mxu0 0.0
          %10383 = vmatpush2.msra.mxu0 0.0
          %10384 = vmatprep.subr.mxu0 0.0
          %10385 = vmatpush2.msra.mxu0 0.0
          %10386 = vmatprep.mubr.f32.mxu0 0.0
          %10387 = vmatmul.mubr.f32.gmra.mxu0 %v10320
          %v10388 = vpop.f32.mrf.mxu0
          %v10389 = vadd.f32 %v10316, %v10388
          %v10390 = vpop.f32.mrf.mxu0
          %10391 = vdwg.mxu0
          %10393 = vrot.lane.b32.xlu0 %v8167, 64
          %v10394 = vpop.permute.xlu0 %10393
          %v10395 = vsel %vm10246, %v10394, 0
          %10397 = vmatprep.subr.mxu0 0.0
          %10398 = vmatpush1.msra.mxu0 0.0
          %10399 = vmatprep.subr.mxu0 0.0
          %10400 = vmatpush1.msra.mxu0 0.0
          %10401 = vmatprep.subr.mxu0 0.0
          %10402 = vmatpush1.msra.mxu0 0.0
          %10403 = vmatprep.subr.mxu0 0.0
          %10404 = vmatpush1.msra.mxu0 0.0
          %10405 = vmatprep.subr.mxu0 0.0
          %10406 = vmatpush1.msra.mxu0 0.0
          %10407 = vmatprep.subr.mxu0 0.0
          %10408 = vmatpush1.msra.mxu0 0.0
          %10409 = vmatprep.subr.mxu0 0.0
          %10410 = vmatpush1.msra.mxu0 0.0
          %10411 = vmatprep.subr.mxu0 0.0
          %10412 = vmatpush1.msra.mxu0 0.0
          %10413 = vmatprep.subr.mxu0 0.0
          %10414 = vmatpush1.msra.mxu0 0.0
          %10415 = vmatprep.subr.mxu0 0.0
          %10416 = vmatpush1.msra.mxu0 0.0
          %10417 = vmatprep.subr.mxu0 0.0
          %10418 = vmatpush1.msra.mxu0 0.0
          %10419 = vmatprep.subr.mxu0 0.0
          %10420 = vmatpush1.msra.mxu0 0.0
          %10421 = vmatprep.subr.mxu0 0.0
          %10422 = vmatpush1.msra.mxu0 %v10242
          %10423 = vmatprep.subr.mxu0 0.0
          %10424 = vmatpush1.msra.mxu0 %v10241
          %10425 = vmatprep.subr.mxu0 0.0
          %10426 = vmatpush1.msra.mxu0 %v10240
          %10427 = vmatprep.subr.mxu0 0.0
          %10428 = vmatpush1.msra.mxu0 %v10239
          %10429 = vmatprep.subr.mxu0 0.0
          %10430 = vmatpush2.msra.mxu0 0.0
          %10431 = vmatprep.subr.mxu0 0.0
          %10432 = vmatpush2.msra.mxu0 0.0
          %10433 = vmatprep.subr.mxu0 0.0
          %10434 = vmatpush2.msra.mxu0 0.0
          %10435 = vmatprep.subr.mxu0 0.0
          %10436 = vmatpush2.msra.mxu0 0.0
          %10437 = vmatprep.subr.mxu0 0.0
          %10438 = vmatpush2.msra.mxu0 0.0
          %10439 = vmatprep.subr.mxu0 0.0
          %10440 = vmatpush2.msra.mxu0 0.0
          %10441 = vmatprep.subr.mxu0 0.0
          %10442 = vmatpush2.msra.mxu0 0.0
          %10443 = vmatprep.subr.mxu0 0.0
          %10444 = vmatpush2.msra.mxu0 0.0
          %10445 = vmatprep.subr.mxu0 0.0
          %10446 = vmatpush2.msra.mxu0 0.0
          %10447 = vmatprep.subr.mxu0 0.0
          %10448 = vmatpush2.msra.mxu0 0.0
          %10449 = vmatprep.subr.mxu0 0.0
          %10450 = vmatpush2.msra.mxu0 0.0
          %10451 = vmatprep.subr.mxu0 0.0
          %10452 = vmatpush2.msra.mxu0 0.0
          %10453 = vmatprep.subr.mxu0 0.0
          %10454 = vmatpush2.msra.mxu0 0.0
          %10455 = vmatprep.subr.mxu0 0.0
          %10456 = vmatpush2.msra.mxu0 0.0
          %10457 = vmatprep.subr.mxu0 0.0
          %10458 = vmatpush2.msra.mxu0 0.0
          %10459 = vmatprep.subr.mxu0 0.0
          %10460 = vmatpush2.msra.mxu0 0.0
          %10461 = vmatprep.mubr.f32.mxu0 0.0
          %10462 = vmatmul.mubr.f32.gmra.mxu0 %v10395
          %v10463 = vpop.f32.mrf.mxu0
          %v10464 = vadd.f32 0.0, %v10463
          %v10465 = vpop.f32.mrf.mxu0
          %10466 = vdwg.mxu0
          %v10467 = vadd.f32 %v10389, %v10464
          %v10468 = vld [vmem:[%s16] sm:$0x1]
          %v10470 = vlaneseq
          %v10471 = vshrl.u32 %v10470, 7
          %v10472 = vsub.s32 0, %v10471
          %v10473 = vrot.slane %v10468, %v10472
          %v10475 = vadd.f32 %v10467, %v10473
          %v10476 = vmax.f32 %v10475, 0.0
          %v10477 = vld [vmem:[%s17] sm:$0xff]
          %v10478 = vld [vmem:[%s17 + $0x8] sm:$0xff]
          %v10479 = vld [vmem:[%s17 + $0x10] sm:$0xff]
          %v10480 = vld [vmem:[%s17 + $0x18] sm:$0xff]
          %v10481 = vld [vmem:[%s17 + $0x20] sm:$0xff]
          %v10482 = vld [vmem:[%s17 + $0x28] sm:$0xff]
          %v10483 = vld [vmem:[%s17 + $0x30] sm:$0xff]
          %v10484 = vld [vmem:[%s17 + $0x38] sm:$0xff]
          %v10485 = vld [vmem:[%s17 + $0x40] sm:$0xff]
          %v10486 = vld [vmem:[%s17 + $0x48] sm:$0xff]
          %v10487 = vld [vmem:[%s17 + $0x50] sm:$0xff]
          %v10488 = vld [vmem:[%s17 + $0x58] sm:$0xff]
          %10490 = vrot.lane.b32.xlu0 %v9520, 96
          %v10491 = vpop.permute.xlu0 %10490
          %v10492 = vsel %vm10246, %v10491, 0
          %10494 = vmatprep.subr.mxu0 0.0
          %10495 = vmatpush1.msra.mxu0 0.0
          %10496 = vmatprep.subr.mxu0 0.0
          %10497 = vmatpush1.msra.mxu0 0.0
          %10498 = vmatprep.subr.mxu0 0.0
          %10499 = vmatpush1.msra.mxu0 0.0
          %10500 = vmatprep.subr.mxu0 0.0
          %10501 = vmatpush1.msra.mxu0 0.0
          %10502 = vmatprep.subr.mxu0 0.0
          %10503 = vmatpush1.msra.mxu0 0.0
          %10504 = vmatprep.subr.mxu0 0.0
          %10505 = vmatpush1.msra.mxu0 0.0
          %10506 = vmatprep.subr.mxu0 0.0
          %10507 = vmatpush1.msra.mxu0 0.0
          %10508 = vmatprep.subr.mxu0 0.0
          %10509 = vmatpush1.msra.mxu0 0.0
          %10510 = vmatprep.subr.mxu0 0.0
          %10511 = vmatpush1.msra.mxu0 0.0
          %10512 = vmatprep.subr.mxu0 0.0
          %10513 = vmatpush1.msra.mxu0 0.0
          %10514 = vmatprep.subr.mxu0 0.0
          %10515 = vmatpush1.msra.mxu0 0.0
          %10516 = vmatprep.subr.mxu0 0.0
          %10517 = vmatpush1.msra.mxu0 0.0
          %10518 = vmatprep.subr.mxu0 0.0
          %10519 = vmatpush1.msra.mxu0 %v10484
          %10520 = vmatprep.subr.mxu0 0.0
          %10521 = vmatpush1.msra.mxu0 %v10483
          %10522 = vmatprep.subr.mxu0 0.0
          %10523 = vmatpush1.msra.mxu0 %v10482
          %10524 = vmatprep.subr.mxu0 0.0
          %10525 = vmatpush1.msra.mxu0 %v10481
          %10526 = vmatprep.subr.mxu0 0.0
          %10527 = vmatpush2.msra.mxu0 0.0
          %10528 = vmatprep.subr.mxu0 0.0
          %10529 = vmatpush2.msra.mxu0 0.0
          %10530 = vmatprep.subr.mxu0 0.0
          %10531 = vmatpush2.msra.mxu0 0.0
          %10532 = vmatprep.subr.mxu0 0.0
          %10533 = vmatpush2.msra.mxu0 0.0
          %10534 = vmatprep.subr.mxu0 0.0
          %10535 = vmatpush2.msra.mxu0 0.0
          %10536 = vmatprep.subr.mxu0 0.0
          %10537 = vmatpush2.msra.mxu0 0.0
          %10538 = vmatprep.subr.mxu0 0.0
          %10539 = vmatpush2.msra.mxu0 0.0
          %10540 = vmatprep.subr.mxu0 0.0
          %10541 = vmatpush2.msra.mxu0 0.0
          %10542 = vmatprep.subr.mxu0 0.0
          %10543 = vmatpush2.msra.mxu0 0.0
          %10544 = vmatprep.subr.mxu0 0.0
          %10545 = vmatpush2.msra.mxu0 0.0
          %10546 = vmatprep.subr.mxu0 0.0
          %10547 = vmatpush2.msra.mxu0 0.0
          %10548 = vmatprep.subr.mxu0 0.0
          %10549 = vmatpush2.msra.mxu0 0.0
          %10550 = vmatprep.subr.mxu0 0.0
          %10551 = vmatpush2.msra.mxu0 0.0
          %10552 = vmatprep.subr.mxu0 0.0
          %10553 = vmatpush2.msra.mxu0 0.0
          %10554 = vmatprep.subr.mxu0 0.0
          %10555 = vmatpush2.msra.mxu0 0.0
          %10556 = vmatprep.subr.mxu0 0.0
          %10557 = vmatpush2.msra.mxu0 0.0
          %10558 = vmatprep.mubr.f32.mxu0 0.0
          %10559 = vmatmul.mubr.f32.gmra.mxu0 %v10492
          %v10560 = vpop.f32.mrf.mxu0
          %v10561 = vadd.f32 0.0, %v10560
          %v10562 = vpop.f32.mrf.mxu0
          %10563 = vdwg.mxu0
          %v10565 = vsel %vm10246, %v9519, 0
          %10567 = vmatprep.subr.mxu0 0.0
          %10568 = vmatpush1.msra.mxu0 0.0
          %10569 = vmatprep.subr.mxu0 0.0
          %10570 = vmatpush1.msra.mxu0 0.0
          %10571 = vmatprep.subr.mxu0 0.0
          %10572 = vmatpush1.msra.mxu0 0.0
          %10573 = vmatprep.subr.mxu0 0.0
          %10574 = vmatpush1.msra.mxu0 0.0
          %10575 = vmatprep.subr.mxu0 0.0
          %10576 = vmatpush1.msra.mxu0 0.0
          %10577 = vmatprep.subr.mxu0 0.0
          %10578 = vmatpush1.msra.mxu0 0.0
          %10579 = vmatprep.subr.mxu0 0.0
          %10580 = vmatpush1.msra.mxu0 0.0
          %10581 = vmatprep.subr.mxu0 0.0
          %10582 = vmatpush1.msra.mxu0 0.0
          %10583 = vmatprep.subr.mxu0 0.0
          %10584 = vmatpush1.msra.mxu0 0.0
          %10585 = vmatprep.subr.mxu0 0.0
          %10586 = vmatpush1.msra.mxu0 0.0
          %10587 = vmatprep.subr.mxu0 0.0
          %10588 = vmatpush1.msra.mxu0 0.0
          %10589 = vmatprep.subr.mxu0 0.0
          %10590 = vmatpush1.msra.mxu0 0.0
          %10591 = vmatprep.subr.mxu0 0.0
          %10592 = vmatpush1.msra.mxu0 %v10480
          %10593 = vmatprep.subr.mxu0 0.0
          %10594 = vmatpush1.msra.mxu0 %v10479
          %10595 = vmatprep.subr.mxu0 0.0
          %10596 = vmatpush1.msra.mxu0 %v10478
          %10597 = vmatprep.subr.mxu0 0.0
          %10598 = vmatpush1.msra.mxu0 %v10477
          %10599 = vmatprep.subr.mxu0 0.0
          %10600 = vmatpush2.msra.mxu0 0.0
          %10601 = vmatprep.subr.mxu0 0.0
          %10602 = vmatpush2.msra.mxu0 0.0
          %10603 = vmatprep.subr.mxu0 0.0
          %10604 = vmatpush2.msra.mxu0 0.0
          %10605 = vmatprep.subr.mxu0 0.0
          %10606 = vmatpush2.msra.mxu0 0.0
          %10607 = vmatprep.subr.mxu0 0.0
          %10608 = vmatpush2.msra.mxu0 0.0
          %10609 = vmatprep.subr.mxu0 0.0
          %10610 = vmatpush2.msra.mxu0 0.0
          %10611 = vmatprep.subr.mxu0 0.0
          %10612 = vmatpush2.msra.mxu0 0.0
          %10613 = vmatprep.subr.mxu0 0.0
          %10614 = vmatpush2.msra.mxu0 0.0
          %10615 = vmatprep.subr.mxu0 0.0
          %10616 = vmatpush2.msra.mxu0 0.0
          %10617 = vmatprep.subr.mxu0 0.0
          %10618 = vmatpush2.msra.mxu0 0.0
          %10619 = vmatprep.subr.mxu0 0.0
          %10620 = vmatpush2.msra.mxu0 0.0
          %10621 = vmatprep.subr.mxu0 0.0
          %10622 = vmatpush2.msra.mxu0 0.0
          %10623 = vmatprep.subr.mxu0 0.0
          %10624 = vmatpush2.msra.mxu0 0.0
          %10625 = vmatprep.subr.mxu0 0.0
          %10626 = vmatpush2.msra.mxu0 0.0
          %10627 = vmatprep.subr.mxu0 0.0
          %10628 = vmatpush2.msra.mxu0 0.0
          %10629 = vmatprep.subr.mxu0 0.0
          %10630 = vmatpush2.msra.mxu0 0.0
          %10631 = vmatprep.mubr.f32.mxu0 0.0
          %10632 = vmatmul.mubr.f32.gmra.mxu0 %v10565
          %v10633 = vpop.f32.mrf.mxu0
          %v10634 = vadd.f32 %v10561, %v10633
          %v10635 = vpop.f32.mrf.mxu0
          %10636 = vdwg.mxu0
          %10638 = vrot.lane.b32.xlu0 %v9521, 64
          %v10639 = vpop.permute.xlu0 %10638
          %v10640 = vsel %vm10246, %v10639, 0
          %10642 = vmatprep.subr.mxu0 0.0
          %10643 = vmatpush1.msra.mxu0 0.0
          %10644 = vmatprep.subr.mxu0 0.0
          %10645 = vmatpush1.msra.mxu0 0.0
          %10646 = vmatprep.subr.mxu0 0.0
          %10647 = vmatpush1.msra.mxu0 0.0
          %10648 = vmatprep.subr.mxu0 0.0
          %10649 = vmatpush1.msra.mxu0 0.0
          %10650 = vmatprep.subr.mxu0 0.0
          %10651 = vmatpush1.msra.mxu0 0.0
          %10652 = vmatprep.subr.mxu0 0.0
          %10653 = vmatpush1.msra.mxu0 0.0
          %10654 = vmatprep.subr.mxu0 0.0
          %10655 = vmatpush1.msra.mxu0 0.0
          %10656 = vmatprep.subr.mxu0 0.0
          %10657 = vmatpush1.msra.mxu0 0.0
          %10658 = vmatprep.subr.mxu0 0.0
          %10659 = vmatpush1.msra.mxu0 0.0
          %10660 = vmatprep.subr.mxu0 0.0
          %10661 = vmatpush1.msra.mxu0 0.0
          %10662 = vmatprep.subr.mxu0 0.0
          %10663 = vmatpush1.msra.mxu0 0.0
          %10664 = vmatprep.subr.mxu0 0.0
          %10665 = vmatpush1.msra.mxu0 0.0
          %10666 = vmatprep.subr.mxu0 0.0
          %10667 = vmatpush1.msra.mxu0 %v10488
          %10668 = vmatprep.subr.mxu0 0.0
          %10669 = vmatpush1.msra.mxu0 %v10487
          %10670 = vmatprep.subr.mxu0 0.0
          %10671 = vmatpush1.msra.mxu0 %v10486
          %10672 = vmatprep.subr.mxu0 0.0
          %10673 = vmatpush1.msra.mxu0 %v10485
          %10674 = vmatprep.subr.mxu0 0.0
          %10675 = vmatpush2.msra.mxu0 0.0
          %10676 = vmatprep.subr.mxu0 0.0
          %10677 = vmatpush2.msra.mxu0 0.0
          %10678 = vmatprep.subr.mxu0 0.0
          %10679 = vmatpush2.msra.mxu0 0.0
          %10680 = vmatprep.subr.mxu0 0.0
          %10681 = vmatpush2.msra.mxu0 0.0
          %10682 = vmatprep.subr.mxu0 0.0
          %10683 = vmatpush2.msra.mxu0 0.0
          %10684 = vmatprep.subr.mxu0 0.0
          %10685 = vmatpush2.msra.mxu0 0.0
          %10686 = vmatprep.subr.mxu0 0.0
          %10687 = vmatpush2.msra.mxu0 0.0
          %10688 = vmatprep.subr.mxu0 0.0
          %10689 = vmatpush2.msra.mxu0 0.0
          %10690 = vmatprep.subr.mxu0 0.0
          %10691 = vmatpush2.msra.mxu0 0.0
          %10692 = vmatprep.subr.mxu0 0.0
          %10693 = vmatpush2.msra.mxu0 0.0
          %10694 = vmatprep.subr.mxu0 0.0
          %10695 = vmatpush2.msra.mxu0 0.0
          %10696 = vmatprep.subr.mxu0 0.0
          %10697 = vmatpush2.msra.mxu0 0.0
          %10698 = vmatprep.subr.mxu0 0.0
          %10699 = vmatpush2.msra.mxu0 0.0
          %10700 = vmatprep.subr.mxu0 0.0
          %10701 = vmatpush2.msra.mxu0 0.0
          %10702 = vmatprep.subr.mxu0 0.0
          %10703 = vmatpush2.msra.mxu0 0.0
          %10704 = vmatprep.subr.mxu0 0.0
          %10705 = vmatpush2.msra.mxu0 0.0
          %10706 = vmatprep.mubr.f32.mxu0 0.0
          %10707 = vmatmul.mubr.f32.gmra.mxu0 %v10640
          %v10708 = vpop.f32.mrf.mxu0
          %v10709 = vadd.f32 0.0, %v10708
          %v10710 = vpop.f32.mrf.mxu0
          %10711 = vdwg.mxu0
          %v10712 = vadd.f32 %v10634, %v10709
          %v10713 = vld [vmem:[%s18] sm:$0x1]
          %v10715 = vlaneseq
          %v10716 = vshrl.u32 %v10715, 7
          %v10717 = vsub.s32 0, %v10716
          %v10718 = vrot.slane %v10713, %v10717
          %v10720 = vadd.f32 %v10712, %v10718
          %v10721 = vmax.f32 %v10720, 0.0
          %v10722 = vld [vmem:[%s19] sm:$0xff]
          %v10723 = vld [vmem:[%s19 + $0x8] sm:$0xff]
          %v10724 = vld [vmem:[%s19 + $0x10] sm:$0xff]
          %v10725 = vld [vmem:[%s19 + $0x18] sm:$0xff]
          %v10726 = vld [vmem:[%s19 + $0x20] sm:$0xff]
          %v10727 = vld [vmem:[%s19 + $0x28] sm:$0xff]
          %v10728 = vld [vmem:[%s19 + $0x30] sm:$0xff]
          %v10729 = vld [vmem:[%s19 + $0x38] sm:$0xff]
          %v10730 = vld [vmem:[%s19 + $0x40] sm:$0xff]
          %v10731 = vld [vmem:[%s19 + $0x48] sm:$0xff]
          %v10732 = vld [vmem:[%s19 + $0x50] sm:$0xff]
          %v10733 = vld [vmem:[%s19 + $0x58] sm:$0xff]
          %10735 = vrot.lane.b32.xlu0 %v10221, 96
          %v10736 = vpop.permute.xlu0 %10735
          %v10737 = vsel %vm10246, %v10736, 0
          %10739 = vmatprep.subr.mxu0 0.0
          %10740 = vmatpush1.msra.mxu0 0.0
          %10741 = vmatprep.subr.mxu0 0.0
          %10742 = vmatpush1.msra.mxu0 0.0
          %10743 = vmatprep.subr.mxu0 0.0
          %10744 = vmatpush1.msra.mxu0 0.0
          %10745 = vmatprep.subr.mxu0 0.0
          %10746 = vmatpush1.msra.mxu0 0.0
          %10747 = vmatprep.subr.mxu0 0.0
          %10748 = vmatpush1.msra.mxu0 0.0
          %10749 = vmatprep.subr.mxu0 0.0
          %10750 = vmatpush1.msra.mxu0 0.0
          %10751 = vmatprep.subr.mxu0 0.0
          %10752 = vmatpush1.msra.mxu0 0.0
          %10753 = vmatprep.subr.mxu0 0.0
          %10754 = vmatpush1.msra.mxu0 0.0
          %10755 = vmatprep.subr.mxu0 0.0
          %10756 = vmatpush1.msra.mxu0 0.0
          %10757 = vmatprep.subr.mxu0 0.0
          %10758 = vmatpush1.msra.mxu0 0.0
          %10759 = vmatprep.subr.mxu0 0.0
          %10760 = vmatpush1.msra.mxu0 0.0
          %10761 = vmatprep.subr.mxu0 0.0
          %10762 = vmatpush1.msra.mxu0 0.0
          %10763 = vmatprep.subr.mxu0 0.0
          %10764 = vmatpush1.msra.mxu0 %v10729
          %10765 = vmatprep.subr.mxu0 0.0
          %10766 = vmatpush1.msra.mxu0 %v10728
          %10767 = vmatprep.subr.mxu0 0.0
          %10768 = vmatpush1.msra.mxu0 %v10727
          %10769 = vmatprep.subr.mxu0 0.0
          %10770 = vmatpush1.msra.mxu0 %v10726
          %10771 = vmatprep.subr.mxu0 0.0
          %10772 = vmatpush2.msra.mxu0 0.0
          %10773 = vmatprep.subr.mxu0 0.0
          %10774 = vmatpush2.msra.mxu0 0.0
          %10775 = vmatprep.subr.mxu0 0.0
          %10776 = vmatpush2.msra.mxu0 0.0
          %10777 = vmatprep.subr.mxu0 0.0
          %10778 = vmatpush2.msra.mxu0 0.0
          %10779 = vmatprep.subr.mxu0 0.0
          %10780 = vmatpush2.msra.mxu0 0.0
          %10781 = vmatprep.subr.mxu0 0.0
          %10782 = vmatpush2.msra.mxu0 0.0
          %10783 = vmatprep.subr.mxu0 0.0
          %10784 = vmatpush2.msra.mxu0 0.0
          %10785 = vmatprep.subr.mxu0 0.0
          %10786 = vmatpush2.msra.mxu0 0.0
          %10787 = vmatprep.subr.mxu0 0.0
          %10788 = vmatpush2.msra.mxu0 0.0
          %10789 = vmatprep.subr.mxu0 0.0
          %10790 = vmatpush2.msra.mxu0 0.0
          %10791 = vmatprep.subr.mxu0 0.0
          %10792 = vmatpush2.msra.mxu0 0.0
          %10793 = vmatprep.subr.mxu0 0.0
          %10794 = vmatpush2.msra.mxu0 0.0
          %10795 = vmatprep.subr.mxu0 0.0
          %10796 = vmatpush2.msra.mxu0 0.0
          %10797 = vmatprep.subr.mxu0 0.0
          %10798 = vmatpush2.msra.mxu0 0.0
          %10799 = vmatprep.subr.mxu0 0.0
          %10800 = vmatpush2.msra.mxu0 0.0
          %10801 = vmatprep.subr.mxu0 0.0
          %10802 = vmatpush2.msra.mxu0 0.0
          %10803 = vmatprep.mubr.f32.mxu0 0.0
          %10804 = vmatmul.mubr.f32.gmra.mxu0 %v10737
          %v10805 = vpop.f32.mrf.mxu0
          %v10806 = vadd.f32 0.0, %v10805
          %v10807 = vpop.f32.mrf.mxu0
          %10808 = vdwg.mxu0
          %v10810 = vsel %vm10246, %v10218, 0
          %10812 = vmatprep.subr.mxu0 0.0
          %10813 = vmatpush1.msra.mxu0 0.0
          %10814 = vmatprep.subr.mxu0 0.0
          %10815 = vmatpush1.msra.mxu0 0.0
          %10816 = vmatprep.subr.mxu0 0.0
          %10817 = vmatpush1.msra.mxu0 0.0
          %10818 = vmatprep.subr.mxu0 0.0
          %10819 = vmatpush1.msra.mxu0 0.0
          %10820 = vmatprep.subr.mxu0 0.0
          %10821 = vmatpush1.msra.mxu0 0.0
          %10822 = vmatprep.subr.mxu0 0.0
          %10823 = vmatpush1.msra.mxu0 0.0
          %10824 = vmatprep.subr.mxu0 0.0
          %10825 = vmatpush1.msra.mxu0 0.0
          %10826 = vmatprep.subr.mxu0 0.0
          %10827 = vmatpush1.msra.mxu0 0.0
          %10828 = vmatprep.subr.mxu0 0.0
          %10829 = vmatpush1.msra.mxu0 0.0
          %10830 = vmatprep.subr.mxu0 0.0
          %10831 = vmatpush1.msra.mxu0 0.0
          %10832 = vmatprep.subr.mxu0 0.0
          %10833 = vmatpush1.msra.mxu0 0.0
          %10834 = vmatprep.subr.mxu0 0.0
          %10835 = vmatpush1.msra.mxu0 0.0
          %10836 = vmatprep.subr.mxu0 0.0
          %10837 = vmatpush1.msra.mxu0 %v10725
          %10838 = vmatprep.subr.mxu0 0.0
          %10839 = vmatpush1.msra.mxu0 %v10724
          %10840 = vmatprep.subr.mxu0 0.0
          %10841 = vmatpush1.msra.mxu0 %v10723
          %10842 = vmatprep.subr.mxu0 0.0
          %10843 = vmatpush1.msra.mxu0 %v10722
          %10844 = vmatprep.subr.mxu0 0.0
          %10845 = vmatpush2.msra.mxu0 0.0
          %10846 = vmatprep.subr.mxu0 0.0
          %10847 = vmatpush2.msra.mxu0 0.0
          %10848 = vmatprep.subr.mxu0 0.0
          %10849 = vmatpush2.msra.mxu0 0.0
          %10850 = vmatprep.subr.mxu0 0.0
          %10851 = vmatpush2.msra.mxu0 0.0
          %10852 = vmatprep.subr.mxu0 0.0
          %10853 = vmatpush2.msra.mxu0 0.0
          %10854 = vmatprep.subr.mxu0 0.0
          %10855 = vmatpush2.msra.mxu0 0.0
          %10856 = vmatprep.subr.mxu0 0.0
          %10857 = vmatpush2.msra.mxu0 0.0
          %10858 = vmatprep.subr.mxu0 0.0
          %10859 = vmatpush2.msra.mxu0 0.0
          %10860 = vmatprep.subr.mxu0 0.0
          %10861 = vmatpush2.msra.mxu0 0.0
          %10862 = vmatprep.subr.mxu0 0.0
          %10863 = vmatpush2.msra.mxu0 0.0
          %10864 = vmatprep.subr.mxu0 0.0
          %10865 = vmatpush2.msra.mxu0 0.0
          %10866 = vmatprep.subr.mxu0 0.0
          %10867 = vmatpush2.msra.mxu0 0.0
          %10868 = vmatprep.subr.mxu0 0.0
          %10869 = vmatpush2.msra.mxu0 0.0
          %10870 = vmatprep.subr.mxu0 0.0
          %10871 = vmatpush2.msra.mxu0 0.0
          %10872 = vmatprep.subr.mxu0 0.0
          %10873 = vmatpush2.msra.mxu0 0.0
          %10874 = vmatprep.subr.mxu0 0.0
          %10875 = vmatpush2.msra.mxu0 0.0
          %10876 = vmatprep.mubr.f32.mxu0 0.0
          %10877 = vmatmul.mubr.f32.gmra.mxu0 %v10810
          %v10878 = vpop.f32.mrf.mxu0
          %v10879 = vadd.f32 %v10806, %v10878
          %v10880 = vpop.f32.mrf.mxu0
          %10881 = vdwg.mxu0
          %10883 = vrot.lane.b32.xlu0 %v10226, 64
          %v10884 = vpop.permute.xlu0 %10883
          %v10885 = vsel %vm10246, %v10884, 0
          %10887 = vmatprep.subr.mxu0 0.0
          %10888 = vmatpush1.msra.mxu0 0.0
          %10889 = vmatprep.subr.mxu0 0.0
          %10890 = vmatpush1.msra.mxu0 0.0
          %10891 = vmatprep.subr.mxu0 0.0
          %10892 = vmatpush1.msra.mxu0 0.0
          %10893 = vmatprep.subr.mxu0 0.0
          %10894 = vmatpush1.msra.mxu0 0.0
          %10895 = vmatprep.subr.mxu0 0.0
          %10896 = vmatpush1.msra.mxu0 0.0
          %10897 = vmatprep.subr.mxu0 0.0
          %10898 = vmatpush1.msra.mxu0 0.0
          %10899 = vmatprep.subr.mxu0 0.0
          %10900 = vmatpush1.msra.mxu0 0.0
          %10901 = vmatprep.subr.mxu0 0.0
          %10902 = vmatpush1.msra.mxu0 0.0
          %10903 = vmatprep.subr.mxu0 0.0
          %10904 = vmatpush1.msra.mxu0 0.0
          %10905 = vmatprep.subr.mxu0 0.0
          %10906 = vmatpush1.msra.mxu0 0.0
          %10907 = vmatprep.subr.mxu0 0.0
          %10908 = vmatpush1.msra.mxu0 0.0
          %10909 = vmatprep.subr.mxu0 0.0
          %10910 = vmatpush1.msra.mxu0 0.0
          %10911 = vmatprep.subr.mxu0 0.0
          %10912 = vmatpush1.msra.mxu0 %v10733
          %10913 = vmatprep.subr.mxu0 0.0
          %10914 = vmatpush1.msra.mxu0 %v10732
          %10915 = vmatprep.subr.mxu0 0.0
          %10916 = vmatpush1.msra.mxu0 %v10731
          %10917 = vmatprep.subr.mxu0 0.0
          %10918 = vmatpush1.msra.mxu0 %v10730
          %10919 = vmatprep.subr.mxu0 0.0
          %10920 = vmatpush2.msra.mxu0 0.0
          %10921 = vmatprep.subr.mxu0 0.0
          %10922 = vmatpush2.msra.mxu0 0.0
          %10923 = vmatprep.subr.mxu0 0.0
          %10924 = vmatpush2.msra.mxu0 0.0
          %10925 = vmatprep.subr.mxu0 0.0
          %10926 = vmatpush2.msra.mxu0 0.0
          %10927 = vmatprep.subr.mxu0 0.0
          %10928 = vmatpush2.msra.mxu0 0.0
          %10929 = vmatprep.subr.mxu0 0.0
          %10930 = vmatpush2.msra.mxu0 0.0
          %10931 = vmatprep.subr.mxu0 0.0
          %10932 = vmatpush2.msra.mxu0 0.0
          %10933 = vmatprep.subr.mxu0 0.0
          %10934 = vmatpush2.msra.mxu0 0.0
          %10935 = vmatprep.subr.mxu0 0.0
          %10936 = vmatpush2.msra.mxu0 0.0
          %10937 = vmatprep.subr.mxu0 0.0
          %10938 = vmatpush2.msra.mxu0 0.0
          %10939 = vmatprep.subr.mxu0 0.0
          %10940 = vmatpush2.msra.mxu0 0.0
          %10941 = vmatprep.subr.mxu0 0.0
          %10942 = vmatpush2.msra.mxu0 0.0
          %10943 = vmatprep.subr.mxu0 0.0
          %10944 = vmatpush2.msra.mxu0 0.0
          %10945 = vmatprep.subr.mxu0 0.0
          %10946 = vmatpush2.msra.mxu0 0.0
          %10947 = vmatprep.subr.mxu0 0.0
          %10948 = vmatpush2.msra.mxu0 0.0
          %10949 = vmatprep.subr.mxu0 0.0
          %10950 = vmatpush2.msra.mxu0 0.0
          %10951 = vmatprep.mubr.f32.mxu0 0.0
          %10952 = vmatmul.mubr.f32.gmra.mxu0 %v10885
          %v10953 = vpop.f32.mrf.mxu0
          %v10954 = vadd.f32 0.0, %v10953
          %v10955 = vpop.f32.mrf.mxu0
          %10956 = vdwg.mxu0
          %v10957 = vadd.f32 %v10879, %v10954
          %v10958 = vld [vmem:[%s20] sm:$0x1]
          %v10960 = vlaneseq
          %v10961 = vshrl.u32 %v10960, 7
          %v10962 = vsub.s32 0, %v10961
          %v10963 = vrot.slane %v10958, %v10962
          %v10965 = vadd.f32 %v10957, %v10963
          %v10966 = vmax.f32 %v10965, 0.0
          %v10967 = vld [vmem:[%s21] sm:$0xff]
          %v10968 = vld [vmem:[%s21 + $0x8] sm:$0xff]
          %v10969 = vld [vmem:[%s21 + $0x10] sm:$0xff]
          %v10970 = vld [vmem:[%s21 + $0x18] sm:$0xff]
          %v10971 = vld [vmem:[%s21 + $0x20] sm:$0xff]
          %v10972 = vld [vmem:[%s21 + $0x28] sm:$0xff]
          %v10973 = vld [vmem:[%s21 + $0x30] sm:$0xff]
          %v10974 = vld [vmem:[%s21 + $0x38] sm:$0xff]
          %v10975 = vld [vmem:[%s21 + $0x40] sm:$0xff]
          %v10976 = vld [vmem:[%s21 + $0x48] sm:$0xff]
          %v10977 = vld [vmem:[%s21 + $0x50] sm:$0xff]
          %v10978 = vld [vmem:[%s21 + $0x58] sm:$0xff]
          %v10980 = vsel %vm10246, %v10721, 0
          %10982 = vmatprep.subr.mxu0 0.0
          %10983 = vmatpush1.msra.mxu0 0.0
          %10984 = vmatprep.subr.mxu0 0.0
          %10985 = vmatpush1.msra.mxu0 0.0
          %10986 = vmatprep.subr.mxu0 0.0
          %10987 = vmatpush1.msra.mxu0 0.0
          %10988 = vmatprep.subr.mxu0 0.0
          %10989 = vmatpush1.msra.mxu0 0.0
          %10990 = vmatprep.subr.mxu0 0.0
          %10991 = vmatpush1.msra.mxu0 0.0
          %10992 = vmatprep.subr.mxu0 0.0
          %10993 = vmatpush1.msra.mxu0 0.0
          %10994 = vmatprep.subr.mxu0 0.0
          %10995 = vmatpush1.msra.mxu0 0.0
          %10996 = vmatprep.subr.mxu0 0.0
          %10997 = vmatpush1.msra.mxu0 0.0
          %10998 = vmatprep.subr.mxu0 0.0
          %10999 = vmatpush1.msra.mxu0 0.0
          %11000 = vmatprep.subr.mxu0 0.0
          %11001 = vmatpush1.msra.mxu0 0.0
          %11002 = vmatprep.subr.mxu0 0.0
          %11003 = vmatpush1.msra.mxu0 0.0
          %11004 = vmatprep.subr.mxu0 0.0
          %11005 = vmatpush1.msra.mxu0 0.0
          %11006 = vmatprep.subr.mxu0 0.0
          %11007 = vmatpush1.msra.mxu0 %v10974
          %11008 = vmatprep.subr.mxu0 0.0
          %11009 = vmatpush1.msra.mxu0 %v10973
          %11010 = vmatprep.subr.mxu0 0.0
          %11011 = vmatpush1.msra.mxu0 %v10972
          %11012 = vmatprep.subr.mxu0 0.0
          %11013 = vmatpush1.msra.mxu0 %v10971
          %11014 = vmatprep.subr.mxu0 0.0
          %11015 = vmatpush2.msra.mxu0 0.0
          %11016 = vmatprep.subr.mxu0 0.0
          %11017 = vmatpush2.msra.mxu0 0.0
          %11018 = vmatprep.subr.mxu0 0.0
          %11019 = vmatpush2.msra.mxu0 0.0
          %11020 = vmatprep.subr.mxu0 0.0
          %11021 = vmatpush2.msra.mxu0 0.0
          %11022 = vmatprep.subr.mxu0 0.0
          %11023 = vmatpush2.msra.mxu0 0.0
          %11024 = vmatprep.subr.mxu0 0.0
          %11025 = vmatpush2.msra.mxu0 0.0
          %11026 = vmatprep.subr.mxu0 0.0
          %11027 = vmatpush2.msra.mxu0 0.0
          %11028 = vmatprep.subr.mxu0 0.0
          %11029 = vmatpush2.msra.mxu0 0.0
          %11030 = vmatprep.subr.mxu0 0.0
          %11031 = vmatpush2.msra.mxu0 0.0
          %11032 = vmatprep.subr.mxu0 0.0
          %11033 = vmatpush2.msra.mxu0 0.0
          %11034 = vmatprep.subr.mxu0 0.0
          %11035 = vmatpush2.msra.mxu0 0.0
          %11036 = vmatprep.subr.mxu0 0.0
          %11037 = vmatpush2.msra.mxu0 0.0
          %11038 = vmatprep.subr.mxu0 0.0
          %11039 = vmatpush2.msra.mxu0 0.0
          %11040 = vmatprep.subr.mxu0 0.0
          %11041 = vmatpush2.msra.mxu0 0.0
          %11042 = vmatprep.subr.mxu0 0.0
          %11043 = vmatpush2.msra.mxu0 0.0
          %11044 = vmatprep.subr.mxu0 0.0
          %11045 = vmatpush2.msra.mxu0 0.0
          %11046 = vmatprep.mubr.f32.mxu0 0.0
          %11047 = vmatmul.mubr.f32.gmra.mxu0 %v10980
          %v11048 = vpop.f32.mrf.mxu0
          %v11049 = vadd.f32 0.0, %v11048
          %v11050 = vpop.f32.mrf.mxu0
          %11051 = vdwg.mxu0
          %v11053 = vsel %vm10246, %v10476, 0
          %11055 = vmatprep.subr.mxu0 0.0
          %11056 = vmatpush1.msra.mxu0 0.0
          %11057 = vmatprep.subr.mxu0 0.0
          %11058 = vmatpush1.msra.mxu0 0.0
          %11059 = vmatprep.subr.mxu0 0.0
          %11060 = vmatpush1.msra.mxu0 0.0
          %11061 = vmatprep.subr.mxu0 0.0
          %11062 = vmatpush1.msra.mxu0 0.0
          %11063 = vmatprep.subr.mxu0 0.0
          %11064 = vmatpush1.msra.mxu0 0.0
          %11065 = vmatprep.subr.mxu0 0.0
          %11066 = vmatpush1.msra.mxu0 0.0
          %11067 = vmatprep.subr.mxu0 0.0
          %11068 = vmatpush1.msra.mxu0 0.0
          %11069 = vmatprep.subr.mxu0 0.0
          %11070 = vmatpush1.msra.mxu0 0.0
          %11071 = vmatprep.subr.mxu0 0.0
          %11072 = vmatpush1.msra.mxu0 0.0
          %11073 = vmatprep.subr.mxu0 0.0
          %11074 = vmatpush1.msra.mxu0 0.0
          %11075 = vmatprep.subr.mxu0 0.0
          %11076 = vmatpush1.msra.mxu0 0.0
          %11077 = vmatprep.subr.mxu0 0.0
          %11078 = vmatpush1.msra.mxu0 0.0
          %11079 = vmatprep.subr.mxu0 0.0
          %11080 = vmatpush1.msra.mxu0 %v10970
          %11081 = vmatprep.subr.mxu0 0.0
          %11082 = vmatpush1.msra.mxu0 %v10969
          %11083 = vmatprep.subr.mxu0 0.0
          %11084 = vmatpush1.msra.mxu0 %v10968
          %11085 = vmatprep.subr.mxu0 0.0
          %11086 = vmatpush1.msra.mxu0 %v10967
          %11087 = vmatprep.subr.mxu0 0.0
          %11088 = vmatpush2.msra.mxu0 0.0
          %11089 = vmatprep.subr.mxu0 0.0
          %11090 = vmatpush2.msra.mxu0 0.0
          %11091 = vmatprep.subr.mxu0 0.0
          %11092 = vmatpush2.msra.mxu0 0.0
          %11093 = vmatprep.subr.mxu0 0.0
          %11094 = vmatpush2.msra.mxu0 0.0
          %11095 = vmatprep.subr.mxu0 0.0
          %11096 = vmatpush2.msra.mxu0 0.0
          %11097 = vmatprep.subr.mxu0 0.0
          %11098 = vmatpush2.msra.mxu0 0.0
          %11099 = vmatprep.subr.mxu0 0.0
          %11100 = vmatpush2.msra.mxu0 0.0
          %11101 = vmatprep.subr.mxu0 0.0
          %11102 = vmatpush2.msra.mxu0 0.0
          %11103 = vmatprep.subr.mxu0 0.0
          %11104 = vmatpush2.msra.mxu0 0.0
          %11105 = vmatprep.subr.mxu0 0.0
          %11106 = vmatpush2.msra.mxu0 0.0
          %11107 = vmatprep.subr.mxu0 0.0
          %11108 = vmatpush2.msra.mxu0 0.0
          %11109 = vmatprep.subr.mxu0 0.0
          %11110 = vmatpush2.msra.mxu0 0.0
          %11111 = vmatprep.subr.mxu0 0.0
          %11112 = vmatpush2.msra.mxu0 0.0
          %11113 = vmatprep.subr.mxu0 0.0
          %11114 = vmatpush2.msra.mxu0 0.0
          %11115 = vmatprep.subr.mxu0 0.0
          %11116 = vmatpush2.msra.mxu0 0.0
          %11117 = vmatprep.subr.mxu0 0.0
          %11118 = vmatpush2.msra.mxu0 0.0
          %11119 = vmatprep.mubr.f32.mxu0 0.0
          %11120 = vmatmul.mubr.f32.gmra.mxu0 %v11053
          %v11121 = vpop.f32.mrf.mxu0
          %v11122 = vadd.f32 %v11049, %v11121
          %v11123 = vpop.f32.mrf.mxu0
          %11124 = vdwg.mxu0
          %v11126 = vsel %vm10246, %v10966, 0
          %11128 = vmatprep.subr.mxu0 0.0
          %11129 = vmatpush1.msra.mxu0 0.0
          %11130 = vmatprep.subr.mxu0 0.0
          %11131 = vmatpush1.msra.mxu0 0.0
          %11132 = vmatprep.subr.mxu0 0.0
          %11133 = vmatpush1.msra.mxu0 0.0
          %11134 = vmatprep.subr.mxu0 0.0
          %11135 = vmatpush1.msra.mxu0 0.0
          %11136 = vmatprep.subr.mxu0 0.0
          %11137 = vmatpush1.msra.mxu0 0.0
          %11138 = vmatprep.subr.mxu0 0.0
          %11139 = vmatpush1.msra.mxu0 0.0
          %11140 = vmatprep.subr.mxu0 0.0
          %11141 = vmatpush1.msra.mxu0 0.0
          %11142 = vmatprep.subr.mxu0 0.0
          %11143 = vmatpush1.msra.mxu0 0.0
          %11144 = vmatprep.subr.mxu0 0.0
          %11145 = vmatpush1.msra.mxu0 0.0
          %11146 = vmatprep.subr.mxu0 0.0
          %11147 = vmatpush1.msra.mxu0 0.0
          %11148 = vmatprep.subr.mxu0 0.0
          %11149 = vmatpush1.msra.mxu0 0.0
          %11150 = vmatprep.subr.mxu0 0.0
          %11151 = vmatpush1.msra.mxu0 0.0
          %11152 = vmatprep.subr.mxu0 0.0
          %11153 = vmatpush1.msra.mxu0 %v10978
          %11154 = vmatprep.subr.mxu0 0.0
          %11155 = vmatpush1.msra.mxu0 %v10977
          %11156 = vmatprep.subr.mxu0 0.0
          %11157 = vmatpush1.msra.mxu0 %v10976
          %11158 = vmatprep.subr.mxu0 0.0
          %11159 = vmatpush1.msra.mxu0 %v10975
          %11160 = vmatprep.subr.mxu0 0.0
          %11161 = vmatpush2.msra.mxu0 0.0
          %11162 = vmatprep.subr.mxu0 0.0
          %11163 = vmatpush2.msra.mxu0 0.0
          %11164 = vmatprep.subr.mxu0 0.0
          %11165 = vmatpush2.msra.mxu0 0.0
          %11166 = vmatprep.subr.mxu0 0.0
          %11167 = vmatpush2.msra.mxu0 0.0
          %11168 = vmatprep.subr.mxu0 0.0
          %11169 = vmatpush2.msra.mxu0 0.0
          %11170 = vmatprep.subr.mxu0 0.0
          %11171 = vmatpush2.msra.mxu0 0.0
          %11172 = vmatprep.subr.mxu0 0.0
          %11173 = vmatpush2.msra.mxu0 0.0
          %11174 = vmatprep.subr.mxu0 0.0
          %11175 = vmatpush2.msra.mxu0 0.0
          %11176 = vmatprep.subr.mxu0 0.0
          %11177 = vmatpush2.msra.mxu0 0.0
          %11178 = vmatprep.subr.mxu0 0.0
          %11179 = vmatpush2.msra.mxu0 0.0
          %11180 = vmatprep.subr.mxu0 0.0
          %11181 = vmatpush2.msra.mxu0 0.0
          %11182 = vmatprep.subr.mxu0 0.0
          %11183 = vmatpush2.msra.mxu0 0.0
          %11184 = vmatprep.subr.mxu0 0.0
          %11185 = vmatpush2.msra.mxu0 0.0
          %11186 = vmatprep.subr.mxu0 0.0
          %11187 = vmatpush2.msra.mxu0 0.0
          %11188 = vmatprep.subr.mxu0 0.0
          %11189 = vmatpush2.msra.mxu0 0.0
          %11190 = vmatprep.subr.mxu0 0.0
          %11191 = vmatpush2.msra.mxu0 0.0
          %11192 = vmatprep.mubr.f32.mxu0 0.0
          %11193 = vmatmul.mubr.f32.gmra.mxu0 %v11126
          %v11194 = vpop.f32.mrf.mxu0
          %v11195 = vadd.f32 0.0, %v11194
          %v11196 = vpop.f32.mrf.mxu0
          %11197 = vdwg.mxu0
          %v11198 = vadd.f32 %v11122, %v11195
          %v11199 = vld [vmem:[%s22] sm:$0x1]
          %v11201 = vlaneseq
          %v11202 = vshrl.u32 %v11201, 7
          %v11203 = vsub.s32 0, %v11202
          %v11204 = vrot.slane %v11199, %v11203
          %v11206 = vadd.f32 %v11198, %v11204
          %vm11207 = vcmask 15360
          %11208 = vst.msk [vmem:[%s23] sm:$0xff] %vm11207, %v11206
        $region124: #{smile_classifier_forward.1} parent=111 // pred_fallthru
          _
        // Predicated region
        $region125: #{smile_classifier_forward.1} parent=111 // pred_check
          %p11209 = pneg %p563
        $region126: #{smile_classifier_forward.1} parent=111 // pred_check_branch
          %11211 = sbr.rel (%p11209) target = $region128
        $region127: #{smile_classifier_forward.1} parent=111 // pred_region
          _
        $region128: #{smile_classifier_forward.1} parent=111 // pred_fallthru
          _
        // Predicated region
        $region129: #{smile_classifier_forward.1} parent=111 // pred_check
          %p11212 = pneg %p563
        $region130: #{smile_classifier_forward.1} parent=111 // pred_check_branch
          %11214 = sbr.rel (%p11212) target = $region132
        $region131: #{smile_classifier_forward.1} parent=111 // pred_region
          _
        $region132: #{smile_classifier_forward.1} parent=111 // pred_fallthru
          _
      $region112: #{smile_classifier_forward.1} parent=5 // pred_fallthru
        _
      %p11215 = scmp.le.s32.totalorder 2, %s32
      // Predicated region
      $region133: #{smile_classifier_forward.1} parent=5 // pred_check
        %p11216 = pneg %p11215
      $region134: #{smile_classifier_forward.1} parent=5 // pred_check_branch
        %11218 = sbr.rel (%p11216) target = $region136
      $region135: #{smile_classifier_forward.1} parent=5 // pred_region
        %s11219 = ssub.s32 %s32, 2
      $region136: #{smile_classifier_forward.1} parent=5 // pred_fallthru
        _
    $region6: #{smile_classifier_forward.1} parent=1 // loop_footer
      %s36 = sadd.s32 1, %s32
    $region7: #{smile_classifier_forward.1} parent=1 // loop_footer_branch
      %31 = sbr.rel target = $region3
    $region8: #{smile_classifier_forward.1} parent=1 // loop_exit
      _
    %11220 = vsyncpa [#allocation6], 1
    %s11221 = scalar_lea.sflag [#allocation6], 1
    %11222 = vsyncpa %s11221, 1

</llo_original>
